<compile_context>
chip_gen: v5e
topology: v5e:2x2
jax: 0.10.0
libtpu: 0.0.40
codegen_flags: <defaults>
</compile_context>

<pallas_src>
import jax
import jax.numpy as jnp
from jax.experimental import pallas as pl
from jax.experimental.pallas import tpu as pltpu

EPS = 1e-5
LANES = 128


def bn_conv_kernel(x_ref, gamma_ref, beta_ref, w_ref, b_ref, o_ref):
    # x_ref:     (N, H, W, Cin)        NHWC, f32
    # gamma_ref: (1, Cin)
    # beta_ref:  (1, Cin)
    # w_ref:     (KH, KW, Cin, Cp)     HWIO, Cout zero-padded to Cp (=128)
    # b_ref:     (1, Cp)
    # o_ref:     (N*OH*OW, Cp)         lane-dense output slab
    N, H, W, Cin = x_ref.shape
    KH, KW, _, Cp = w_ref.shape
    OH, OW = H - KH + 1, W - KW + 1

    x = x_ref[...].astype(jnp.float32)

    # ---- BatchNorm2d statistics (training mode, biased var, two-pass) ----
    x2d = x.reshape(N * H * W, Cin)
    mean = jnp.mean(x2d, axis=0, keepdims=True)                  # (1, Cin)
    cent = x2d - mean
    var = jnp.mean(cent * cent, axis=0, keepdims=True)           # (1, Cin)

    scale = gamma_ref[...] * jax.lax.rsqrt(var + EPS)            # (1, Cin)
    shift = beta_ref[...] - mean * scale                         # (1, Cin)

    # ---- Fold BN into the conv weights / bias (tiny tensors, no per-pixel
    #      affine work) ----
    s4 = scale.reshape(1, 1, Cin, 1)
    t4 = shift.reshape(1, 1, Cin, 1)
    w = w_ref[...]                                               # (KH,KW,Cin,Cp)
    w_f = (w * s4).reshape(KH * KW * Cin, Cp)                    # (72, Cp)
    b_f = b_ref[...] + jnp.sum((w * t4).reshape(KH * KW * Cin, Cp),
                               axis=0, keepdims=True)            # (1, Cp)

    # ---- im2col: one (N*OH*OW, KH*KW*Cin) patch matrix, single MXU matmul ---
    # Column order (kh, kw, cin) matches the row order of w_f's reshape above.
    cols = []
    for kh in range(KH):
        for kw in range(KW):
            cols.append(
                x[:, kh:kh + OH, kw:kw + OW, :].reshape(N * OH * OW, Cin))
    patches = jnp.concatenate(cols, axis=1)                      # (392, 72)

    out = jnp.dot(patches, w_f, preferred_element_type=jnp.float32) + b_f
    o_ref[...] = out.astype(o_ref.dtype)                         # unmasked, lane-dense


@jax.jit
def fused_bn_conv(x_nchw, gamma, beta, w_oihw, b):
    """x_nchw: (N, Cin, H, W); returns (N, Cout, H-KH+1, W-KW+1) like PyTorch."""
    N, Cin, H, W = x_nchw.shape
    Cout, _, KH, KW = w_oihw.shape
    OH, OW = H - KH + 1, W - KW + 1
    Cp = max(LANES, ((Cout + LANES - 1) // LANES) * LANES)

    # NCHW -> NHWC (kept in the wrapper; 4-D minor-dim transpose in-kernel is a
    # lowering risk and x is tiny).
    x_nhwc = jnp.transpose(x_nchw, (0, 2, 3, 1)).astype(jnp.float32)

    # OIHW -> HWIO, zero-padded along Cout to a full 128-lane width so the
    # kernel's matmul output and stores are lane-dense.
    w_hwio = jnp.transpose(w_oihw, (2, 3, 1, 0)).astype(jnp.float32)
    w_pad = jnp.zeros((KH, KW, Cin, Cp), jnp.float32).at[..., :Cout].set(w_hwio)
    b_pad = jnp.zeros((1, Cp), jnp.float32).at[:, :Cout].set(
        b.reshape(1, Cout).astype(jnp.float32))

    out2d = pl.pallas_call(
        bn_conv_kernel,
        out_shape=jax.ShapeDtypeStruct((N * OH * OW, Cp), jnp.float32),
        in_specs=[pl.BlockSpec(memory_space=pltpu.MemorySpace.VMEM)] * 5,
        out_specs=pl.BlockSpec(memory_space=pltpu.MemorySpace.VMEM),
    )(x_nhwc,
      gamma.reshape(1, Cin).astype(jnp.float32),
      beta.reshape(1, Cin).astype(jnp.float32),
      w_pad,
      b_pad)

    # Lane-dense (N*OH*OW, 128) slab -> (N, Cout, OH, OW) in the wrapper.
    out = out2d[:, :Cout].reshape(N, OH, OW, Cout)
    return jnp.transpose(out, (0, 3, 1, 2)).astype(x_nchw.dtype)


def _reference(x_nchw, gamma, beta, w_oihw, b):
    # Pure-JAX reference (training-mode BN + valid conv).
    mean = jnp.mean(x_nchw, axis=(0, 2, 3), keepdims=True)
    var = jnp.mean((x_nchw - mean) ** 2, axis=(0, 2, 3), keepdims=True)
    xhat = (x_nchw - mean) * jax.lax.rsqrt(var + EPS)
    xhat = xhat * gamma.reshape(1, -1, 1, 1) + beta.reshape(1, -1, 1, 1)
    out = jax.lax.conv_general_dilated(
        xhat, w_oihw, window_strides=(1, 1), padding="VALID",
        dimension_numbers=("NCHW", "OIHW", "NCHW"))
    return out + b.reshape(1, -1, 1, 1)


if __name__ == "__main__":
    key = jax.random.PRNGKey(0)
    kx, kw, kb = jax.random.split(key, 3)

    N, Cin, H, W = 2, 8, 16, 16
    Cout, KH, KW = 16, 3, 3

    x = jax.random.normal(kx, (N, Cin, H, W), dtype=jnp.float32)

    # BatchNorm2d(8) default-initialized parameters.
    gamma = jnp.ones((Cin,), dtype=jnp.float32)
    beta = jnp.zeros((Cin,), dtype=jnp.float32)

    # Conv2d(8, 16, 3) parameters (deterministic uniform init, PyTorch-style bound).
    fan_in = Cin * KH * KW
    bound = 1.0 / (fan_in ** 0.5)
    w = jax.random.uniform(kw, (Cout, Cin, KH, KW), jnp.float32, -bound, bound)
    b = jax.random.uniform(kb, (Cout,), jnp.float32, -bound, bound)

    out = fused_bn_conv(x, gamma, beta, w, b)
    out = jax.block_until_ready(out)

    ref = _reference(x, gamma, beta, w, b)
    assert out.shape == (N, Cout, H - 2, W - 2)
    assert jnp.allclose(out, ref, atol=1e-4, rtol=1e-4)

    print("KERNEL_OK")
</pallas_src>

<mosaic_0001>
module attributes {stable_mosaic.version = 11 : i64} {
  func.func @bn_conv_kernel(%arg0: memref<2x16x16x8xf32, #tpu.memory_space<vmem>>, %arg1: memref<1x8xf32, #tpu.memory_space<vmem>>, %arg2: memref<1x8xf32, #tpu.memory_space<vmem>>, %arg3: memref<3x3x8x128xf32, #tpu.memory_space<vmem>>, %arg4: memref<1x128xf32, #tpu.memory_space<vmem>>, %arg5: memref<392x128xf32, #tpu.memory_space<vmem>>) attributes {dimension_semantics = [], scalar_prefetch = 0 : i64, scratch_operands = 0 : i64, tpu.core_type = #tpu.core_type<tc>} {
    %c0 = arith.constant 0 : index
    %c0_0 = arith.constant 0 : index
    %c0_1 = arith.constant 0 : index
    %c0_2 = arith.constant 0 : index
    %0 = vector.load %arg0[%c0, %c0_0, %c0_1, %c0_2] : memref<2x16x16x8xf32, #tpu.memory_space<vmem>>, vector<2x16x16x8xf32>
    %1 = vector.shape_cast %0 : vector<2x16x16x8xf32> to vector<512x8xf32>
    %cst = arith.constant dense<0.000000e+00> : vector<8xf32>
    %2 = vector.multi_reduction <add>, %1, %cst [0] : vector<512x8xf32> to vector<8xf32>
    %3 = vector.shape_cast %2 : vector<8xf32> to vector<1x8xf32>
    %cst_3 = arith.constant 5.120000e+02 : f32
    %4 = vector.broadcast %cst_3 : f32 to vector<1x8xf32>
    %5 = arith.divf %3, %4 : vector<1x8xf32>
    %6 = vector.broadcast %5 : vector<1x8xf32> to vector<512x8xf32>
    %7 = arith.subf %1, %6 : vector<512x8xf32>
    %8 = arith.mulf %7, %7 : vector<512x8xf32>
    %cst_4 = arith.constant dense<0.000000e+00> : vector<8xf32>
    %9 = vector.multi_reduction <add>, %8, %cst_4 [0] : vector<512x8xf32> to vector<8xf32>
    %10 = vector.shape_cast %9 : vector<8xf32> to vector<1x8xf32>
    %cst_5 = arith.constant 5.120000e+02 : f32
    %11 = vector.broadcast %cst_5 : f32 to vector<1x8xf32>
    %12 = arith.divf %10, %11 : vector<1x8xf32>
    %c0_6 = arith.constant 0 : index
    %c0_7 = arith.constant 0 : index
    %13 = vector.load %arg1[%c0_6, %c0_7] : memref<1x8xf32, #tpu.memory_space<vmem>>, vector<1x8xf32>
    %cst_8 = arith.constant 9.99999974E-6 : f32
    %14 = vector.broadcast %cst_8 : f32 to vector<1x8xf32>
    %15 = arith.addf %12, %14 : vector<1x8xf32>
    %16 = math.rsqrt %15 : vector<1x8xf32>
    %17 = arith.mulf %13, %16 : vector<1x8xf32>
    %c0_9 = arith.constant 0 : index
    %c0_10 = arith.constant 0 : index
    %18 = vector.load %arg2[%c0_9, %c0_10] : memref<1x8xf32, #tpu.memory_space<vmem>>, vector<1x8xf32>
    %19 = arith.mulf %5, %17 : vector<1x8xf32>
    %20 = arith.subf %18, %19 : vector<1x8xf32>
    %21 = vector.shape_cast %17 : vector<1x8xf32> to vector<1x1x8x1xf32>
    %22 = vector.shape_cast %20 : vector<1x8xf32> to vector<1x1x8x1xf32>
    %c0_11 = arith.constant 0 : index
    %c0_12 = arith.constant 0 : index
    %c0_13 = arith.constant 0 : index
    %c0_14 = arith.constant 0 : index
    %23 = vector.load %arg3[%c0_11, %c0_12, %c0_13, %c0_14] : memref<3x3x8x128xf32, #tpu.memory_space<vmem>>, vector<3x3x8x128xf32>
    %24 = vector.broadcast %21 : vector<1x1x8x1xf32> to vector<3x3x8x128xf32>
    %25 = arith.mulf %23, %24 : vector<3x3x8x128xf32>
    %26 = vector.shape_cast %25 : vector<3x3x8x128xf32> to vector<72x128xf32>
    %c0_15 = arith.constant 0 : index
    %c0_16 = arith.constant 0 : index
    %27 = vector.load %arg4[%c0_15, %c0_16] : memref<1x128xf32, #tpu.memory_space<vmem>>, vector<1x128xf32>
    %28 = vector.broadcast %22 : vector<1x1x8x1xf32> to vector<3x3x8x128xf32>
    %29 = arith.mulf %23, %28 : vector<3x3x8x128xf32>
    %30 = vector.shape_cast %29 : vector<3x3x8x128xf32> to vector<72x128xf32>
    %cst_17 = arith.constant dense<0.000000e+00> : vector<128xf32>
    %31 = vector.multi_reduction <add>, %30, %cst_17 [0] : vector<72x128xf32> to vector<128xf32>
    %32 = vector.shape_cast %31 : vector<128xf32> to vector<1x128xf32>
    %33 = arith.addf %27, %32 : vector<1x128xf32>
    %34 = vector.extract_strided_slice %0 {offsets = [0, 0, 0, 0], sizes = [2, 14, 14, 8], strides = [1, 1, 1, 1]} : vector<2x16x16x8xf32> to vector<2x14x14x8xf32>
    %35 = vector.shape_cast %34 : vector<2x14x14x8xf32> to vector<392x8xf32>
    %36 = vector.extract_strided_slice %0 {offsets = [0, 0, 1, 0], sizes = [2, 14, 14, 8], strides = [1, 1, 1, 1]} : vector<2x16x16x8xf32> to vector<2x14x14x8xf32>
    %37 = vector.shape_cast %36 : vector<2x14x14x8xf32> to vector<392x8xf32>
    %38 = vector.extract_strided_slice %0 {offsets = [0, 0, 2, 0], sizes = [2, 14, 14, 8], strides = [1, 1, 1, 1]} : vector<2x16x16x8xf32> to vector<2x14x14x8xf32>
    %39 = vector.shape_cast %38 : vector<2x14x14x8xf32> to vector<392x8xf32>
    %40 = vector.extract_strided_slice %0 {offsets = [0, 1, 0, 0], sizes = [2, 14, 14, 8], strides = [1, 1, 1, 1]} : vector<2x16x16x8xf32> to vector<2x14x14x8xf32>
    %41 = vector.shape_cast %40 : vector<2x14x14x8xf32> to vector<392x8xf32>
    %42 = vector.extract_strided_slice %0 {offsets = [0, 1, 1, 0], sizes = [2, 14, 14, 8], strides = [1, 1, 1, 1]} : vector<2x16x16x8xf32> to vector<2x14x14x8xf32>
    %43 = vector.shape_cast %42 : vector<2x14x14x8xf32> to vector<392x8xf32>
    %44 = vector.extract_strided_slice %0 {offsets = [0, 1, 2, 0], sizes = [2, 14, 14, 8], strides = [1, 1, 1, 1]} : vector<2x16x16x8xf32> to vector<2x14x14x8xf32>
    %45 = vector.shape_cast %44 : vector<2x14x14x8xf32> to vector<392x8xf32>
    %46 = vector.extract_strided_slice %0 {offsets = [0, 2, 0, 0], sizes = [2, 14, 14, 8], strides = [1, 1, 1, 1]} : vector<2x16x16x8xf32> to vector<2x14x14x8xf32>
    %47 = vector.shape_cast %46 : vector<2x14x14x8xf32> to vector<392x8xf32>
    %48 = vector.extract_strided_slice %0 {offsets = [0, 2, 1, 0], sizes = [2, 14, 14, 8], strides = [1, 1, 1, 1]} : vector<2x16x16x8xf32> to vector<2x14x14x8xf32>
    %49 = vector.shape_cast %48 : vector<2x14x14x8xf32> to vector<392x8xf32>
    %50 = vector.extract_strided_slice %0 {offsets = [0, 2, 2, 0], sizes = [2, 14, 14, 8], strides = [1, 1, 1, 1]} : vector<2x16x16x8xf32> to vector<2x14x14x8xf32>
    %51 = vector.shape_cast %50 : vector<2x14x14x8xf32> to vector<392x8xf32>
    %52 = tpu.concatenate %35, %37, %39, %41, %43, %45, %47, %49, %51 in 1 : vector<392x8xf32>, vector<392x8xf32>, vector<392x8xf32>, vector<392x8xf32>, vector<392x8xf32>, vector<392x8xf32>, vector<392x8xf32>, vector<392x8xf32>, vector<392x8xf32> -> vector<392x72xf32>
    %cst_18 = arith.constant dense<0.000000e+00> : vector<392x128xf32>
    %53 = tpu.matmul %52, %26, %cst_18 {dimension_numbers = #tpu.dot_dimension_numbers<[1], [0], [0], [1], [0, 0, 1, 1], [], []>} : vector<392x72xf32>, vector<72x128xf32>, vector<392x128xf32> -> vector<392x128xf32>
    %54 = vector.broadcast %33 : vector<1x128xf32> to vector<392x128xf32>
    %55 = arith.addf %53, %54 : vector<392x128xf32>
    %c0_19 = arith.constant 0 : index
    %c0_20 = arith.constant 0 : index
    %56 = vector.load %arg5[%c0_19, %c0_20] : memref<392x128xf32, #tpu.memory_space<vmem>>, vector<392x128xf32>
    tpu.vector_store %arg5[%c0_19, %c0_20], %55 {strides = array<i32>} : memref<392x128xf32, #tpu.memory_space<vmem>>, vector<392x128xf32>,
    return
  }
}

</mosaic_0001>

<llo_original>
// kernel: fused_bn_conv.1
$region0: #{fused_bn_conv.1}
  #allocation0 [shape = 'u32[]', space=smem, size = 0x4, offset = 0x4, fixed_abs, tag = 'smem constant byte address 0x4 - core index']
  #allocation1 [shape = 'u32[72,128]{1,0:T(1,128)}', space=vmem, size = 0x9000, scoped, tag = 'internal scratch']
  %s0 = inlined_call_operand.vmem [shape: f32[2,16,16,8], index: 0, kind: input, shape index: {}]
  %s1 = inlined_call_operand.vmem [shape: f32[1,8], index: 1, kind: input, shape index: {}]
  %s2 = inlined_call_operand.vmem [shape: f32[1,8], index: 2, kind: input, shape index: {}]
  %s3 = inlined_call_operand.vmem [shape: f32[3,3,8,128], index: 3, kind: input, shape index: {}]
  %s4 = inlined_call_operand.vmem [shape: f32[1,128], index: 4, kind: input, shape index: {}]
  %s5 = inlined_call_operand.vmem [shape: f32[392,128], index: 5, kind: output, shape index: {}]
  %s6 = sld [smem:[#allocation0]]
  $region30: #{fused_bn_conv.1} parent=0
    _
  %s8 = ssub.s32 1, %s6
  %s9 = scalar_select 0, %s8, %s6
  // Predicated region
  $region2: #{fused_bn_conv.1} parent=0 // pred_check
    _
  $region3: #{fused_bn_conv.1} parent=0 // pred_check_branch
    %11 = sbr.rel (0) target = $region5
  $region4: #{fused_bn_conv.1} parent=0 // pred_region
    _
  $region5: #{fused_bn_conv.1} parent=0 // pred_fallthru
    _
  // Predicated region
  $region6: #{fused_bn_conv.1} parent=0 // pred_check
    _
  $region7: #{fused_bn_conv.1} parent=0 // pred_check_branch
    %13 = sbr.rel (0) target = $region9
  $region8: #{fused_bn_conv.1} parent=0 // pred_region
    _
  $region9: #{fused_bn_conv.1} parent=0 // pred_fallthru
    _
  // Predicated region
  $region10: #{fused_bn_conv.1} parent=0 // pred_check
    _
  $region11: #{fused_bn_conv.1} parent=0 // pred_check_branch
    %15 = sbr.rel (0) target = $region13
  $region12: #{fused_bn_conv.1} parent=0 // pred_region
    _
  $region13: #{fused_bn_conv.1} parent=0 // pred_fallthru
    _
  // Predicated region
  $region14: #{fused_bn_conv.1} parent=0 // pred_check
    _
  $region15: #{fused_bn_conv.1} parent=0 // pred_check_branch
    %17 = sbr.rel (0) target = $region17
  $region16: #{fused_bn_conv.1} parent=0 // pred_region
    _
  $region17: #{fused_bn_conv.1} parent=0 // pred_fallthru
    _
  // Predicated region
  $region18: #{fused_bn_conv.1} parent=0 // pred_check
    _
  $region19: #{fused_bn_conv.1} parent=0 // pred_check_branch
    %19 = sbr.rel (0) target = $region21
  $region20: #{fused_bn_conv.1} parent=0 // pred_region
    _
  $region21: #{fused_bn_conv.1} parent=0 // pred_fallthru
    _
  %v20 = vld [vmem:[%s0] sm:$0xff]
  %v21 = vld [vmem:[%s0 + $0x8] sm:$0xff]
  %v22 = vld [vmem:[%s0 + $0x10] sm:$0xff]
  %v23 = vld [vmem:[%s0 + $0x18] sm:$0xff]
  %v24 = vld [vmem:[%s0 + $0x20] sm:$0xff]
  %v25 = vld [vmem:[%s0 + $0x28] sm:$0xff]
  %v26 = vld [vmem:[%s0 + $0x30] sm:$0xff]
  %v27 = vld [vmem:[%s0 + $0x38] sm:$0xff]
  %v28 = vld [vmem:[%s0 + $0x40] sm:$0xff]
  %v29 = vld [vmem:[%s0 + $0x48] sm:$0xff]
  %v30 = vld [vmem:[%s0 + $0x50] sm:$0xff]
  %v31 = vld [vmem:[%s0 + $0x58] sm:$0xff]
  %v32 = vld [vmem:[%s0 + $0x60] sm:$0xff]
  %v33 = vld [vmem:[%s0 + $0x68] sm:$0xff]
  %v34 = vld [vmem:[%s0 + $0x70] sm:$0xff]
  %v35 = vld [vmem:[%s0 + $0x78] sm:$0xff]
  %v36 = vld [vmem:[%s0 + $0x80] sm:$0xff]
  %v37 = vld [vmem:[%s0 + $0x88] sm:$0xff]
  %v38 = vld [vmem:[%s0 + $0x90] sm:$0xff]
  %v39 = vld [vmem:[%s0 + $0x98] sm:$0xff]
  %v40 = vld [vmem:[%s0 + $0xa0] sm:$0xff]
  %v41 = vld [vmem:[%s0 + $0xa8] sm:$0xff]
  %v42 = vld [vmem:[%s0 + $0xb0] sm:$0xff]
  %v43 = vld [vmem:[%s0 + $0xb8] sm:$0xff]
  %v44 = vld [vmem:[%s0 + $0xc0] sm:$0xff]
  %v45 = vld [vmem:[%s0 + $0xc8] sm:$0xff]
  %v46 = vld [vmem:[%s0 + $0xd0] sm:$0xff]
  %v47 = vld [vmem:[%s0 + $0xd8] sm:$0xff]
  %v48 = vld [vmem:[%s0 + $0xe0] sm:$0xff]
  %v49 = vld [vmem:[%s0 + $0xe8] sm:$0xff]
  %v50 = vld [vmem:[%s0 + $0xf0] sm:$0xff]
  %v51 = vld [vmem:[%s0 + $0xf8] sm:$0xff]
  %v52 = vld [vmem:[%s0 + $0x100] sm:$0xff]
  %v53 = vld [vmem:[%s0 + $0x108] sm:$0xff]
  %v54 = vld [vmem:[%s0 + $0x110] sm:$0xff]
  %v55 = vld [vmem:[%s0 + $0x118] sm:$0xff]
  %v56 = vld [vmem:[%s0 + $0x120] sm:$0xff]
  %v57 = vld [vmem:[%s0 + $0x128] sm:$0xff]
  %v58 = vld [vmem:[%s0 + $0x130] sm:$0xff]
  %v59 = vld [vmem:[%s0 + $0x138] sm:$0xff]
  %v60 = vld [vmem:[%s0 + $0x140] sm:$0xff]
  %v61 = vld [vmem:[%s0 + $0x148] sm:$0xff]
  %v62 = vld [vmem:[%s0 + $0x150] sm:$0xff]
  %v63 = vld [vmem:[%s0 + $0x158] sm:$0xff]
  %v64 = vld [vmem:[%s0 + $0x160] sm:$0xff]
  %v65 = vld [vmem:[%s0 + $0x168] sm:$0xff]
  %v66 = vld [vmem:[%s0 + $0x170] sm:$0xff]
  %v67 = vld [vmem:[%s0 + $0x178] sm:$0xff]
  %v68 = vld [vmem:[%s0 + $0x180] sm:$0xff]
  %v69 = vld [vmem:[%s0 + $0x188] sm:$0xff]
  %v70 = vld [vmem:[%s0 + $0x190] sm:$0xff]
  %v71 = vld [vmem:[%s0 + $0x198] sm:$0xff]
  %v72 = vld [vmem:[%s0 + $0x1a0] sm:$0xff]
  %v73 = vld [vmem:[%s0 + $0x1a8] sm:$0xff]
  %v74 = vld [vmem:[%s0 + $0x1b0] sm:$0xff]
  %v75 = vld [vmem:[%s0 + $0x1b8] sm:$0xff]
  %v76 = vld [vmem:[%s0 + $0x1c0] sm:$0xff]
  %v77 = vld [vmem:[%s0 + $0x1c8] sm:$0xff]
  %v78 = vld [vmem:[%s0 + $0x1d0] sm:$0xff]
  %v79 = vld [vmem:[%s0 + $0x1d8] sm:$0xff]
  %v80 = vld [vmem:[%s0 + $0x1e0] sm:$0xff]
  %v81 = vld [vmem:[%s0 + $0x1e8] sm:$0xff]
  %v82 = vld [vmem:[%s0 + $0x1f0] sm:$0xff]
  %v83 = vld [vmem:[%s0 + $0x1f8] sm:$0xff]
  %vm84 = vcmask 64512
  %v85 = vsel %vm84, %v20, 0.0
  %v86 = vsel %vm84, %v21, 0.0
  %v87 = vadd.f32 %v85, %v86
  %v88 = vsel %vm84, %v22, 0.0
  %v89 = vadd.f32 %v87, %v88
  %v90 = vsel %vm84, %v23, 0.0
  %v91 = vadd.f32 %v89, %v90
  %v92 = vsel %vm84, %v24, 0.0
  %v93 = vadd.f32 %v91, %v92
  %v94 = vsel %vm84, %v25, 0.0
  %v95 = vadd.f32 %v93, %v94
  %v96 = vsel %vm84, %v26, 0.0
  %v97 = vadd.f32 %v95, %v96
  %v98 = vsel %vm84, %v27, 0.0
  %v99 = vadd.f32 %v97, %v98
  %v100 = vsel %vm84, %v28, 0.0
  %v101 = vadd.f32 %v99, %v100
  %v102 = vsel %vm84, %v29, 0.0
  %v103 = vadd.f32 %v101, %v102
  %v104 = vsel %vm84, %v30, 0.0
  %v105 = vadd.f32 %v103, %v104
  %v106 = vsel %vm84, %v31, 0.0
  %v107 = vadd.f32 %v105, %v106
  %v108 = vsel %vm84, %v32, 0.0
  %v109 = vadd.f32 %v107, %v108
  %v110 = vsel %vm84, %v33, 0.0
  %v111 = vadd.f32 %v109, %v110
  %v112 = vsel %vm84, %v34, 0.0
  %v113 = vadd.f32 %v111, %v112
  %v114 = vsel %vm84, %v35, 0.0
  %v115 = vadd.f32 %v113, %v114
  %v116 = vsel %vm84, %v36, 0.0
  %v117 = vadd.f32 %v115, %v116
  %v118 = vsel %vm84, %v37, 0.0
  %v119 = vadd.f32 %v117, %v118
  %v120 = vsel %vm84, %v38, 0.0
  %v121 = vadd.f32 %v119, %v120
  %v122 = vsel %vm84, %v39, 0.0
  %v123 = vadd.f32 %v121, %v122
  %v124 = vsel %vm84, %v40, 0.0
  %v125 = vadd.f32 %v123, %v124
  %v126 = vsel %vm84, %v41, 0.0
  %v127 = vadd.f32 %v125, %v126
  %v128 = vsel %vm84, %v42, 0.0
  %v129 = vadd.f32 %v127, %v128
  %v130 = vsel %vm84, %v43, 0.0
  %v131 = vadd.f32 %v129, %v130
  %v132 = vsel %vm84, %v44, 0.0
  %v133 = vadd.f32 %v131, %v132
  %v134 = vsel %vm84, %v45, 0.0
  %v135 = vadd.f32 %v133, %v134
  %v136 = vsel %vm84, %v46, 0.0
  %v137 = vadd.f32 %v135, %v136
  %v138 = vsel %vm84, %v47, 0.0
  %v139 = vadd.f32 %v137, %v138
  %v140 = vsel %vm84, %v48, 0.0
  %v141 = vadd.f32 %v139, %v140
  %v142 = vsel %vm84, %v49, 0.0
  %v143 = vadd.f32 %v141, %v142
  %v144 = vsel %vm84, %v50, 0.0
  %v145 = vadd.f32 %v143, %v144
  %v146 = vsel %vm84, %v51, 0.0
  %v147 = vadd.f32 %v145, %v146
  %v148 = vsel %vm84, %v52, 0.0
  %v149 = vadd.f32 %v147, %v148
  %v150 = vsel %vm84, %v53, 0.0
  %v151 = vadd.f32 %v149, %v150
  %v152 = vsel %vm84, %v54, 0.0
  %v153 = vadd.f32 %v151, %v152
  %v154 = vsel %vm84, %v55, 0.0
  %v155 = vadd.f32 %v153, %v154
  %v156 = vsel %vm84, %v56, 0.0
  %v157 = vadd.f32 %v155, %v156
  %v158 = vsel %vm84, %v57, 0.0
  %v159 = vadd.f32 %v157, %v158
  %v160 = vsel %vm84, %v58, 0.0
  %v161 = vadd.f32 %v159, %v160
  %v162 = vsel %vm84, %v59, 0.0
  %v163 = vadd.f32 %v161, %v162
  %v164 = vsel %vm84, %v60, 0.0
  %v165 = vadd.f32 %v163, %v164
  %v166 = vsel %vm84, %v61, 0.0
  %v167 = vadd.f32 %v165, %v166
  %v168 = vsel %vm84, %v62, 0.0
  %v169 = vadd.f32 %v167, %v168
  %v170 = vsel %vm84, %v63, 0.0
  %v171 = vadd.f32 %v169, %v170
  %v172 = vsel %vm84, %v64, 0.0
  %v173 = vadd.f32 %v171, %v172
  %v174 = vsel %vm84, %v65, 0.0
  %v175 = vadd.f32 %v173, %v174
  %v176 = vsel %vm84, %v66, 0.0
  %v177 = vadd.f32 %v175, %v176
  %v178 = vsel %vm84, %v67, 0.0
  %v179 = vadd.f32 %v177, %v178
  %v180 = vsel %vm84, %v68, 0.0
  %v181 = vadd.f32 %v179, %v180
  %v182 = vsel %vm84, %v69, 0.0
  %v183 = vadd.f32 %v181, %v182
  %v184 = vsel %vm84, %v70, 0.0
  %v185 = vadd.f32 %v183, %v184
  %v186 = vsel %vm84, %v71, 0.0
  %v187 = vadd.f32 %v185, %v186
  %v188 = vsel %vm84, %v72, 0.0
  %v189 = vadd.f32 %v187, %v188
  %v190 = vsel %vm84, %v73, 0.0
  %v191 = vadd.f32 %v189, %v190
  %v192 = vsel %vm84, %v74, 0.0
  %v193 = vadd.f32 %v191, %v192
  %v194 = vsel %vm84, %v75, 0.0
  %v195 = vadd.f32 %v193, %v194
  %v196 = vsel %vm84, %v76, 0.0
  %v197 = vadd.f32 %v195, %v196
  %v198 = vsel %vm84, %v77, 0.0
  %v199 = vadd.f32 %v197, %v198
  %v200 = vsel %vm84, %v78, 0.0
  %v201 = vadd.f32 %v199, %v200
  %v202 = vsel %vm84, %v79, 0.0
  %v203 = vadd.f32 %v201, %v202
  %v204 = vsel %vm84, %v80, 0.0
  %v205 = vadd.f32 %v203, %v204
  %v206 = vsel %vm84, %v81, 0.0
  %v207 = vadd.f32 %v205, %v206
  %v208 = vsel %vm84, %v82, 0.0
  %v209 = vadd.f32 %v207, %v208
  %v210 = vsel %vm84, %v83, 0.0
  %v211 = vadd.f32 %v209, %v210
  %v212 = vrot.slane %v211, 4
  %v213 = vadd.f32 %v211, %v212
  %v214 = vrot.slane %v213, 2
  %v215 = vadd.f32 %v213, %v214
  %v216 = vrot.slane %v215, 1
  %v217 = vadd.f32 %v215, %v216
  %v218 = vrcp.pop 512.0
  %v219 = vmul.f32 512.0, %v218
  %v220 = vsub.f32 1.0, %v219
  %v221 = vmul.f32 %v218, %v220
  %v222 = vadd.f32 %v218, %v221
  %vm223 = vweird.f32 %v218
  %v224 = vsel %vm223, %v218, %v222
  %v225 = vmul.f32 %v217, %v224
  %v226 = vsub.f32 %v20, %v225
  %v227 = vsub.f32 %v21, %v225
  %v228 = vsub.f32 %v22, %v225
  %v229 = vsub.f32 %v23, %v225
  %v230 = vsub.f32 %v24, %v225
  %v231 = vsub.f32 %v25, %v225
  %v232 = vsub.f32 %v26, %v225
  %v233 = vsub.f32 %v27, %v225
  %v234 = vsub.f32 %v28, %v225
  %v235 = vsub.f32 %v29, %v225
  %v236 = vsub.f32 %v30, %v225
  %v237 = vsub.f32 %v31, %v225
  %v238 = vsub.f32 %v32, %v225
  %v239 = vsub.f32 %v33, %v225
  %v240 = vsub.f32 %v34, %v225
  %v241 = vsub.f32 %v35, %v225
  %v242 = vsub.f32 %v36, %v225
  %v243 = vsub.f32 %v37, %v225
  %v244 = vsub.f32 %v38, %v225
  %v245 = vsub.f32 %v39, %v225
  %v246 = vsub.f32 %v40, %v225
  %v247 = vsub.f32 %v41, %v225
  %v248 = vsub.f32 %v42, %v225
  %v249 = vsub.f32 %v43, %v225
  %v250 = vsub.f32 %v44, %v225
  %v251 = vsub.f32 %v45, %v225
  %v252 = vsub.f32 %v46, %v225
  %v253 = vsub.f32 %v47, %v225
  %v254 = vsub.f32 %v48, %v225
  %v255 = vsub.f32 %v49, %v225
  %v256 = vsub.f32 %v50, %v225
  %v257 = vsub.f32 %v51, %v225
  %v258 = vsub.f32 %v52, %v225
  %v259 = vsub.f32 %v53, %v225
  %v260 = vsub.f32 %v54, %v225
  %v261 = vsub.f32 %v55, %v225
  %v262 = vsub.f32 %v56, %v225
  %v263 = vsub.f32 %v57, %v225
  %v264 = vsub.f32 %v58, %v225
  %v265 = vsub.f32 %v59, %v225
  %v266 = vsub.f32 %v60, %v225
  %v267 = vsub.f32 %v61, %v225
  %v268 = vsub.f32 %v62, %v225
  %v269 = vsub.f32 %v63, %v225
  %v270 = vsub.f32 %v64, %v225
  %v271 = vsub.f32 %v65, %v225
  %v272 = vsub.f32 %v66, %v225
  %v273 = vsub.f32 %v67, %v225
  %v274 = vsub.f32 %v68, %v225
  %v275 = vsub.f32 %v69, %v225
  %v276 = vsub.f32 %v70, %v225
  %v277 = vsub.f32 %v71, %v225
  %v278 = vsub.f32 %v72, %v225
  %v279 = vsub.f32 %v73, %v225
  %v280 = vsub.f32 %v74, %v225
  %v281 = vsub.f32 %v75, %v225
  %v282 = vsub.f32 %v76, %v225
  %v283 = vsub.f32 %v77, %v225
  %v284 = vsub.f32 %v78, %v225
  %v285 = vsub.f32 %v79, %v225
  %v286 = vsub.f32 %v80, %v225
  %v287 = vsub.f32 %v81, %v225
  %v288 = vsub.f32 %v82, %v225
  %v289 = vsub.f32 %v83, %v225
  %v290 = vmul.f32 %v226, %v226
  %v291 = vmul.f32 %v227, %v227
  %v292 = vmul.f32 %v228, %v228
  %v293 = vmul.f32 %v229, %v229
  %v294 = vmul.f32 %v230, %v230
  %v295 = vmul.f32 %v231, %v231
  %v296 = vmul.f32 %v232, %v232
  %v297 = vmul.f32 %v233, %v233
  %v298 = vmul.f32 %v234, %v234
  %v299 = vmul.f32 %v235, %v235
  %v300 = vmul.f32 %v236, %v236
  %v301 = vmul.f32 %v237, %v237
  %v302 = vmul.f32 %v238, %v238
  %v303 = vmul.f32 %v239, %v239
  %v304 = vmul.f32 %v240, %v240
  %v305 = vmul.f32 %v241, %v241
  %v306 = vmul.f32 %v242, %v242
  %v307 = vmul.f32 %v243, %v243
  %v308 = vmul.f32 %v244, %v244
  %v309 = vmul.f32 %v245, %v245
  %v310 = vmul.f32 %v246, %v246
  %v311 = vmul.f32 %v247, %v247
  %v312 = vmul.f32 %v248, %v248
  %v313 = vmul.f32 %v249, %v249
  %v314 = vmul.f32 %v250, %v250
  %v315 = vmul.f32 %v251, %v251
  %v316 = vmul.f32 %v252, %v252
  %v317 = vmul.f32 %v253, %v253
  %v318 = vmul.f32 %v254, %v254
  %v319 = vmul.f32 %v255, %v255
  %v320 = vmul.f32 %v256, %v256
  %v321 = vmul.f32 %v257, %v257
  %v322 = vmul.f32 %v258, %v258
  %v323 = vmul.f32 %v259, %v259
  %v324 = vmul.f32 %v260, %v260
  %v325 = vmul.f32 %v261, %v261
  %v326 = vmul.f32 %v262, %v262
  %v327 = vmul.f32 %v263, %v263
  %v328 = vmul.f32 %v264, %v264
  %v329 = vmul.f32 %v265, %v265
  %v330 = vmul.f32 %v266, %v266
  %v331 = vmul.f32 %v267, %v267
  %v332 = vmul.f32 %v268, %v268
  %v333 = vmul.f32 %v269, %v269
  %v334 = vmul.f32 %v270, %v270
  %v335 = vmul.f32 %v271, %v271
  %v336 = vmul.f32 %v272, %v272
  %v337 = vmul.f32 %v273, %v273
  %v338 = vmul.f32 %v274, %v274
  %v339 = vmul.f32 %v275, %v275
  %v340 = vmul.f32 %v276, %v276
  %v341 = vmul.f32 %v277, %v277
  %v342 = vmul.f32 %v278, %v278
  %v343 = vmul.f32 %v279, %v279
  %v344 = vmul.f32 %v280, %v280
  %v345 = vmul.f32 %v281, %v281
  %v346 = vmul.f32 %v282, %v282
  %v347 = vmul.f32 %v283, %v283
  %v348 = vmul.f32 %v284, %v284
  %v349 = vmul.f32 %v285, %v285
  %v350 = vmul.f32 %v286, %v286
  %v351 = vmul.f32 %v287, %v287
  %v352 = vmul.f32 %v288, %v288
  %v353 = vmul.f32 %v289, %v289
  %v354 = vsel %vm84, %v290, 0.0
  %v355 = vsel %vm84, %v291, 0.0
  %v356 = vadd.f32 %v354, %v355
  %v357 = vsel %vm84, %v292, 0.0
  %v358 = vadd.f32 %v356, %v357
  %v359 = vsel %vm84, %v293, 0.0
  %v360 = vadd.f32 %v358, %v359
  %v361 = vsel %vm84, %v294, 0.0
  %v362 = vadd.f32 %v360, %v361
  %v363 = vsel %vm84, %v295, 0.0
  %v364 = vadd.f32 %v362, %v363
  %v365 = vsel %vm84, %v296, 0.0
  %v366 = vadd.f32 %v364, %v365
  %v367 = vsel %vm84, %v297, 0.0
  %v368 = vadd.f32 %v366, %v367
  %v369 = vsel %vm84, %v298, 0.0
  %v370 = vadd.f32 %v368, %v369
  %v371 = vsel %vm84, %v299, 0.0
  %v372 = vadd.f32 %v370, %v371
  %v373 = vsel %vm84, %v300, 0.0
  %v374 = vadd.f32 %v372, %v373
  %v375 = vsel %vm84, %v301, 0.0
  %v376 = vadd.f32 %v374, %v375
  %v377 = vsel %vm84, %v302, 0.0
  %v378 = vadd.f32 %v376, %v377
  %v379 = vsel %vm84, %v303, 0.0
  %v380 = vadd.f32 %v378, %v379
  %v381 = vsel %vm84, %v304, 0.0
  %v382 = vadd.f32 %v380, %v381
  %v383 = vsel %vm84, %v305, 0.0
  %v384 = vadd.f32 %v382, %v383
  %v385 = vsel %vm84, %v306, 0.0
  %v386 = vadd.f32 %v384, %v385
  %v387 = vsel %vm84, %v307, 0.0
  %v388 = vadd.f32 %v386, %v387
  %v389 = vsel %vm84, %v308, 0.0
  %v390 = vadd.f32 %v388, %v389
  %v391 = vsel %vm84, %v309, 0.0
  %v392 = vadd.f32 %v390, %v391
  %v393 = vsel %vm84, %v310, 0.0
  %v394 = vadd.f32 %v392, %v393
  %v395 = vsel %vm84, %v311, 0.0
  %v396 = vadd.f32 %v394, %v395
  %v397 = vsel %vm84, %v312, 0.0
  %v398 = vadd.f32 %v396, %v397
  %v399 = vsel %vm84, %v313, 0.0
  %v400 = vadd.f32 %v398, %v399
  %v401 = vsel %vm84, %v314, 0.0
  %v402 = vadd.f32 %v400, %v401
  %v403 = vsel %vm84, %v315, 0.0
  %v404 = vadd.f32 %v402, %v403
  %v405 = vsel %vm84, %v316, 0.0
  %v406 = vadd.f32 %v404, %v405
  %v407 = vsel %vm84, %v317, 0.0
  %v408 = vadd.f32 %v406, %v407
  %v409 = vsel %vm84, %v318, 0.0
  %v410 = vadd.f32 %v408, %v409
  %v411 = vsel %vm84, %v319, 0.0
  %v412 = vadd.f32 %v410, %v411
  %v413 = vsel %vm84, %v320, 0.0
  %v414 = vadd.f32 %v412, %v413
  %v415 = vsel %vm84, %v321, 0.0
  %v416 = vadd.f32 %v414, %v415
  %v417 = vsel %vm84, %v322, 0.0
  %v418 = vadd.f32 %v416, %v417
  %v419 = vsel %vm84, %v323, 0.0
  %v420 = vadd.f32 %v418, %v419
  %v421 = vsel %vm84, %v324, 0.0
  %v422 = vadd.f32 %v420, %v421
  %v423 = vsel %vm84, %v325, 0.0
  %v424 = vadd.f32 %v422, %v423
  %v425 = vsel %vm84, %v326, 0.0
  %v426 = vadd.f32 %v424, %v425
  %v427 = vsel %vm84, %v327, 0.0
  %v428 = vadd.f32 %v426, %v427
  %v429 = vsel %vm84, %v328, 0.0
  %v430 = vadd.f32 %v428, %v429
  %v431 = vsel %vm84, %v329, 0.0
  %v432 = vadd.f32 %v430, %v431
  %v433 = vsel %vm84, %v330, 0.0
  %v434 = vadd.f32 %v432, %v433
  %v435 = vsel %vm84, %v331, 0.0
  %v436 = vadd.f32 %v434, %v435
  %v437 = vsel %vm84, %v332, 0.0
  %v438 = vadd.f32 %v436, %v437
  %v439 = vsel %vm84, %v333, 0.0
  %v440 = vadd.f32 %v438, %v439
  %v441 = vsel %vm84, %v334, 0.0
  %v442 = vadd.f32 %v440, %v441
  %v443 = vsel %vm84, %v335, 0.0
  %v444 = vadd.f32 %v442, %v443
  %v445 = vsel %vm84, %v336, 0.0
  %v446 = vadd.f32 %v444, %v445
  %v447 = vsel %vm84, %v337, 0.0
  %v448 = vadd.f32 %v446, %v447
  %v449 = vsel %vm84, %v338, 0.0
  %v450 = vadd.f32 %v448, %v449
  %v451 = vsel %vm84, %v339, 0.0
  %v452 = vadd.f32 %v450, %v451
  %v453 = vsel %vm84, %v340, 0.0
  %v454 = vadd.f32 %v452, %v453
  %v455 = vsel %vm84, %v341, 0.0
  %v456 = vadd.f32 %v454, %v455
  %v457 = vsel %vm84, %v342, 0.0
  %v458 = vadd.f32 %v456, %v457
  %v459 = vsel %vm84, %v343, 0.0
  %v460 = vadd.f32 %v458, %v459
  %v461 = vsel %vm84, %v344, 0.0
  %v462 = vadd.f32 %v460, %v461
  %v463 = vsel %vm84, %v345, 0.0
  %v464 = vadd.f32 %v462, %v463
  %v465 = vsel %vm84, %v346, 0.0
  %v466 = vadd.f32 %v464, %v465
  %v467 = vsel %vm84, %v347, 0.0
  %v468 = vadd.f32 %v466, %v467
  %v469 = vsel %vm84, %v348, 0.0
  %v470 = vadd.f32 %v468, %v469
  %v471 = vsel %vm84, %v349, 0.0
  %v472 = vadd.f32 %v470, %v471
  %v473 = vsel %vm84, %v350, 0.0
  %v474 = vadd.f32 %v472, %v473
  %v475 = vsel %vm84, %v351, 0.0
  %v476 = vadd.f32 %v474, %v475
  %v477 = vsel %vm84, %v352, 0.0
  %v478 = vadd.f32 %v476, %v477
  %v479 = vsel %vm84, %v353, 0.0
  %v480 = vadd.f32 %v478, %v479
  %v481 = vrot.slane %v480, 4
  %v482 = vadd.f32 %v480, %v481
  %v483 = vrot.slane %v482, 2
  %v484 = vadd.f32 %v482, %v483
  %v485 = vrot.slane %v484, 1
  %v486 = vadd.f32 %v484, %v485
  %v487 = vmul.f32 %v486, %v224
  %v488 = vld [vmem:[%s1] sm:$0x1]
  %v489 = vadd.f32 %v487, 1e-05
  %v490 = vrsqrt.pop %v489
  %v491 = vmul.f32 %v490, %v489
  %v492 = vmul.f32 %v491, %v490
  %v493 = vmul.f32 0.5, %v492
  %v494 = vsub.f32 1.5, %v493
  %v495 = vmul.f32 %v490, %v494
  %vm496 = vweird.f32 %v489
  %vm497 = vweird.f32 %v490
  %vm498 = vmor %vm496, %vm497
  %v499 = vsel %vm498, %v490, %v495
  %v500 = vmul.f32 %v488, %v499
  %v501 = vld [vmem:[%s2] sm:$0x1]
  %v502 = vmul.f32 %v225, %v500
  %v503 = vsub.f32 %v501, %v502
  %v504 = vperm.slane %v500, 0
  %v505 = vlaneseq
  %v506 = vshrl.u32 %v505, 7
  %508 = vset.pattern.permute.xlu0 %v506
  %509 = vperm.xlu0 %508, %v504
  %v510 = vpop.permute.xlu0 %509
  %v511 = vperm.slane %v503, 0
  %v512 = vlaneseq
  %v513 = vshrl.u32 %v512, 7
  %515 = vset.pattern.permute.xlu0 %v513
  %516 = vperm.xlu0 %515, %v511
  %v517 = vpop.permute.xlu0 %516
  %v518 = vld [vmem:[%s3] sm:$0xff]
  %v519 = vld [vmem:[%s3 + $0x8] sm:$0xff]
  %v520 = vld [vmem:[%s3 + $0x10] sm:$0xff]
  %v521 = vld [vmem:[%s3 + $0x18] sm:$0xff]
  %v522 = vld [vmem:[%s3 + $0x20] sm:$0xff]
  %v523 = vld [vmem:[%s3 + $0x28] sm:$0xff]
  %v524 = vld [vmem:[%s3 + $0x30] sm:$0xff]
  %v525 = vld [vmem:[%s3 + $0x38] sm:$0xff]
  %v526 = vld [vmem:[%s3 + $0x40] sm:$0xff]
  %v527 = vmul.f32 %v518, %v510
  %v528 = vmul.f32 %v519, %v510
  %v529 = vmul.f32 %v520, %v510
  %v530 = vmul.f32 %v521, %v510
  %v531 = vmul.f32 %v522, %v510
  %v532 = vmul.f32 %v523, %v510
  %v533 = vmul.f32 %v524, %v510
  %v534 = vmul.f32 %v525, %v510
  %v535 = vmul.f32 %v526, %v510
  %v536 = vld [vmem:[%s4] sm:$0x1]
  %v537 = vmul.f32 %v518, %v517
  %v538 = vmul.f32 %v519, %v517
  %v539 = vmul.f32 %v520, %v517
  %v540 = vmul.f32 %v521, %v517
  %v541 = vmul.f32 %v522, %v517
  %v542 = vmul.f32 %v523, %v517
  %v543 = vmul.f32 %v524, %v517
  %v544 = vmul.f32 %v525, %v517
  %v545 = vmul.f32 %v526, %v517
  %v546 = vadd.f32 %v537, %v538
  %v547 = vadd.f32 %v546, %v539
  %v548 = vadd.f32 %v547, %v540
  %v549 = vadd.f32 %v548, %v541
  %v550 = vadd.f32 %v549, %v542
  %v551 = vadd.f32 %v550, %v543
  %v552 = vadd.f32 %v551, %v544
  %v553 = vadd.f32 %v552, %v545
  %v554 = vrot.slane %v553, 4
  %v555 = vadd.f32 %v553, %v554
  %v556 = vrot.slane %v555, 2
  %v557 = vadd.f32 %v555, %v556
  %v558 = vrot.slane %v557, 1
  %v559 = vadd.f32 %v557, %v558
  %v560 = vadd.f32 %v536, %v559
  %v617 = vrot.slane %v20, 2
  %v618 = vrot.slane %v20, 4
  %v619 = vrot.slane %v20, 6
  %v620 = vrot.slane %v21, 2
  %v621 = vrot.slane %v21, 4
  %v622 = vrot.slane %v22, 2
  %v623 = vrot.slane %v22, 4
  %v624 = vrot.slane %v22, 6
  %v625 = vrot.slane %v23, 2
  %v626 = vrot.slane %v23, 4
  %v627 = vrot.slane %v24, 2
  %v628 = vrot.slane %v24, 4
  %v629 = vrot.slane %v24, 6
  %v630 = vrot.slane %v25, 2
  %v631 = vrot.slane %v25, 4
  %v632 = vrot.slane %v26, 2
  %v633 = vrot.slane %v26, 4
  %v634 = vrot.slane %v26, 6
  %v635 = vrot.slane %v27, 2
  %v636 = vrot.slane %v27, 4
  %v637 = vrot.slane %v28, 2
  %v638 = vrot.slane %v28, 4
  %v639 = vrot.slane %v28, 6
  %v640 = vrot.slane %v29, 2
  %v641 = vrot.slane %v29, 4
  %v642 = vrot.slane %v30, 2
  %v643 = vrot.slane %v30, 4
  %v644 = vrot.slane %v30, 6
  %v645 = vrot.slane %v31, 2
  %v646 = vrot.slane %v31, 4
  %v647 = vrot.slane %v32, 2
  %v648 = vrot.slane %v32, 4
  %v649 = vrot.slane %v32, 6
  %v650 = vrot.slane %v33, 2
  %v651 = vrot.slane %v33, 4
  %v652 = vrot.slane %v34, 2
  %v653 = vrot.slane %v34, 4
  %v654 = vrot.slane %v34, 6
  %v655 = vrot.slane %v35, 2
  %v656 = vrot.slane %v35, 4
  %v657 = vrot.slane %v36, 2
  %v658 = vrot.slane %v36, 4
  %v659 = vrot.slane %v36, 6
  %v660 = vrot.slane %v37, 2
  %v661 = vrot.slane %v37, 4
  %v662 = vrot.slane %v38, 2
  %v663 = vrot.slane %v38, 4
  %v664 = vrot.slane %v38, 6
  %v665 = vrot.slane %v39, 2
  %v666 = vrot.slane %v39, 4
  %v667 = vrot.slane %v40, 2
  %v668 = vrot.slane %v40, 4
  %v669 = vrot.slane %v40, 6
  %v670 = vrot.slane %v41, 2
  %v671 = vrot.slane %v41, 4
  %v672 = vrot.slane %v42, 2
  %v673 = vrot.slane %v42, 4
  %v674 = vrot.slane %v42, 6
  %v675 = vrot.slane %v43, 2
  %v676 = vrot.slane %v43, 4
  %v677 = vrot.slane %v44, 2
  %v678 = vrot.slane %v44, 4
  %v679 = vrot.slane %v44, 6
  %v680 = vrot.slane %v45, 2
  %v681 = vrot.slane %v45, 4
  %v682 = vrot.slane %v46, 2
  %v683 = vrot.slane %v46, 4
  %v684 = vrot.slane %v46, 6
  %v685 = vrot.slane %v47, 2
  %v686 = vrot.slane %v47, 4
  %v687 = vrot.slane %v52, 2
  %v688 = vrot.slane %v52, 4
  %v689 = vrot.slane %v52, 6
  %v690 = vrot.slane %v53, 2
  %v691 = vrot.slane %v53, 4
  %v692 = vrot.slane %v54, 2
  %v693 = vrot.slane %v54, 4
  %v694 = vrot.slane %v54, 6
  %v695 = vrot.slane %v55, 2
  %v696 = vrot.slane %v55, 4
  %v697 = vrot.slane %v56, 2
  %v698 = vrot.slane %v56, 4
  %v699 = vrot.slane %v56, 6
  %v700 = vrot.slane %v57, 2
  %v701 = vrot.slane %v57, 4
  %v702 = vrot.slane %v58, 2
  %v703 = vrot.slane %v58, 4
  %v704 = vrot.slane %v58, 6
  %v705 = vrot.slane %v59, 2
  %v706 = vrot.slane %v59, 4
  %v707 = vrot.slane %v60, 2
  %v708 = vrot.slane %v60, 4
  %v709 = vrot.slane %v60, 6
  %v710 = vrot.slane %v61, 2
  %v711 = vrot.slane %v61, 4
  %v712 = vrot.slane %v62, 2
  %v713 = vrot.slane %v62, 4
  %v714 = vrot.slane %v62, 6
  %v715 = vrot.slane %v63, 2
  %v716 = vrot.slane %v63, 4
  %v717 = vrot.slane %v64, 2
  %v718 = vrot.slane %v64, 4
  %v719 = vrot.slane %v64, 6
  %v720 = vrot.slane %v65, 2
  %v721 = vrot.slane %v65, 4
  %v722 = vrot.slane %v66, 2
  %v723 = vrot.slane %v66, 4
  %v724 = vrot.slane %v66, 6
  %v725 = vrot.slane %v67, 2
  %v726 = vrot.slane %v67, 4
  %v727 = vrot.slane %v68, 2
  %v728 = vrot.slane %v68, 4
  %v729 = vrot.slane %v68, 6
  %v730 = vrot.slane %v69, 2
  %v731 = vrot.slane %v69, 4
  %v732 = vrot.slane %v70, 2
  %v733 = vrot.slane %v70, 4
  %v734 = vrot.slane %v70, 6
  %v735 = vrot.slane %v71, 2
  %v736 = vrot.slane %v71, 4
  %v737 = vrot.slane %v72, 2
  %v738 = vrot.slane %v72, 4
  %v739 = vrot.slane %v72, 6
  %v740 = vrot.slane %v73, 2
  %v741 = vrot.slane %v73, 4
  %v742 = vrot.slane %v74, 2
  %v743 = vrot.slane %v74, 4
  %v744 = vrot.slane %v74, 6
  %v745 = vrot.slane %v75, 2
  %v746 = vrot.slane %v75, 4
  %v747 = vrot.slane %v76, 2
  %v748 = vrot.slane %v76, 4
  %v749 = vrot.slane %v76, 6
  %v750 = vrot.slane %v77, 2
  %v751 = vrot.slane %v77, 4
  %v752 = vrot.slane %v78, 2
  %v753 = vrot.slane %v78, 4
  %v754 = vrot.slane %v78, 6
  %v755 = vrot.slane %v79, 2
  %v756 = vrot.slane %v79, 4
  %v757 = vrot.slane %v21, 6
  %v758 = vrot.slane %v23, 6
  %v759 = vrot.slane %v25, 6
  %v760 = vrot.slane %v27, 6
  %v761 = vrot.slane %v29, 6
  %v762 = vrot.slane %v31, 6
  %v763 = vrot.slane %v33, 6
  %v764 = vrot.slane %v35, 6
  %v765 = vrot.slane %v37, 6
  %v766 = vrot.slane %v39, 6
  %v767 = vrot.slane %v41, 6
  %v768 = vrot.slane %v43, 6
  %v769 = vrot.slane %v45, 6
  %v770 = vrot.slane %v47, 6
  %v771 = vrot.slane %v53, 6
  %v772 = vrot.slane %v55, 6
  %v773 = vrot.slane %v57, 6
  %v774 = vrot.slane %v59, 6
  %v775 = vrot.slane %v61, 6
  %v776 = vrot.slane %v63, 6
  %v777 = vrot.slane %v65, 6
  %v778 = vrot.slane %v67, 6
  %v779 = vrot.slane %v69, 6
  %v780 = vrot.slane %v71, 6
  %v781 = vrot.slane %v73, 6
  %v782 = vrot.slane %v75, 6
  %v783 = vrot.slane %v77, 6
  %v784 = vrot.slane %v79, 6
  %vm785 = vcmask 1040384
  %vm786 = vcmask 1042434
  %vm787 = vmor %vm785, %vm786
  %vm788 = vcmask 1044484
  %vm789 = vmor %vm787, %vm788
  %vm790 = vcmask 1046534
  %vm791 = vmor %vm789, %vm790
  %v792 = vrot.slane %v20, 7
  %v793 = vrot.slane %v792, 2
  %v794 = vrot.slane %v617, 7
  %v795 = vsel %vm791, %v793, %v794
  %v796 = vrot.slane %v794, 2
  %v797 = vrot.slane %v618, 7
  %v798 = vsel %vm791, %v796, %v797
  %v799 = vrot.slane %v797, 2
  %v800 = vrot.slane %v619, 7
  %v801 = vsel %vm791, %v799, %v800
  %v802 = vrot.slane %v800, 2
  %v803 = vrot.slane %v21, 7
  %v804 = vsel %vm791, %v802, %v803
  %v805 = vrot.slane %v803, 2
  %v806 = vrot.slane %v620, 7
  %v807 = vsel %vm791, %v805, %v806
  %v808 = vrot.slane %v806, 2
  %v809 = vrot.slane %v621, 7
  %v810 = vsel %vm791, %v808, %v809
  %v811 = vrot.slane %v809, 2
  %v812 = vrot.slane %v757, 7
  %v813 = vsel %vm791, %v811, %v812
  %v814 = vrot.slane %v22, 7
  %v815 = vrot.slane %v814, 2
  %v816 = vrot.slane %v622, 7
  %v817 = vsel %vm791, %v815, %v816
  %v818 = vrot.slane %v816, 2
  %v819 = vrot.slane %v623, 7
  %v820 = vsel %vm791, %v818, %v819
  %v821 = vrot.slane %v819, 2
  %v822 = vrot.slane %v624, 7
  %v823 = vsel %vm791, %v821, %v822
  %v824 = vrot.slane %v822, 2
  %v825 = vrot.slane %v23, 7
  %v826 = vsel %vm791, %v824, %v825
  %v827 = vrot.slane %v825, 2
  %v828 = vrot.slane %v625, 7
  %v829 = vsel %vm791, %v827, %v828
  %v830 = vrot.slane %v828, 2
  %v831 = vrot.slane %v626, 7
  %v832 = vsel %vm791, %v830, %v831
  %v833 = vrot.slane %v831, 2
  %v834 = vrot.slane %v758, 7
  %v835 = vsel %vm791, %v833, %v834
  %v836 = vrot.slane %v24, 7
  %v837 = vrot.slane %v836, 2
  %v838 = vrot.slane %v627, 7
  %v839 = vsel %vm791, %v837, %v838
  %v840 = vrot.slane %v838, 2
  %v841 = vrot.slane %v628, 7
  %v842 = vsel %vm791, %v840, %v841
  %v843 = vrot.slane %v841, 2
  %v844 = vrot.slane %v629, 7
  %v845 = vsel %vm791, %v843, %v844
  %v846 = vrot.slane %v844, 2
  %v847 = vrot.slane %v25, 7
  %v848 = vsel %vm791, %v846, %v847
  %v849 = vrot.slane %v847, 2
  %v850 = vrot.slane %v630, 7
  %v851 = vsel %vm791, %v849, %v850
  %v852 = vrot.slane %v850, 2
  %v853 = vrot.slane %v631, 7
  %v854 = vsel %vm791, %v852, %v853
  %v855 = vrot.slane %v853, 2
  %v856 = vrot.slane %v759, 7
  %v857 = vsel %vm791, %v855, %v856
  %v858 = vrot.slane %v26, 7
  %v859 = vrot.slane %v858, 2
  %v860 = vrot.slane %v632, 7
  %v861 = vsel %vm791, %v859, %v860
  %v862 = vrot.slane %v860, 2
  %v863 = vrot.slane %v633, 7
  %v864 = vsel %vm791, %v862, %v863
  %v865 = vrot.slane %v863, 2
  %v866 = vrot.slane %v634, 7
  %v867 = vsel %vm791, %v865, %v866
  %v868 = vrot.slane %v866, 2
  %v869 = vrot.slane %v27, 7
  %v870 = vsel %vm791, %v868, %v869
  %v871 = vrot.slane %v869, 2
  %v872 = vrot.slane %v635, 7
  %v873 = vsel %vm791, %v871, %v872
  %v874 = vrot.slane %v872, 2
  %v875 = vrot.slane %v636, 7
  %v876 = vsel %vm791, %v874, %v875
  %v877 = vrot.slane %v875, 2
  %v878 = vrot.slane %v760, 7
  %v879 = vsel %vm791, %v877, %v878
  %v880 = vrot.slane %v28, 7
  %v881 = vrot.slane %v880, 2
  %v882 = vrot.slane %v637, 7
  %v883 = vsel %vm791, %v881, %v882
  %v884 = vrot.slane %v882, 2
  %v885 = vrot.slane %v638, 7
  %v886 = vsel %vm791, %v884, %v885
  %v887 = vrot.slane %v885, 2
  %v888 = vrot.slane %v639, 7
  %v889 = vsel %vm791, %v887, %v888
  %v890 = vrot.slane %v888, 2
  %v891 = vrot.slane %v29, 7
  %v892 = vsel %vm791, %v890, %v891
  %v893 = vrot.slane %v891, 2
  %v894 = vrot.slane %v640, 7
  %v895 = vsel %vm791, %v893, %v894
  %v896 = vrot.slane %v894, 2
  %v897 = vrot.slane %v641, 7
  %v898 = vsel %vm791, %v896, %v897
  %v899 = vrot.slane %v897, 2
  %v900 = vrot.slane %v761, 7
  %v901 = vsel %vm791, %v899, %v900
  %v902 = vrot.slane %v30, 7
  %v903 = vrot.slane %v902, 2
  %v904 = vrot.slane %v642, 7
  %v905 = vsel %vm791, %v903, %v904
  %v906 = vrot.slane %v904, 2
  %v907 = vrot.slane %v643, 7
  %v908 = vsel %vm791, %v906, %v907
  %v909 = vrot.slane %v907, 2
  %v910 = vrot.slane %v644, 7
  %v911 = vsel %vm791, %v909, %v910
  %v912 = vrot.slane %v910, 2
  %v913 = vrot.slane %v31, 7
  %v914 = vsel %vm791, %v912, %v913
  %v915 = vrot.slane %v913, 2
  %v916 = vrot.slane %v645, 7
  %v917 = vsel %vm791, %v915, %v916
  %v918 = vrot.slane %v916, 2
  %v919 = vrot.slane %v646, 7
  %v920 = vsel %vm791, %v918, %v919
  %v921 = vrot.slane %v919, 2
  %v922 = vrot.slane %v762, 7
  %v923 = vsel %vm791, %v921, %v922
  %v924 = vrot.slane %v32, 7
  %v925 = vrot.slane %v924, 2
  %v926 = vrot.slane %v647, 7
  %v927 = vsel %vm791, %v925, %v926
  %v928 = vrot.slane %v926, 2
  %v929 = vrot.slane %v648, 7
  %v930 = vsel %vm791, %v928, %v929
  %v931 = vrot.slane %v929, 2
  %v932 = vrot.slane %v649, 7
  %v933 = vsel %vm791, %v931, %v932
  %v934 = vrot.slane %v932, 2
  %v935 = vrot.slane %v33, 7
  %v936 = vsel %vm791, %v934, %v935
  %v937 = vrot.slane %v935, 2
  %v938 = vrot.slane %v650, 7
  %v939 = vsel %vm791, %v937, %v938
  %v940 = vrot.slane %v938, 2
  %v941 = vrot.slane %v651, 7
  %v942 = vsel %vm791, %v940, %v941
  %v943 = vrot.slane %v941, 2
  %v944 = vrot.slane %v763, 7
  %v945 = vsel %vm791, %v943, %v944
  %v946 = vrot.slane %v34, 7
  %v947 = vrot.slane %v946, 2
  %v948 = vrot.slane %v652, 7
  %v949 = vsel %vm791, %v947, %v948
  %v950 = vrot.slane %v948, 2
  %v951 = vrot.slane %v653, 7
  %v952 = vsel %vm791, %v950, %v951
  %v953 = vrot.slane %v951, 2
  %v954 = vrot.slane %v654, 7
  %v955 = vsel %vm791, %v953, %v954
  %v956 = vrot.slane %v954, 2
  %v957 = vrot.slane %v35, 7
  %v958 = vsel %vm791, %v956, %v957
  %v959 = vrot.slane %v957, 2
  %v960 = vrot.slane %v655, 7
  %v961 = vsel %vm791, %v959, %v960
  %v962 = vrot.slane %v960, 2
  %v963 = vrot.slane %v656, 7
  %v964 = vsel %vm791, %v962, %v963
  %v965 = vrot.slane %v963, 2
  %v966 = vrot.slane %v764, 7
  %v967 = vsel %vm791, %v965, %v966
  %v968 = vrot.slane %v36, 7
  %v969 = vrot.slane %v968, 2
  %v970 = vrot.slane %v657, 7
  %v971 = vsel %vm791, %v969, %v970
  %v972 = vrot.slane %v970, 2
  %v973 = vrot.slane %v658, 7
  %v974 = vsel %vm791, %v972, %v973
  %v975 = vrot.slane %v973, 2
  %v976 = vrot.slane %v659, 7
  %v977 = vsel %vm791, %v975, %v976
  %v978 = vrot.slane %v976, 2
  %v979 = vrot.slane %v37, 7
  %v980 = vsel %vm791, %v978, %v979
  %v981 = vrot.slane %v979, 2
  %v982 = vrot.slane %v660, 7
  %v983 = vsel %vm791, %v981, %v982
  %v984 = vrot.slane %v982, 2
  %v985 = vrot.slane %v661, 7
  %v986 = vsel %vm791, %v984, %v985
  %v987 = vrot.slane %v985, 2
  %v988 = vrot.slane %v765, 7
  %v989 = vsel %vm791, %v987, %v988
  %v990 = vrot.slane %v38, 7
  %v991 = vrot.slane %v990, 2
  %v992 = vrot.slane %v662, 7
  %v993 = vsel %vm791, %v991, %v992
  %v994 = vrot.slane %v992, 2
  %v995 = vrot.slane %v663, 7
  %v996 = vsel %vm791, %v994, %v995
  %v997 = vrot.slane %v995, 2
  %v998 = vrot.slane %v664, 7
  %v999 = vsel %vm791, %v997, %v998
  %v1000 = vrot.slane %v998, 2
  %v1001 = vrot.slane %v39, 7
  %v1002 = vsel %vm791, %v1000, %v1001
  %v1003 = vrot.slane %v1001, 2
  %v1004 = vrot.slane %v665, 7
  %v1005 = vsel %vm791, %v1003, %v1004
  %v1006 = vrot.slane %v1004, 2
  %v1007 = vrot.slane %v666, 7
  %v1008 = vsel %vm791, %v1006, %v1007
  %v1009 = vrot.slane %v1007, 2
  %v1010 = vrot.slane %v766, 7
  %v1011 = vsel %vm791, %v1009, %v1010
  %v1012 = vrot.slane %v40, 7
  %v1013 = vrot.slane %v1012, 2
  %v1014 = vrot.slane %v667, 7
  %v1015 = vsel %vm791, %v1013, %v1014
  %v1016 = vrot.slane %v1014, 2
  %v1017 = vrot.slane %v668, 7
  %v1018 = vsel %vm791, %v1016, %v1017
  %v1019 = vrot.slane %v1017, 2
  %v1020 = vrot.slane %v669, 7
  %v1021 = vsel %vm791, %v1019, %v1020
  %v1022 = vrot.slane %v1020, 2
  %v1023 = vrot.slane %v41, 7
  %v1024 = vsel %vm791, %v1022, %v1023
  %v1025 = vrot.slane %v1023, 2
  %v1026 = vrot.slane %v670, 7
  %v1027 = vsel %vm791, %v1025, %v1026
  %v1028 = vrot.slane %v1026, 2
  %v1029 = vrot.slane %v671, 7
  %v1030 = vsel %vm791, %v1028, %v1029
  %v1031 = vrot.slane %v1029, 2
  %v1032 = vrot.slane %v767, 7
  %v1033 = vsel %vm791, %v1031, %v1032
  %v1034 = vrot.slane %v42, 7
  %v1035 = vrot.slane %v1034, 2
  %v1036 = vrot.slane %v672, 7
  %v1037 = vsel %vm791, %v1035, %v1036
  %v1038 = vrot.slane %v1036, 2
  %v1039 = vrot.slane %v673, 7
  %v1040 = vsel %vm791, %v1038, %v1039
  %v1041 = vrot.slane %v1039, 2
  %v1042 = vrot.slane %v674, 7
  %v1043 = vsel %vm791, %v1041, %v1042
  %v1044 = vrot.slane %v1042, 2
  %v1045 = vrot.slane %v43, 7
  %v1046 = vsel %vm791, %v1044, %v1045
  %v1047 = vrot.slane %v1045, 2
  %v1048 = vrot.slane %v675, 7
  %v1049 = vsel %vm791, %v1047, %v1048
  %v1050 = vrot.slane %v1048, 2
  %v1051 = vrot.slane %v676, 7
  %v1052 = vsel %vm791, %v1050, %v1051
  %v1053 = vrot.slane %v1051, 2
  %v1054 = vrot.slane %v768, 7
  %v1055 = vsel %vm791, %v1053, %v1054
  %v1056 = vrot.slane %v44, 7
  %v1057 = vrot.slane %v1056, 2
  %v1058 = vrot.slane %v677, 7
  %v1059 = vsel %vm791, %v1057, %v1058
  %v1060 = vrot.slane %v1058, 2
  %v1061 = vrot.slane %v678, 7
  %v1062 = vsel %vm791, %v1060, %v1061
  %v1063 = vrot.slane %v1061, 2
  %v1064 = vrot.slane %v679, 7
  %v1065 = vsel %vm791, %v1063, %v1064
  %v1066 = vrot.slane %v1064, 2
  %v1067 = vrot.slane %v45, 7
  %v1068 = vsel %vm791, %v1066, %v1067
  %v1069 = vrot.slane %v1067, 2
  %v1070 = vrot.slane %v680, 7
  %v1071 = vsel %vm791, %v1069, %v1070
  %v1072 = vrot.slane %v1070, 2
  %v1073 = vrot.slane %v681, 7
  %v1074 = vsel %vm791, %v1072, %v1073
  %v1075 = vrot.slane %v1073, 2
  %v1076 = vrot.slane %v769, 7
  %v1077 = vsel %vm791, %v1075, %v1076
  %v1078 = vrot.slane %v46, 7
  %v1079 = vrot.slane %v1078, 2
  %v1080 = vrot.slane %v682, 7
  %v1081 = vsel %vm791, %v1079, %v1080
  %v1082 = vrot.slane %v1080, 2
  %v1083 = vrot.slane %v683, 7
  %v1084 = vsel %vm791, %v1082, %v1083
  %v1085 = vrot.slane %v1083, 2
  %v1086 = vrot.slane %v684, 7
  %v1087 = vsel %vm791, %v1085, %v1086
  %v1088 = vrot.slane %v1086, 2
  %v1089 = vrot.slane %v47, 7
  %v1090 = vsel %vm791, %v1088, %v1089
  %v1091 = vrot.slane %v1089, 2
  %v1092 = vrot.slane %v685, 7
  %v1093 = vsel %vm791, %v1091, %v1092
  %v1094 = vrot.slane %v1092, 2
  %v1095 = vrot.slane %v686, 7
  %v1096 = vsel %vm791, %v1094, %v1095
  %v1097 = vrot.slane %v1095, 2
  %v1098 = vrot.slane %v770, 7
  %v1099 = vsel %vm791, %v1097, %v1098
  %v1100 = vrot.slane %v52, 7
  %v1101 = vrot.slane %v1100, 2
  %v1102 = vrot.slane %v687, 7
  %v1103 = vsel %vm791, %v1101, %v1102
  %v1104 = vrot.slane %v1102, 2
  %v1105 = vrot.slane %v688, 7
  %v1106 = vsel %vm791, %v1104, %v1105
  %v1107 = vrot.slane %v1105, 2
  %v1108 = vrot.slane %v689, 7
  %v1109 = vsel %vm791, %v1107, %v1108
  %v1110 = vrot.slane %v1108, 2
  %v1111 = vrot.slane %v53, 7
  %v1112 = vsel %vm791, %v1110, %v1111
  %v1113 = vrot.slane %v1111, 2
  %v1114 = vrot.slane %v690, 7
  %v1115 = vsel %vm791, %v1113, %v1114
  %v1116 = vrot.slane %v1114, 2
  %v1117 = vrot.slane %v691, 7
  %v1118 = vsel %vm791, %v1116, %v1117
  %v1119 = vrot.slane %v1117, 2
  %v1120 = vrot.slane %v771, 7
  %v1121 = vsel %vm791, %v1119, %v1120
  %v1122 = vrot.slane %v54, 7
  %v1123 = vrot.slane %v1122, 2
  %v1124 = vrot.slane %v692, 7
  %v1125 = vsel %vm791, %v1123, %v1124
  %v1126 = vrot.slane %v1124, 2
  %v1127 = vrot.slane %v693, 7
  %v1128 = vsel %vm791, %v1126, %v1127
  %v1129 = vrot.slane %v1127, 2
  %v1130 = vrot.slane %v694, 7
  %v1131 = vsel %vm791, %v1129, %v1130
  %v1132 = vrot.slane %v1130, 2
  %v1133 = vrot.slane %v55, 7
  %v1134 = vsel %vm791, %v1132, %v1133
  %v1135 = vrot.slane %v1133, 2
  %v1136 = vrot.slane %v695, 7
  %v1137 = vsel %vm791, %v1135, %v1136
  %v1138 = vrot.slane %v1136, 2
  %v1139 = vrot.slane %v696, 7
  %v1140 = vsel %vm791, %v1138, %v1139
  %v1141 = vrot.slane %v1139, 2
  %v1142 = vrot.slane %v772, 7
  %v1143 = vsel %vm791, %v1141, %v1142
  %v1144 = vrot.slane %v56, 7
  %v1145 = vrot.slane %v1144, 2
  %v1146 = vrot.slane %v697, 7
  %v1147 = vsel %vm791, %v1145, %v1146
  %v1148 = vrot.slane %v1146, 2
  %v1149 = vrot.slane %v698, 7
  %v1150 = vsel %vm791, %v1148, %v1149
  %v1151 = vrot.slane %v1149, 2
  %v1152 = vrot.slane %v699, 7
  %v1153 = vsel %vm791, %v1151, %v1152
  %v1154 = vrot.slane %v1152, 2
  %v1155 = vrot.slane %v57, 7
  %v1156 = vsel %vm791, %v1154, %v1155
  %v1157 = vrot.slane %v1155, 2
  %v1158 = vrot.slane %v700, 7
  %v1159 = vsel %vm791, %v1157, %v1158
  %v1160 = vrot.slane %v1158, 2
  %v1161 = vrot.slane %v701, 7
  %v1162 = vsel %vm791, %v1160, %v1161
  %v1163 = vrot.slane %v1161, 2
  %v1164 = vrot.slane %v773, 7
  %v1165 = vsel %vm791, %v1163, %v1164
  %v1166 = vrot.slane %v58, 7
  %v1167 = vrot.slane %v1166, 2
  %v1168 = vrot.slane %v702, 7
  %v1169 = vsel %vm791, %v1167, %v1168
  %v1170 = vrot.slane %v1168, 2
  %v1171 = vrot.slane %v703, 7
  %v1172 = vsel %vm791, %v1170, %v1171
  %v1173 = vrot.slane %v1171, 2
  %v1174 = vrot.slane %v704, 7
  %v1175 = vsel %vm791, %v1173, %v1174
  %v1176 = vrot.slane %v1174, 2
  %v1177 = vrot.slane %v59, 7
  %v1178 = vsel %vm791, %v1176, %v1177
  %v1179 = vrot.slane %v1177, 2
  %v1180 = vrot.slane %v705, 7
  %v1181 = vsel %vm791, %v1179, %v1180
  %v1182 = vrot.slane %v1180, 2
  %v1183 = vrot.slane %v706, 7
  %v1184 = vsel %vm791, %v1182, %v1183
  %v1185 = vrot.slane %v1183, 2
  %v1186 = vrot.slane %v774, 7
  %v1187 = vsel %vm791, %v1185, %v1186
  %v1188 = vrot.slane %v60, 7
  %v1189 = vrot.slane %v1188, 2
  %v1190 = vrot.slane %v707, 7
  %v1191 = vsel %vm791, %v1189, %v1190
  %v1192 = vrot.slane %v1190, 2
  %v1193 = vrot.slane %v708, 7
  %v1194 = vsel %vm791, %v1192, %v1193
  %v1195 = vrot.slane %v1193, 2
  %v1196 = vrot.slane %v709, 7
  %v1197 = vsel %vm791, %v1195, %v1196
  %v1198 = vrot.slane %v1196, 2
  %v1199 = vrot.slane %v61, 7
  %v1200 = vsel %vm791, %v1198, %v1199
  %v1201 = vrot.slane %v1199, 2
  %v1202 = vrot.slane %v710, 7
  %v1203 = vsel %vm791, %v1201, %v1202
  %v1204 = vrot.slane %v1202, 2
  %v1205 = vrot.slane %v711, 7
  %v1206 = vsel %vm791, %v1204, %v1205
  %v1207 = vrot.slane %v1205, 2
  %v1208 = vrot.slane %v775, 7
  %v1209 = vsel %vm791, %v1207, %v1208
  %v1210 = vrot.slane %v62, 7
  %v1211 = vrot.slane %v1210, 2
  %v1212 = vrot.slane %v712, 7
  %v1213 = vsel %vm791, %v1211, %v1212
  %v1214 = vrot.slane %v1212, 2
  %v1215 = vrot.slane %v713, 7
  %v1216 = vsel %vm791, %v1214, %v1215
  %v1217 = vrot.slane %v1215, 2
  %v1218 = vrot.slane %v714, 7
  %v1219 = vsel %vm791, %v1217, %v1218
  %v1220 = vrot.slane %v1218, 2
  %v1221 = vrot.slane %v63, 7
  %v1222 = vsel %vm791, %v1220, %v1221
  %v1223 = vrot.slane %v1221, 2
  %v1224 = vrot.slane %v715, 7
  %v1225 = vsel %vm791, %v1223, %v1224
  %v1226 = vrot.slane %v1224, 2
  %v1227 = vrot.slane %v716, 7
  %v1228 = vsel %vm791, %v1226, %v1227
  %v1229 = vrot.slane %v1227, 2
  %v1230 = vrot.slane %v776, 7
  %v1231 = vsel %vm791, %v1229, %v1230
  %v1232 = vrot.slane %v64, 7
  %v1233 = vrot.slane %v1232, 2
  %v1234 = vrot.slane %v717, 7
  %v1235 = vsel %vm791, %v1233, %v1234
  %v1236 = vrot.slane %v1234, 2
  %v1237 = vrot.slane %v718, 7
  %v1238 = vsel %vm791, %v1236, %v1237
  %v1239 = vrot.slane %v1237, 2
  %v1240 = vrot.slane %v719, 7
  %v1241 = vsel %vm791, %v1239, %v1240
  %v1242 = vrot.slane %v1240, 2
  %v1243 = vrot.slane %v65, 7
  %v1244 = vsel %vm791, %v1242, %v1243
  %v1245 = vrot.slane %v1243, 2
  %v1246 = vrot.slane %v720, 7
  %v1247 = vsel %vm791, %v1245, %v1246
  %v1248 = vrot.slane %v1246, 2
  %v1249 = vrot.slane %v721, 7
  %v1250 = vsel %vm791, %v1248, %v1249
  %v1251 = vrot.slane %v1249, 2
  %v1252 = vrot.slane %v777, 7
  %v1253 = vsel %vm791, %v1251, %v1252
  %v1254 = vrot.slane %v66, 7
  %v1255 = vrot.slane %v1254, 2
  %v1256 = vrot.slane %v722, 7
  %v1257 = vsel %vm791, %v1255, %v1256
  %v1258 = vrot.slane %v1256, 2
  %v1259 = vrot.slane %v723, 7
  %v1260 = vsel %vm791, %v1258, %v1259
  %v1261 = vrot.slane %v1259, 2
  %v1262 = vrot.slane %v724, 7
  %v1263 = vsel %vm791, %v1261, %v1262
  %v1264 = vrot.slane %v1262, 2
  %v1265 = vrot.slane %v67, 7
  %v1266 = vsel %vm791, %v1264, %v1265
  %v1267 = vrot.slane %v1265, 2
  %v1268 = vrot.slane %v725, 7
  %v1269 = vsel %vm791, %v1267, %v1268
  %v1270 = vrot.slane %v1268, 2
  %v1271 = vrot.slane %v726, 7
  %v1272 = vsel %vm791, %v1270, %v1271
  %v1273 = vrot.slane %v1271, 2
  %v1274 = vrot.slane %v778, 7
  %v1275 = vsel %vm791, %v1273, %v1274
  %v1276 = vrot.slane %v68, 7
  %v1277 = vrot.slane %v1276, 2
  %v1278 = vrot.slane %v727, 7
  %v1279 = vsel %vm791, %v1277, %v1278
  %v1280 = vrot.slane %v1278, 2
  %v1281 = vrot.slane %v728, 7
  %v1282 = vsel %vm791, %v1280, %v1281
  %v1283 = vrot.slane %v1281, 2
  %v1284 = vrot.slane %v729, 7
  %v1285 = vsel %vm791, %v1283, %v1284
  %v1286 = vrot.slane %v1284, 2
  %v1287 = vrot.slane %v69, 7
  %v1288 = vsel %vm791, %v1286, %v1287
  %v1289 = vrot.slane %v1287, 2
  %v1290 = vrot.slane %v730, 7
  %v1291 = vsel %vm791, %v1289, %v1290
  %v1292 = vrot.slane %v1290, 2
  %v1293 = vrot.slane %v731, 7
  %v1294 = vsel %vm791, %v1292, %v1293
  %v1295 = vrot.slane %v1293, 2
  %v1296 = vrot.slane %v779, 7
  %v1297 = vsel %vm791, %v1295, %v1296
  %v1298 = vrot.slane %v70, 7
  %v1299 = vrot.slane %v1298, 2
  %v1300 = vrot.slane %v732, 7
  %v1301 = vsel %vm791, %v1299, %v1300
  %v1302 = vrot.slane %v1300, 2
  %v1303 = vrot.slane %v733, 7
  %v1304 = vsel %vm791, %v1302, %v1303
  %v1305 = vrot.slane %v1303, 2
  %v1306 = vrot.slane %v734, 7
  %v1307 = vsel %vm791, %v1305, %v1306
  %v1308 = vrot.slane %v1306, 2
  %v1309 = vrot.slane %v71, 7
  %v1310 = vsel %vm791, %v1308, %v1309
  %v1311 = vrot.slane %v1309, 2
  %v1312 = vrot.slane %v735, 7
  %v1313 = vsel %vm791, %v1311, %v1312
  %v1314 = vrot.slane %v1312, 2
  %v1315 = vrot.slane %v736, 7
  %v1316 = vsel %vm791, %v1314, %v1315
  %v1317 = vrot.slane %v1315, 2
  %v1318 = vrot.slane %v780, 7
  %v1319 = vsel %vm791, %v1317, %v1318
  %v1320 = vrot.slane %v72, 7
  %v1321 = vrot.slane %v1320, 2
  %v1322 = vrot.slane %v737, 7
  %v1323 = vsel %vm791, %v1321, %v1322
  %v1324 = vrot.slane %v1322, 2
  %v1325 = vrot.slane %v738, 7
  %v1326 = vsel %vm791, %v1324, %v1325
  %v1327 = vrot.slane %v1325, 2
  %v1328 = vrot.slane %v739, 7
  %v1329 = vsel %vm791, %v1327, %v1328
  %v1330 = vrot.slane %v1328, 2
  %v1331 = vrot.slane %v73, 7
  %v1332 = vsel %vm791, %v1330, %v1331
  %v1333 = vrot.slane %v1331, 2
  %v1334 = vrot.slane %v740, 7
  %v1335 = vsel %vm791, %v1333, %v1334
  %v1336 = vrot.slane %v1334, 2
  %v1337 = vrot.slane %v741, 7
  %v1338 = vsel %vm791, %v1336, %v1337
  %v1339 = vrot.slane %v1337, 2
  %v1340 = vrot.slane %v781, 7
  %v1341 = vsel %vm791, %v1339, %v1340
  %v1342 = vrot.slane %v74, 7
  %v1343 = vrot.slane %v1342, 2
  %v1344 = vrot.slane %v742, 7
  %v1345 = vsel %vm791, %v1343, %v1344
  %v1346 = vrot.slane %v1344, 2
  %v1347 = vrot.slane %v743, 7
  %v1348 = vsel %vm791, %v1346, %v1347
  %v1349 = vrot.slane %v1347, 2
  %v1350 = vrot.slane %v744, 7
  %v1351 = vsel %vm791, %v1349, %v1350
  %v1352 = vrot.slane %v1350, 2
  %v1353 = vrot.slane %v75, 7
  %v1354 = vsel %vm791, %v1352, %v1353
  %v1355 = vrot.slane %v1353, 2
  %v1356 = vrot.slane %v745, 7
  %v1357 = vsel %vm791, %v1355, %v1356
  %v1358 = vrot.slane %v1356, 2
  %v1359 = vrot.slane %v746, 7
  %v1360 = vsel %vm791, %v1358, %v1359
  %v1361 = vrot.slane %v1359, 2
  %v1362 = vrot.slane %v782, 7
  %v1363 = vsel %vm791, %v1361, %v1362
  %v1364 = vrot.slane %v76, 7
  %v1365 = vrot.slane %v1364, 2
  %v1366 = vrot.slane %v747, 7
  %v1367 = vsel %vm791, %v1365, %v1366
  %v1368 = vrot.slane %v1366, 2
  %v1369 = vrot.slane %v748, 7
  %v1370 = vsel %vm791, %v1368, %v1369
  %v1371 = vrot.slane %v1369, 2
  %v1372 = vrot.slane %v749, 7
  %v1373 = vsel %vm791, %v1371, %v1372
  %v1374 = vrot.slane %v1372, 2
  %v1375 = vrot.slane %v77, 7
  %v1376 = vsel %vm791, %v1374, %v1375
  %v1377 = vrot.slane %v1375, 2
  %v1378 = vrot.slane %v750, 7
  %v1379 = vsel %vm791, %v1377, %v1378
  %v1380 = vrot.slane %v1378, 2
  %v1381 = vrot.slane %v751, 7
  %v1382 = vsel %vm791, %v1380, %v1381
  %v1383 = vrot.slane %v1381, 2
  %v1384 = vrot.slane %v783, 7
  %v1385 = vsel %vm791, %v1383, %v1384
  %v1386 = vrot.slane %v78, 7
  %v1387 = vrot.slane %v1386, 2
  %v1388 = vrot.slane %v752, 7
  %v1389 = vsel %vm791, %v1387, %v1388
  %v1390 = vrot.slane %v1388, 2
  %v1391 = vrot.slane %v753, 7
  %v1392 = vsel %vm791, %v1390, %v1391
  %v1393 = vrot.slane %v1391, 2
  %v1394 = vrot.slane %v754, 7
  %v1395 = vsel %vm791, %v1393, %v1394
  %v1396 = vrot.slane %v1394, 2
  %v1397 = vrot.slane %v79, 7
  %v1398 = vsel %vm791, %v1396, %v1397
  %v1399 = vrot.slane %v1397, 2
  %v1400 = vrot.slane %v755, 7
  %v1401 = vsel %vm791, %v1399, %v1400
  %v1402 = vrot.slane %v1400, 2
  %v1403 = vrot.slane %v756, 7
  %v1404 = vsel %vm791, %v1402, %v1403
  %v1405 = vrot.slane %v1403, 2
  %v1406 = vrot.slane %v784, 7
  %v1407 = vsel %vm791, %v1405, %v1406
  %1408 = vst.sshfl [vmem:[#allocation1] sm:$0xff pattern:$0x73625140] %v20
  %1409 = vst.sshfl [vmem:[#allocation1 + $0x20] sm:$0xff pattern:$0x73625140] %v21
  %s1410 = scalar_lea.vmem [#allocation1], 1
  %v1411 = vld [vmem:[%s1410] ss:$4 sm:$0xff]
  %s1412 = scalar_lea.vmem [#allocation1], 2
  %v1413 = vld [vmem:[%s1412] ss:$4 sm:$0xff]
  %s1414 = scalar_lea.vmem [#allocation1], 3
  %v1415 = vld [vmem:[%s1414] ss:$4 sm:$0xff]
  %s1416 = scalar_lea.vmem [#allocation1], 32
  %v1417 = vld [vmem:[%s1416] ss:$4 sm:$0xff]
  %s1418 = scalar_lea.vmem [#allocation1], 33
  %v1419 = vld [vmem:[%s1418] ss:$4 sm:$0xff]
  %s1420 = scalar_lea.vmem [#allocation1], 34
  %v1421 = vld [vmem:[%s1420] ss:$4 sm:$0xff]
  %s1422 = scalar_lea.vmem [#allocation1], 35
  %v1423 = vld [vmem:[%s1422] ss:$4 sm:$0xff]
  %1424 = vst.sshfl [vmem:[#allocation1] sm:$0xff pattern:$0x73625140] %v22
  %1425 = vst.sshfl [vmem:[#allocation1 + $0x20] sm:$0xff pattern:$0x73625140] %v23
  %v1426 = vld [vmem:[%s1410] ss:$4 sm:$0xff]
  %v1427 = vld [vmem:[%s1412] ss:$4 sm:$0xff]
  %v1428 = vld [vmem:[%s1414] ss:$4 sm:$0xff]
  %v1429 = vld [vmem:[%s1416] ss:$4 sm:$0xff]
  %v1430 = vld [vmem:[%s1418] ss:$4 sm:$0xff]
  %v1431 = vld [vmem:[%s1420] ss:$4 sm:$0xff]
  %v1432 = vld [vmem:[%s1422] ss:$4 sm:$0xff]
  %1433 = vst.sshfl [vmem:[#allocation1] sm:$0xff pattern:$0x73625140] %v24
  %1434 = vst.sshfl [vmem:[#allocation1 + $0x20] sm:$0xff pattern:$0x73625140] %v25
  %v1435 = vld [vmem:[%s1410] ss:$4 sm:$0xff]
  %v1436 = vld [vmem:[%s1412] ss:$4 sm:$0xff]
  %v1437 = vld [vmem:[%s1414] ss:$4 sm:$0xff]
  %v1438 = vld [vmem:[%s1416] ss:$4 sm:$0xff]
  %v1439 = vld [vmem:[%s1418] ss:$4 sm:$0xff]
  %v1440 = vld [vmem:[%s1420] ss:$4 sm:$0xff]
  %v1441 = vld [vmem:[%s1422] ss:$4 sm:$0xff]
  %1442 = vst.sshfl [vmem:[#allocation1] sm:$0xff pattern:$0x73625140] %v26
  %1443 = vst.sshfl [vmem:[#allocation1 + $0x20] sm:$0xff pattern:$0x73625140] %v27
  %v1444 = vld [vmem:[%s1410] ss:$4 sm:$0xff]
  %v1445 = vld [vmem:[%s1412] ss:$4 sm:$0xff]
  %v1446 = vld [vmem:[%s1414] ss:$4 sm:$0xff]
  %v1447 = vld [vmem:[%s1416] ss:$4 sm:$0xff]
  %v1448 = vld [vmem:[%s1418] ss:$4 sm:$0xff]
  %v1449 = vld [vmem:[%s1420] ss:$4 sm:$0xff]
  %v1450 = vld [vmem:[%s1422] ss:$4 sm:$0xff]
  %1451 = vst.sshfl [vmem:[#allocation1] sm:$0xff pattern:$0x73625140] %v28
  %1452 = vst.sshfl [vmem:[#allocation1 + $0x20] sm:$0xff pattern:$0x73625140] %v29
  %v1453 = vld [vmem:[%s1410] ss:$4 sm:$0xff]
  %v1454 = vld [vmem:[%s1412] ss:$4 sm:$0xff]
  %v1455 = vld [vmem:[%s1414] ss:$4 sm:$0xff]
  %v1456 = vld [vmem:[%s1416] ss:$4 sm:$0xff]
  %v1457 = vld [vmem:[%s1418] ss:$4 sm:$0xff]
  %v1458 = vld [vmem:[%s1420] ss:$4 sm:$0xff]
  %v1459 = vld [vmem:[%s1422] ss:$4 sm:$0xff]
  %1460 = vst.sshfl [vmem:[#allocation1] sm:$0xff pattern:$0x73625140] %v30
  %1461 = vst.sshfl [vmem:[#allocation1 + $0x20] sm:$0xff pattern:$0x73625140] %v31
  %v1462 = vld [vmem:[%s1410] ss:$4 sm:$0xff]
  %v1463 = vld [vmem:[%s1412] ss:$4 sm:$0xff]
  %v1464 = vld [vmem:[%s1414] ss:$4 sm:$0xff]
  %v1465 = vld [vmem:[%s1416] ss:$4 sm:$0xff]
  %v1466 = vld [vmem:[%s1418] ss:$4 sm:$0xff]
  %v1467 = vld [vmem:[%s1420] ss:$4 sm:$0xff]
  %v1468 = vld [vmem:[%s1422] ss:$4 sm:$0xff]
  %1469 = vst.sshfl [vmem:[#allocation1] sm:$0xff pattern:$0x73625140] %v32
  %1470 = vst.sshfl [vmem:[#allocation1 + $0x20] sm:$0xff pattern:$0x73625140] %v33
  %v1471 = vld [vmem:[%s1410] ss:$4 sm:$0xff]
  %v1472 = vld [vmem:[%s1412] ss:$4 sm:$0xff]
  %v1473 = vld [vmem:[%s1414] ss:$4 sm:$0xff]
  %v1474 = vld [vmem:[%s1416] ss:$4 sm:$0xff]
  %v1475 = vld [vmem:[%s1418] ss:$4 sm:$0xff]
  %v1476 = vld [vmem:[%s1420] ss:$4 sm:$0xff]
  %v1477 = vld [vmem:[%s1422] ss:$4 sm:$0xff]
  %1478 = vst.sshfl [vmem:[#allocation1] sm:$0xff pattern:$0x73625140] %v34
  %1479 = vst.sshfl [vmem:[#allocation1 + $0x20] sm:$0xff pattern:$0x73625140] %v35
  %v1480 = vld [vmem:[%s1410] ss:$4 sm:$0xff]
  %v1481 = vld [vmem:[%s1412] ss:$4 sm:$0xff]
  %v1482 = vld [vmem:[%s1414] ss:$4 sm:$0xff]
  %v1483 = vld [vmem:[%s1416] ss:$4 sm:$0xff]
  %v1484 = vld [vmem:[%s1418] ss:$4 sm:$0xff]
  %v1485 = vld [vmem:[%s1420] ss:$4 sm:$0xff]
  %v1486 = vld [vmem:[%s1422] ss:$4 sm:$0xff]
  %1487 = vst.sshfl [vmem:[#allocation1] sm:$0xff pattern:$0x73625140] %v36
  %1488 = vst.sshfl [vmem:[#allocation1 + $0x20] sm:$0xff pattern:$0x73625140] %v37
  %v1489 = vld [vmem:[%s1410] ss:$4 sm:$0xff]
  %v1490 = vld [vmem:[%s1412] ss:$4 sm:$0xff]
  %v1491 = vld [vmem:[%s1414] ss:$4 sm:$0xff]
  %v1492 = vld [vmem:[%s1416] ss:$4 sm:$0xff]
  %v1493 = vld [vmem:[%s1418] ss:$4 sm:$0xff]
  %v1494 = vld [vmem:[%s1420] ss:$4 sm:$0xff]
  %v1495 = vld [vmem:[%s1422] ss:$4 sm:$0xff]
  %1496 = vst.sshfl [vmem:[#allocation1] sm:$0xff pattern:$0x73625140] %v38
  %1497 = vst.sshfl [vmem:[#allocation1 + $0x20] sm:$0xff pattern:$0x73625140] %v39
  %v1498 = vld [vmem:[%s1410] ss:$4 sm:$0xff]
  %v1499 = vld [vmem:[%s1412] ss:$4 sm:$0xff]
  %v1500 = vld [vmem:[%s1414] ss:$4 sm:$0xff]
  %v1501 = vld [vmem:[%s1416] ss:$4 sm:$0xff]
  %v1502 = vld [vmem:[%s1418] ss:$4 sm:$0xff]
  %v1503 = vld [vmem:[%s1420] ss:$4 sm:$0xff]
  %v1504 = vld [vmem:[%s1422] ss:$4 sm:$0xff]
  %1505 = vst.sshfl [vmem:[#allocation1] sm:$0xff pattern:$0x73625140] %v40
  %1506 = vst.sshfl [vmem:[#allocation1 + $0x20] sm:$0xff pattern:$0x73625140] %v41
  %v1507 = vld [vmem:[%s1410] ss:$4 sm:$0xff]
  %v1508 = vld [vmem:[%s1412] ss:$4 sm:$0xff]
  %v1509 = vld [vmem:[%s1414] ss:$4 sm:$0xff]
  %v1510 = vld [vmem:[%s1416] ss:$4 sm:$0xff]
  %v1511 = vld [vmem:[%s1418] ss:$4 sm:$0xff]
  %v1512 = vld [vmem:[%s1420] ss:$4 sm:$0xff]
  %v1513 = vld [vmem:[%s1422] ss:$4 sm:$0xff]
  %1514 = vst.sshfl [vmem:[#allocation1] sm:$0xff pattern:$0x73625140] %v42
  %1515 = vst.sshfl [vmem:[#allocation1 + $0x20] sm:$0xff pattern:$0x73625140] %v43
  %v1516 = vld [vmem:[%s1410] ss:$4 sm:$0xff]
  %v1517 = vld [vmem:[%s1412] ss:$4 sm:$0xff]
  %v1518 = vld [vmem:[%s1414] ss:$4 sm:$0xff]
  %v1519 = vld [vmem:[%s1416] ss:$4 sm:$0xff]
  %v1520 = vld [vmem:[%s1418] ss:$4 sm:$0xff]
  %v1521 = vld [vmem:[%s1420] ss:$4 sm:$0xff]
  %v1522 = vld [vmem:[%s1422] ss:$4 sm:$0xff]
  %1523 = vst.sshfl [vmem:[#allocation1] sm:$0xff pattern:$0x73625140] %v44
  %1524 = vst.sshfl [vmem:[#allocation1 + $0x20] sm:$0xff pattern:$0x73625140] %v45
  %v1525 = vld [vmem:[%s1410] ss:$4 sm:$0xff]
  %v1526 = vld [vmem:[%s1412] ss:$4 sm:$0xff]
  %v1527 = vld [vmem:[%s1414] ss:$4 sm:$0xff]
  %v1528 = vld [vmem:[%s1416] ss:$4 sm:$0xff]
  %v1529 = vld [vmem:[%s1418] ss:$4 sm:$0xff]
  %v1530 = vld [vmem:[%s1420] ss:$4 sm:$0xff]
  %v1531 = vld [vmem:[%s1422] ss:$4 sm:$0xff]
  %1532 = vst.sshfl [vmem:[#allocation1] sm:$0xff pattern:$0x73625140] %v46
  %1533 = vst.sshfl [vmem:[#allocation1 + $0x20] sm:$0xff pattern:$0x73625140] %v47
  %v1534 = vld [vmem:[%s1410] ss:$4 sm:$0xff]
  %v1535 = vld [vmem:[%s1412] ss:$4 sm:$0xff]
  %v1536 = vld [vmem:[%s1414] ss:$4 sm:$0xff]
  %v1537 = vld [vmem:[%s1416] ss:$4 sm:$0xff]
  %v1538 = vld [vmem:[%s1418] ss:$4 sm:$0xff]
  %v1539 = vld [vmem:[%s1420] ss:$4 sm:$0xff]
  %v1540 = vld [vmem:[%s1422] ss:$4 sm:$0xff]
  %1541 = vst.sshfl [vmem:[#allocation1] sm:$0xff pattern:$0x73625140] %v52
  %1542 = vst.sshfl [vmem:[#allocation1 + $0x20] sm:$0xff pattern:$0x73625140] %v53
  %v1543 = vld [vmem:[%s1410] ss:$4 sm:$0xff]
  %v1544 = vld [vmem:[%s1412] ss:$4 sm:$0xff]
  %v1545 = vld [vmem:[%s1414] ss:$4 sm:$0xff]
  %v1546 = vld [vmem:[%s1416] ss:$4 sm:$0xff]
  %v1547 = vld [vmem:[%s1418] ss:$4 sm:$0xff]
  %v1548 = vld [vmem:[%s1420] ss:$4 sm:$0xff]
  %v1549 = vld [vmem:[%s1422] ss:$4 sm:$0xff]
  %1550 = vst.sshfl [vmem:[#allocation1] sm:$0xff pattern:$0x73625140] %v54
  %1551 = vst.sshfl [vmem:[#allocation1 + $0x20] sm:$0xff pattern:$0x73625140] %v55
  %v1552 = vld [vmem:[%s1410] ss:$4 sm:$0xff]
  %v1553 = vld [vmem:[%s1412] ss:$4 sm:$0xff]
  %v1554 = vld [vmem:[%s1414] ss:$4 sm:$0xff]
  %v1555 = vld [vmem:[%s1416] ss:$4 sm:$0xff]
  %v1556 = vld [vmem:[%s1418] ss:$4 sm:$0xff]
  %v1557 = vld [vmem:[%s1420] ss:$4 sm:$0xff]
  %v1558 = vld [vmem:[%s1422] ss:$4 sm:$0xff]
  %1559 = vst.sshfl [vmem:[#allocation1] sm:$0xff pattern:$0x73625140] %v56
  %1560 = vst.sshfl [vmem:[#allocation1 + $0x20] sm:$0xff pattern:$0x73625140] %v57
  %v1561 = vld [vmem:[%s1410] ss:$4 sm:$0xff]
  %v1562 = vld [vmem:[%s1412] ss:$4 sm:$0xff]
  %v1563 = vld [vmem:[%s1414] ss:$4 sm:$0xff]
  %v1564 = vld [vmem:[%s1416] ss:$4 sm:$0xff]
  %v1565 = vld [vmem:[%s1418] ss:$4 sm:$0xff]
  %v1566 = vld [vmem:[%s1420] ss:$4 sm:$0xff]
  %v1567 = vld [vmem:[%s1422] ss:$4 sm:$0xff]
  %1568 = vst.sshfl [vmem:[#allocation1] sm:$0xff pattern:$0x73625140] %v58
  %1569 = vst.sshfl [vmem:[#allocation1 + $0x20] sm:$0xff pattern:$0x73625140] %v59
  %v1570 = vld [vmem:[%s1410] ss:$4 sm:$0xff]
  %v1571 = vld [vmem:[%s1412] ss:$4 sm:$0xff]
  %v1572 = vld [vmem:[%s1414] ss:$4 sm:$0xff]
  %v1573 = vld [vmem:[%s1416] ss:$4 sm:$0xff]
  %v1574 = vld [vmem:[%s1418] ss:$4 sm:$0xff]
  %v1575 = vld [vmem:[%s1420] ss:$4 sm:$0xff]
  %v1576 = vld [vmem:[%s1422] ss:$4 sm:$0xff]
  %1577 = vst.sshfl [vmem:[#allocation1] sm:$0xff pattern:$0x73625140] %v60
  %1578 = vst.sshfl [vmem:[#allocation1 + $0x20] sm:$0xff pattern:$0x73625140] %v61
  %v1579 = vld [vmem:[%s1410] ss:$4 sm:$0xff]
  %v1580 = vld [vmem:[%s1412] ss:$4 sm:$0xff]
  %v1581 = vld [vmem:[%s1414] ss:$4 sm:$0xff]
  %v1582 = vld [vmem:[%s1416] ss:$4 sm:$0xff]
  %v1583 = vld [vmem:[%s1418] ss:$4 sm:$0xff]
  %v1584 = vld [vmem:[%s1420] ss:$4 sm:$0xff]
  %v1585 = vld [vmem:[%s1422] ss:$4 sm:$0xff]
  %1586 = vst.sshfl [vmem:[#allocation1] sm:$0xff pattern:$0x73625140] %v62
  %1587 = vst.sshfl [vmem:[#allocation1 + $0x20] sm:$0xff pattern:$0x73625140] %v63
  %v1588 = vld [vmem:[%s1410] ss:$4 sm:$0xff]
  %v1589 = vld [vmem:[%s1412] ss:$4 sm:$0xff]
  %v1590 = vld [vmem:[%s1414] ss:$4 sm:$0xff]
  %v1591 = vld [vmem:[%s1416] ss:$4 sm:$0xff]
  %v1592 = vld [vmem:[%s1418] ss:$4 sm:$0xff]
  %v1593 = vld [vmem:[%s1420] ss:$4 sm:$0xff]
  %v1594 = vld [vmem:[%s1422] ss:$4 sm:$0xff]
  %1595 = vst.sshfl [vmem:[#allocation1] sm:$0xff pattern:$0x73625140] %v64
  %1596 = vst.sshfl [vmem:[#allocation1 + $0x20] sm:$0xff pattern:$0x73625140] %v65
  %v1597 = vld [vmem:[%s1410] ss:$4 sm:$0xff]
  %v1598 = vld [vmem:[%s1412] ss:$4 sm:$0xff]
  %v1599 = vld [vmem:[%s1414] ss:$4 sm:$0xff]
  %v1600 = vld [vmem:[%s1416] ss:$4 sm:$0xff]
  %v1601 = vld [vmem:[%s1418] ss:$4 sm:$0xff]
  %v1602 = vld [vmem:[%s1420] ss:$4 sm:$0xff]
  %v1603 = vld [vmem:[%s1422] ss:$4 sm:$0xff]
  %1604 = vst.sshfl [vmem:[#allocation1] sm:$0xff pattern:$0x73625140] %v66
  %1605 = vst.sshfl [vmem:[#allocation1 + $0x20] sm:$0xff pattern:$0x73625140] %v67
  %v1606 = vld [vmem:[%s1410] ss:$4 sm:$0xff]
  %v1607 = vld [vmem:[%s1412] ss:$4 sm:$0xff]
  %v1608 = vld [vmem:[%s1414] ss:$4 sm:$0xff]
  %v1609 = vld [vmem:[%s1416] ss:$4 sm:$0xff]
  %v1610 = vld [vmem:[%s1418] ss:$4 sm:$0xff]
  %v1611 = vld [vmem:[%s1420] ss:$4 sm:$0xff]
  %v1612 = vld [vmem:[%s1422] ss:$4 sm:$0xff]
  %1613 = vst.sshfl [vmem:[#allocation1] sm:$0xff pattern:$0x73625140] %v68
  %1614 = vst.sshfl [vmem:[#allocation1 + $0x20] sm:$0xff pattern:$0x73625140] %v69
  %v1615 = vld [vmem:[%s1410] ss:$4 sm:$0xff]
  %v1616 = vld [vmem:[%s1412] ss:$4 sm:$0xff]
  %v1617 = vld [vmem:[%s1414] ss:$4 sm:$0xff]
  %v1618 = vld [vmem:[%s1416] ss:$4 sm:$0xff]
  %v1619 = vld [vmem:[%s1418] ss:$4 sm:$0xff]
  %v1620 = vld [vmem:[%s1420] ss:$4 sm:$0xff]
  %v1621 = vld [vmem:[%s1422] ss:$4 sm:$0xff]
  %1622 = vst.sshfl [vmem:[#allocation1] sm:$0xff pattern:$0x73625140] %v70
  %1623 = vst.sshfl [vmem:[#allocation1 + $0x20] sm:$0xff pattern:$0x73625140] %v71
  %v1624 = vld [vmem:[%s1410] ss:$4 sm:$0xff]
  %v1625 = vld [vmem:[%s1412] ss:$4 sm:$0xff]
  %v1626 = vld [vmem:[%s1414] ss:$4 sm:$0xff]
  %v1627 = vld [vmem:[%s1416] ss:$4 sm:$0xff]
  %v1628 = vld [vmem:[%s1418] ss:$4 sm:$0xff]
  %v1629 = vld [vmem:[%s1420] ss:$4 sm:$0xff]
  %v1630 = vld [vmem:[%s1422] ss:$4 sm:$0xff]
  %1631 = vst.sshfl [vmem:[#allocation1] sm:$0xff pattern:$0x73625140] %v72
  %1632 = vst.sshfl [vmem:[#allocation1 + $0x20] sm:$0xff pattern:$0x73625140] %v73
  %v1633 = vld [vmem:[%s1410] ss:$4 sm:$0xff]
  %v1634 = vld [vmem:[%s1412] ss:$4 sm:$0xff]
  %v1635 = vld [vmem:[%s1414] ss:$4 sm:$0xff]
  %v1636 = vld [vmem:[%s1416] ss:$4 sm:$0xff]
  %v1637 = vld [vmem:[%s1418] ss:$4 sm:$0xff]
  %v1638 = vld [vmem:[%s1420] ss:$4 sm:$0xff]
  %v1639 = vld [vmem:[%s1422] ss:$4 sm:$0xff]
  %1640 = vst.sshfl [vmem:[#allocation1] sm:$0xff pattern:$0x73625140] %v74
  %1641 = vst.sshfl [vmem:[#allocation1 + $0x20] sm:$0xff pattern:$0x73625140] %v75
  %v1642 = vld [vmem:[%s1410] ss:$4 sm:$0xff]
  %v1643 = vld [vmem:[%s1412] ss:$4 sm:$0xff]
  %v1644 = vld [vmem:[%s1414] ss:$4 sm:$0xff]
  %v1645 = vld [vmem:[%s1416] ss:$4 sm:$0xff]
  %v1646 = vld [vmem:[%s1418] ss:$4 sm:$0xff]
  %v1647 = vld [vmem:[%s1420] ss:$4 sm:$0xff]
  %v1648 = vld [vmem:[%s1422] ss:$4 sm:$0xff]
  %1649 = vst.sshfl [vmem:[#allocation1] sm:$0xff pattern:$0x73625140] %v76
  %1650 = vst.sshfl [vmem:[#allocation1 + $0x20] sm:$0xff pattern:$0x73625140] %v77
  %v1651 = vld [vmem:[%s1410] ss:$4 sm:$0xff]
  %v1652 = vld [vmem:[%s1412] ss:$4 sm:$0xff]
  %v1653 = vld [vmem:[%s1414] ss:$4 sm:$0xff]
  %v1654 = vld [vmem:[%s1416] ss:$4 sm:$0xff]
  %v1655 = vld [vmem:[%s1418] ss:$4 sm:$0xff]
  %v1656 = vld [vmem:[%s1420] ss:$4 sm:$0xff]
  %v1657 = vld [vmem:[%s1422] ss:$4 sm:$0xff]
  %1658 = vst.sshfl [vmem:[#allocation1] sm:$0xff pattern:$0x73625140] %v78
  %1659 = vst.sshfl [vmem:[#allocation1 + $0x20] sm:$0xff pattern:$0x73625140] %v79
  %v1660 = vld [vmem:[%s1410] ss:$4 sm:$0xff]
  %v1661 = vld [vmem:[%s1412] ss:$4 sm:$0xff]
  %v1662 = vld [vmem:[%s1414] ss:$4 sm:$0xff]
  %v1663 = vld [vmem:[%s1416] ss:$4 sm:$0xff]
  %v1664 = vld [vmem:[%s1418] ss:$4 sm:$0xff]
  %v1665 = vld [vmem:[%s1420] ss:$4 sm:$0xff]
  %v1666 = vld [vmem:[%s1422] ss:$4 sm:$0xff]
  %v1671 = vrot.slane %v48, 2
  %v1672 = vrot.slane %v48, 4
  %v1673 = vrot.slane %v48, 6
  %v1674 = vrot.slane %v49, 2
  %v1675 = vrot.slane %v49, 4
  %v1676 = vrot.slane %v80, 2
  %v1677 = vrot.slane %v80, 4
  %v1678 = vrot.slane %v80, 6
  %v1679 = vrot.slane %v81, 2
  %v1680 = vrot.slane %v81, 4
  %v1681 = vrot.slane %v49, 6
  %v1682 = vrot.slane %v81, 6
  %v1683 = vrot.slane %v48, 7
  %v1684 = vrot.slane %v1683, 2
  %v1685 = vrot.slane %v1671, 7
  %v1686 = vsel %vm791, %v1684, %v1685
  %v1687 = vrot.slane %v1685, 2
  %v1688 = vrot.slane %v1672, 7
  %v1689 = vsel %vm791, %v1687, %v1688
  %v1690 = vrot.slane %v1688, 2
  %v1691 = vrot.slane %v1673, 7
  %v1692 = vsel %vm791, %v1690, %v1691
  %v1693 = vrot.slane %v1691, 2
  %v1694 = vrot.slane %v49, 7
  %v1695 = vsel %vm791, %v1693, %v1694
  %v1696 = vrot.slane %v1694, 2
  %v1697 = vrot.slane %v1674, 7
  %v1698 = vsel %vm791, %v1696, %v1697
  %v1699 = vrot.slane %v1697, 2
  %v1700 = vrot.slane %v1675, 7
  %v1701 = vsel %vm791, %v1699, %v1700
  %v1702 = vrot.slane %v1700, 2
  %v1703 = vrot.slane %v1681, 7
  %v1704 = vsel %vm791, %v1702, %v1703
  %v1705 = vrot.slane %v80, 7
  %v1706 = vrot.slane %v1705, 2
  %v1707 = vrot.slane %v1676, 7
  %v1708 = vsel %vm791, %v1706, %v1707
  %v1709 = vrot.slane %v1707, 2
  %v1710 = vrot.slane %v1677, 7
  %v1711 = vsel %vm791, %v1709, %v1710
  %v1712 = vrot.slane %v1710, 2
  %v1713 = vrot.slane %v1678, 7
  %v1714 = vsel %vm791, %v1712, %v1713
  %v1715 = vrot.slane %v1713, 2
  %v1716 = vrot.slane %v81, 7
  %v1717 = vsel %vm791, %v1715, %v1716
  %v1718 = vrot.slane %v1716, 2
  %v1719 = vrot.slane %v1679, 7
  %v1720 = vsel %vm791, %v1718, %v1719
  %v1721 = vrot.slane %v1719, 2
  %v1722 = vrot.slane %v1680, 7
  %v1723 = vsel %vm791, %v1721, %v1722
  %v1724 = vrot.slane %v1722, 2
  %v1725 = vrot.slane %v1682, 7
  %v1726 = vsel %vm791, %v1724, %v1725
  %1727 = vst.sshfl [vmem:[#allocation1] sm:$0xff pattern:$0x73625140] %v22
  %1728 = vst.sshfl [vmem:[#allocation1 + $0x20] sm:$0xff pattern:$0x73625140] %v23
  %s1729 = scalar_lea.vmem [#allocation1], 1
  %v1730 = vld [vmem:[%s1729] ss:$4 sm:$0xff]
  %s1731 = scalar_lea.vmem [#allocation1], 2
  %v1732 = vld [vmem:[%s1731] ss:$4 sm:$0xff]
  %s1733 = scalar_lea.vmem [#allocation1], 3
  %v1734 = vld [vmem:[%s1733] ss:$4 sm:$0xff]
  %s1735 = scalar_lea.vmem [#allocation1], 32
  %v1736 = vld [vmem:[%s1735] ss:$4 sm:$0xff]
  %s1737 = scalar_lea.vmem [#allocation1], 33
  %v1738 = vld [vmem:[%s1737] ss:$4 sm:$0xff]
  %s1739 = scalar_lea.vmem [#allocation1], 34
  %v1740 = vld [vmem:[%s1739] ss:$4 sm:$0xff]
  %s1741 = scalar_lea.vmem [#allocation1], 35
  %v1742 = vld [vmem:[%s1741] ss:$4 sm:$0xff]
  %1743 = vst.sshfl [vmem:[#allocation1] sm:$0xff pattern:$0x73625140] %v24
  %1744 = vst.sshfl [vmem:[#allocation1 + $0x20] sm:$0xff pattern:$0x73625140] %v25
  %v1745 = vld [vmem:[%s1729] ss:$4 sm:$0xff]
  %v1746 = vld [vmem:[%s1731] ss:$4 sm:$0xff]
  %v1747 = vld [vmem:[%s1733] ss:$4 sm:$0xff]
  %v1748 = vld [vmem:[%s1735] ss:$4 sm:$0xff]
  %v1749 = vld [vmem:[%s1737] ss:$4 sm:$0xff]
  %v1750 = vld [vmem:[%s1739] ss:$4 sm:$0xff]
  %v1751 = vld [vmem:[%s1741] ss:$4 sm:$0xff]
  %1752 = vst.sshfl [vmem:[#allocation1] sm:$0xff pattern:$0x73625140] %v26
  %1753 = vst.sshfl [vmem:[#allocation1 + $0x20] sm:$0xff pattern:$0x73625140] %v27
  %v1754 = vld [vmem:[%s1729] ss:$4 sm:$0xff]
  %v1755 = vld [vmem:[%s1731] ss:$4 sm:$0xff]
  %v1756 = vld [vmem:[%s1733] ss:$4 sm:$0xff]
  %v1757 = vld [vmem:[%s1735] ss:$4 sm:$0xff]
  %v1758 = vld [vmem:[%s1737] ss:$4 sm:$0xff]
  %v1759 = vld [vmem:[%s1739] ss:$4 sm:$0xff]
  %v1760 = vld [vmem:[%s1741] ss:$4 sm:$0xff]
  %1761 = vst.sshfl [vmem:[#allocation1] sm:$0xff pattern:$0x73625140] %v28
  %1762 = vst.sshfl [vmem:[#allocation1 + $0x20] sm:$0xff pattern:$0x73625140] %v29
  %v1763 = vld [vmem:[%s1729] ss:$4 sm:$0xff]
  %v1764 = vld [vmem:[%s1731] ss:$4 sm:$0xff]
  %v1765 = vld [vmem:[%s1733] ss:$4 sm:$0xff]
  %v1766 = vld [vmem:[%s1735] ss:$4 sm:$0xff]
  %v1767 = vld [vmem:[%s1737] ss:$4 sm:$0xff]
  %v1768 = vld [vmem:[%s1739] ss:$4 sm:$0xff]
  %v1769 = vld [vmem:[%s1741] ss:$4 sm:$0xff]
  %1770 = vst.sshfl [vmem:[#allocation1] sm:$0xff pattern:$0x73625140] %v30
  %1771 = vst.sshfl [vmem:[#allocation1 + $0x20] sm:$0xff pattern:$0x73625140] %v31
  %v1772 = vld [vmem:[%s1729] ss:$4 sm:$0xff]
  %v1773 = vld [vmem:[%s1731] ss:$4 sm:$0xff]
  %v1774 = vld [vmem:[%s1733] ss:$4 sm:$0xff]
  %v1775 = vld [vmem:[%s1735] ss:$4 sm:$0xff]
  %v1776 = vld [vmem:[%s1737] ss:$4 sm:$0xff]
  %v1777 = vld [vmem:[%s1739] ss:$4 sm:$0xff]
  %v1778 = vld [vmem:[%s1741] ss:$4 sm:$0xff]
  %1779 = vst.sshfl [vmem:[#allocation1] sm:$0xff pattern:$0x73625140] %v32
  %1780 = vst.sshfl [vmem:[#allocation1 + $0x20] sm:$0xff pattern:$0x73625140] %v33
  %v1781 = vld [vmem:[%s1729] ss:$4 sm:$0xff]
  %v1782 = vld [vmem:[%s1731] ss:$4 sm:$0xff]
  %v1783 = vld [vmem:[%s1733] ss:$4 sm:$0xff]
  %v1784 = vld [vmem:[%s1735] ss:$4 sm:$0xff]
  %v1785 = vld [vmem:[%s1737] ss:$4 sm:$0xff]
  %v1786 = vld [vmem:[%s1739] ss:$4 sm:$0xff]
  %v1787 = vld [vmem:[%s1741] ss:$4 sm:$0xff]
  %1788 = vst.sshfl [vmem:[#allocation1] sm:$0xff pattern:$0x73625140] %v34
  %1789 = vst.sshfl [vmem:[#allocation1 + $0x20] sm:$0xff pattern:$0x73625140] %v35
  %v1790 = vld [vmem:[%s1729] ss:$4 sm:$0xff]
  %v1791 = vld [vmem:[%s1731] ss:$4 sm:$0xff]
  %v1792 = vld [vmem:[%s1733] ss:$4 sm:$0xff]
  %v1793 = vld [vmem:[%s1735] ss:$4 sm:$0xff]
  %v1794 = vld [vmem:[%s1737] ss:$4 sm:$0xff]
  %v1795 = vld [vmem:[%s1739] ss:$4 sm:$0xff]
  %v1796 = vld [vmem:[%s1741] ss:$4 sm:$0xff]
  %1797 = vst.sshfl [vmem:[#allocation1] sm:$0xff pattern:$0x73625140] %v36
  %1798 = vst.sshfl [vmem:[#allocation1 + $0x20] sm:$0xff pattern:$0x73625140] %v37
  %v1799 = vld [vmem:[%s1729] ss:$4 sm:$0xff]
  %v1800 = vld [vmem:[%s1731] ss:$4 sm:$0xff]
  %v1801 = vld [vmem:[%s1733] ss:$4 sm:$0xff]
  %v1802 = vld [vmem:[%s1735] ss:$4 sm:$0xff]
  %v1803 = vld [vmem:[%s1737] ss:$4 sm:$0xff]
  %v1804 = vld [vmem:[%s1739] ss:$4 sm:$0xff]
  %v1805 = vld [vmem:[%s1741] ss:$4 sm:$0xff]
  %1806 = vst.sshfl [vmem:[#allocation1] sm:$0xff pattern:$0x73625140] %v38
  %1807 = vst.sshfl [vmem:[#allocation1 + $0x20] sm:$0xff pattern:$0x73625140] %v39
  %v1808 = vld [vmem:[%s1729] ss:$4 sm:$0xff]
  %v1809 = vld [vmem:[%s1731] ss:$4 sm:$0xff]
  %v1810 = vld [vmem:[%s1733] ss:$4 sm:$0xff]
  %v1811 = vld [vmem:[%s1735] ss:$4 sm:$0xff]
  %v1812 = vld [vmem:[%s1737] ss:$4 sm:$0xff]
  %v1813 = vld [vmem:[%s1739] ss:$4 sm:$0xff]
  %v1814 = vld [vmem:[%s1741] ss:$4 sm:$0xff]
  %1815 = vst.sshfl [vmem:[#allocation1] sm:$0xff pattern:$0x73625140] %v40
  %1816 = vst.sshfl [vmem:[#allocation1 + $0x20] sm:$0xff pattern:$0x73625140] %v41
  %v1817 = vld [vmem:[%s1729] ss:$4 sm:$0xff]
  %v1818 = vld [vmem:[%s1731] ss:$4 sm:$0xff]
  %v1819 = vld [vmem:[%s1733] ss:$4 sm:$0xff]
  %v1820 = vld [vmem:[%s1735] ss:$4 sm:$0xff]
  %v1821 = vld [vmem:[%s1737] ss:$4 sm:$0xff]
  %v1822 = vld [vmem:[%s1739] ss:$4 sm:$0xff]
  %v1823 = vld [vmem:[%s1741] ss:$4 sm:$0xff]
  %1824 = vst.sshfl [vmem:[#allocation1] sm:$0xff pattern:$0x73625140] %v42
  %1825 = vst.sshfl [vmem:[#allocation1 + $0x20] sm:$0xff pattern:$0x73625140] %v43
  %v1826 = vld [vmem:[%s1729] ss:$4 sm:$0xff]
  %v1827 = vld [vmem:[%s1731] ss:$4 sm:$0xff]
  %v1828 = vld [vmem:[%s1733] ss:$4 sm:$0xff]
  %v1829 = vld [vmem:[%s1735] ss:$4 sm:$0xff]
  %v1830 = vld [vmem:[%s1737] ss:$4 sm:$0xff]
  %v1831 = vld [vmem:[%s1739] ss:$4 sm:$0xff]
  %v1832 = vld [vmem:[%s1741] ss:$4 sm:$0xff]
  %1833 = vst.sshfl [vmem:[#allocation1] sm:$0xff pattern:$0x73625140] %v44
  %1834 = vst.sshfl [vmem:[#allocation1 + $0x20] sm:$0xff pattern:$0x73625140] %v45
  %v1835 = vld [vmem:[%s1729] ss:$4 sm:$0xff]
  %v1836 = vld [vmem:[%s1731] ss:$4 sm:$0xff]
  %v1837 = vld [vmem:[%s1733] ss:$4 sm:$0xff]
  %v1838 = vld [vmem:[%s1735] ss:$4 sm:$0xff]
  %v1839 = vld [vmem:[%s1737] ss:$4 sm:$0xff]
  %v1840 = vld [vmem:[%s1739] ss:$4 sm:$0xff]
  %v1841 = vld [vmem:[%s1741] ss:$4 sm:$0xff]
  %1842 = vst.sshfl [vmem:[#allocation1] sm:$0xff pattern:$0x73625140] %v46
  %1843 = vst.sshfl [vmem:[#allocation1 + $0x20] sm:$0xff pattern:$0x73625140] %v47
  %v1844 = vld [vmem:[%s1729] ss:$4 sm:$0xff]
  %v1845 = vld [vmem:[%s1731] ss:$4 sm:$0xff]
  %v1846 = vld [vmem:[%s1733] ss:$4 sm:$0xff]
  %v1847 = vld [vmem:[%s1735] ss:$4 sm:$0xff]
  %v1848 = vld [vmem:[%s1737] ss:$4 sm:$0xff]
  %v1849 = vld [vmem:[%s1739] ss:$4 sm:$0xff]
  %v1850 = vld [vmem:[%s1741] ss:$4 sm:$0xff]
  %1851 = vst.sshfl [vmem:[#allocation1] sm:$0xff pattern:$0x73625140] %v48
  %1852 = vst.sshfl [vmem:[#allocation1 + $0x20] sm:$0xff pattern:$0x73625140] %v49
  %v1853 = vld [vmem:[%s1729] ss:$4 sm:$0xff]
  %v1854 = vld [vmem:[%s1731] ss:$4 sm:$0xff]
  %v1855 = vld [vmem:[%s1733] ss:$4 sm:$0xff]
  %v1856 = vld [vmem:[%s1735] ss:$4 sm:$0xff]
  %v1857 = vld [vmem:[%s1737] ss:$4 sm:$0xff]
  %v1858 = vld [vmem:[%s1739] ss:$4 sm:$0xff]
  %v1859 = vld [vmem:[%s1741] ss:$4 sm:$0xff]
  %1860 = vst.sshfl [vmem:[#allocation1] sm:$0xff pattern:$0x73625140] %v54
  %1861 = vst.sshfl [vmem:[#allocation1 + $0x20] sm:$0xff pattern:$0x73625140] %v55
  %v1862 = vld [vmem:[%s1729] ss:$4 sm:$0xff]
  %v1863 = vld [vmem:[%s1731] ss:$4 sm:$0xff]
  %v1864 = vld [vmem:[%s1733] ss:$4 sm:$0xff]
  %v1865 = vld [vmem:[%s1735] ss:$4 sm:$0xff]
  %v1866 = vld [vmem:[%s1737] ss:$4 sm:$0xff]
  %v1867 = vld [vmem:[%s1739] ss:$4 sm:$0xff]
  %v1868 = vld [vmem:[%s1741] ss:$4 sm:$0xff]
  %1869 = vst.sshfl [vmem:[#allocation1] sm:$0xff pattern:$0x73625140] %v56
  %1870 = vst.sshfl [vmem:[#allocation1 + $0x20] sm:$0xff pattern:$0x73625140] %v57
  %v1871 = vld [vmem:[%s1729] ss:$4 sm:$0xff]
  %v1872 = vld [vmem:[%s1731] ss:$4 sm:$0xff]
  %v1873 = vld [vmem:[%s1733] ss:$4 sm:$0xff]
  %v1874 = vld [vmem:[%s1735] ss:$4 sm:$0xff]
  %v1875 = vld [vmem:[%s1737] ss:$4 sm:$0xff]
  %v1876 = vld [vmem:[%s1739] ss:$4 sm:$0xff]
  %v1877 = vld [vmem:[%s1741] ss:$4 sm:$0xff]
  %1878 = vst.sshfl [vmem:[#allocation1] sm:$0xff pattern:$0x73625140] %v58
  %1879 = vst.sshfl [vmem:[#allocation1 + $0x20] sm:$0xff pattern:$0x73625140] %v59
  %v1880 = vld [vmem:[%s1729] ss:$4 sm:$0xff]
  %v1881 = vld [vmem:[%s1731] ss:$4 sm:$0xff]
  %v1882 = vld [vmem:[%s1733] ss:$4 sm:$0xff]
  %v1883 = vld [vmem:[%s1735] ss:$4 sm:$0xff]
  %v1884 = vld [vmem:[%s1737] ss:$4 sm:$0xff]
  %v1885 = vld [vmem:[%s1739] ss:$4 sm:$0xff]
  %v1886 = vld [vmem:[%s1741] ss:$4 sm:$0xff]
  %1887 = vst.sshfl [vmem:[#allocation1] sm:$0xff pattern:$0x73625140] %v60
  %1888 = vst.sshfl [vmem:[#allocation1 + $0x20] sm:$0xff pattern:$0x73625140] %v61
  %v1889 = vld [vmem:[%s1729] ss:$4 sm:$0xff]
  %v1890 = vld [vmem:[%s1731] ss:$4 sm:$0xff]
  %v1891 = vld [vmem:[%s1733] ss:$4 sm:$0xff]
  %v1892 = vld [vmem:[%s1735] ss:$4 sm:$0xff]
  %v1893 = vld [vmem:[%s1737] ss:$4 sm:$0xff]
  %v1894 = vld [vmem:[%s1739] ss:$4 sm:$0xff]
  %v1895 = vld [vmem:[%s1741] ss:$4 sm:$0xff]
  %1896 = vst.sshfl [vmem:[#allocation1] sm:$0xff pattern:$0x73625140] %v62
  %1897 = vst.sshfl [vmem:[#allocation1 + $0x20] sm:$0xff pattern:$0x73625140] %v63
  %v1898 = vld [vmem:[%s1729] ss:$4 sm:$0xff]
  %v1899 = vld [vmem:[%s1731] ss:$4 sm:$0xff]
  %v1900 = vld [vmem:[%s1733] ss:$4 sm:$0xff]
  %v1901 = vld [vmem:[%s1735] ss:$4 sm:$0xff]
  %v1902 = vld [vmem:[%s1737] ss:$4 sm:$0xff]
  %v1903 = vld [vmem:[%s1739] ss:$4 sm:$0xff]
  %v1904 = vld [vmem:[%s1741] ss:$4 sm:$0xff]
  %1905 = vst.sshfl [vmem:[#allocation1] sm:$0xff pattern:$0x73625140] %v64
  %1906 = vst.sshfl [vmem:[#allocation1 + $0x20] sm:$0xff pattern:$0x73625140] %v65
  %v1907 = vld [vmem:[%s1729] ss:$4 sm:$0xff]
  %v1908 = vld [vmem:[%s1731] ss:$4 sm:$0xff]
  %v1909 = vld [vmem:[%s1733] ss:$4 sm:$0xff]
  %v1910 = vld [vmem:[%s1735] ss:$4 sm:$0xff]
  %v1911 = vld [vmem:[%s1737] ss:$4 sm:$0xff]
  %v1912 = vld [vmem:[%s1739] ss:$4 sm:$0xff]
  %v1913 = vld [vmem:[%s1741] ss:$4 sm:$0xff]
  %1914 = vst.sshfl [vmem:[#allocation1] sm:$0xff pattern:$0x73625140] %v66
  %1915 = vst.sshfl [vmem:[#allocation1 + $0x20] sm:$0xff pattern:$0x73625140] %v67
  %v1916 = vld [vmem:[%s1729] ss:$4 sm:$0xff]
  %v1917 = vld [vmem:[%s1731] ss:$4 sm:$0xff]
  %v1918 = vld [vmem:[%s1733] ss:$4 sm:$0xff]
  %v1919 = vld [vmem:[%s1735] ss:$4 sm:$0xff]
  %v1920 = vld [vmem:[%s1737] ss:$4 sm:$0xff]
  %v1921 = vld [vmem:[%s1739] ss:$4 sm:$0xff]
  %v1922 = vld [vmem:[%s1741] ss:$4 sm:$0xff]
  %1923 = vst.sshfl [vmem:[#allocation1] sm:$0xff pattern:$0x73625140] %v68
  %1924 = vst.sshfl [vmem:[#allocation1 + $0x20] sm:$0xff pattern:$0x73625140] %v69
  %v1925 = vld [vmem:[%s1729] ss:$4 sm:$0xff]
  %v1926 = vld [vmem:[%s1731] ss:$4 sm:$0xff]
  %v1927 = vld [vmem:[%s1733] ss:$4 sm:$0xff]
  %v1928 = vld [vmem:[%s1735] ss:$4 sm:$0xff]
  %v1929 = vld [vmem:[%s1737] ss:$4 sm:$0xff]
  %v1930 = vld [vmem:[%s1739] ss:$4 sm:$0xff]
  %v1931 = vld [vmem:[%s1741] ss:$4 sm:$0xff]
  %1932 = vst.sshfl [vmem:[#allocation1] sm:$0xff pattern:$0x73625140] %v70
  %1933 = vst.sshfl [vmem:[#allocation1 + $0x20] sm:$0xff pattern:$0x73625140] %v71
  %v1934 = vld [vmem:[%s1729] ss:$4 sm:$0xff]
  %v1935 = vld [vmem:[%s1731] ss:$4 sm:$0xff]
  %v1936 = vld [vmem:[%s1733] ss:$4 sm:$0xff]
  %v1937 = vld [vmem:[%s1735] ss:$4 sm:$0xff]
  %v1938 = vld [vmem:[%s1737] ss:$4 sm:$0xff]
  %v1939 = vld [vmem:[%s1739] ss:$4 sm:$0xff]
  %v1940 = vld [vmem:[%s1741] ss:$4 sm:$0xff]
  %1941 = vst.sshfl [vmem:[#allocation1] sm:$0xff pattern:$0x73625140] %v72
  %1942 = vst.sshfl [vmem:[#allocation1 + $0x20] sm:$0xff pattern:$0x73625140] %v73
  %v1943 = vld [vmem:[%s1729] ss:$4 sm:$0xff]
  %v1944 = vld [vmem:[%s1731] ss:$4 sm:$0xff]
  %v1945 = vld [vmem:[%s1733] ss:$4 sm:$0xff]
  %v1946 = vld [vmem:[%s1735] ss:$4 sm:$0xff]
  %v1947 = vld [vmem:[%s1737] ss:$4 sm:$0xff]
  %v1948 = vld [vmem:[%s1739] ss:$4 sm:$0xff]
  %v1949 = vld [vmem:[%s1741] ss:$4 sm:$0xff]
  %1950 = vst.sshfl [vmem:[#allocation1] sm:$0xff pattern:$0x73625140] %v74
  %1951 = vst.sshfl [vmem:[#allocation1 + $0x20] sm:$0xff pattern:$0x73625140] %v75
  %v1952 = vld [vmem:[%s1729] ss:$4 sm:$0xff]
  %v1953 = vld [vmem:[%s1731] ss:$4 sm:$0xff]
  %v1954 = vld [vmem:[%s1733] ss:$4 sm:$0xff]
  %v1955 = vld [vmem:[%s1735] ss:$4 sm:$0xff]
  %v1956 = vld [vmem:[%s1737] ss:$4 sm:$0xff]
  %v1957 = vld [vmem:[%s1739] ss:$4 sm:$0xff]
  %v1958 = vld [vmem:[%s1741] ss:$4 sm:$0xff]
  %1959 = vst.sshfl [vmem:[#allocation1] sm:$0xff pattern:$0x73625140] %v76
  %1960 = vst.sshfl [vmem:[#allocation1 + $0x20] sm:$0xff pattern:$0x73625140] %v77
  %v1961 = vld [vmem:[%s1729] ss:$4 sm:$0xff]
  %v1962 = vld [vmem:[%s1731] ss:$4 sm:$0xff]
  %v1963 = vld [vmem:[%s1733] ss:$4 sm:$0xff]
  %v1964 = vld [vmem:[%s1735] ss:$4 sm:$0xff]
  %v1965 = vld [vmem:[%s1737] ss:$4 sm:$0xff]
  %v1966 = vld [vmem:[%s1739] ss:$4 sm:$0xff]
  %v1967 = vld [vmem:[%s1741] ss:$4 sm:$0xff]
  %1968 = vst.sshfl [vmem:[#allocation1] sm:$0xff pattern:$0x73625140] %v78
  %1969 = vst.sshfl [vmem:[#allocation1 + $0x20] sm:$0xff pattern:$0x73625140] %v79
  %v1970 = vld [vmem:[%s1729] ss:$4 sm:$0xff]
  %v1971 = vld [vmem:[%s1731] ss:$4 sm:$0xff]
  %v1972 = vld [vmem:[%s1733] ss:$4 sm:$0xff]
  %v1973 = vld [vmem:[%s1735] ss:$4 sm:$0xff]
  %v1974 = vld [vmem:[%s1737] ss:$4 sm:$0xff]
  %v1975 = vld [vmem:[%s1739] ss:$4 sm:$0xff]
  %v1976 = vld [vmem:[%s1741] ss:$4 sm:$0xff]
  %1977 = vst.sshfl [vmem:[#allocation1] sm:$0xff pattern:$0x73625140] %v80
  %1978 = vst.sshfl [vmem:[#allocation1 + $0x20] sm:$0xff pattern:$0x73625140] %v81
  %v1979 = vld [vmem:[%s1729] ss:$4 sm:$0xff]
  %v1980 = vld [vmem:[%s1731] ss:$4 sm:$0xff]
  %v1981 = vld [vmem:[%s1733] ss:$4 sm:$0xff]
  %v1982 = vld [vmem:[%s1735] ss:$4 sm:$0xff]
  %v1983 = vld [vmem:[%s1737] ss:$4 sm:$0xff]
  %v1984 = vld [vmem:[%s1739] ss:$4 sm:$0xff]
  %v1985 = vld [vmem:[%s1741] ss:$4 sm:$0xff]
  %v1990 = vrot.slane %v50, 2
  %v1991 = vrot.slane %v50, 4
  %v1992 = vrot.slane %v50, 6
  %v1993 = vrot.slane %v51, 2
  %v1994 = vrot.slane %v51, 4
  %v1995 = vrot.slane %v82, 2
  %v1996 = vrot.slane %v82, 4
  %v1997 = vrot.slane %v82, 6
  %v1998 = vrot.slane %v83, 2
  %v1999 = vrot.slane %v83, 4
  %v2000 = vrot.slane %v51, 6
  %v2001 = vrot.slane %v83, 6
  %v2002 = vrot.slane %v50, 7
  %v2003 = vrot.slane %v2002, 2
  %v2004 = vrot.slane %v1990, 7
  %v2005 = vsel %vm791, %v2003, %v2004
  %v2006 = vrot.slane %v2004, 2
  %v2007 = vrot.slane %v1991, 7
  %v2008 = vsel %vm791, %v2006, %v2007
  %v2009 = vrot.slane %v2007, 2
  %v2010 = vrot.slane %v1992, 7
  %v2011 = vsel %vm791, %v2009, %v2010
  %v2012 = vrot.slane %v2010, 2
  %v2013 = vrot.slane %v51, 7
  %v2014 = vsel %vm791, %v2012, %v2013
  %v2015 = vrot.slane %v2013, 2
  %v2016 = vrot.slane %v1993, 7
  %v2017 = vsel %vm791, %v2015, %v2016
  %v2018 = vrot.slane %v2016, 2
  %v2019 = vrot.slane %v1994, 7
  %v2020 = vsel %vm791, %v2018, %v2019
  %v2021 = vrot.slane %v2019, 2
  %v2022 = vrot.slane %v2000, 7
  %v2023 = vsel %vm791, %v2021, %v2022
  %v2024 = vrot.slane %v82, 7
  %v2025 = vrot.slane %v2024, 2
  %v2026 = vrot.slane %v1995, 7
  %v2027 = vsel %vm791, %v2025, %v2026
  %v2028 = vrot.slane %v2026, 2
  %v2029 = vrot.slane %v1996, 7
  %v2030 = vsel %vm791, %v2028, %v2029
  %v2031 = vrot.slane %v2029, 2
  %v2032 = vrot.slane %v1997, 7
  %v2033 = vsel %vm791, %v2031, %v2032
  %v2034 = vrot.slane %v2032, 2
  %v2035 = vrot.slane %v83, 7
  %v2036 = vsel %vm791, %v2034, %v2035
  %v2037 = vrot.slane %v2035, 2
  %v2038 = vrot.slane %v1998, 7
  %v2039 = vsel %vm791, %v2037, %v2038
  %v2040 = vrot.slane %v2038, 2
  %v2041 = vrot.slane %v1999, 7
  %v2042 = vsel %vm791, %v2040, %v2041
  %v2043 = vrot.slane %v2041, 2
  %v2044 = vrot.slane %v2001, 7
  %v2045 = vsel %vm791, %v2043, %v2044
  %2046 = vst.sshfl [vmem:[#allocation1] sm:$0xff pattern:$0x73625140] %v24
  %2047 = vst.sshfl [vmem:[#allocation1 + $0x20] sm:$0xff pattern:$0x73625140] %v25
  %s2048 = scalar_lea.vmem [#allocation1], 1
  %v2049 = vld [vmem:[%s2048] ss:$4 sm:$0xff]
  %s2050 = scalar_lea.vmem [#allocation1], 2
  %v2051 = vld [vmem:[%s2050] ss:$4 sm:$0xff]
  %s2052 = scalar_lea.vmem [#allocation1], 3
  %v2053 = vld [vmem:[%s2052] ss:$4 sm:$0xff]
  %s2054 = scalar_lea.vmem [#allocation1], 32
  %v2055 = vld [vmem:[%s2054] ss:$4 sm:$0xff]
  %s2056 = scalar_lea.vmem [#allocation1], 33
  %v2057 = vld [vmem:[%s2056] ss:$4 sm:$0xff]
  %s2058 = scalar_lea.vmem [#allocation1], 34
  %v2059 = vld [vmem:[%s2058] ss:$4 sm:$0xff]
  %s2060 = scalar_lea.vmem [#allocation1], 35
  %v2061 = vld [vmem:[%s2060] ss:$4 sm:$0xff]
  %2062 = vst.sshfl [vmem:[#allocation1] sm:$0xff pattern:$0x73625140] %v26
  %2063 = vst.sshfl [vmem:[#allocation1 + $0x20] sm:$0xff pattern:$0x73625140] %v27
  %v2064 = vld [vmem:[%s2048] ss:$4 sm:$0xff]
  %v2065 = vld [vmem:[%s2050] ss:$4 sm:$0xff]
  %v2066 = vld [vmem:[%s2052] ss:$4 sm:$0xff]
  %v2067 = vld [vmem:[%s2054] ss:$4 sm:$0xff]
  %v2068 = vld [vmem:[%s2056] ss:$4 sm:$0xff]
  %v2069 = vld [vmem:[%s2058] ss:$4 sm:$0xff]
  %v2070 = vld [vmem:[%s2060] ss:$4 sm:$0xff]
  %2071 = vst.sshfl [vmem:[#allocation1] sm:$0xff pattern:$0x73625140] %v28
  %2072 = vst.sshfl [vmem:[#allocation1 + $0x20] sm:$0xff pattern:$0x73625140] %v29
  %v2073 = vld [vmem:[%s2048] ss:$4 sm:$0xff]
  %v2074 = vld [vmem:[%s2050] ss:$4 sm:$0xff]
  %v2075 = vld [vmem:[%s2052] ss:$4 sm:$0xff]
  %v2076 = vld [vmem:[%s2054] ss:$4 sm:$0xff]
  %v2077 = vld [vmem:[%s2056] ss:$4 sm:$0xff]
  %v2078 = vld [vmem:[%s2058] ss:$4 sm:$0xff]
  %v2079 = vld [vmem:[%s2060] ss:$4 sm:$0xff]
  %2080 = vst.sshfl [vmem:[#allocation1] sm:$0xff pattern:$0x73625140] %v30
  %2081 = vst.sshfl [vmem:[#allocation1 + $0x20] sm:$0xff pattern:$0x73625140] %v31
  %v2082 = vld [vmem:[%s2048] ss:$4 sm:$0xff]
  %v2083 = vld [vmem:[%s2050] ss:$4 sm:$0xff]
  %v2084 = vld [vmem:[%s2052] ss:$4 sm:$0xff]
  %v2085 = vld [vmem:[%s2054] ss:$4 sm:$0xff]
  %v2086 = vld [vmem:[%s2056] ss:$4 sm:$0xff]
  %v2087 = vld [vmem:[%s2058] ss:$4 sm:$0xff]
  %v2088 = vld [vmem:[%s2060] ss:$4 sm:$0xff]
  %2089 = vst.sshfl [vmem:[#allocation1] sm:$0xff pattern:$0x73625140] %v32
  %2090 = vst.sshfl [vmem:[#allocation1 + $0x20] sm:$0xff pattern:$0x73625140] %v33
  %v2091 = vld [vmem:[%s2048] ss:$4 sm:$0xff]
  %v2092 = vld [vmem:[%s2050] ss:$4 sm:$0xff]
  %v2093 = vld [vmem:[%s2052] ss:$4 sm:$0xff]
  %v2094 = vld [vmem:[%s2054] ss:$4 sm:$0xff]
  %v2095 = vld [vmem:[%s2056] ss:$4 sm:$0xff]
  %v2096 = vld [vmem:[%s2058] ss:$4 sm:$0xff]
  %v2097 = vld [vmem:[%s2060] ss:$4 sm:$0xff]
  %2098 = vst.sshfl [vmem:[#allocation1] sm:$0xff pattern:$0x73625140] %v34
  %2099 = vst.sshfl [vmem:[#allocation1 + $0x20] sm:$0xff pattern:$0x73625140] %v35
  %v2100 = vld [vmem:[%s2048] ss:$4 sm:$0xff]
  %v2101 = vld [vmem:[%s2050] ss:$4 sm:$0xff]
  %v2102 = vld [vmem:[%s2052] ss:$4 sm:$0xff]
  %v2103 = vld [vmem:[%s2054] ss:$4 sm:$0xff]
  %v2104 = vld [vmem:[%s2056] ss:$4 sm:$0xff]
  %v2105 = vld [vmem:[%s2058] ss:$4 sm:$0xff]
  %v2106 = vld [vmem:[%s2060] ss:$4 sm:$0xff]
  %2107 = vst.sshfl [vmem:[#allocation1] sm:$0xff pattern:$0x73625140] %v36
  %2108 = vst.sshfl [vmem:[#allocation1 + $0x20] sm:$0xff pattern:$0x73625140] %v37
  %v2109 = vld [vmem:[%s2048] ss:$4 sm:$0xff]
  %v2110 = vld [vmem:[%s2050] ss:$4 sm:$0xff]
  %v2111 = vld [vmem:[%s2052] ss:$4 sm:$0xff]
  %v2112 = vld [vmem:[%s2054] ss:$4 sm:$0xff]
  %v2113 = vld [vmem:[%s2056] ss:$4 sm:$0xff]
  %v2114 = vld [vmem:[%s2058] ss:$4 sm:$0xff]
  %v2115 = vld [vmem:[%s2060] ss:$4 sm:$0xff]
  %2116 = vst.sshfl [vmem:[#allocation1] sm:$0xff pattern:$0x73625140] %v38
  %2117 = vst.sshfl [vmem:[#allocation1 + $0x20] sm:$0xff pattern:$0x73625140] %v39
  %v2118 = vld [vmem:[%s2048] ss:$4 sm:$0xff]
  %v2119 = vld [vmem:[%s2050] ss:$4 sm:$0xff]
  %v2120 = vld [vmem:[%s2052] ss:$4 sm:$0xff]
  %v2121 = vld [vmem:[%s2054] ss:$4 sm:$0xff]
  %v2122 = vld [vmem:[%s2056] ss:$4 sm:$0xff]
  %v2123 = vld [vmem:[%s2058] ss:$4 sm:$0xff]
  %v2124 = vld [vmem:[%s2060] ss:$4 sm:$0xff]
  %2125 = vst.sshfl [vmem:[#allocation1] sm:$0xff pattern:$0x73625140] %v40
  %2126 = vst.sshfl [vmem:[#allocation1 + $0x20] sm:$0xff pattern:$0x73625140] %v41
  %v2127 = vld [vmem:[%s2048] ss:$4 sm:$0xff]
  %v2128 = vld [vmem:[%s2050] ss:$4 sm:$0xff]
  %v2129 = vld [vmem:[%s2052] ss:$4 sm:$0xff]
  %v2130 = vld [vmem:[%s2054] ss:$4 sm:$0xff]
  %v2131 = vld [vmem:[%s2056] ss:$4 sm:$0xff]
  %v2132 = vld [vmem:[%s2058] ss:$4 sm:$0xff]
  %v2133 = vld [vmem:[%s2060] ss:$4 sm:$0xff]
  %2134 = vst.sshfl [vmem:[#allocation1] sm:$0xff pattern:$0x73625140] %v42
  %2135 = vst.sshfl [vmem:[#allocation1 + $0x20] sm:$0xff pattern:$0x73625140] %v43
  %v2136 = vld [vmem:[%s2048] ss:$4 sm:$0xff]
  %v2137 = vld [vmem:[%s2050] ss:$4 sm:$0xff]
  %v2138 = vld [vmem:[%s2052] ss:$4 sm:$0xff]
  %v2139 = vld [vmem:[%s2054] ss:$4 sm:$0xff]
  %v2140 = vld [vmem:[%s2056] ss:$4 sm:$0xff]
  %v2141 = vld [vmem:[%s2058] ss:$4 sm:$0xff]
  %v2142 = vld [vmem:[%s2060] ss:$4 sm:$0xff]
  %2143 = vst.sshfl [vmem:[#allocation1] sm:$0xff pattern:$0x73625140] %v44
  %2144 = vst.sshfl [vmem:[#allocation1 + $0x20] sm:$0xff pattern:$0x73625140] %v45
  %v2145 = vld [vmem:[%s2048] ss:$4 sm:$0xff]
  %v2146 = vld [vmem:[%s2050] ss:$4 sm:$0xff]
  %v2147 = vld [vmem:[%s2052] ss:$4 sm:$0xff]
  %v2148 = vld [vmem:[%s2054] ss:$4 sm:$0xff]
  %v2149 = vld [vmem:[%s2056] ss:$4 sm:$0xff]
  %v2150 = vld [vmem:[%s2058] ss:$4 sm:$0xff]
  %v2151 = vld [vmem:[%s2060] ss:$4 sm:$0xff]
  %2152 = vst.sshfl [vmem:[#allocation1] sm:$0xff pattern:$0x73625140] %v46
  %2153 = vst.sshfl [vmem:[#allocation1 + $0x20] sm:$0xff pattern:$0x73625140] %v47
  %v2154 = vld [vmem:[%s2048] ss:$4 sm:$0xff]
  %v2155 = vld [vmem:[%s2050] ss:$4 sm:$0xff]
  %v2156 = vld [vmem:[%s2052] ss:$4 sm:$0xff]
  %v2157 = vld [vmem:[%s2054] ss:$4 sm:$0xff]
  %v2158 = vld [vmem:[%s2056] ss:$4 sm:$0xff]
  %v2159 = vld [vmem:[%s2058] ss:$4 sm:$0xff]
  %v2160 = vld [vmem:[%s2060] ss:$4 sm:$0xff]
  %2161 = vst.sshfl [vmem:[#allocation1] sm:$0xff pattern:$0x73625140] %v48
  %2162 = vst.sshfl [vmem:[#allocation1 + $0x20] sm:$0xff pattern:$0x73625140] %v49
  %v2163 = vld [vmem:[%s2048] ss:$4 sm:$0xff]
  %v2164 = vld [vmem:[%s2050] ss:$4 sm:$0xff]
  %v2165 = vld [vmem:[%s2052] ss:$4 sm:$0xff]
  %v2166 = vld [vmem:[%s2054] ss:$4 sm:$0xff]
  %v2167 = vld [vmem:[%s2056] ss:$4 sm:$0xff]
  %v2168 = vld [vmem:[%s2058] ss:$4 sm:$0xff]
  %v2169 = vld [vmem:[%s2060] ss:$4 sm:$0xff]
  %2170 = vst.sshfl [vmem:[#allocation1] sm:$0xff pattern:$0x73625140] %v50
  %2171 = vst.sshfl [vmem:[#allocation1 + $0x20] sm:$0xff pattern:$0x73625140] %v51
  %v2172 = vld [vmem:[%s2048] ss:$4 sm:$0xff]
  %v2173 = vld [vmem:[%s2050] ss:$4 sm:$0xff]
  %v2174 = vld [vmem:[%s2052] ss:$4 sm:$0xff]
  %v2175 = vld [vmem:[%s2054] ss:$4 sm:$0xff]
  %v2176 = vld [vmem:[%s2056] ss:$4 sm:$0xff]
  %v2177 = vld [vmem:[%s2058] ss:$4 sm:$0xff]
  %v2178 = vld [vmem:[%s2060] ss:$4 sm:$0xff]
  %2179 = vst.sshfl [vmem:[#allocation1] sm:$0xff pattern:$0x73625140] %v56
  %2180 = vst.sshfl [vmem:[#allocation1 + $0x20] sm:$0xff pattern:$0x73625140] %v57
  %v2181 = vld [vmem:[%s2048] ss:$4 sm:$0xff]
  %v2182 = vld [vmem:[%s2050] ss:$4 sm:$0xff]
  %v2183 = vld [vmem:[%s2052] ss:$4 sm:$0xff]
  %v2184 = vld [vmem:[%s2054] ss:$4 sm:$0xff]
  %v2185 = vld [vmem:[%s2056] ss:$4 sm:$0xff]
  %v2186 = vld [vmem:[%s2058] ss:$4 sm:$0xff]
  %v2187 = vld [vmem:[%s2060] ss:$4 sm:$0xff]
  %2188 = vst.sshfl [vmem:[#allocation1] sm:$0xff pattern:$0x73625140] %v58
  %2189 = vst.sshfl [vmem:[#allocation1 + $0x20] sm:$0xff pattern:$0x73625140] %v59
  %v2190 = vld [vmem:[%s2048] ss:$4 sm:$0xff]
  %v2191 = vld [vmem:[%s2050] ss:$4 sm:$0xff]
  %v2192 = vld [vmem:[%s2052] ss:$4 sm:$0xff]
  %v2193 = vld [vmem:[%s2054] ss:$4 sm:$0xff]
  %v2194 = vld [vmem:[%s2056] ss:$4 sm:$0xff]
  %v2195 = vld [vmem:[%s2058] ss:$4 sm:$0xff]
  %v2196 = vld [vmem:[%s2060] ss:$4 sm:$0xff]
  %2197 = vst.sshfl [vmem:[#allocation1] sm:$0xff pattern:$0x73625140] %v60
  %2198 = vst.sshfl [vmem:[#allocation1 + $0x20] sm:$0xff pattern:$0x73625140] %v61
  %v2199 = vld [vmem:[%s2048] ss:$4 sm:$0xff]
  %v2200 = vld [vmem:[%s2050] ss:$4 sm:$0xff]
  %v2201 = vld [vmem:[%s2052] ss:$4 sm:$0xff]
  %v2202 = vld [vmem:[%s2054] ss:$4 sm:$0xff]
  %v2203 = vld [vmem:[%s2056] ss:$4 sm:$0xff]
  %v2204 = vld [vmem:[%s2058] ss:$4 sm:$0xff]
  %v2205 = vld [vmem:[%s2060] ss:$4 sm:$0xff]
  %2206 = vst.sshfl [vmem:[#allocation1] sm:$0xff pattern:$0x73625140] %v62
  %2207 = vst.sshfl [vmem:[#allocation1 + $0x20] sm:$0xff pattern:$0x73625140] %v63
  %v2208 = vld [vmem:[%s2048] ss:$4 sm:$0xff]
  %v2209 = vld [vmem:[%s2050] ss:$4 sm:$0xff]
  %v2210 = vld [vmem:[%s2052] ss:$4 sm:$0xff]
  %v2211 = vld [vmem:[%s2054] ss:$4 sm:$0xff]
  %v2212 = vld [vmem:[%s2056] ss:$4 sm:$0xff]
  %v2213 = vld [vmem:[%s2058] ss:$4 sm:$0xff]
  %v2214 = vld [vmem:[%s2060] ss:$4 sm:$0xff]
  %2215 = vst.sshfl [vmem:[#allocation1] sm:$0xff pattern:$0x73625140] %v64
  %2216 = vst.sshfl [vmem:[#allocation1 + $0x20] sm:$0xff pattern:$0x73625140] %v65
  %v2217 = vld [vmem:[%s2048] ss:$4 sm:$0xff]
  %v2218 = vld [vmem:[%s2050] ss:$4 sm:$0xff]
  %v2219 = vld [vmem:[%s2052] ss:$4 sm:$0xff]
  %v2220 = vld [vmem:[%s2054] ss:$4 sm:$0xff]
  %v2221 = vld [vmem:[%s2056] ss:$4 sm:$0xff]
  %v2222 = vld [vmem:[%s2058] ss:$4 sm:$0xff]
  %v2223 = vld [vmem:[%s2060] ss:$4 sm:$0xff]
  %2224 = vst.sshfl [vmem:[#allocation1] sm:$0xff pattern:$0x73625140] %v66
  %2225 = vst.sshfl [vmem:[#allocation1 + $0x20] sm:$0xff pattern:$0x73625140] %v67
  %v2226 = vld [vmem:[%s2048] ss:$4 sm:$0xff]
  %v2227 = vld [vmem:[%s2050] ss:$4 sm:$0xff]
  %v2228 = vld [vmem:[%s2052] ss:$4 sm:$0xff]
  %v2229 = vld [vmem:[%s2054] ss:$4 sm:$0xff]
  %v2230 = vld [vmem:[%s2056] ss:$4 sm:$0xff]
  %v2231 = vld [vmem:[%s2058] ss:$4 sm:$0xff]
  %v2232 = vld [vmem:[%s2060] ss:$4 sm:$0xff]
  %2233 = vst.sshfl [vmem:[#allocation1] sm:$0xff pattern:$0x73625140] %v68
  %2234 = vst.sshfl [vmem:[#allocation1 + $0x20] sm:$0xff pattern:$0x73625140] %v69
  %v2235 = vld [vmem:[%s2048] ss:$4 sm:$0xff]
  %v2236 = vld [vmem:[%s2050] ss:$4 sm:$0xff]
  %v2237 = vld [vmem:[%s2052] ss:$4 sm:$0xff]
  %v2238 = vld [vmem:[%s2054] ss:$4 sm:$0xff]
  %v2239 = vld [vmem:[%s2056] ss:$4 sm:$0xff]
  %v2240 = vld [vmem:[%s2058] ss:$4 sm:$0xff]
  %v2241 = vld [vmem:[%s2060] ss:$4 sm:$0xff]
  %2242 = vst.sshfl [vmem:[#allocation1] sm:$0xff pattern:$0x73625140] %v70
  %2243 = vst.sshfl [vmem:[#allocation1 + $0x20] sm:$0xff pattern:$0x73625140] %v71
  %v2244 = vld [vmem:[%s2048] ss:$4 sm:$0xff]
  %v2245 = vld [vmem:[%s2050] ss:$4 sm:$0xff]
  %v2246 = vld [vmem:[%s2052] ss:$4 sm:$0xff]
  %v2247 = vld [vmem:[%s2054] ss:$4 sm:$0xff]
  %v2248 = vld [vmem:[%s2056] ss:$4 sm:$0xff]
  %v2249 = vld [vmem:[%s2058] ss:$4 sm:$0xff]
  %v2250 = vld [vmem:[%s2060] ss:$4 sm:$0xff]
  %2251 = vst.sshfl [vmem:[#allocation1] sm:$0xff pattern:$0x73625140] %v72
  %2252 = vst.sshfl [vmem:[#allocation1 + $0x20] sm:$0xff pattern:$0x73625140] %v73
  %v2253 = vld [vmem:[%s2048] ss:$4 sm:$0xff]
  %v2254 = vld [vmem:[%s2050] ss:$4 sm:$0xff]
  %v2255 = vld [vmem:[%s2052] ss:$4 sm:$0xff]
  %v2256 = vld [vmem:[%s2054] ss:$4 sm:$0xff]
  %v2257 = vld [vmem:[%s2056] ss:$4 sm:$0xff]
  %v2258 = vld [vmem:[%s2058] ss:$4 sm:$0xff]
  %v2259 = vld [vmem:[%s2060] ss:$4 sm:$0xff]
  %2260 = vst.sshfl [vmem:[#allocation1] sm:$0xff pattern:$0x73625140] %v74
  %2261 = vst.sshfl [vmem:[#allocation1 + $0x20] sm:$0xff pattern:$0x73625140] %v75
  %v2262 = vld [vmem:[%s2048] ss:$4 sm:$0xff]
  %v2263 = vld [vmem:[%s2050] ss:$4 sm:$0xff]
  %v2264 = vld [vmem:[%s2052] ss:$4 sm:$0xff]
  %v2265 = vld [vmem:[%s2054] ss:$4 sm:$0xff]
  %v2266 = vld [vmem:[%s2056] ss:$4 sm:$0xff]
  %v2267 = vld [vmem:[%s2058] ss:$4 sm:$0xff]
  %v2268 = vld [vmem:[%s2060] ss:$4 sm:$0xff]
  %2269 = vst.sshfl [vmem:[#allocation1] sm:$0xff pattern:$0x73625140] %v76
  %2270 = vst.sshfl [vmem:[#allocation1 + $0x20] sm:$0xff pattern:$0x73625140] %v77
  %v2271 = vld [vmem:[%s2048] ss:$4 sm:$0xff]
  %v2272 = vld [vmem:[%s2050] ss:$4 sm:$0xff]
  %v2273 = vld [vmem:[%s2052] ss:$4 sm:$0xff]
  %v2274 = vld [vmem:[%s2054] ss:$4 sm:$0xff]
  %v2275 = vld [vmem:[%s2056] ss:$4 sm:$0xff]
  %v2276 = vld [vmem:[%s2058] ss:$4 sm:$0xff]
  %v2277 = vld [vmem:[%s2060] ss:$4 sm:$0xff]
  %2278 = vst.sshfl [vmem:[#allocation1] sm:$0xff pattern:$0x73625140] %v78
  %2279 = vst.sshfl [vmem:[#allocation1 + $0x20] sm:$0xff pattern:$0x73625140] %v79
  %v2280 = vld [vmem:[%s2048] ss:$4 sm:$0xff]
  %v2281 = vld [vmem:[%s2050] ss:$4 sm:$0xff]
  %v2282 = vld [vmem:[%s2052] ss:$4 sm:$0xff]
  %v2283 = vld [vmem:[%s2054] ss:$4 sm:$0xff]
  %v2284 = vld [vmem:[%s2056] ss:$4 sm:$0xff]
  %v2285 = vld [vmem:[%s2058] ss:$4 sm:$0xff]
  %v2286 = vld [vmem:[%s2060] ss:$4 sm:$0xff]
  %2287 = vst.sshfl [vmem:[#allocation1] sm:$0xff pattern:$0x73625140] %v80
  %2288 = vst.sshfl [vmem:[#allocation1 + $0x20] sm:$0xff pattern:$0x73625140] %v81
  %v2289 = vld [vmem:[%s2048] ss:$4 sm:$0xff]
  %v2290 = vld [vmem:[%s2050] ss:$4 sm:$0xff]
  %v2291 = vld [vmem:[%s2052] ss:$4 sm:$0xff]
  %v2292 = vld [vmem:[%s2054] ss:$4 sm:$0xff]
  %v2293 = vld [vmem:[%s2056] ss:$4 sm:$0xff]
  %v2294 = vld [vmem:[%s2058] ss:$4 sm:$0xff]
  %v2295 = vld [vmem:[%s2060] ss:$4 sm:$0xff]
  %2296 = vst.sshfl [vmem:[#allocation1] sm:$0xff pattern:$0x73625140] %v82
  %2297 = vst.sshfl [vmem:[#allocation1 + $0x20] sm:$0xff pattern:$0x73625140] %v83
  %v2298 = vld [vmem:[%s2048] ss:$4 sm:$0xff]
  %v2299 = vld [vmem:[%s2050] ss:$4 sm:$0xff]
  %v2300 = vld [vmem:[%s2052] ss:$4 sm:$0xff]
  %v2301 = vld [vmem:[%s2054] ss:$4 sm:$0xff]
  %v2302 = vld [vmem:[%s2056] ss:$4 sm:$0xff]
  %v2303 = vld [vmem:[%s2058] ss:$4 sm:$0xff]
  %v2304 = vld [vmem:[%s2060] ss:$4 sm:$0xff]
  %2305 = vst [vmem:[#allocation1] ss:$4 sm:$0xff] %v20
  %s2306 = scalar_lea.vmem [#allocation1], 1
  %2307 = vst [vmem:[%s2306] ss:$4 sm:$0xff] %v617
  %s2308 = scalar_lea.vmem [#allocation1], 2
  %2309 = vst [vmem:[%s2308] ss:$4 sm:$0xff] %v618
  %s2310 = scalar_lea.vmem [#allocation1], 3
  %2311 = vst [vmem:[%s2310] ss:$4 sm:$0xff] %v619
  %s2312 = scalar_lea.vmem [#allocation1], 32
  %2313 = vst [vmem:[%s2312] ss:$4 sm:$0xff] %v21
  %s2314 = scalar_lea.vmem [#allocation1], 33
  %2315 = vst [vmem:[%s2314] ss:$4 sm:$0xff] %v620
  %s2316 = scalar_lea.vmem [#allocation1], 34
  %2317 = vst [vmem:[%s2316] ss:$4 sm:$0xff] %v621
  %s2318 = scalar_lea.vmem [#allocation1], 35
  %2319 = vst [vmem:[%s2318] ss:$4 sm:$0xff] %v22
  %v2320 = vld.sshfl [vmem:[#allocation1] sm:$0xff pattern:$0x73625140]
  %v2321 = vld.sshfl [vmem:[#allocation1 + $0x20] sm:$0xff pattern:$0x73625140]
  %2322 = vst [vmem:[#allocation1] ss:$4 sm:$0xff] %v622
  %2323 = vst [vmem:[%s2306] ss:$4 sm:$0xff] %v623
  %2324 = vst [vmem:[%s2308] ss:$4 sm:$0xff] %v624
  %2325 = vst [vmem:[%s2310] ss:$4 sm:$0xff] %v23
  %2326 = vst [vmem:[%s2312] ss:$4 sm:$0xff] %v625
  %2327 = vst [vmem:[%s2314] ss:$4 sm:$0xff] %v626
  %2328 = vst [vmem:[%s2316] ss:$4 sm:$0xff] %v24
  %2329 = vst [vmem:[%s2318] ss:$4 sm:$0xff] %v627
  %v2330 = vld.sshfl [vmem:[#allocation1] sm:$0xff pattern:$0x73625140]
  %v2331 = vld.sshfl [vmem:[#allocation1 + $0x20] sm:$0xff pattern:$0x73625140]
  %2332 = vst [vmem:[#allocation1] ss:$4 sm:$0xff] %v628
  %2333 = vst [vmem:[%s2306] ss:$4 sm:$0xff] %v629
  %2334 = vst [vmem:[%s2308] ss:$4 sm:$0xff] %v25
  %2335 = vst [vmem:[%s2310] ss:$4 sm:$0xff] %v630
  %2336 = vst [vmem:[%s2312] ss:$4 sm:$0xff] %v631
  %2337 = vst [vmem:[%s2314] ss:$4 sm:$0xff] %v26
  %2338 = vst [vmem:[%s2316] ss:$4 sm:$0xff] %v632
  %2339 = vst [vmem:[%s2318] ss:$4 sm:$0xff] %v633
  %v2340 = vld.sshfl [vmem:[#allocation1] sm:$0xff pattern:$0x73625140]
  %v2341 = vld.sshfl [vmem:[#allocation1 + $0x20] sm:$0xff pattern:$0x73625140]
  %2342 = vst [vmem:[#allocation1] ss:$4 sm:$0xff] %v634
  %2343 = vst [vmem:[%s2306] ss:$4 sm:$0xff] %v27
  %2344 = vst [vmem:[%s2308] ss:$4 sm:$0xff] %v635
  %2345 = vst [vmem:[%s2310] ss:$4 sm:$0xff] %v636
  %2346 = vst [vmem:[%s2312] ss:$4 sm:$0xff] %v28
  %2347 = vst [vmem:[%s2314] ss:$4 sm:$0xff] %v637
  %2348 = vst [vmem:[%s2316] ss:$4 sm:$0xff] %v638
  %2349 = vst [vmem:[%s2318] ss:$4 sm:$0xff] %v639
  %v2350 = vld.sshfl [vmem:[#allocation1] sm:$0xff pattern:$0x73625140]
  %v2351 = vld.sshfl [vmem:[#allocation1 + $0x20] sm:$0xff pattern:$0x73625140]
  %2352 = vst [vmem:[#allocation1] ss:$4 sm:$0xff] %v29
  %2353 = vst [vmem:[%s2306] ss:$4 sm:$0xff] %v640
  %2354 = vst [vmem:[%s2308] ss:$4 sm:$0xff] %v641
  %2355 = vst [vmem:[%s2310] ss:$4 sm:$0xff] %v30
  %2356 = vst [vmem:[%s2312] ss:$4 sm:$0xff] %v642
  %2357 = vst [vmem:[%s2314] ss:$4 sm:$0xff] %v643
  %2358 = vst [vmem:[%s2316] ss:$4 sm:$0xff] %v644
  %2359 = vst [vmem:[%s2318] ss:$4 sm:$0xff] %v31
  %v2360 = vld.sshfl [vmem:[#allocation1] sm:$0xff pattern:$0x73625140]
  %v2361 = vld.sshfl [vmem:[#allocation1 + $0x20] sm:$0xff pattern:$0x73625140]
  %2362 = vst [vmem:[#allocation1] ss:$4 sm:$0xff] %v645
  %2363 = vst [vmem:[%s2306] ss:$4 sm:$0xff] %v646
  %2364 = vst [vmem:[%s2308] ss:$4 sm:$0xff] %v32
  %2365 = vst [vmem:[%s2310] ss:$4 sm:$0xff] %v647
  %2366 = vst [vmem:[%s2312] ss:$4 sm:$0xff] %v648
  %2367 = vst [vmem:[%s2314] ss:$4 sm:$0xff] %v649
  %2368 = vst [vmem:[%s2316] ss:$4 sm:$0xff] %v33
  %2369 = vst [vmem:[%s2318] ss:$4 sm:$0xff] %v650
  %v2370 = vld.sshfl [vmem:[#allocation1] sm:$0xff pattern:$0x73625140]
  %v2371 = vld.sshfl [vmem:[#allocation1 + $0x20] sm:$0xff pattern:$0x73625140]
  %2372 = vst [vmem:[#allocation1] ss:$4 sm:$0xff] %v651
  %2373 = vst [vmem:[%s2306] ss:$4 sm:$0xff] %v34
  %2374 = vst [vmem:[%s2308] ss:$4 sm:$0xff] %v652
  %2375 = vst [vmem:[%s2310] ss:$4 sm:$0xff] %v653
  %2376 = vst [vmem:[%s2312] ss:$4 sm:$0xff] %v654
  %2377 = vst [vmem:[%s2314] ss:$4 sm:$0xff] %v35
  %2378 = vst [vmem:[%s2316] ss:$4 sm:$0xff] %v655
  %2379 = vst [vmem:[%s2318] ss:$4 sm:$0xff] %v656
  %v2380 = vld.sshfl [vmem:[#allocation1] sm:$0xff pattern:$0x73625140]
  %v2381 = vld.sshfl [vmem:[#allocation1 + $0x20] sm:$0xff pattern:$0x73625140]
  %2382 = vst [vmem:[#allocation1] ss:$4 sm:$0xff] %v36
  %2383 = vst [vmem:[%s2306] ss:$4 sm:$0xff] %v657
  %2384 = vst [vmem:[%s2308] ss:$4 sm:$0xff] %v658
  %2385 = vst [vmem:[%s2310] ss:$4 sm:$0xff] %v659
  %2386 = vst [vmem:[%s2312] ss:$4 sm:$0xff] %v37
  %2387 = vst [vmem:[%s2314] ss:$4 sm:$0xff] %v660
  %2388 = vst [vmem:[%s2316] ss:$4 sm:$0xff] %v661
  %2389 = vst [vmem:[%s2318] ss:$4 sm:$0xff] %v38
  %v2390 = vld.sshfl [vmem:[#allocation1] sm:$0xff pattern:$0x73625140]
  %v2391 = vld.sshfl [vmem:[#allocation1 + $0x20] sm:$0xff pattern:$0x73625140]
  %2392 = vst [vmem:[#allocation1] ss:$4 sm:$0xff] %v662
  %2393 = vst [vmem:[%s2306] ss:$4 sm:$0xff] %v663
  %2394 = vst [vmem:[%s2308] ss:$4 sm:$0xff] %v664
  %2395 = vst [vmem:[%s2310] ss:$4 sm:$0xff] %v39
  %2396 = vst [vmem:[%s2312] ss:$4 sm:$0xff] %v665
  %2397 = vst [vmem:[%s2314] ss:$4 sm:$0xff] %v666
  %2398 = vst [vmem:[%s2316] ss:$4 sm:$0xff] %v40
  %2399 = vst [vmem:[%s2318] ss:$4 sm:$0xff] %v667
  %v2400 = vld.sshfl [vmem:[#allocation1] sm:$0xff pattern:$0x73625140]
  %v2401 = vld.sshfl [vmem:[#allocation1 + $0x20] sm:$0xff pattern:$0x73625140]
  %2402 = vst [vmem:[#allocation1] ss:$4 sm:$0xff] %v668
  %2403 = vst [vmem:[%s2306] ss:$4 sm:$0xff] %v669
  %2404 = vst [vmem:[%s2308] ss:$4 sm:$0xff] %v41
  %2405 = vst [vmem:[%s2310] ss:$4 sm:$0xff] %v670
  %2406 = vst [vmem:[%s2312] ss:$4 sm:$0xff] %v671
  %2407 = vst [vmem:[%s2314] ss:$4 sm:$0xff] %v42
  %2408 = vst [vmem:[%s2316] ss:$4 sm:$0xff] %v672
  %2409 = vst [vmem:[%s2318] ss:$4 sm:$0xff] %v673
  %v2410 = vld.sshfl [vmem:[#allocation1] sm:$0xff pattern:$0x73625140]
  %v2411 = vld.sshfl [vmem:[#allocation1 + $0x20] sm:$0xff pattern:$0x73625140]
  %2412 = vst [vmem:[#allocation1] ss:$4 sm:$0xff] %v674
  %2413 = vst [vmem:[%s2306] ss:$4 sm:$0xff] %v43
  %2414 = vst [vmem:[%s2308] ss:$4 sm:$0xff] %v675
  %2415 = vst [vmem:[%s2310] ss:$4 sm:$0xff] %v676
  %2416 = vst [vmem:[%s2312] ss:$4 sm:$0xff] %v44
  %2417 = vst [vmem:[%s2314] ss:$4 sm:$0xff] %v677
  %2418 = vst [vmem:[%s2316] ss:$4 sm:$0xff] %v678
  %2419 = vst [vmem:[%s2318] ss:$4 sm:$0xff] %v679
  %v2420 = vld.sshfl [vmem:[#allocation1] sm:$0xff pattern:$0x73625140]
  %v2421 = vld.sshfl [vmem:[#allocation1 + $0x20] sm:$0xff pattern:$0x73625140]
  %2422 = vst [vmem:[#allocation1] ss:$4 sm:$0xff] %v45
  %2423 = vst [vmem:[%s2306] ss:$4 sm:$0xff] %v680
  %2424 = vst [vmem:[%s2308] ss:$4 sm:$0xff] %v681
  %2425 = vst [vmem:[%s2310] ss:$4 sm:$0xff] %v46
  %2426 = vst [vmem:[%s2312] ss:$4 sm:$0xff] %v682
  %2427 = vst [vmem:[%s2314] ss:$4 sm:$0xff] %v683
  %2428 = vst [vmem:[%s2316] ss:$4 sm:$0xff] %v684
  %2429 = vst [vmem:[%s2318] ss:$4 sm:$0xff] %v47
  %v2430 = vld.sshfl [vmem:[#allocation1] sm:$0xff pattern:$0x73625140]
  %v2431 = vld.sshfl [vmem:[#allocation1 + $0x20] sm:$0xff pattern:$0x73625140]
  %2432 = vst [vmem:[#allocation1] ss:$4 sm:$0xff] %v685
  %2433 = vst [vmem:[%s2306] ss:$4 sm:$0xff] %v686
  %2434 = vst [vmem:[%s2308] ss:$4 sm:$0xff] %v52
  %2435 = vst [vmem:[%s2310] ss:$4 sm:$0xff] %v687
  %2436 = vst [vmem:[%s2312] ss:$4 sm:$0xff] %v688
  %2437 = vst [vmem:[%s2314] ss:$4 sm:$0xff] %v689
  %2438 = vst [vmem:[%s2316] ss:$4 sm:$0xff] %v53
  %2439 = vst [vmem:[%s2318] ss:$4 sm:$0xff] %v690
  %v2440 = vld.sshfl [vmem:[#allocation1] sm:$0xff pattern:$0x73625140]
  %v2441 = vld.sshfl [vmem:[#allocation1 + $0x20] sm:$0xff pattern:$0x73625140]
  %2442 = vst [vmem:[#allocation1] ss:$4 sm:$0xff] %v691
  %2443 = vst [vmem:[%s2306] ss:$4 sm:$0xff] %v54
  %2444 = vst [vmem:[%s2308] ss:$4 sm:$0xff] %v692
  %2445 = vst [vmem:[%s2310] ss:$4 sm:$0xff] %v693
  %2446 = vst [vmem:[%s2312] ss:$4 sm:$0xff] %v694
  %2447 = vst [vmem:[%s2314] ss:$4 sm:$0xff] %v55
  %2448 = vst [vmem:[%s2316] ss:$4 sm:$0xff] %v695
  %2449 = vst [vmem:[%s2318] ss:$4 sm:$0xff] %v696
  %v2450 = vld.sshfl [vmem:[#allocation1] sm:$0xff pattern:$0x73625140]
  %v2451 = vld.sshfl [vmem:[#allocation1 + $0x20] sm:$0xff pattern:$0x73625140]
  %2452 = vst [vmem:[#allocation1] ss:$4 sm:$0xff] %v56
  %2453 = vst [vmem:[%s2306] ss:$4 sm:$0xff] %v697
  %2454 = vst [vmem:[%s2308] ss:$4 sm:$0xff] %v698
  %2455 = vst [vmem:[%s2310] ss:$4 sm:$0xff] %v699
  %2456 = vst [vmem:[%s2312] ss:$4 sm:$0xff] %v57
  %2457 = vst [vmem:[%s2314] ss:$4 sm:$0xff] %v700
  %2458 = vst [vmem:[%s2316] ss:$4 sm:$0xff] %v701
  %2459 = vst [vmem:[%s2318] ss:$4 sm:$0xff] %v58
  %v2460 = vld.sshfl [vmem:[#allocation1] sm:$0xff pattern:$0x73625140]
  %v2461 = vld.sshfl [vmem:[#allocation1 + $0x20] sm:$0xff pattern:$0x73625140]
  %2462 = vst [vmem:[#allocation1] ss:$4 sm:$0xff] %v702
  %2463 = vst [vmem:[%s2306] ss:$4 sm:$0xff] %v703
  %2464 = vst [vmem:[%s2308] ss:$4 sm:$0xff] %v704
  %2465 = vst [vmem:[%s2310] ss:$4 sm:$0xff] %v59
  %2466 = vst [vmem:[%s2312] ss:$4 sm:$0xff] %v705
  %2467 = vst [vmem:[%s2314] ss:$4 sm:$0xff] %v706
  %2468 = vst [vmem:[%s2316] ss:$4 sm:$0xff] %v60
  %2469 = vst [vmem:[%s2318] ss:$4 sm:$0xff] %v707
  %v2470 = vld.sshfl [vmem:[#allocation1] sm:$0xff pattern:$0x73625140]
  %v2471 = vld.sshfl [vmem:[#allocation1 + $0x20] sm:$0xff pattern:$0x73625140]
  %2472 = vst [vmem:[#allocation1] ss:$4 sm:$0xff] %v708
  %2473 = vst [vmem:[%s2306] ss:$4 sm:$0xff] %v709
  %2474 = vst [vmem:[%s2308] ss:$4 sm:$0xff] %v61
  %2475 = vst [vmem:[%s2310] ss:$4 sm:$0xff] %v710
  %2476 = vst [vmem:[%s2312] ss:$4 sm:$0xff] %v711
  %2477 = vst [vmem:[%s2314] ss:$4 sm:$0xff] %v62
  %2478 = vst [vmem:[%s2316] ss:$4 sm:$0xff] %v712
  %2479 = vst [vmem:[%s2318] ss:$4 sm:$0xff] %v713
  %v2480 = vld.sshfl [vmem:[#allocation1] sm:$0xff pattern:$0x73625140]
  %v2481 = vld.sshfl [vmem:[#allocation1 + $0x20] sm:$0xff pattern:$0x73625140]
  %2482 = vst [vmem:[#allocation1] ss:$4 sm:$0xff] %v714
  %2483 = vst [vmem:[%s2306] ss:$4 sm:$0xff] %v63
  %2484 = vst [vmem:[%s2308] ss:$4 sm:$0xff] %v715
  %2485 = vst [vmem:[%s2310] ss:$4 sm:$0xff] %v716
  %2486 = vst [vmem:[%s2312] ss:$4 sm:$0xff] %v64
  %2487 = vst [vmem:[%s2314] ss:$4 sm:$0xff] %v717
  %2488 = vst [vmem:[%s2316] ss:$4 sm:$0xff] %v718
  %2489 = vst [vmem:[%s2318] ss:$4 sm:$0xff] %v719
  %v2490 = vld.sshfl [vmem:[#allocation1] sm:$0xff pattern:$0x73625140]
  %v2491 = vld.sshfl [vmem:[#allocation1 + $0x20] sm:$0xff pattern:$0x73625140]
  %2492 = vst [vmem:[#allocation1] ss:$4 sm:$0xff] %v65
  %2493 = vst [vmem:[%s2306] ss:$4 sm:$0xff] %v720
  %2494 = vst [vmem:[%s2308] ss:$4 sm:$0xff] %v721
  %2495 = vst [vmem:[%s2310] ss:$4 sm:$0xff] %v66
  %2496 = vst [vmem:[%s2312] ss:$4 sm:$0xff] %v722
  %2497 = vst [vmem:[%s2314] ss:$4 sm:$0xff] %v723
  %2498 = vst [vmem:[%s2316] ss:$4 sm:$0xff] %v724
  %2499 = vst [vmem:[%s2318] ss:$4 sm:$0xff] %v67
  %v2500 = vld.sshfl [vmem:[#allocation1] sm:$0xff pattern:$0x73625140]
  %v2501 = vld.sshfl [vmem:[#allocation1 + $0x20] sm:$0xff pattern:$0x73625140]
  %2502 = vst [vmem:[#allocation1] ss:$4 sm:$0xff] %v725
  %2503 = vst [vmem:[%s2306] ss:$4 sm:$0xff] %v726
  %2504 = vst [vmem:[%s2308] ss:$4 sm:$0xff] %v68
  %2505 = vst [vmem:[%s2310] ss:$4 sm:$0xff] %v727
  %2506 = vst [vmem:[%s2312] ss:$4 sm:$0xff] %v728
  %2507 = vst [vmem:[%s2314] ss:$4 sm:$0xff] %v729
  %2508 = vst [vmem:[%s2316] ss:$4 sm:$0xff] %v69
  %2509 = vst [vmem:[%s2318] ss:$4 sm:$0xff] %v730
  %v2510 = vld.sshfl [vmem:[#allocation1] sm:$0xff pattern:$0x73625140]
  %v2511 = vld.sshfl [vmem:[#allocation1 + $0x20] sm:$0xff pattern:$0x73625140]
  %2512 = vst [vmem:[#allocation1] ss:$4 sm:$0xff] %v731
  %2513 = vst [vmem:[%s2306] ss:$4 sm:$0xff] %v70
  %2514 = vst [vmem:[%s2308] ss:$4 sm:$0xff] %v732
  %2515 = vst [vmem:[%s2310] ss:$4 sm:$0xff] %v733
  %2516 = vst [vmem:[%s2312] ss:$4 sm:$0xff] %v734
  %2517 = vst [vmem:[%s2314] ss:$4 sm:$0xff] %v71
  %2518 = vst [vmem:[%s2316] ss:$4 sm:$0xff] %v735
  %2519 = vst [vmem:[%s2318] ss:$4 sm:$0xff] %v736
  %v2520 = vld.sshfl [vmem:[#allocation1] sm:$0xff pattern:$0x73625140]
  %v2521 = vld.sshfl [vmem:[#allocation1 + $0x20] sm:$0xff pattern:$0x73625140]
  %2522 = vst [vmem:[#allocation1] ss:$4 sm:$0xff] %v72
  %2523 = vst [vmem:[%s2306] ss:$4 sm:$0xff] %v737
  %2524 = vst [vmem:[%s2308] ss:$4 sm:$0xff] %v738
  %2525 = vst [vmem:[%s2310] ss:$4 sm:$0xff] %v739
  %2526 = vst [vmem:[%s2312] ss:$4 sm:$0xff] %v73
  %2527 = vst [vmem:[%s2314] ss:$4 sm:$0xff] %v740
  %2528 = vst [vmem:[%s2316] ss:$4 sm:$0xff] %v741
  %2529 = vst [vmem:[%s2318] ss:$4 sm:$0xff] %v74
  %v2530 = vld.sshfl [vmem:[#allocation1] sm:$0xff pattern:$0x73625140]
  %v2531 = vld.sshfl [vmem:[#allocation1 + $0x20] sm:$0xff pattern:$0x73625140]
  %2532 = vst [vmem:[#allocation1] ss:$4 sm:$0xff] %v742
  %2533 = vst [vmem:[%s2306] ss:$4 sm:$0xff] %v743
  %2534 = vst [vmem:[%s2308] ss:$4 sm:$0xff] %v744
  %2535 = vst [vmem:[%s2310] ss:$4 sm:$0xff] %v75
  %2536 = vst [vmem:[%s2312] ss:$4 sm:$0xff] %v745
  %2537 = vst [vmem:[%s2314] ss:$4 sm:$0xff] %v746
  %2538 = vst [vmem:[%s2316] ss:$4 sm:$0xff] %v76
  %2539 = vst [vmem:[%s2318] ss:$4 sm:$0xff] %v747
  %v2540 = vld.sshfl [vmem:[#allocation1] sm:$0xff pattern:$0x73625140]
  %v2541 = vld.sshfl [vmem:[#allocation1 + $0x20] sm:$0xff pattern:$0x73625140]
  %2542 = vst [vmem:[#allocation1] ss:$4 sm:$0xff] %v748
  %2543 = vst [vmem:[%s2306] ss:$4 sm:$0xff] %v749
  %2544 = vst [vmem:[%s2308] ss:$4 sm:$0xff] %v77
  %2545 = vst [vmem:[%s2310] ss:$4 sm:$0xff] %v750
  %2546 = vst [vmem:[%s2312] ss:$4 sm:$0xff] %v751
  %2547 = vst [vmem:[%s2314] ss:$4 sm:$0xff] %v78
  %2548 = vst [vmem:[%s2316] ss:$4 sm:$0xff] %v752
  %2549 = vst [vmem:[%s2318] ss:$4 sm:$0xff] %v753
  %v2550 = vld.sshfl [vmem:[#allocation1] sm:$0xff pattern:$0x73625140]
  %v2551 = vld.sshfl [vmem:[#allocation1 + $0x20] sm:$0xff pattern:$0x73625140]
  %2552 = vst [vmem:[#allocation1] ss:$4 sm:$0xff] %v754
  %2553 = vst [vmem:[%s2306] ss:$4 sm:$0xff] %v79
  %2554 = vst [vmem:[%s2308] ss:$4 sm:$0xff] %v755
  %2555 = vst [vmem:[%s2310] ss:$4 sm:$0xff] %v756
  %v2556 = vld.sshfl [vmem:[#allocation1] sm:$0xff pattern:$0x73625140]
  %2606 = vst [vmem:[#allocation1] ss:$4 sm:$0xff] %v795
  %s2607 = scalar_lea.vmem [#allocation1], 1
  %2608 = vst [vmem:[%s2607] ss:$4 sm:$0xff] %v798
  %s2609 = scalar_lea.vmem [#allocation1], 2
  %2610 = vst [vmem:[%s2609] ss:$4 sm:$0xff] %v801
  %s2611 = scalar_lea.vmem [#allocation1], 3
  %2612 = vst [vmem:[%s2611] ss:$4 sm:$0xff] %v804
  %s2613 = scalar_lea.vmem [#allocation1], 32
  %2614 = vst [vmem:[%s2613] ss:$4 sm:$0xff] %v807
  %s2615 = scalar_lea.vmem [#allocation1], 33
  %2616 = vst [vmem:[%s2615] ss:$4 sm:$0xff] %v810
  %s2617 = scalar_lea.vmem [#allocation1], 34
  %2618 = vst [vmem:[%s2617] ss:$4 sm:$0xff] %v813
  %s2619 = scalar_lea.vmem [#allocation1], 35
  %2620 = vst [vmem:[%s2619] ss:$4 sm:$0xff] %v817
  %v2621 = vld.sshfl [vmem:[#allocation1] sm:$0xff pattern:$0x73625140]
  %v2622 = vld.sshfl [vmem:[#allocation1 + $0x20] sm:$0xff pattern:$0x73625140]
  %2623 = vst [vmem:[#allocation1] ss:$4 sm:$0xff] %v820
  %2624 = vst [vmem:[%s2607] ss:$4 sm:$0xff] %v823
  %2625 = vst [vmem:[%s2609] ss:$4 sm:$0xff] %v826
  %2626 = vst [vmem:[%s2611] ss:$4 sm:$0xff] %v829
  %2627 = vst [vmem:[%s2613] ss:$4 sm:$0xff] %v832
  %2628 = vst [vmem:[%s2615] ss:$4 sm:$0xff] %v835
  %2629 = vst [vmem:[%s2617] ss:$4 sm:$0xff] %v839
  %2630 = vst [vmem:[%s2619] ss:$4 sm:$0xff] %v842
  %v2631 = vld.sshfl [vmem:[#allocation1] sm:$0xff pattern:$0x73625140]
  %v2632 = vld.sshfl [vmem:[#allocation1 + $0x20] sm:$0xff pattern:$0x73625140]
  %2633 = vst [vmem:[#allocation1] ss:$4 sm:$0xff] %v845
  %2634 = vst [vmem:[%s2607] ss:$4 sm:$0xff] %v848
  %2635 = vst [vmem:[%s2609] ss:$4 sm:$0xff] %v851
  %2636 = vst [vmem:[%s2611] ss:$4 sm:$0xff] %v854
  %2637 = vst [vmem:[%s2613] ss:$4 sm:$0xff] %v857
  %2638 = vst [vmem:[%s2615] ss:$4 sm:$0xff] %v861
  %2639 = vst [vmem:[%s2617] ss:$4 sm:$0xff] %v864
  %2640 = vst [vmem:[%s2619] ss:$4 sm:$0xff] %v867
  %v2641 = vld.sshfl [vmem:[#allocation1] sm:$0xff pattern:$0x73625140]
  %v2642 = vld.sshfl [vmem:[#allocation1 + $0x20] sm:$0xff pattern:$0x73625140]
  %2643 = vst [vmem:[#allocation1] ss:$4 sm:$0xff] %v870
  %2644 = vst [vmem:[%s2607] ss:$4 sm:$0xff] %v873
  %2645 = vst [vmem:[%s2609] ss:$4 sm:$0xff] %v876
  %2646 = vst [vmem:[%s2611] ss:$4 sm:$0xff] %v879
  %2647 = vst [vmem:[%s2613] ss:$4 sm:$0xff] %v883
  %2648 = vst [vmem:[%s2615] ss:$4 sm:$0xff] %v886
  %2649 = vst [vmem:[%s2617] ss:$4 sm:$0xff] %v889
  %2650 = vst [vmem:[%s2619] ss:$4 sm:$0xff] %v892
  %v2651 = vld.sshfl [vmem:[#allocation1] sm:$0xff pattern:$0x73625140]
  %v2652 = vld.sshfl [vmem:[#allocation1 + $0x20] sm:$0xff pattern:$0x73625140]
  %2653 = vst [vmem:[#allocation1] ss:$4 sm:$0xff] %v895
  %2654 = vst [vmem:[%s2607] ss:$4 sm:$0xff] %v898
  %2655 = vst [vmem:[%s2609] ss:$4 sm:$0xff] %v901
  %2656 = vst [vmem:[%s2611] ss:$4 sm:$0xff] %v905
  %2657 = vst [vmem:[%s2613] ss:$4 sm:$0xff] %v908
  %2658 = vst [vmem:[%s2615] ss:$4 sm:$0xff] %v911
  %2659 = vst [vmem:[%s2617] ss:$4 sm:$0xff] %v914
  %2660 = vst [vmem:[%s2619] ss:$4 sm:$0xff] %v917
  %v2661 = vld.sshfl [vmem:[#allocation1] sm:$0xff pattern:$0x73625140]
  %v2662 = vld.sshfl [vmem:[#allocation1 + $0x20] sm:$0xff pattern:$0x73625140]
  %2663 = vst [vmem:[#allocation1] ss:$4 sm:$0xff] %v920
  %2664 = vst [vmem:[%s2607] ss:$4 sm:$0xff] %v923
  %2665 = vst [vmem:[%s2609] ss:$4 sm:$0xff] %v927
  %2666 = vst [vmem:[%s2611] ss:$4 sm:$0xff] %v930
  %2667 = vst [vmem:[%s2613] ss:$4 sm:$0xff] %v933
  %2668 = vst [vmem:[%s2615] ss:$4 sm:$0xff] %v936
  %2669 = vst [vmem:[%s2617] ss:$4 sm:$0xff] %v939
  %2670 = vst [vmem:[%s2619] ss:$4 sm:$0xff] %v942
  %v2671 = vld.sshfl [vmem:[#allocation1] sm:$0xff pattern:$0x73625140]
  %v2672 = vld.sshfl [vmem:[#allocation1 + $0x20] sm:$0xff pattern:$0x73625140]
  %2673 = vst [vmem:[#allocation1] ss:$4 sm:$0xff] %v945
  %2674 = vst [vmem:[%s2607] ss:$4 sm:$0xff] %v949
  %2675 = vst [vmem:[%s2609] ss:$4 sm:$0xff] %v952
  %2676 = vst [vmem:[%s2611] ss:$4 sm:$0xff] %v955
  %2677 = vst [vmem:[%s2613] ss:$4 sm:$0xff] %v958
  %2678 = vst [vmem:[%s2615] ss:$4 sm:$0xff] %v961
  %2679 = vst [vmem:[%s2617] ss:$4 sm:$0xff] %v964
  %2680 = vst [vmem:[%s2619] ss:$4 sm:$0xff] %v967
  %v2681 = vld.sshfl [vmem:[#allocation1] sm:$0xff pattern:$0x73625140]
  %v2682 = vld.sshfl [vmem:[#allocation1 + $0x20] sm:$0xff pattern:$0x73625140]
  %2683 = vst [vmem:[#allocation1] ss:$4 sm:$0xff] %v971
  %2684 = vst [vmem:[%s2607] ss:$4 sm:$0xff] %v974
  %2685 = vst [vmem:[%s2609] ss:$4 sm:$0xff] %v977
  %2686 = vst [vmem:[%s2611] ss:$4 sm:$0xff] %v980
  %2687 = vst [vmem:[%s2613] ss:$4 sm:$0xff] %v983
  %2688 = vst [vmem:[%s2615] ss:$4 sm:$0xff] %v986
  %2689 = vst [vmem:[%s2617] ss:$4 sm:$0xff] %v989
  %2690 = vst [vmem:[%s2619] ss:$4 sm:$0xff] %v993
  %v2691 = vld.sshfl [vmem:[#allocation1] sm:$0xff pattern:$0x73625140]
  %v2692 = vld.sshfl [vmem:[#allocation1 + $0x20] sm:$0xff pattern:$0x73625140]
  %2693 = vst [vmem:[#allocation1] ss:$4 sm:$0xff] %v996
  %2694 = vst [vmem:[%s2607] ss:$4 sm:$0xff] %v999
  %2695 = vst [vmem:[%s2609] ss:$4 sm:$0xff] %v1002
  %2696 = vst [vmem:[%s2611] ss:$4 sm:$0xff] %v1005
  %2697 = vst [vmem:[%s2613] ss:$4 sm:$0xff] %v1008
  %2698 = vst [vmem:[%s2615] ss:$4 sm:$0xff] %v1011
  %2699 = vst [vmem:[%s2617] ss:$4 sm:$0xff] %v1015
  %2700 = vst [vmem:[%s2619] ss:$4 sm:$0xff] %v1018
  %v2701 = vld.sshfl [vmem:[#allocation1] sm:$0xff pattern:$0x73625140]
  %v2702 = vld.sshfl [vmem:[#allocation1 + $0x20] sm:$0xff pattern:$0x73625140]
  %2703 = vst [vmem:[#allocation1] ss:$4 sm:$0xff] %v1021
  %2704 = vst [vmem:[%s2607] ss:$4 sm:$0xff] %v1024
  %2705 = vst [vmem:[%s2609] ss:$4 sm:$0xff] %v1027
  %2706 = vst [vmem:[%s2611] ss:$4 sm:$0xff] %v1030
  %2707 = vst [vmem:[%s2613] ss:$4 sm:$0xff] %v1033
  %2708 = vst [vmem:[%s2615] ss:$4 sm:$0xff] %v1037
  %2709 = vst [vmem:[%s2617] ss:$4 sm:$0xff] %v1040
  %2710 = vst [vmem:[%s2619] ss:$4 sm:$0xff] %v1043
  %v2711 = vld.sshfl [vmem:[#allocation1] sm:$0xff pattern:$0x73625140]
  %v2712 = vld.sshfl [vmem:[#allocation1 + $0x20] sm:$0xff pattern:$0x73625140]
  %2713 = vst [vmem:[#allocation1] ss:$4 sm:$0xff] %v1046
  %2714 = vst [vmem:[%s2607] ss:$4 sm:$0xff] %v1049
  %2715 = vst [vmem:[%s2609] ss:$4 sm:$0xff] %v1052
  %2716 = vst [vmem:[%s2611] ss:$4 sm:$0xff] %v1055
  %2717 = vst [vmem:[%s2613] ss:$4 sm:$0xff] %v1059
  %2718 = vst [vmem:[%s2615] ss:$4 sm:$0xff] %v1062
  %2719 = vst [vmem:[%s2617] ss:$4 sm:$0xff] %v1065
  %2720 = vst [vmem:[%s2619] ss:$4 sm:$0xff] %v1068
  %v2721 = vld.sshfl [vmem:[#allocation1] sm:$0xff pattern:$0x73625140]
  %v2722 = vld.sshfl [vmem:[#allocation1 + $0x20] sm:$0xff pattern:$0x73625140]
  %2723 = vst [vmem:[#allocation1] ss:$4 sm:$0xff] %v1071
  %2724 = vst [vmem:[%s2607] ss:$4 sm:$0xff] %v1074
  %2725 = vst [vmem:[%s2609] ss:$4 sm:$0xff] %v1077
  %2726 = vst [vmem:[%s2611] ss:$4 sm:$0xff] %v1081
  %2727 = vst [vmem:[%s2613] ss:$4 sm:$0xff] %v1084
  %2728 = vst [vmem:[%s2615] ss:$4 sm:$0xff] %v1087
  %2729 = vst [vmem:[%s2617] ss:$4 sm:$0xff] %v1090
  %2730 = vst [vmem:[%s2619] ss:$4 sm:$0xff] %v1093
  %v2731 = vld.sshfl [vmem:[#allocation1] sm:$0xff pattern:$0x73625140]
  %v2732 = vld.sshfl [vmem:[#allocation1 + $0x20] sm:$0xff pattern:$0x73625140]
  %2733 = vst [vmem:[#allocation1] ss:$4 sm:$0xff] %v1096
  %2734 = vst [vmem:[%s2607] ss:$4 sm:$0xff] %v1099
  %2735 = vst [vmem:[%s2609] ss:$4 sm:$0xff] %v1103
  %2736 = vst [vmem:[%s2611] ss:$4 sm:$0xff] %v1106
  %2737 = vst [vmem:[%s2613] ss:$4 sm:$0xff] %v1109
  %2738 = vst [vmem:[%s2615] ss:$4 sm:$0xff] %v1112
  %2739 = vst [vmem:[%s2617] ss:$4 sm:$0xff] %v1115
  %2740 = vst [vmem:[%s2619] ss:$4 sm:$0xff] %v1118
  %v2741 = vld.sshfl [vmem:[#allocation1] sm:$0xff pattern:$0x73625140]
  %v2742 = vld.sshfl [vmem:[#allocation1 + $0x20] sm:$0xff pattern:$0x73625140]
  %2743 = vst [vmem:[#allocation1] ss:$4 sm:$0xff] %v1121
  %2744 = vst [vmem:[%s2607] ss:$4 sm:$0xff] %v1125
  %2745 = vst [vmem:[%s2609] ss:$4 sm:$0xff] %v1128
  %2746 = vst [vmem:[%s2611] ss:$4 sm:$0xff] %v1131
  %2747 = vst [vmem:[%s2613] ss:$4 sm:$0xff] %v1134
  %2748 = vst [vmem:[%s2615] ss:$4 sm:$0xff] %v1137
  %2749 = vst [vmem:[%s2617] ss:$4 sm:$0xff] %v1140
  %2750 = vst [vmem:[%s2619] ss:$4 sm:$0xff] %v1143
  %v2751 = vld.sshfl [vmem:[#allocation1] sm:$0xff pattern:$0x73625140]
  %v2752 = vld.sshfl [vmem:[#allocation1 + $0x20] sm:$0xff pattern:$0x73625140]
  %2753 = vst [vmem:[#allocation1] ss:$4 sm:$0xff] %v1147
  %2754 = vst [vmem:[%s2607] ss:$4 sm:$0xff] %v1150
  %2755 = vst [vmem:[%s2609] ss:$4 sm:$0xff] %v1153
  %2756 = vst [vmem:[%s2611] ss:$4 sm:$0xff] %v1156
  %2757 = vst [vmem:[%s2613] ss:$4 sm:$0xff] %v1159
  %2758 = vst [vmem:[%s2615] ss:$4 sm:$0xff] %v1162
  %2759 = vst [vmem:[%s2617] ss:$4 sm:$0xff] %v1165
  %2760 = vst [vmem:[%s2619] ss:$4 sm:$0xff] %v1169
  %v2761 = vld.sshfl [vmem:[#allocation1] sm:$0xff pattern:$0x73625140]
  %v2762 = vld.sshfl [vmem:[#allocation1 + $0x20] sm:$0xff pattern:$0x73625140]
  %2763 = vst [vmem:[#allocation1] ss:$4 sm:$0xff] %v1172
  %2764 = vst [vmem:[%s2607] ss:$4 sm:$0xff] %v1175
  %2765 = vst [vmem:[%s2609] ss:$4 sm:$0xff] %v1178
  %2766 = vst [vmem:[%s2611] ss:$4 sm:$0xff] %v1181
  %2767 = vst [vmem:[%s2613] ss:$4 sm:$0xff] %v1184
  %2768 = vst [vmem:[%s2615] ss:$4 sm:$0xff] %v1187
  %2769 = vst [vmem:[%s2617] ss:$4 sm:$0xff] %v1191
  %2770 = vst [vmem:[%s2619] ss:$4 sm:$0xff] %v1194
  %v2771 = vld.sshfl [vmem:[#allocation1] sm:$0xff pattern:$0x73625140]
  %v2772 = vld.sshfl [vmem:[#allocation1 + $0x20] sm:$0xff pattern:$0x73625140]
  %2773 = vst [vmem:[#allocation1] ss:$4 sm:$0xff] %v1197
  %2774 = vst [vmem:[%s2607] ss:$4 sm:$0xff] %v1200
  %2775 = vst [vmem:[%s2609] ss:$4 sm:$0xff] %v1203
  %2776 = vst [vmem:[%s2611] ss:$4 sm:$0xff] %v1206
  %2777 = vst [vmem:[%s2613] ss:$4 sm:$0xff] %v1209
  %2778 = vst [vmem:[%s2615] ss:$4 sm:$0xff] %v1213
  %2779 = vst [vmem:[%s2617] ss:$4 sm:$0xff] %v1216
  %2780 = vst [vmem:[%s2619] ss:$4 sm:$0xff] %v1219
  %v2781 = vld.sshfl [vmem:[#allocation1] sm:$0xff pattern:$0x73625140]
  %v2782 = vld.sshfl [vmem:[#allocation1 + $0x20] sm:$0xff pattern:$0x73625140]
  %2783 = vst [vmem:[#allocation1] ss:$4 sm:$0xff] %v1222
  %2784 = vst [vmem:[%s2607] ss:$4 sm:$0xff] %v1225
  %2785 = vst [vmem:[%s2609] ss:$4 sm:$0xff] %v1228
  %2786 = vst [vmem:[%s2611] ss:$4 sm:$0xff] %v1231
  %2787 = vst [vmem:[%s2613] ss:$4 sm:$0xff] %v1235
  %2788 = vst [vmem:[%s2615] ss:$4 sm:$0xff] %v1238
  %2789 = vst [vmem:[%s2617] ss:$4 sm:$0xff] %v1241
  %2790 = vst [vmem:[%s2619] ss:$4 sm:$0xff] %v1244
  %v2791 = vld.sshfl [vmem:[#allocation1] sm:$0xff pattern:$0x73625140]
  %v2792 = vld.sshfl [vmem:[#allocation1 + $0x20] sm:$0xff pattern:$0x73625140]
  %2793 = vst [vmem:[#allocation1] ss:$4 sm:$0xff] %v1247
  %2794 = vst [vmem:[%s2607] ss:$4 sm:$0xff] %v1250
  %2795 = vst [vmem:[%s2609] ss:$4 sm:$0xff] %v1253
  %2796 = vst [vmem:[%s2611] ss:$4 sm:$0xff] %v1257
  %2797 = vst [vmem:[%s2613] ss:$4 sm:$0xff] %v1260
  %2798 = vst [vmem:[%s2615] ss:$4 sm:$0xff] %v1263
  %2799 = vst [vmem:[%s2617] ss:$4 sm:$0xff] %v1266
  %2800 = vst [vmem:[%s2619] ss:$4 sm:$0xff] %v1269
  %v2801 = vld.sshfl [vmem:[#allocation1] sm:$0xff pattern:$0x73625140]
  %v2802 = vld.sshfl [vmem:[#allocation1 + $0x20] sm:$0xff pattern:$0x73625140]
  %2803 = vst [vmem:[#allocation1] ss:$4 sm:$0xff] %v1272
  %2804 = vst [vmem:[%s2607] ss:$4 sm:$0xff] %v1275
  %2805 = vst [vmem:[%s2609] ss:$4 sm:$0xff] %v1279
  %2806 = vst [vmem:[%s2611] ss:$4 sm:$0xff] %v1282
  %2807 = vst [vmem:[%s2613] ss:$4 sm:$0xff] %v1285
  %2808 = vst [vmem:[%s2615] ss:$4 sm:$0xff] %v1288
  %2809 = vst [vmem:[%s2617] ss:$4 sm:$0xff] %v1291
  %2810 = vst [vmem:[%s2619] ss:$4 sm:$0xff] %v1294
  %v2811 = vld.sshfl [vmem:[#allocation1] sm:$0xff pattern:$0x73625140]
  %v2812 = vld.sshfl [vmem:[#allocation1 + $0x20] sm:$0xff pattern:$0x73625140]
  %2813 = vst [vmem:[#allocation1] ss:$4 sm:$0xff] %v1297
  %2814 = vst [vmem:[%s2607] ss:$4 sm:$0xff] %v1301
  %2815 = vst [vmem:[%s2609] ss:$4 sm:$0xff] %v1304
  %2816 = vst [vmem:[%s2611] ss:$4 sm:$0xff] %v1307
  %2817 = vst [vmem:[%s2613] ss:$4 sm:$0xff] %v1310
  %2818 = vst [vmem:[%s2615] ss:$4 sm:$0xff] %v1313
  %2819 = vst [vmem:[%s2617] ss:$4 sm:$0xff] %v1316
  %2820 = vst [vmem:[%s2619] ss:$4 sm:$0xff] %v1319
  %v2821 = vld.sshfl [vmem:[#allocation1] sm:$0xff pattern:$0x73625140]
  %v2822 = vld.sshfl [vmem:[#allocation1 + $0x20] sm:$0xff pattern:$0x73625140]
  %2823 = vst [vmem:[#allocation1] ss:$4 sm:$0xff] %v1323
  %2824 = vst [vmem:[%s2607] ss:$4 sm:$0xff] %v1326
  %2825 = vst [vmem:[%s2609] ss:$4 sm:$0xff] %v1329
  %2826 = vst [vmem:[%s2611] ss:$4 sm:$0xff] %v1332
  %2827 = vst [vmem:[%s2613] ss:$4 sm:$0xff] %v1335
  %2828 = vst [vmem:[%s2615] ss:$4 sm:$0xff] %v1338
  %2829 = vst [vmem:[%s2617] ss:$4 sm:$0xff] %v1341
  %2830 = vst [vmem:[%s2619] ss:$4 sm:$0xff] %v1345
  %v2831 = vld.sshfl [vmem:[#allocation1] sm:$0xff pattern:$0x73625140]
  %v2832 = vld.sshfl [vmem:[#allocation1 + $0x20] sm:$0xff pattern:$0x73625140]
  %2833 = vst [vmem:[#allocation1] ss:$4 sm:$0xff] %v1348
  %2834 = vst [vmem:[%s2607] ss:$4 sm:$0xff] %v1351
  %2835 = vst [vmem:[%s2609] ss:$4 sm:$0xff] %v1354
  %2836 = vst [vmem:[%s2611] ss:$4 sm:$0xff] %v1357
  %2837 = vst [vmem:[%s2613] ss:$4 sm:$0xff] %v1360
  %2838 = vst [vmem:[%s2615] ss:$4 sm:$0xff] %v1363
  %2839 = vst [vmem:[%s2617] ss:$4 sm:$0xff] %v1367
  %2840 = vst [vmem:[%s2619] ss:$4 sm:$0xff] %v1370
  %v2841 = vld.sshfl [vmem:[#allocation1] sm:$0xff pattern:$0x73625140]
  %v2842 = vld.sshfl [vmem:[#allocation1 + $0x20] sm:$0xff pattern:$0x73625140]
  %2843 = vst [vmem:[#allocation1] ss:$4 sm:$0xff] %v1373
  %2844 = vst [vmem:[%s2607] ss:$4 sm:$0xff] %v1376
  %2845 = vst [vmem:[%s2609] ss:$4 sm:$0xff] %v1379
  %2846 = vst [vmem:[%s2611] ss:$4 sm:$0xff] %v1382
  %2847 = vst [vmem:[%s2613] ss:$4 sm:$0xff] %v1385
  %2848 = vst [vmem:[%s2615] ss:$4 sm:$0xff] %v1389
  %2849 = vst [vmem:[%s2617] ss:$4 sm:$0xff] %v1392
  %2850 = vst [vmem:[%s2619] ss:$4 sm:$0xff] %v1395
  %v2851 = vld.sshfl [vmem:[#allocation1] sm:$0xff pattern:$0x73625140]
  %v2852 = vld.sshfl [vmem:[#allocation1 + $0x20] sm:$0xff pattern:$0x73625140]
  %2853 = vst [vmem:[#allocation1] ss:$4 sm:$0xff] %v1398
  %2854 = vst [vmem:[%s2607] ss:$4 sm:$0xff] %v1401
  %2855 = vst [vmem:[%s2609] ss:$4 sm:$0xff] %v1404
  %2856 = vst [vmem:[%s2611] ss:$4 sm:$0xff] %v1407
  %v2857 = vld.sshfl [vmem:[#allocation1] sm:$0xff pattern:$0x73625140]
  %2858 = vrot.lane.b32.xlu0 %v2621, 8
  %v2859 = vpop.permute.xlu0 %2858
  %2860 = vrot.lane.b32.xlu0 %v2622, 8
  %v2861 = vpop.permute.xlu0 %2860
  %2862 = vrot.lane.b32.xlu0 %v2631, 8
  %v2863 = vpop.permute.xlu0 %2862
  %2864 = vrot.lane.b32.xlu0 %v2632, 8
  %v2865 = vpop.permute.xlu0 %2864
  %2866 = vrot.lane.b32.xlu0 %v2641, 8
  %v2867 = vpop.permute.xlu0 %2866
  %2868 = vrot.lane.b32.xlu0 %v2642, 8
  %v2869 = vpop.permute.xlu0 %2868
  %2870 = vrot.lane.b32.xlu0 %v2651, 8
  %v2871 = vpop.permute.xlu0 %2870
  %2872 = vrot.lane.b32.xlu0 %v2652, 8
  %v2873 = vpop.permute.xlu0 %2872
  %2874 = vrot.lane.b32.xlu0 %v2661, 8
  %v2875 = vpop.permute.xlu0 %2874
  %2876 = vrot.lane.b32.xlu0 %v2662, 8
  %v2877 = vpop.permute.xlu0 %2876
  %2878 = vrot.lane.b32.xlu0 %v2671, 8
  %v2879 = vpop.permute.xlu0 %2878
  %2880 = vrot.lane.b32.xlu0 %v2672, 8
  %v2881 = vpop.permute.xlu0 %2880
  %2882 = vrot.lane.b32.xlu0 %v2681, 8
  %v2883 = vpop.permute.xlu0 %2882
  %2884 = vrot.lane.b32.xlu0 %v2682, 8
  %v2885 = vpop.permute.xlu0 %2884
  %2886 = vrot.lane.b32.xlu0 %v2691, 8
  %v2887 = vpop.permute.xlu0 %2886
  %2888 = vrot.lane.b32.xlu0 %v2692, 8
  %v2889 = vpop.permute.xlu0 %2888
  %2890 = vrot.lane.b32.xlu0 %v2701, 8
  %v2891 = vpop.permute.xlu0 %2890
  %2892 = vrot.lane.b32.xlu0 %v2702, 8
  %v2893 = vpop.permute.xlu0 %2892
  %2894 = vrot.lane.b32.xlu0 %v2711, 8
  %v2895 = vpop.permute.xlu0 %2894
  %2896 = vrot.lane.b32.xlu0 %v2712, 8
  %v2897 = vpop.permute.xlu0 %2896
  %2898 = vrot.lane.b32.xlu0 %v2721, 8
  %v2899 = vpop.permute.xlu0 %2898
  %2900 = vrot.lane.b32.xlu0 %v2722, 8
  %v2901 = vpop.permute.xlu0 %2900
  %2902 = vrot.lane.b32.xlu0 %v2731, 8
  %v2903 = vpop.permute.xlu0 %2902
  %2904 = vrot.lane.b32.xlu0 %v2732, 8
  %v2905 = vpop.permute.xlu0 %2904
  %2906 = vrot.lane.b32.xlu0 %v2741, 8
  %v2907 = vpop.permute.xlu0 %2906
  %2908 = vrot.lane.b32.xlu0 %v2742, 8
  %v2909 = vpop.permute.xlu0 %2908
  %2910 = vrot.lane.b32.xlu0 %v2751, 8
  %v2911 = vpop.permute.xlu0 %2910
  %2912 = vrot.lane.b32.xlu0 %v2752, 8
  %v2913 = vpop.permute.xlu0 %2912
  %2914 = vrot.lane.b32.xlu0 %v2761, 8
  %v2915 = vpop.permute.xlu0 %2914
  %2916 = vrot.lane.b32.xlu0 %v2762, 8
  %v2917 = vpop.permute.xlu0 %2916
  %2918 = vrot.lane.b32.xlu0 %v2771, 8
  %v2919 = vpop.permute.xlu0 %2918
  %2920 = vrot.lane.b32.xlu0 %v2772, 8
  %v2921 = vpop.permute.xlu0 %2920
  %2922 = vrot.lane.b32.xlu0 %v2781, 8
  %v2923 = vpop.permute.xlu0 %2922
  %2924 = vrot.lane.b32.xlu0 %v2782, 8
  %v2925 = vpop.permute.xlu0 %2924
  %2926 = vrot.lane.b32.xlu0 %v2791, 8
  %v2927 = vpop.permute.xlu0 %2926
  %2928 = vrot.lane.b32.xlu0 %v2792, 8
  %v2929 = vpop.permute.xlu0 %2928
  %2930 = vrot.lane.b32.xlu0 %v2801, 8
  %v2931 = vpop.permute.xlu0 %2930
  %2932 = vrot.lane.b32.xlu0 %v2802, 8
  %v2933 = vpop.permute.xlu0 %2932
  %2934 = vrot.lane.b32.xlu0 %v2811, 8
  %v2935 = vpop.permute.xlu0 %2934
  %2936 = vrot.lane.b32.xlu0 %v2812, 8
  %v2937 = vpop.permute.xlu0 %2936
  %2938 = vrot.lane.b32.xlu0 %v2821, 8
  %v2939 = vpop.permute.xlu0 %2938
  %2940 = vrot.lane.b32.xlu0 %v2822, 8
  %v2941 = vpop.permute.xlu0 %2940
  %2942 = vrot.lane.b32.xlu0 %v2831, 8
  %v2943 = vpop.permute.xlu0 %2942
  %2944 = vrot.lane.b32.xlu0 %v2832, 8
  %v2945 = vpop.permute.xlu0 %2944
  %2946 = vrot.lane.b32.xlu0 %v2841, 8
  %v2947 = vpop.permute.xlu0 %2946
  %2948 = vrot.lane.b32.xlu0 %v2842, 8
  %v2949 = vpop.permute.xlu0 %2948
  %2950 = vrot.lane.b32.xlu0 %v2851, 8
  %v2951 = vpop.permute.xlu0 %2950
  %2952 = vrot.lane.b32.xlu0 %v2852, 8
  %v2953 = vpop.permute.xlu0 %2952
  %2954 = vrot.lane.b32.xlu0 %v2857, 8
  %v2955 = vpop.permute.xlu0 %2954
  %3005 = vst [vmem:[#allocation1] ss:$4 sm:$0xff] %v1411
  %s3006 = scalar_lea.vmem [#allocation1], 1
  %3007 = vst [vmem:[%s3006] ss:$4 sm:$0xff] %v1413
  %s3008 = scalar_lea.vmem [#allocation1], 2
  %3009 = vst [vmem:[%s3008] ss:$4 sm:$0xff] %v1415
  %s3010 = scalar_lea.vmem [#allocation1], 3
  %3011 = vst [vmem:[%s3010] ss:$4 sm:$0xff] %v1417
  %s3012 = scalar_lea.vmem [#allocation1], 32
  %3013 = vst [vmem:[%s3012] ss:$4 sm:$0xff] %v1419
  %s3014 = scalar_lea.vmem [#allocation1], 33
  %3015 = vst [vmem:[%s3014] ss:$4 sm:$0xff] %v1421
  %s3016 = scalar_lea.vmem [#allocation1], 34
  %3017 = vst [vmem:[%s3016] ss:$4 sm:$0xff] %v1423
  %s3018 = scalar_lea.vmem [#allocation1], 35
  %3019 = vst [vmem:[%s3018] ss:$4 sm:$0xff] %v1426
  %v3020 = vld.sshfl [vmem:[#allocation1] sm:$0xff pattern:$0x73625140]
  %v3021 = vld.sshfl [vmem:[#allocation1 + $0x20] sm:$0xff pattern:$0x73625140]
  %3022 = vst [vmem:[#allocation1] ss:$4 sm:$0xff] %v1427
  %3023 = vst [vmem:[%s3006] ss:$4 sm:$0xff] %v1428
  %3024 = vst [vmem:[%s3008] ss:$4 sm:$0xff] %v1429
  %3025 = vst [vmem:[%s3010] ss:$4 sm:$0xff] %v1430
  %3026 = vst [vmem:[%s3012] ss:$4 sm:$0xff] %v1431
  %3027 = vst [vmem:[%s3014] ss:$4 sm:$0xff] %v1432
  %3028 = vst [vmem:[%s3016] ss:$4 sm:$0xff] %v1435
  %3029 = vst [vmem:[%s3018] ss:$4 sm:$0xff] %v1436
  %v3030 = vld.sshfl [vmem:[#allocation1] sm:$0xff pattern:$0x73625140]
  %v3031 = vld.sshfl [vmem:[#allocation1 + $0x20] sm:$0xff pattern:$0x73625140]
  %3032 = vst [vmem:[#allocation1] ss:$4 sm:$0xff] %v1437
  %3033 = vst [vmem:[%s3006] ss:$4 sm:$0xff] %v1438
  %3034 = vst [vmem:[%s3008] ss:$4 sm:$0xff] %v1439
  %3035 = vst [vmem:[%s3010] ss:$4 sm:$0xff] %v1440
  %3036 = vst [vmem:[%s3012] ss:$4 sm:$0xff] %v1441
  %3037 = vst [vmem:[%s3014] ss:$4 sm:$0xff] %v1444
  %3038 = vst [vmem:[%s3016] ss:$4 sm:$0xff] %v1445
  %3039 = vst [vmem:[%s3018] ss:$4 sm:$0xff] %v1446
  %v3040 = vld.sshfl [vmem:[#allocation1] sm:$0xff pattern:$0x73625140]
  %v3041 = vld.sshfl [vmem:[#allocation1 + $0x20] sm:$0xff pattern:$0x73625140]
  %3042 = vst [vmem:[#allocation1] ss:$4 sm:$0xff] %v1447
  %3043 = vst [vmem:[%s3006] ss:$4 sm:$0xff] %v1448
  %3044 = vst [vmem:[%s3008] ss:$4 sm:$0xff] %v1449
  %3045 = vst [vmem:[%s3010] ss:$4 sm:$0xff] %v1450
  %3046 = vst [vmem:[%s3012] ss:$4 sm:$0xff] %v1453
  %3047 = vst [vmem:[%s3014] ss:$4 sm:$0xff] %v1454
  %3048 = vst [vmem:[%s3016] ss:$4 sm:$0xff] %v1455
  %3049 = vst [vmem:[%s3018] ss:$4 sm:$0xff] %v1456
  %v3050 = vld.sshfl [vmem:[#allocation1] sm:$0xff pattern:$0x73625140]
  %v3051 = vld.sshfl [vmem:[#allocation1 + $0x20] sm:$0xff pattern:$0x73625140]
  %3052 = vst [vmem:[#allocation1] ss:$4 sm:$0xff] %v1457
  %3053 = vst [vmem:[%s3006] ss:$4 sm:$0xff] %v1458
  %3054 = vst [vmem:[%s3008] ss:$4 sm:$0xff] %v1459
  %3055 = vst [vmem:[%s3010] ss:$4 sm:$0xff] %v1462
  %3056 = vst [vmem:[%s3012] ss:$4 sm:$0xff] %v1463
  %3057 = vst [vmem:[%s3014] ss:$4 sm:$0xff] %v1464
  %3058 = vst [vmem:[%s3016] ss:$4 sm:$0xff] %v1465
  %3059 = vst [vmem:[%s3018] ss:$4 sm:$0xff] %v1466
  %v3060 = vld.sshfl [vmem:[#allocation1] sm:$0xff pattern:$0x73625140]
  %v3061 = vld.sshfl [vmem:[#allocation1 + $0x20] sm:$0xff pattern:$0x73625140]
  %3062 = vst [vmem:[#allocation1] ss:$4 sm:$0xff] %v1467
  %3063 = vst [vmem:[%s3006] ss:$4 sm:$0xff] %v1468
  %3064 = vst [vmem:[%s3008] ss:$4 sm:$0xff] %v1471
  %3065 = vst [vmem:[%s3010] ss:$4 sm:$0xff] %v1472
  %3066 = vst [vmem:[%s3012] ss:$4 sm:$0xff] %v1473
  %3067 = vst [vmem:[%s3014] ss:$4 sm:$0xff] %v1474
  %3068 = vst [vmem:[%s3016] ss:$4 sm:$0xff] %v1475
  %3069 = vst [vmem:[%s3018] ss:$4 sm:$0xff] %v1476
  %v3070 = vld.sshfl [vmem:[#allocation1] sm:$0xff pattern:$0x73625140]
  %v3071 = vld.sshfl [vmem:[#allocation1 + $0x20] sm:$0xff pattern:$0x73625140]
  %3072 = vst [vmem:[#allocation1] ss:$4 sm:$0xff] %v1477
  %3073 = vst [vmem:[%s3006] ss:$4 sm:$0xff] %v1480
  %3074 = vst [vmem:[%s3008] ss:$4 sm:$0xff] %v1481
  %3075 = vst [vmem:[%s3010] ss:$4 sm:$0xff] %v1482
  %3076 = vst [vmem:[%s3012] ss:$4 sm:$0xff] %v1483
  %3077 = vst [vmem:[%s3014] ss:$4 sm:$0xff] %v1484
  %3078 = vst [vmem:[%s3016] ss:$4 sm:$0xff] %v1485
  %3079 = vst [vmem:[%s3018] ss:$4 sm:$0xff] %v1486
  %v3080 = vld.sshfl [vmem:[#allocation1] sm:$0xff pattern:$0x73625140]
  %v3081 = vld.sshfl [vmem:[#allocation1 + $0x20] sm:$0xff pattern:$0x73625140]
  %3082 = vst [vmem:[#allocation1] ss:$4 sm:$0xff] %v1489
  %3083 = vst [vmem:[%s3006] ss:$4 sm:$0xff] %v1490
  %3084 = vst [vmem:[%s3008] ss:$4 sm:$0xff] %v1491
  %3085 = vst [vmem:[%s3010] ss:$4 sm:$0xff] %v1492
  %3086 = vst [vmem:[%s3012] ss:$4 sm:$0xff] %v1493
  %3087 = vst [vmem:[%s3014] ss:$4 sm:$0xff] %v1494
  %3088 = vst [vmem:[%s3016] ss:$4 sm:$0xff] %v1495
  %3089 = vst [vmem:[%s3018] ss:$4 sm:$0xff] %v1498
  %v3090 = vld.sshfl [vmem:[#allocation1] sm:$0xff pattern:$0x73625140]
  %v3091 = vld.sshfl [vmem:[#allocation1 + $0x20] sm:$0xff pattern:$0x73625140]
  %3092 = vst [vmem:[#allocation1] ss:$4 sm:$0xff] %v1499
  %3093 = vst [vmem:[%s3006] ss:$4 sm:$0xff] %v1500
  %3094 = vst [vmem:[%s3008] ss:$4 sm:$0xff] %v1501
  %3095 = vst [vmem:[%s3010] ss:$4 sm:$0xff] %v1502
  %3096 = vst [vmem:[%s3012] ss:$4 sm:$0xff] %v1503
  %3097 = vst [vmem:[%s3014] ss:$4 sm:$0xff] %v1504
  %3098 = vst [vmem:[%s3016] ss:$4 sm:$0xff] %v1507
  %3099 = vst [vmem:[%s3018] ss:$4 sm:$0xff] %v1508
  %v3100 = vld.sshfl [vmem:[#allocation1] sm:$0xff pattern:$0x73625140]
  %v3101 = vld.sshfl [vmem:[#allocation1 + $0x20] sm:$0xff pattern:$0x73625140]
  %3102 = vst [vmem:[#allocation1] ss:$4 sm:$0xff] %v1509
  %3103 = vst [vmem:[%s3006] ss:$4 sm:$0xff] %v1510
  %3104 = vst [vmem:[%s3008] ss:$4 sm:$0xff] %v1511
  %3105 = vst [vmem:[%s3010] ss:$4 sm:$0xff] %v1512
  %3106 = vst [vmem:[%s3012] ss:$4 sm:$0xff] %v1513
  %3107 = vst [vmem:[%s3014] ss:$4 sm:$0xff] %v1516
  %3108 = vst [vmem:[%s3016] ss:$4 sm:$0xff] %v1517
  %3109 = vst [vmem:[%s3018] ss:$4 sm:$0xff] %v1518
  %v3110 = vld.sshfl [vmem:[#allocation1] sm:$0xff pattern:$0x73625140]
  %v3111 = vld.sshfl [vmem:[#allocation1 + $0x20] sm:$0xff pattern:$0x73625140]
  %3112 = vst [vmem:[#allocation1] ss:$4 sm:$0xff] %v1519
  %3113 = vst [vmem:[%s3006] ss:$4 sm:$0xff] %v1520
  %3114 = vst [vmem:[%s3008] ss:$4 sm:$0xff] %v1521
  %3115 = vst [vmem:[%s3010] ss:$4 sm:$0xff] %v1522
  %3116 = vst [vmem:[%s3012] ss:$4 sm:$0xff] %v1525
  %3117 = vst [vmem:[%s3014] ss:$4 sm:$0xff] %v1526
  %3118 = vst [vmem:[%s3016] ss:$4 sm:$0xff] %v1527
  %3119 = vst [vmem:[%s3018] ss:$4 sm:$0xff] %v1528
  %v3120 = vld.sshfl [vmem:[#allocation1] sm:$0xff pattern:$0x73625140]
  %v3121 = vld.sshfl [vmem:[#allocation1 + $0x20] sm:$0xff pattern:$0x73625140]
  %3122 = vst [vmem:[#allocation1] ss:$4 sm:$0xff] %v1529
  %3123 = vst [vmem:[%s3006] ss:$4 sm:$0xff] %v1530
  %3124 = vst [vmem:[%s3008] ss:$4 sm:$0xff] %v1531
  %3125 = vst [vmem:[%s3010] ss:$4 sm:$0xff] %v1534
  %3126 = vst [vmem:[%s3012] ss:$4 sm:$0xff] %v1535
  %3127 = vst [vmem:[%s3014] ss:$4 sm:$0xff] %v1536
  %3128 = vst [vmem:[%s3016] ss:$4 sm:$0xff] %v1537
  %3129 = vst [vmem:[%s3018] ss:$4 sm:$0xff] %v1538
  %v3130 = vld.sshfl [vmem:[#allocation1] sm:$0xff pattern:$0x73625140]
  %v3131 = vld.sshfl [vmem:[#allocation1 + $0x20] sm:$0xff pattern:$0x73625140]
  %3132 = vst [vmem:[#allocation1] ss:$4 sm:$0xff] %v1539
  %3133 = vst [vmem:[%s3006] ss:$4 sm:$0xff] %v1540
  %3134 = vst [vmem:[%s3008] ss:$4 sm:$0xff] %v1543
  %3135 = vst [vmem:[%s3010] ss:$4 sm:$0xff] %v1544
  %3136 = vst [vmem:[%s3012] ss:$4 sm:$0xff] %v1545
  %3137 = vst [vmem:[%s3014] ss:$4 sm:$0xff] %v1546
  %3138 = vst [vmem:[%s3016] ss:$4 sm:$0xff] %v1547
  %3139 = vst [vmem:[%s3018] ss:$4 sm:$0xff] %v1548
  %v3140 = vld.sshfl [vmem:[#allocation1] sm:$0xff pattern:$0x73625140]
  %v3141 = vld.sshfl [vmem:[#allocation1 + $0x20] sm:$0xff pattern:$0x73625140]
  %3142 = vst [vmem:[#allocation1] ss:$4 sm:$0xff] %v1549
  %3143 = vst [vmem:[%s3006] ss:$4 sm:$0xff] %v1552
  %3144 = vst [vmem:[%s3008] ss:$4 sm:$0xff] %v1553
  %3145 = vst [vmem:[%s3010] ss:$4 sm:$0xff] %v1554
  %3146 = vst [vmem:[%s3012] ss:$4 sm:$0xff] %v1555
  %3147 = vst [vmem:[%s3014] ss:$4 sm:$0xff] %v1556
  %3148 = vst [vmem:[%s3016] ss:$4 sm:$0xff] %v1557
  %3149 = vst [vmem:[%s3018] ss:$4 sm:$0xff] %v1558
  %v3150 = vld.sshfl [vmem:[#allocation1] sm:$0xff pattern:$0x73625140]
  %v3151 = vld.sshfl [vmem:[#allocation1 + $0x20] sm:$0xff pattern:$0x73625140]
  %3152 = vst [vmem:[#allocation1] ss:$4 sm:$0xff] %v1561
  %3153 = vst [vmem:[%s3006] ss:$4 sm:$0xff] %v1562
  %3154 = vst [vmem:[%s3008] ss:$4 sm:$0xff] %v1563
  %3155 = vst [vmem:[%s3010] ss:$4 sm:$0xff] %v1564
  %3156 = vst [vmem:[%s3012] ss:$4 sm:$0xff] %v1565
  %3157 = vst [vmem:[%s3014] ss:$4 sm:$0xff] %v1566
  %3158 = vst [vmem:[%s3016] ss:$4 sm:$0xff] %v1567
  %3159 = vst [vmem:[%s3018] ss:$4 sm:$0xff] %v1570
  %v3160 = vld.sshfl [vmem:[#allocation1] sm:$0xff pattern:$0x73625140]
  %v3161 = vld.sshfl [vmem:[#allocation1 + $0x20] sm:$0xff pattern:$0x73625140]
  %3162 = vst [vmem:[#allocation1] ss:$4 sm:$0xff] %v1571
  %3163 = vst [vmem:[%s3006] ss:$4 sm:$0xff] %v1572
  %3164 = vst [vmem:[%s3008] ss:$4 sm:$0xff] %v1573
  %3165 = vst [vmem:[%s3010] ss:$4 sm:$0xff] %v1574
  %3166 = vst [vmem:[%s3012] ss:$4 sm:$0xff] %v1575
  %3167 = vst [vmem:[%s3014] ss:$4 sm:$0xff] %v1576
  %3168 = vst [vmem:[%s3016] ss:$4 sm:$0xff] %v1579
  %3169 = vst [vmem:[%s3018] ss:$4 sm:$0xff] %v1580
  %v3170 = vld.sshfl [vmem:[#allocation1] sm:$0xff pattern:$0x73625140]
  %v3171 = vld.sshfl [vmem:[#allocation1 + $0x20] sm:$0xff pattern:$0x73625140]
  %3172 = vst [vmem:[#allocation1] ss:$4 sm:$0xff] %v1581
  %3173 = vst [vmem:[%s3006] ss:$4 sm:$0xff] %v1582
  %3174 = vst [vmem:[%s3008] ss:$4 sm:$0xff] %v1583
  %3175 = vst [vmem:[%s3010] ss:$4 sm:$0xff] %v1584
  %3176 = vst [vmem:[%s3012] ss:$4 sm:$0xff] %v1585
  %3177 = vst [vmem:[%s3014] ss:$4 sm:$0xff] %v1588
  %3178 = vst [vmem:[%s3016] ss:$4 sm:$0xff] %v1589
  %3179 = vst [vmem:[%s3018] ss:$4 sm:$0xff] %v1590
  %v3180 = vld.sshfl [vmem:[#allocation1] sm:$0xff pattern:$0x73625140]
  %v3181 = vld.sshfl [vmem:[#allocation1 + $0x20] sm:$0xff pattern:$0x73625140]
  %3182 = vst [vmem:[#allocation1] ss:$4 sm:$0xff] %v1591
  %3183 = vst [vmem:[%s3006] ss:$4 sm:$0xff] %v1592
  %3184 = vst [vmem:[%s3008] ss:$4 sm:$0xff] %v1593
  %3185 = vst [vmem:[%s3010] ss:$4 sm:$0xff] %v1594
  %3186 = vst [vmem:[%s3012] ss:$4 sm:$0xff] %v1597
  %3187 = vst [vmem:[%s3014] ss:$4 sm:$0xff] %v1598
  %3188 = vst [vmem:[%s3016] ss:$4 sm:$0xff] %v1599
  %3189 = vst [vmem:[%s3018] ss:$4 sm:$0xff] %v1600
  %v3190 = vld.sshfl [vmem:[#allocation1] sm:$0xff pattern:$0x73625140]
  %v3191 = vld.sshfl [vmem:[#allocation1 + $0x20] sm:$0xff pattern:$0x73625140]
  %3192 = vst [vmem:[#allocation1] ss:$4 sm:$0xff] %v1601
  %3193 = vst [vmem:[%s3006] ss:$4 sm:$0xff] %v1602
  %3194 = vst [vmem:[%s3008] ss:$4 sm:$0xff] %v1603
  %3195 = vst [vmem:[%s3010] ss:$4 sm:$0xff] %v1606
  %3196 = vst [vmem:[%s3012] ss:$4 sm:$0xff] %v1607
  %3197 = vst [vmem:[%s3014] ss:$4 sm:$0xff] %v1608
  %3198 = vst [vmem:[%s3016] ss:$4 sm:$0xff] %v1609
  %3199 = vst [vmem:[%s3018] ss:$4 sm:$0xff] %v1610
  %v3200 = vld.sshfl [vmem:[#allocation1] sm:$0xff pattern:$0x73625140]
  %v3201 = vld.sshfl [vmem:[#allocation1 + $0x20] sm:$0xff pattern:$0x73625140]
  %3202 = vst [vmem:[#allocation1] ss:$4 sm:$0xff] %v1611
  %3203 = vst [vmem:[%s3006] ss:$4 sm:$0xff] %v1612
  %3204 = vst [vmem:[%s3008] ss:$4 sm:$0xff] %v1615
  %3205 = vst [vmem:[%s3010] ss:$4 sm:$0xff] %v1616
  %3206 = vst [vmem:[%s3012] ss:$4 sm:$0xff] %v1617
  %3207 = vst [vmem:[%s3014] ss:$4 sm:$0xff] %v1618
  %3208 = vst [vmem:[%s3016] ss:$4 sm:$0xff] %v1619
  %3209 = vst [vmem:[%s3018] ss:$4 sm:$0xff] %v1620
  %v3210 = vld.sshfl [vmem:[#allocation1] sm:$0xff pattern:$0x73625140]
  %v3211 = vld.sshfl [vmem:[#allocation1 + $0x20] sm:$0xff pattern:$0x73625140]
  %3212 = vst [vmem:[#allocation1] ss:$4 sm:$0xff] %v1621
  %3213 = vst [vmem:[%s3006] ss:$4 sm:$0xff] %v1624
  %3214 = vst [vmem:[%s3008] ss:$4 sm:$0xff] %v1625
  %3215 = vst [vmem:[%s3010] ss:$4 sm:$0xff] %v1626
  %3216 = vst [vmem:[%s3012] ss:$4 sm:$0xff] %v1627
  %3217 = vst [vmem:[%s3014] ss:$4 sm:$0xff] %v1628
  %3218 = vst [vmem:[%s3016] ss:$4 sm:$0xff] %v1629
  %3219 = vst [vmem:[%s3018] ss:$4 sm:$0xff] %v1630
  %v3220 = vld.sshfl [vmem:[#allocation1] sm:$0xff pattern:$0x73625140]
  %v3221 = vld.sshfl [vmem:[#allocation1 + $0x20] sm:$0xff pattern:$0x73625140]
  %3222 = vst [vmem:[#allocation1] ss:$4 sm:$0xff] %v1633
  %3223 = vst [vmem:[%s3006] ss:$4 sm:$0xff] %v1634
  %3224 = vst [vmem:[%s3008] ss:$4 sm:$0xff] %v1635
  %3225 = vst [vmem:[%s3010] ss:$4 sm:$0xff] %v1636
  %3226 = vst [vmem:[%s3012] ss:$4 sm:$0xff] %v1637
  %3227 = vst [vmem:[%s3014] ss:$4 sm:$0xff] %v1638
  %3228 = vst [vmem:[%s3016] ss:$4 sm:$0xff] %v1639
  %3229 = vst [vmem:[%s3018] ss:$4 sm:$0xff] %v1642
  %v3230 = vld.sshfl [vmem:[#allocation1] sm:$0xff pattern:$0x73625140]
  %v3231 = vld.sshfl [vmem:[#allocation1 + $0x20] sm:$0xff pattern:$0x73625140]
  %3232 = vst [vmem:[#allocation1] ss:$4 sm:$0xff] %v1643
  %3233 = vst [vmem:[%s3006] ss:$4 sm:$0xff] %v1644
  %3234 = vst [vmem:[%s3008] ss:$4 sm:$0xff] %v1645
  %3235 = vst [vmem:[%s3010] ss:$4 sm:$0xff] %v1646
  %3236 = vst [vmem:[%s3012] ss:$4 sm:$0xff] %v1647
  %3237 = vst [vmem:[%s3014] ss:$4 sm:$0xff] %v1648
  %3238 = vst [vmem:[%s3016] ss:$4 sm:$0xff] %v1651
  %3239 = vst [vmem:[%s3018] ss:$4 sm:$0xff] %v1652
  %v3240 = vld.sshfl [vmem:[#allocation1] sm:$0xff pattern:$0x73625140]
  %v3241 = vld.sshfl [vmem:[#allocation1 + $0x20] sm:$0xff pattern:$0x73625140]
  %3242 = vst [vmem:[#allocation1] ss:$4 sm:$0xff] %v1653
  %3243 = vst [vmem:[%s3006] ss:$4 sm:$0xff] %v1654
  %3244 = vst [vmem:[%s3008] ss:$4 sm:$0xff] %v1655
  %3245 = vst [vmem:[%s3010] ss:$4 sm:$0xff] %v1656
  %3246 = vst [vmem:[%s3012] ss:$4 sm:$0xff] %v1657
  %3247 = vst [vmem:[%s3014] ss:$4 sm:$0xff] %v1660
  %3248 = vst [vmem:[%s3016] ss:$4 sm:$0xff] %v1661
  %3249 = vst [vmem:[%s3018] ss:$4 sm:$0xff] %v1662
  %v3250 = vld.sshfl [vmem:[#allocation1] sm:$0xff pattern:$0x73625140]
  %v3251 = vld.sshfl [vmem:[#allocation1 + $0x20] sm:$0xff pattern:$0x73625140]
  %3252 = vst [vmem:[#allocation1] ss:$4 sm:$0xff] %v1663
  %3253 = vst [vmem:[%s3006] ss:$4 sm:$0xff] %v1664
  %3254 = vst [vmem:[%s3008] ss:$4 sm:$0xff] %v1665
  %3255 = vst [vmem:[%s3010] ss:$4 sm:$0xff] %v1666
  %v3256 = vld.sshfl [vmem:[#allocation1] sm:$0xff pattern:$0x73625140]
  %3257 = vrot.lane.b32.xlu0 %v3020, 16
  %v3258 = vpop.permute.xlu0 %3257
  %3259 = vrot.lane.b32.xlu0 %v3021, 16
  %v3260 = vpop.permute.xlu0 %3259
  %3261 = vrot.lane.b32.xlu0 %v3030, 16
  %v3262 = vpop.permute.xlu0 %3261
  %3263 = vrot.lane.b32.xlu0 %v3031, 16
  %v3264 = vpop.permute.xlu0 %3263
  %3265 = vrot.lane.b32.xlu0 %v3040, 16
  %v3266 = vpop.permute.xlu0 %3265
  %3267 = vrot.lane.b32.xlu0 %v3041, 16
  %v3268 = vpop.permute.xlu0 %3267
  %3269 = vrot.lane.b32.xlu0 %v3050, 16
  %v3270 = vpop.permute.xlu0 %3269
  %3271 = vrot.lane.b32.xlu0 %v3051, 16
  %v3272 = vpop.permute.xlu0 %3271
  %3273 = vrot.lane.b32.xlu0 %v3060, 16
  %v3274 = vpop.permute.xlu0 %3273
  %3275 = vrot.lane.b32.xlu0 %v3061, 16
  %v3276 = vpop.permute.xlu0 %3275
  %3277 = vrot.lane.b32.xlu0 %v3070, 16
  %v3278 = vpop.permute.xlu0 %3277
  %3279 = vrot.lane.b32.xlu0 %v3071, 16
  %v3280 = vpop.permute.xlu0 %3279
  %3281 = vrot.lane.b32.xlu0 %v3080, 16
  %v3282 = vpop.permute.xlu0 %3281
  %3283 = vrot.lane.b32.xlu0 %v3081, 16
  %v3284 = vpop.permute.xlu0 %3283
  %3285 = vrot.lane.b32.xlu0 %v3090, 16
  %v3286 = vpop.permute.xlu0 %3285
  %3287 = vrot.lane.b32.xlu0 %v3091, 16
  %v3288 = vpop.permute.xlu0 %3287
  %3289 = vrot.lane.b32.xlu0 %v3100, 16
  %v3290 = vpop.permute.xlu0 %3289
  %3291 = vrot.lane.b32.xlu0 %v3101, 16
  %v3292 = vpop.permute.xlu0 %3291
  %3293 = vrot.lane.b32.xlu0 %v3110, 16
  %v3294 = vpop.permute.xlu0 %3293
  %3295 = vrot.lane.b32.xlu0 %v3111, 16
  %v3296 = vpop.permute.xlu0 %3295
  %3297 = vrot.lane.b32.xlu0 %v3120, 16
  %v3298 = vpop.permute.xlu0 %3297
  %3299 = vrot.lane.b32.xlu0 %v3121, 16
  %v3300 = vpop.permute.xlu0 %3299
  %3301 = vrot.lane.b32.xlu0 %v3130, 16
  %v3302 = vpop.permute.xlu0 %3301
  %3303 = vrot.lane.b32.xlu0 %v3131, 16
  %v3304 = vpop.permute.xlu0 %3303
  %3305 = vrot.lane.b32.xlu0 %v3140, 16
  %v3306 = vpop.permute.xlu0 %3305
  %3307 = vrot.lane.b32.xlu0 %v3141, 16
  %v3308 = vpop.permute.xlu0 %3307
  %3309 = vrot.lane.b32.xlu0 %v3150, 16
  %v3310 = vpop.permute.xlu0 %3309
  %3311 = vrot.lane.b32.xlu0 %v3151, 16
  %v3312 = vpop.permute.xlu0 %3311
  %3313 = vrot.lane.b32.xlu0 %v3160, 16
  %v3314 = vpop.permute.xlu0 %3313
  %3315 = vrot.lane.b32.xlu0 %v3161, 16
  %v3316 = vpop.permute.xlu0 %3315
  %3317 = vrot.lane.b32.xlu0 %v3170, 16
  %v3318 = vpop.permute.xlu0 %3317
  %3319 = vrot.lane.b32.xlu0 %v3171, 16
  %v3320 = vpop.permute.xlu0 %3319
  %3321 = vrot.lane.b32.xlu0 %v3180, 16
  %v3322 = vpop.permute.xlu0 %3321
  %3323 = vrot.lane.b32.xlu0 %v3181, 16
  %v3324 = vpop.permute.xlu0 %3323
  %3325 = vrot.lane.b32.xlu0 %v3190, 16
  %v3326 = vpop.permute.xlu0 %3325
  %3327 = vrot.lane.b32.xlu0 %v3191, 16
  %v3328 = vpop.permute.xlu0 %3327
  %3329 = vrot.lane.b32.xlu0 %v3200, 16
  %v3330 = vpop.permute.xlu0 %3329
  %3331 = vrot.lane.b32.xlu0 %v3201, 16
  %v3332 = vpop.permute.xlu0 %3331
  %3333 = vrot.lane.b32.xlu0 %v3210, 16
  %v3334 = vpop.permute.xlu0 %3333
  %3335 = vrot.lane.b32.xlu0 %v3211, 16
  %v3336 = vpop.permute.xlu0 %3335
  %3337 = vrot.lane.b32.xlu0 %v3220, 16
  %v3338 = vpop.permute.xlu0 %3337
  %3339 = vrot.lane.b32.xlu0 %v3221, 16
  %v3340 = vpop.permute.xlu0 %3339
  %3341 = vrot.lane.b32.xlu0 %v3230, 16
  %v3342 = vpop.permute.xlu0 %3341
  %3343 = vrot.lane.b32.xlu0 %v3231, 16
  %v3344 = vpop.permute.xlu0 %3343
  %3345 = vrot.lane.b32.xlu0 %v3240, 16
  %v3346 = vpop.permute.xlu0 %3345
  %3347 = vrot.lane.b32.xlu0 %v3241, 16
  %v3348 = vpop.permute.xlu0 %3347
  %3349 = vrot.lane.b32.xlu0 %v3250, 16
  %v3350 = vpop.permute.xlu0 %3349
  %3351 = vrot.lane.b32.xlu0 %v3251, 16
  %v3352 = vpop.permute.xlu0 %3351
  %3353 = vrot.lane.b32.xlu0 %v3256, 16
  %v3354 = vpop.permute.xlu0 %3353
  %3404 = vst [vmem:[#allocation1] ss:$4 sm:$0xff] %v22
  %s3405 = scalar_lea.vmem [#allocation1], 1
  %3406 = vst [vmem:[%s3405] ss:$4 sm:$0xff] %v622
  %s3407 = scalar_lea.vmem [#allocation1], 2
  %3408 = vst [vmem:[%s3407] ss:$4 sm:$0xff] %v623
  %s3409 = scalar_lea.vmem [#allocation1], 3
  %3410 = vst [vmem:[%s3409] ss:$4 sm:$0xff] %v624
  %s3411 = scalar_lea.vmem [#allocation1], 32
  %3412 = vst [vmem:[%s3411] ss:$4 sm:$0xff] %v23
  %s3413 = scalar_lea.vmem [#allocation1], 33
  %3414 = vst [vmem:[%s3413] ss:$4 sm:$0xff] %v625
  %s3415 = scalar_lea.vmem [#allocation1], 34
  %3416 = vst [vmem:[%s3415] ss:$4 sm:$0xff] %v626
  %s3417 = scalar_lea.vmem [#allocation1], 35
  %3418 = vst [vmem:[%s3417] ss:$4 sm:$0xff] %v24
  %v3419 = vld.sshfl [vmem:[#allocation1] sm:$0xff pattern:$0x73625140]
  %v3420 = vld.sshfl [vmem:[#allocation1 + $0x20] sm:$0xff pattern:$0x73625140]
  %3421 = vst [vmem:[#allocation1] ss:$4 sm:$0xff] %v627
  %3422 = vst [vmem:[%s3405] ss:$4 sm:$0xff] %v628
  %3423 = vst [vmem:[%s3407] ss:$4 sm:$0xff] %v629
  %3424 = vst [vmem:[%s3409] ss:$4 sm:$0xff] %v25
  %3425 = vst [vmem:[%s3411] ss:$4 sm:$0xff] %v630
  %3426 = vst [vmem:[%s3413] ss:$4 sm:$0xff] %v631
  %3427 = vst [vmem:[%s3415] ss:$4 sm:$0xff] %v26
  %3428 = vst [vmem:[%s3417] ss:$4 sm:$0xff] %v632
  %v3429 = vld.sshfl [vmem:[#allocation1] sm:$0xff pattern:$0x73625140]
  %v3430 = vld.sshfl [vmem:[#allocation1 + $0x20] sm:$0xff pattern:$0x73625140]
  %3431 = vst [vmem:[#allocation1] ss:$4 sm:$0xff] %v633
  %3432 = vst [vmem:[%s3405] ss:$4 sm:$0xff] %v634
  %3433 = vst [vmem:[%s3407] ss:$4 sm:$0xff] %v27
  %3434 = vst [vmem:[%s3409] ss:$4 sm:$0xff] %v635
  %3435 = vst [vmem:[%s3411] ss:$4 sm:$0xff] %v636
  %3436 = vst [vmem:[%s3413] ss:$4 sm:$0xff] %v28
  %3437 = vst [vmem:[%s3415] ss:$4 sm:$0xff] %v637
  %3438 = vst [vmem:[%s3417] ss:$4 sm:$0xff] %v638
  %v3439 = vld.sshfl [vmem:[#allocation1] sm:$0xff pattern:$0x73625140]
  %v3440 = vld.sshfl [vmem:[#allocation1 + $0x20] sm:$0xff pattern:$0x73625140]
  %3441 = vst [vmem:[#allocation1] ss:$4 sm:$0xff] %v639
  %3442 = vst [vmem:[%s3405] ss:$4 sm:$0xff] %v29
  %3443 = vst [vmem:[%s3407] ss:$4 sm:$0xff] %v640
  %3444 = vst [vmem:[%s3409] ss:$4 sm:$0xff] %v641
  %3445 = vst [vmem:[%s3411] ss:$4 sm:$0xff] %v30
  %3446 = vst [vmem:[%s3413] ss:$4 sm:$0xff] %v642
  %3447 = vst [vmem:[%s3415] ss:$4 sm:$0xff] %v643
  %3448 = vst [vmem:[%s3417] ss:$4 sm:$0xff] %v644
  %v3449 = vld.sshfl [vmem:[#allocation1] sm:$0xff pattern:$0x73625140]
  %v3450 = vld.sshfl [vmem:[#allocation1 + $0x20] sm:$0xff pattern:$0x73625140]
  %3451 = vst [vmem:[#allocation1] ss:$4 sm:$0xff] %v31
  %3452 = vst [vmem:[%s3405] ss:$4 sm:$0xff] %v645
  %3453 = vst [vmem:[%s3407] ss:$4 sm:$0xff] %v646
  %3454 = vst [vmem:[%s3409] ss:$4 sm:$0xff] %v32
  %3455 = vst [vmem:[%s3411] ss:$4 sm:$0xff] %v647
  %3456 = vst [vmem:[%s3413] ss:$4 sm:$0xff] %v648
  %3457 = vst [vmem:[%s3415] ss:$4 sm:$0xff] %v649
  %3458 = vst [vmem:[%s3417] ss:$4 sm:$0xff] %v33
  %v3459 = vld.sshfl [vmem:[#allocation1] sm:$0xff pattern:$0x73625140]
  %v3460 = vld.sshfl [vmem:[#allocation1 + $0x20] sm:$0xff pattern:$0x73625140]
  %3461 = vst [vmem:[#allocation1] ss:$4 sm:$0xff] %v650
  %3462 = vst [vmem:[%s3405] ss:$4 sm:$0xff] %v651
  %3463 = vst [vmem:[%s3407] ss:$4 sm:$0xff] %v34
  %3464 = vst [vmem:[%s3409] ss:$4 sm:$0xff] %v652
  %3465 = vst [vmem:[%s3411] ss:$4 sm:$0xff] %v653
  %3466 = vst [vmem:[%s3413] ss:$4 sm:$0xff] %v654
  %3467 = vst [vmem:[%s3415] ss:$4 sm:$0xff] %v35
  %3468 = vst [vmem:[%s3417] ss:$4 sm:$0xff] %v655
  %v3469 = vld.sshfl [vmem:[#allocation1] sm:$0xff pattern:$0x73625140]
  %v3470 = vld.sshfl [vmem:[#allocation1 + $0x20] sm:$0xff pattern:$0x73625140]
  %3471 = vst [vmem:[#allocation1] ss:$4 sm:$0xff] %v656
  %3472 = vst [vmem:[%s3405] ss:$4 sm:$0xff] %v36
  %3473 = vst [vmem:[%s3407] ss:$4 sm:$0xff] %v657
  %3474 = vst [vmem:[%s3409] ss:$4 sm:$0xff] %v658
  %3475 = vst [vmem:[%s3411] ss:$4 sm:$0xff] %v659
  %3476 = vst [vmem:[%s3413] ss:$4 sm:$0xff] %v37
  %3477 = vst [vmem:[%s3415] ss:$4 sm:$0xff] %v660
  %3478 = vst [vmem:[%s3417] ss:$4 sm:$0xff] %v661
  %v3479 = vld.sshfl [vmem:[#allocation1] sm:$0xff pattern:$0x73625140]
  %v3480 = vld.sshfl [vmem:[#allocation1 + $0x20] sm:$0xff pattern:$0x73625140]
  %3481 = vst [vmem:[#allocation1] ss:$4 sm:$0xff] %v38
  %3482 = vst [vmem:[%s3405] ss:$4 sm:$0xff] %v662
  %3483 = vst [vmem:[%s3407] ss:$4 sm:$0xff] %v663
  %3484 = vst [vmem:[%s3409] ss:$4 sm:$0xff] %v664
  %3485 = vst [vmem:[%s3411] ss:$4 sm:$0xff] %v39
  %3486 = vst [vmem:[%s3413] ss:$4 sm:$0xff] %v665
  %3487 = vst [vmem:[%s3415] ss:$4 sm:$0xff] %v666
  %3488 = vst [vmem:[%s3417] ss:$4 sm:$0xff] %v40
  %v3489 = vld.sshfl [vmem:[#allocation1] sm:$0xff pattern:$0x73625140]
  %v3490 = vld.sshfl [vmem:[#allocation1 + $0x20] sm:$0xff pattern:$0x73625140]
  %3491 = vst [vmem:[#allocation1] ss:$4 sm:$0xff] %v667
  %3492 = vst [vmem:[%s3405] ss:$4 sm:$0xff] %v668
  %3493 = vst [vmem:[%s3407] ss:$4 sm:$0xff] %v669
  %3494 = vst [vmem:[%s3409] ss:$4 sm:$0xff] %v41
  %3495 = vst [vmem:[%s3411] ss:$4 sm:$0xff] %v670
  %3496 = vst [vmem:[%s3413] ss:$4 sm:$0xff] %v671
  %3497 = vst [vmem:[%s3415] ss:$4 sm:$0xff] %v42
  %3498 = vst [vmem:[%s3417] ss:$4 sm:$0xff] %v672
  %v3499 = vld.sshfl [vmem:[#allocation1] sm:$0xff pattern:$0x73625140]
  %v3500 = vld.sshfl [vmem:[#allocation1 + $0x20] sm:$0xff pattern:$0x73625140]
  %3501 = vst [vmem:[#allocation1] ss:$4 sm:$0xff] %v673
  %3502 = vst [vmem:[%s3405] ss:$4 sm:$0xff] %v674
  %3503 = vst [vmem:[%s3407] ss:$4 sm:$0xff] %v43
  %3504 = vst [vmem:[%s3409] ss:$4 sm:$0xff] %v675
  %3505 = vst [vmem:[%s3411] ss:$4 sm:$0xff] %v676
  %3506 = vst [vmem:[%s3413] ss:$4 sm:$0xff] %v44
  %3507 = vst [vmem:[%s3415] ss:$4 sm:$0xff] %v677
  %3508 = vst [vmem:[%s3417] ss:$4 sm:$0xff] %v678
  %v3509 = vld.sshfl [vmem:[#allocation1] sm:$0xff pattern:$0x73625140]
  %v3510 = vld.sshfl [vmem:[#allocation1 + $0x20] sm:$0xff pattern:$0x73625140]
  %3511 = vst [vmem:[#allocation1] ss:$4 sm:$0xff] %v679
  %3512 = vst [vmem:[%s3405] ss:$4 sm:$0xff] %v45
  %3513 = vst [vmem:[%s3407] ss:$4 sm:$0xff] %v680
  %3514 = vst [vmem:[%s3409] ss:$4 sm:$0xff] %v681
  %3515 = vst [vmem:[%s3411] ss:$4 sm:$0xff] %v46
  %3516 = vst [vmem:[%s3413] ss:$4 sm:$0xff] %v682
  %3517 = vst [vmem:[%s3415] ss:$4 sm:$0xff] %v683
  %3518 = vst [vmem:[%s3417] ss:$4 sm:$0xff] %v684
  %v3519 = vld.sshfl [vmem:[#allocation1] sm:$0xff pattern:$0x73625140]
  %v3520 = vld.sshfl [vmem:[#allocation1 + $0x20] sm:$0xff pattern:$0x73625140]
  %3521 = vst [vmem:[#allocation1] ss:$4 sm:$0xff] %v47
  %3522 = vst [vmem:[%s3405] ss:$4 sm:$0xff] %v685
  %3523 = vst [vmem:[%s3407] ss:$4 sm:$0xff] %v686
  %3524 = vst [vmem:[%s3409] ss:$4 sm:$0xff] %v48
  %3525 = vst [vmem:[%s3411] ss:$4 sm:$0xff] %v1671
  %3526 = vst [vmem:[%s3413] ss:$4 sm:$0xff] %v1672
  %3527 = vst [vmem:[%s3415] ss:$4 sm:$0xff] %v1673
  %3528 = vst [vmem:[%s3417] ss:$4 sm:$0xff] %v49
  %v3529 = vld.sshfl [vmem:[#allocation1] sm:$0xff pattern:$0x73625140]
  %v3530 = vld.sshfl [vmem:[#allocation1 + $0x20] sm:$0xff pattern:$0x73625140]
  %3531 = vst [vmem:[#allocation1] ss:$4 sm:$0xff] %v1674
  %3532 = vst [vmem:[%s3405] ss:$4 sm:$0xff] %v1675
  %3533 = vst [vmem:[%s3407] ss:$4 sm:$0xff] %v54
  %3534 = vst [vmem:[%s3409] ss:$4 sm:$0xff] %v692
  %3535 = vst [vmem:[%s3411] ss:$4 sm:$0xff] %v693
  %3536 = vst [vmem:[%s3413] ss:$4 sm:$0xff] %v694
  %3537 = vst [vmem:[%s3415] ss:$4 sm:$0xff] %v55
  %3538 = vst [vmem:[%s3417] ss:$4 sm:$0xff] %v695
  %v3539 = vld.sshfl [vmem:[#allocation1] sm:$0xff pattern:$0x73625140]
  %v3540 = vld.sshfl [vmem:[#allocation1 + $0x20] sm:$0xff pattern:$0x73625140]
  %3541 = vst [vmem:[#allocation1] ss:$4 sm:$0xff] %v696
  %3542 = vst [vmem:[%s3405] ss:$4 sm:$0xff] %v56
  %3543 = vst [vmem:[%s3407] ss:$4 sm:$0xff] %v697
  %3544 = vst [vmem:[%s3409] ss:$4 sm:$0xff] %v698
  %3545 = vst [vmem:[%s3411] ss:$4 sm:$0xff] %v699
  %3546 = vst [vmem:[%s3413] ss:$4 sm:$0xff] %v57
  %3547 = vst [vmem:[%s3415] ss:$4 sm:$0xff] %v700
  %3548 = vst [vmem:[%s3417] ss:$4 sm:$0xff] %v701
  %v3549 = vld.sshfl [vmem:[#allocation1] sm:$0xff pattern:$0x73625140]
  %v3550 = vld.sshfl [vmem:[#allocation1 + $0x20] sm:$0xff pattern:$0x73625140]
  %3551 = vst [vmem:[#allocation1] ss:$4 sm:$0xff] %v58
  %3552 = vst [vmem:[%s3405] ss:$4 sm:$0xff] %v702
  %3553 = vst [vmem:[%s3407] ss:$4 sm:$0xff] %v703
  %3554 = vst [vmem:[%s3409] ss:$4 sm:$0xff] %v704
  %3555 = vst [vmem:[%s3411] ss:$4 sm:$0xff] %v59
  %3556 = vst [vmem:[%s3413] ss:$4 sm:$0xff] %v705
  %3557 = vst [vmem:[%s3415] ss:$4 sm:$0xff] %v706
  %3558 = vst [vmem:[%s3417] ss:$4 sm:$0xff] %v60
  %v3559 = vld.sshfl [vmem:[#allocation1] sm:$0xff pattern:$0x73625140]
  %v3560 = vld.sshfl [vmem:[#allocation1 + $0x20] sm:$0xff pattern:$0x73625140]
  %3561 = vst [vmem:[#allocation1] ss:$4 sm:$0xff] %v707
  %3562 = vst [vmem:[%s3405] ss:$4 sm:$0xff] %v708
  %3563 = vst [vmem:[%s3407] ss:$4 sm:$0xff] %v709
  %3564 = vst [vmem:[%s3409] ss:$4 sm:$0xff] %v61
  %3565 = vst [vmem:[%s3411] ss:$4 sm:$0xff] %v710
  %3566 = vst [vmem:[%s3413] ss:$4 sm:$0xff] %v711
  %3567 = vst [vmem:[%s3415] ss:$4 sm:$0xff] %v62
  %3568 = vst [vmem:[%s3417] ss:$4 sm:$0xff] %v712
  %v3569 = vld.sshfl [vmem:[#allocation1] sm:$0xff pattern:$0x73625140]
  %v3570 = vld.sshfl [vmem:[#allocation1 + $0x20] sm:$0xff pattern:$0x73625140]
  %3571 = vst [vmem:[#allocation1] ss:$4 sm:$0xff] %v713
  %3572 = vst [vmem:[%s3405] ss:$4 sm:$0xff] %v714
  %3573 = vst [vmem:[%s3407] ss:$4 sm:$0xff] %v63
  %3574 = vst [vmem:[%s3409] ss:$4 sm:$0xff] %v715
  %3575 = vst [vmem:[%s3411] ss:$4 sm:$0xff] %v716
  %3576 = vst [vmem:[%s3413] ss:$4 sm:$0xff] %v64
  %3577 = vst [vmem:[%s3415] ss:$4 sm:$0xff] %v717
  %3578 = vst [vmem:[%s3417] ss:$4 sm:$0xff] %v718
  %v3579 = vld.sshfl [vmem:[#allocation1] sm:$0xff pattern:$0x73625140]
  %v3580 = vld.sshfl [vmem:[#allocation1 + $0x20] sm:$0xff pattern:$0x73625140]
  %3581 = vst [vmem:[#allocation1] ss:$4 sm:$0xff] %v719
  %3582 = vst [vmem:[%s3405] ss:$4 sm:$0xff] %v65
  %3583 = vst [vmem:[%s3407] ss:$4 sm:$0xff] %v720
  %3584 = vst [vmem:[%s3409] ss:$4 sm:$0xff] %v721
  %3585 = vst [vmem:[%s3411] ss:$4 sm:$0xff] %v66
  %3586 = vst [vmem:[%s3413] ss:$4 sm:$0xff] %v722
  %3587 = vst [vmem:[%s3415] ss:$4 sm:$0xff] %v723
  %3588 = vst [vmem:[%s3417] ss:$4 sm:$0xff] %v724
  %v3589 = vld.sshfl [vmem:[#allocation1] sm:$0xff pattern:$0x73625140]
  %v3590 = vld.sshfl [vmem:[#allocation1 + $0x20] sm:$0xff pattern:$0x73625140]
  %3591 = vst [vmem:[#allocation1] ss:$4 sm:$0xff] %v67
  %3592 = vst [vmem:[%s3405] ss:$4 sm:$0xff] %v725
  %3593 = vst [vmem:[%s3407] ss:$4 sm:$0xff] %v726
  %3594 = vst [vmem:[%s3409] ss:$4 sm:$0xff] %v68
  %3595 = vst [vmem:[%s3411] ss:$4 sm:$0xff] %v727
  %3596 = vst [vmem:[%s3413] ss:$4 sm:$0xff] %v728
  %3597 = vst [vmem:[%s3415] ss:$4 sm:$0xff] %v729
  %3598 = vst [vmem:[%s3417] ss:$4 sm:$0xff] %v69
  %v3599 = vld.sshfl [vmem:[#allocation1] sm:$0xff pattern:$0x73625140]
  %v3600 = vld.sshfl [vmem:[#allocation1 + $0x20] sm:$0xff pattern:$0x73625140]
  %3601 = vst [vmem:[#allocation1] ss:$4 sm:$0xff] %v730
  %3602 = vst [vmem:[%s3405] ss:$4 sm:$0xff] %v731
  %3603 = vst [vmem:[%s3407] ss:$4 sm:$0xff] %v70
  %3604 = vst [vmem:[%s3409] ss:$4 sm:$0xff] %v732
  %3605 = vst [vmem:[%s3411] ss:$4 sm:$0xff] %v733
  %3606 = vst [vmem:[%s3413] ss:$4 sm:$0xff] %v734
  %3607 = vst [vmem:[%s3415] ss:$4 sm:$0xff] %v71
  %3608 = vst [vmem:[%s3417] ss:$4 sm:$0xff] %v735
  %v3609 = vld.sshfl [vmem:[#allocation1] sm:$0xff pattern:$0x73625140]
  %v3610 = vld.sshfl [vmem:[#allocation1 + $0x20] sm:$0xff pattern:$0x73625140]
  %3611 = vst [vmem:[#allocation1] ss:$4 sm:$0xff] %v736
  %3612 = vst [vmem:[%s3405] ss:$4 sm:$0xff] %v72
  %3613 = vst [vmem:[%s3407] ss:$4 sm:$0xff] %v737
  %3614 = vst [vmem:[%s3409] ss:$4 sm:$0xff] %v738
  %3615 = vst [vmem:[%s3411] ss:$4 sm:$0xff] %v739
  %3616 = vst [vmem:[%s3413] ss:$4 sm:$0xff] %v73
  %3617 = vst [vmem:[%s3415] ss:$4 sm:$0xff] %v740
  %3618 = vst [vmem:[%s3417] ss:$4 sm:$0xff] %v741
  %v3619 = vld.sshfl [vmem:[#allocation1] sm:$0xff pattern:$0x73625140]
  %v3620 = vld.sshfl [vmem:[#allocation1 + $0x20] sm:$0xff pattern:$0x73625140]
  %3621 = vst [vmem:[#allocation1] ss:$4 sm:$0xff] %v74
  %3622 = vst [vmem:[%s3405] ss:$4 sm:$0xff] %v742
  %3623 = vst [vmem:[%s3407] ss:$4 sm:$0xff] %v743
  %3624 = vst [vmem:[%s3409] ss:$4 sm:$0xff] %v744
  %3625 = vst [vmem:[%s3411] ss:$4 sm:$0xff] %v75
  %3626 = vst [vmem:[%s3413] ss:$4 sm:$0xff] %v745
  %3627 = vst [vmem:[%s3415] ss:$4 sm:$0xff] %v746
  %3628 = vst [vmem:[%s3417] ss:$4 sm:$0xff] %v76
  %v3629 = vld.sshfl [vmem:[#allocation1] sm:$0xff pattern:$0x73625140]
  %v3630 = vld.sshfl [vmem:[#allocation1 + $0x20] sm:$0xff pattern:$0x73625140]
  %3631 = vst [vmem:[#allocation1] ss:$4 sm:$0xff] %v747
  %3632 = vst [vmem:[%s3405] ss:$4 sm:$0xff] %v748
  %3633 = vst [vmem:[%s3407] ss:$4 sm:$0xff] %v749
  %3634 = vst [vmem:[%s3409] ss:$4 sm:$0xff] %v77
  %3635 = vst [vmem:[%s3411] ss:$4 sm:$0xff] %v750
  %3636 = vst [vmem:[%s3413] ss:$4 sm:$0xff] %v751
  %3637 = vst [vmem:[%s3415] ss:$4 sm:$0xff] %v78
  %3638 = vst [vmem:[%s3417] ss:$4 sm:$0xff] %v752
  %v3639 = vld.sshfl [vmem:[#allocation1] sm:$0xff pattern:$0x73625140]
  %v3640 = vld.sshfl [vmem:[#allocation1 + $0x20] sm:$0xff pattern:$0x73625140]
  %3641 = vst [vmem:[#allocation1] ss:$4 sm:$0xff] %v753
  %3642 = vst [vmem:[%s3405] ss:$4 sm:$0xff] %v754
  %3643 = vst [vmem:[%s3407] ss:$4 sm:$0xff] %v79
  %3644 = vst [vmem:[%s3409] ss:$4 sm:$0xff] %v755
  %3645 = vst [vmem:[%s3411] ss:$4 sm:$0xff] %v756
  %3646 = vst [vmem:[%s3413] ss:$4 sm:$0xff] %v80
  %3647 = vst [vmem:[%s3415] ss:$4 sm:$0xff] %v1676
  %3648 = vst [vmem:[%s3417] ss:$4 sm:$0xff] %v1677
  %v3649 = vld.sshfl [vmem:[#allocation1] sm:$0xff pattern:$0x73625140]
  %v3650 = vld.sshfl [vmem:[#allocation1 + $0x20] sm:$0xff pattern:$0x73625140]
  %3651 = vst [vmem:[#allocation1] ss:$4 sm:$0xff] %v1678
  %3652 = vst [vmem:[%s3405] ss:$4 sm:$0xff] %v81
  %3653 = vst [vmem:[%s3407] ss:$4 sm:$0xff] %v1679
  %3654 = vst [vmem:[%s3409] ss:$4 sm:$0xff] %v1680
  %v3655 = vld.sshfl [vmem:[#allocation1] sm:$0xff pattern:$0x73625140]
  %3656 = vrot.lane.b32.xlu0 %v3419, 24
  %v3657 = vpop.permute.xlu0 %3656
  %3658 = vrot.lane.b32.xlu0 %v3420, 24
  %v3659 = vpop.permute.xlu0 %3658
  %3660 = vrot.lane.b32.xlu0 %v3429, 24
  %v3661 = vpop.permute.xlu0 %3660
  %3662 = vrot.lane.b32.xlu0 %v3430, 24
  %v3663 = vpop.permute.xlu0 %3662
  %3664 = vrot.lane.b32.xlu0 %v3439, 24
  %v3665 = vpop.permute.xlu0 %3664
  %3666 = vrot.lane.b32.xlu0 %v3440, 24
  %v3667 = vpop.permute.xlu0 %3666
  %3668 = vrot.lane.b32.xlu0 %v3449, 24
  %v3669 = vpop.permute.xlu0 %3668
  %3670 = vrot.lane.b32.xlu0 %v3450, 24
  %v3671 = vpop.permute.xlu0 %3670
  %3672 = vrot.lane.b32.xlu0 %v3459, 24
  %v3673 = vpop.permute.xlu0 %3672
  %3674 = vrot.lane.b32.xlu0 %v3460, 24
  %v3675 = vpop.permute.xlu0 %3674
  %3676 = vrot.lane.b32.xlu0 %v3469, 24
  %v3677 = vpop.permute.xlu0 %3676
  %3678 = vrot.lane.b32.xlu0 %v3470, 24
  %v3679 = vpop.permute.xlu0 %3678
  %3680 = vrot.lane.b32.xlu0 %v3479, 24
  %v3681 = vpop.permute.xlu0 %3680
  %3682 = vrot.lane.b32.xlu0 %v3480, 24
  %v3683 = vpop.permute.xlu0 %3682
  %3684 = vrot.lane.b32.xlu0 %v3489, 24
  %v3685 = vpop.permute.xlu0 %3684
  %3686 = vrot.lane.b32.xlu0 %v3490, 24
  %v3687 = vpop.permute.xlu0 %3686
  %3688 = vrot.lane.b32.xlu0 %v3499, 24
  %v3689 = vpop.permute.xlu0 %3688
  %3690 = vrot.lane.b32.xlu0 %v3500, 24
  %v3691 = vpop.permute.xlu0 %3690
  %3692 = vrot.lane.b32.xlu0 %v3509, 24
  %v3693 = vpop.permute.xlu0 %3692
  %3694 = vrot.lane.b32.xlu0 %v3510, 24
  %v3695 = vpop.permute.xlu0 %3694
  %3696 = vrot.lane.b32.xlu0 %v3519, 24
  %v3697 = vpop.permute.xlu0 %3696
  %3698 = vrot.lane.b32.xlu0 %v3520, 24
  %v3699 = vpop.permute.xlu0 %3698
  %3700 = vrot.lane.b32.xlu0 %v3529, 24
  %v3701 = vpop.permute.xlu0 %3700
  %3702 = vrot.lane.b32.xlu0 %v3530, 24
  %v3703 = vpop.permute.xlu0 %3702
  %3704 = vrot.lane.b32.xlu0 %v3539, 24
  %v3705 = vpop.permute.xlu0 %3704
  %3706 = vrot.lane.b32.xlu0 %v3540, 24
  %v3707 = vpop.permute.xlu0 %3706
  %3708 = vrot.lane.b32.xlu0 %v3549, 24
  %v3709 = vpop.permute.xlu0 %3708
  %3710 = vrot.lane.b32.xlu0 %v3550, 24
  %v3711 = vpop.permute.xlu0 %3710
  %3712 = vrot.lane.b32.xlu0 %v3559, 24
  %v3713 = vpop.permute.xlu0 %3712
  %3714 = vrot.lane.b32.xlu0 %v3560, 24
  %v3715 = vpop.permute.xlu0 %3714
  %3716 = vrot.lane.b32.xlu0 %v3569, 24
  %v3717 = vpop.permute.xlu0 %3716
  %3718 = vrot.lane.b32.xlu0 %v3570, 24
  %v3719 = vpop.permute.xlu0 %3718
  %3720 = vrot.lane.b32.xlu0 %v3579, 24
  %v3721 = vpop.permute.xlu0 %3720
  %3722 = vrot.lane.b32.xlu0 %v3580, 24
  %v3723 = vpop.permute.xlu0 %3722
  %3724 = vrot.lane.b32.xlu0 %v3589, 24
  %v3725 = vpop.permute.xlu0 %3724
  %3726 = vrot.lane.b32.xlu0 %v3590, 24
  %v3727 = vpop.permute.xlu0 %3726
  %3728 = vrot.lane.b32.xlu0 %v3599, 24
  %v3729 = vpop.permute.xlu0 %3728
  %3730 = vrot.lane.b32.xlu0 %v3600, 24
  %v3731 = vpop.permute.xlu0 %3730
  %3732 = vrot.lane.b32.xlu0 %v3609, 24
  %v3733 = vpop.permute.xlu0 %3732
  %3734 = vrot.lane.b32.xlu0 %v3610, 24
  %v3735 = vpop.permute.xlu0 %3734
  %3736 = vrot.lane.b32.xlu0 %v3619, 24
  %v3737 = vpop.permute.xlu0 %3736
  %3738 = vrot.lane.b32.xlu0 %v3620, 24
  %v3739 = vpop.permute.xlu0 %3738
  %3740 = vrot.lane.b32.xlu0 %v3629, 24
  %v3741 = vpop.permute.xlu0 %3740
  %3742 = vrot.lane.b32.xlu0 %v3630, 24
  %v3743 = vpop.permute.xlu0 %3742
  %3744 = vrot.lane.b32.xlu0 %v3639, 24
  %v3745 = vpop.permute.xlu0 %3744
  %3746 = vrot.lane.b32.xlu0 %v3640, 24
  %v3747 = vpop.permute.xlu0 %3746
  %3748 = vrot.lane.b32.xlu0 %v3649, 24
  %v3749 = vpop.permute.xlu0 %3748
  %3750 = vrot.lane.b32.xlu0 %v3650, 24
  %v3751 = vpop.permute.xlu0 %3750
  %3752 = vrot.lane.b32.xlu0 %v3655, 24
  %v3753 = vpop.permute.xlu0 %3752
  %3803 = vst [vmem:[#allocation1] ss:$4 sm:$0xff] %v817
  %s3804 = scalar_lea.vmem [#allocation1], 1
  %3805 = vst [vmem:[%s3804] ss:$4 sm:$0xff] %v820
  %s3806 = scalar_lea.vmem [#allocation1], 2
  %3807 = vst [vmem:[%s3806] ss:$4 sm:$0xff] %v823
  %s3808 = scalar_lea.vmem [#allocation1], 3
  %3809 = vst [vmem:[%s3808] ss:$4 sm:$0xff] %v826
  %s3810 = scalar_lea.vmem [#allocation1], 32
  %3811 = vst [vmem:[%s3810] ss:$4 sm:$0xff] %v829
  %s3812 = scalar_lea.vmem [#allocation1], 33
  %3813 = vst [vmem:[%s3812] ss:$4 sm:$0xff] %v832
  %s3814 = scalar_lea.vmem [#allocation1], 34
  %3815 = vst [vmem:[%s3814] ss:$4 sm:$0xff] %v835
  %s3816 = scalar_lea.vmem [#allocation1], 35
  %3817 = vst [vmem:[%s3816] ss:$4 sm:$0xff] %v839
  %v3818 = vld.sshfl [vmem:[#allocation1] sm:$0xff pattern:$0x73625140]
  %v3819 = vld.sshfl [vmem:[#allocation1 + $0x20] sm:$0xff pattern:$0x73625140]
  %3820 = vst [vmem:[#allocation1] ss:$4 sm:$0xff] %v842
  %3821 = vst [vmem:[%s3804] ss:$4 sm:$0xff] %v845
  %3822 = vst [vmem:[%s3806] ss:$4 sm:$0xff] %v848
  %3823 = vst [vmem:[%s3808] ss:$4 sm:$0xff] %v851
  %3824 = vst [vmem:[%s3810] ss:$4 sm:$0xff] %v854
  %3825 = vst [vmem:[%s3812] ss:$4 sm:$0xff] %v857
  %3826 = vst [vmem:[%s3814] ss:$4 sm:$0xff] %v861
  %3827 = vst [vmem:[%s3816] ss:$4 sm:$0xff] %v864
  %v3828 = vld.sshfl [vmem:[#allocation1] sm:$0xff pattern:$0x73625140]
  %v3829 = vld.sshfl [vmem:[#allocation1 + $0x20] sm:$0xff pattern:$0x73625140]
  %3830 = vst [vmem:[#allocation1] ss:$4 sm:$0xff] %v867
  %3831 = vst [vmem:[%s3804] ss:$4 sm:$0xff] %v870
  %3832 = vst [vmem:[%s3806] ss:$4 sm:$0xff] %v873
  %3833 = vst [vmem:[%s3808] ss:$4 sm:$0xff] %v876
  %3834 = vst [vmem:[%s3810] ss:$4 sm:$0xff] %v879
  %3835 = vst [vmem:[%s3812] ss:$4 sm:$0xff] %v883
  %3836 = vst [vmem:[%s3814] ss:$4 sm:$0xff] %v886
  %3837 = vst [vmem:[%s3816] ss:$4 sm:$0xff] %v889
  %v3838 = vld.sshfl [vmem:[#allocation1] sm:$0xff pattern:$0x73625140]
  %v3839 = vld.sshfl [vmem:[#allocation1 + $0x20] sm:$0xff pattern:$0x73625140]
  %3840 = vst [vmem:[#allocation1] ss:$4 sm:$0xff] %v892
  %3841 = vst [vmem:[%s3804] ss:$4 sm:$0xff] %v895
  %3842 = vst [vmem:[%s3806] ss:$4 sm:$0xff] %v898
  %3843 = vst [vmem:[%s3808] ss:$4 sm:$0xff] %v901
  %3844 = vst [vmem:[%s3810] ss:$4 sm:$0xff] %v905
  %3845 = vst [vmem:[%s3812] ss:$4 sm:$0xff] %v908
  %3846 = vst [vmem:[%s3814] ss:$4 sm:$0xff] %v911
  %3847 = vst [vmem:[%s3816] ss:$4 sm:$0xff] %v914
  %v3848 = vld.sshfl [vmem:[#allocation1] sm:$0xff pattern:$0x73625140]
  %v3849 = vld.sshfl [vmem:[#allocation1 + $0x20] sm:$0xff pattern:$0x73625140]
  %3850 = vst [vmem:[#allocation1] ss:$4 sm:$0xff] %v917
  %3851 = vst [vmem:[%s3804] ss:$4 sm:$0xff] %v920
  %3852 = vst [vmem:[%s3806] ss:$4 sm:$0xff] %v923
  %3853 = vst [vmem:[%s3808] ss:$4 sm:$0xff] %v927
  %3854 = vst [vmem:[%s3810] ss:$4 sm:$0xff] %v930
  %3855 = vst [vmem:[%s3812] ss:$4 sm:$0xff] %v933
  %3856 = vst [vmem:[%s3814] ss:$4 sm:$0xff] %v936
  %3857 = vst [vmem:[%s3816] ss:$4 sm:$0xff] %v939
  %v3858 = vld.sshfl [vmem:[#allocation1] sm:$0xff pattern:$0x73625140]
  %v3859 = vld.sshfl [vmem:[#allocation1 + $0x20] sm:$0xff pattern:$0x73625140]
  %3860 = vst [vmem:[#allocation1] ss:$4 sm:$0xff] %v942
  %3861 = vst [vmem:[%s3804] ss:$4 sm:$0xff] %v945
  %3862 = vst [vmem:[%s3806] ss:$4 sm:$0xff] %v949
  %3863 = vst [vmem:[%s3808] ss:$4 sm:$0xff] %v952
  %3864 = vst [vmem:[%s3810] ss:$4 sm:$0xff] %v955
  %3865 = vst [vmem:[%s3812] ss:$4 sm:$0xff] %v958
  %3866 = vst [vmem:[%s3814] ss:$4 sm:$0xff] %v961
  %3867 = vst [vmem:[%s3816] ss:$4 sm:$0xff] %v964
  %v3868 = vld.sshfl [vmem:[#allocation1] sm:$0xff pattern:$0x73625140]
  %v3869 = vld.sshfl [vmem:[#allocation1 + $0x20] sm:$0xff pattern:$0x73625140]
  %3870 = vst [vmem:[#allocation1] ss:$4 sm:$0xff] %v967
  %3871 = vst [vmem:[%s3804] ss:$4 sm:$0xff] %v971
  %3872 = vst [vmem:[%s3806] ss:$4 sm:$0xff] %v974
  %3873 = vst [vmem:[%s3808] ss:$4 sm:$0xff] %v977
  %3874 = vst [vmem:[%s3810] ss:$4 sm:$0xff] %v980
  %3875 = vst [vmem:[%s3812] ss:$4 sm:$0xff] %v983
  %3876 = vst [vmem:[%s3814] ss:$4 sm:$0xff] %v986
  %3877 = vst [vmem:[%s3816] ss:$4 sm:$0xff] %v989
  %v3878 = vld.sshfl [vmem:[#allocation1] sm:$0xff pattern:$0x73625140]
  %v3879 = vld.sshfl [vmem:[#allocation1 + $0x20] sm:$0xff pattern:$0x73625140]
  %3880 = vst [vmem:[#allocation1] ss:$4 sm:$0xff] %v993
  %3881 = vst [vmem:[%s3804] ss:$4 sm:$0xff] %v996
  %3882 = vst [vmem:[%s3806] ss:$4 sm:$0xff] %v999
  %3883 = vst [vmem:[%s3808] ss:$4 sm:$0xff] %v1002
  %3884 = vst [vmem:[%s3810] ss:$4 sm:$0xff] %v1005
  %3885 = vst [vmem:[%s3812] ss:$4 sm:$0xff] %v1008
  %3886 = vst [vmem:[%s3814] ss:$4 sm:$0xff] %v1011
  %3887 = vst [vmem:[%s3816] ss:$4 sm:$0xff] %v1015
  %v3888 = vld.sshfl [vmem:[#allocation1] sm:$0xff pattern:$0x73625140]
  %v3889 = vld.sshfl [vmem:[#allocation1 + $0x20] sm:$0xff pattern:$0x73625140]
  %3890 = vst [vmem:[#allocation1] ss:$4 sm:$0xff] %v1018
  %3891 = vst [vmem:[%s3804] ss:$4 sm:$0xff] %v1021
  %3892 = vst [vmem:[%s3806] ss:$4 sm:$0xff] %v1024
  %3893 = vst [vmem:[%s3808] ss:$4 sm:$0xff] %v1027
  %3894 = vst [vmem:[%s3810] ss:$4 sm:$0xff] %v1030
  %3895 = vst [vmem:[%s3812] ss:$4 sm:$0xff] %v1033
  %3896 = vst [vmem:[%s3814] ss:$4 sm:$0xff] %v1037
  %3897 = vst [vmem:[%s3816] ss:$4 sm:$0xff] %v1040
  %v3898 = vld.sshfl [vmem:[#allocation1] sm:$0xff pattern:$0x73625140]
  %v3899 = vld.sshfl [vmem:[#allocation1 + $0x20] sm:$0xff pattern:$0x73625140]
  %3900 = vst [vmem:[#allocation1] ss:$4 sm:$0xff] %v1043
  %3901 = vst [vmem:[%s3804] ss:$4 sm:$0xff] %v1046
  %3902 = vst [vmem:[%s3806] ss:$4 sm:$0xff] %v1049
  %3903 = vst [vmem:[%s3808] ss:$4 sm:$0xff] %v1052
  %3904 = vst [vmem:[%s3810] ss:$4 sm:$0xff] %v1055
  %3905 = vst [vmem:[%s3812] ss:$4 sm:$0xff] %v1059
  %3906 = vst [vmem:[%s3814] ss:$4 sm:$0xff] %v1062
  %3907 = vst [vmem:[%s3816] ss:$4 sm:$0xff] %v1065
  %v3908 = vld.sshfl [vmem:[#allocation1] sm:$0xff pattern:$0x73625140]
  %v3909 = vld.sshfl [vmem:[#allocation1 + $0x20] sm:$0xff pattern:$0x73625140]
  %3910 = vst [vmem:[#allocation1] ss:$4 sm:$0xff] %v1068
  %3911 = vst [vmem:[%s3804] ss:$4 sm:$0xff] %v1071
  %3912 = vst [vmem:[%s3806] ss:$4 sm:$0xff] %v1074
  %3913 = vst [vmem:[%s3808] ss:$4 sm:$0xff] %v1077
  %3914 = vst [vmem:[%s3810] ss:$4 sm:$0xff] %v1081
  %3915 = vst [vmem:[%s3812] ss:$4 sm:$0xff] %v1084
  %3916 = vst [vmem:[%s3814] ss:$4 sm:$0xff] %v1087
  %3917 = vst [vmem:[%s3816] ss:$4 sm:$0xff] %v1090
  %v3918 = vld.sshfl [vmem:[#allocation1] sm:$0xff pattern:$0x73625140]
  %v3919 = vld.sshfl [vmem:[#allocation1 + $0x20] sm:$0xff pattern:$0x73625140]
  %3920 = vst [vmem:[#allocation1] ss:$4 sm:$0xff] %v1093
  %3921 = vst [vmem:[%s3804] ss:$4 sm:$0xff] %v1096
  %3922 = vst [vmem:[%s3806] ss:$4 sm:$0xff] %v1099
  %3923 = vst [vmem:[%s3808] ss:$4 sm:$0xff] %v1686
  %3924 = vst [vmem:[%s3810] ss:$4 sm:$0xff] %v1689
  %3925 = vst [vmem:[%s3812] ss:$4 sm:$0xff] %v1692
  %3926 = vst [vmem:[%s3814] ss:$4 sm:$0xff] %v1695
  %3927 = vst [vmem:[%s3816] ss:$4 sm:$0xff] %v1698
  %v3928 = vld.sshfl [vmem:[#allocation1] sm:$0xff pattern:$0x73625140]
  %v3929 = vld.sshfl [vmem:[#allocation1 + $0x20] sm:$0xff pattern:$0x73625140]
  %3930 = vst [vmem:[#allocation1] ss:$4 sm:$0xff] %v1701
  %3931 = vst [vmem:[%s3804] ss:$4 sm:$0xff] %v1704
  %3932 = vst [vmem:[%s3806] ss:$4 sm:$0xff] %v1125
  %3933 = vst [vmem:[%s3808] ss:$4 sm:$0xff] %v1128
  %3934 = vst [vmem:[%s3810] ss:$4 sm:$0xff] %v1131
  %3935 = vst [vmem:[%s3812] ss:$4 sm:$0xff] %v1134
  %3936 = vst [vmem:[%s3814] ss:$4 sm:$0xff] %v1137
  %3937 = vst [vmem:[%s3816] ss:$4 sm:$0xff] %v1140
  %v3938 = vld.sshfl [vmem:[#allocation1] sm:$0xff pattern:$0x73625140]
  %v3939 = vld.sshfl [vmem:[#allocation1 + $0x20] sm:$0xff pattern:$0x73625140]
  %3940 = vst [vmem:[#allocation1] ss:$4 sm:$0xff] %v1143
  %3941 = vst [vmem:[%s3804] ss:$4 sm:$0xff] %v1147
  %3942 = vst [vmem:[%s3806] ss:$4 sm:$0xff] %v1150
  %3943 = vst [vmem:[%s3808] ss:$4 sm:$0xff] %v1153
  %3944 = vst [vmem:[%s3810] ss:$4 sm:$0xff] %v1156
  %3945 = vst [vmem:[%s3812] ss:$4 sm:$0xff] %v1159
  %3946 = vst [vmem:[%s3814] ss:$4 sm:$0xff] %v1162
  %3947 = vst [vmem:[%s3816] ss:$4 sm:$0xff] %v1165
  %v3948 = vld.sshfl [vmem:[#allocation1] sm:$0xff pattern:$0x73625140]
  %v3949 = vld.sshfl [vmem:[#allocation1 + $0x20] sm:$0xff pattern:$0x73625140]
  %3950 = vst [vmem:[#allocation1] ss:$4 sm:$0xff] %v1169
  %3951 = vst [vmem:[%s3804] ss:$4 sm:$0xff] %v1172
  %3952 = vst [vmem:[%s3806] ss:$4 sm:$0xff] %v1175
  %3953 = vst [vmem:[%s3808] ss:$4 sm:$0xff] %v1178
  %3954 = vst [vmem:[%s3810] ss:$4 sm:$0xff] %v1181
  %3955 = vst [vmem:[%s3812] ss:$4 sm:$0xff] %v1184
  %3956 = vst [vmem:[%s3814] ss:$4 sm:$0xff] %v1187
  %3957 = vst [vmem:[%s3816] ss:$4 sm:$0xff] %v1191
  %v3958 = vld.sshfl [vmem:[#allocation1] sm:$0xff pattern:$0x73625140]
  %v3959 = vld.sshfl [vmem:[#allocation1 + $0x20] sm:$0xff pattern:$0x73625140]
  %3960 = vst [vmem:[#allocation1] ss:$4 sm:$0xff] %v1194
  %3961 = vst [vmem:[%s3804] ss:$4 sm:$0xff] %v1197
  %3962 = vst [vmem:[%s3806] ss:$4 sm:$0xff] %v1200
  %3963 = vst [vmem:[%s3808] ss:$4 sm:$0xff] %v1203
  %3964 = vst [vmem:[%s3810] ss:$4 sm:$0xff] %v1206
  %3965 = vst [vmem:[%s3812] ss:$4 sm:$0xff] %v1209
  %3966 = vst [vmem:[%s3814] ss:$4 sm:$0xff] %v1213
  %3967 = vst [vmem:[%s3816] ss:$4 sm:$0xff] %v1216
  %v3968 = vld.sshfl [vmem:[#allocation1] sm:$0xff pattern:$0x73625140]
  %v3969 = vld.sshfl [vmem:[#allocation1 + $0x20] sm:$0xff pattern:$0x73625140]
  %3970 = vst [vmem:[#allocation1] ss:$4 sm:$0xff] %v1219
  %3971 = vst [vmem:[%s3804] ss:$4 sm:$0xff] %v1222
  %3972 = vst [vmem:[%s3806] ss:$4 sm:$0xff] %v1225
  %3973 = vst [vmem:[%s3808] ss:$4 sm:$0xff] %v1228
  %3974 = vst [vmem:[%s3810] ss:$4 sm:$0xff] %v1231
  %3975 = vst [vmem:[%s3812] ss:$4 sm:$0xff] %v1235
  %3976 = vst [vmem:[%s3814] ss:$4 sm:$0xff] %v1238
  %3977 = vst [vmem:[%s3816] ss:$4 sm:$0xff] %v1241
  %v3978 = vld.sshfl [vmem:[#allocation1] sm:$0xff pattern:$0x73625140]
  %v3979 = vld.sshfl [vmem:[#allocation1 + $0x20] sm:$0xff pattern:$0x73625140]
  %3980 = vst [vmem:[#allocation1] ss:$4 sm:$0xff] %v1244
  %3981 = vst [vmem:[%s3804] ss:$4 sm:$0xff] %v1247
  %3982 = vst [vmem:[%s3806] ss:$4 sm:$0xff] %v1250
  %3983 = vst [vmem:[%s3808] ss:$4 sm:$0xff] %v1253
  %3984 = vst [vmem:[%s3810] ss:$4 sm:$0xff] %v1257
  %3985 = vst [vmem:[%s3812] ss:$4 sm:$0xff] %v1260
  %3986 = vst [vmem:[%s3814] ss:$4 sm:$0xff] %v1263
  %3987 = vst [vmem:[%s3816] ss:$4 sm:$0xff] %v1266
  %v3988 = vld.sshfl [vmem:[#allocation1] sm:$0xff pattern:$0x73625140]
  %v3989 = vld.sshfl [vmem:[#allocation1 + $0x20] sm:$0xff pattern:$0x73625140]
  %3990 = vst [vmem:[#allocation1] ss:$4 sm:$0xff] %v1269
  %3991 = vst [vmem:[%s3804] ss:$4 sm:$0xff] %v1272
  %3992 = vst [vmem:[%s3806] ss:$4 sm:$0xff] %v1275
  %3993 = vst [vmem:[%s3808] ss:$4 sm:$0xff] %v1279
  %3994 = vst [vmem:[%s3810] ss:$4 sm:$0xff] %v1282
  %3995 = vst [vmem:[%s3812] ss:$4 sm:$0xff] %v1285
  %3996 = vst [vmem:[%s3814] ss:$4 sm:$0xff] %v1288
  %3997 = vst [vmem:[%s3816] ss:$4 sm:$0xff] %v1291
  %v3998 = vld.sshfl [vmem:[#allocation1] sm:$0xff pattern:$0x73625140]
  %v3999 = vld.sshfl [vmem:[#allocation1 + $0x20] sm:$0xff pattern:$0x73625140]
  %4000 = vst [vmem:[#allocation1] ss:$4 sm:$0xff] %v1294
  %4001 = vst [vmem:[%s3804] ss:$4 sm:$0xff] %v1297
  %4002 = vst [vmem:[%s3806] ss:$4 sm:$0xff] %v1301
  %4003 = vst [vmem:[%s3808] ss:$4 sm:$0xff] %v1304
  %4004 = vst [vmem:[%s3810] ss:$4 sm:$0xff] %v1307
  %4005 = vst [vmem:[%s3812] ss:$4 sm:$0xff] %v1310
  %4006 = vst [vmem:[%s3814] ss:$4 sm:$0xff] %v1313
  %4007 = vst [vmem:[%s3816] ss:$4 sm:$0xff] %v1316
  %v4008 = vld.sshfl [vmem:[#allocation1] sm:$0xff pattern:$0x73625140]
  %v4009 = vld.sshfl [vmem:[#allocation1 + $0x20] sm:$0xff pattern:$0x73625140]
  %4010 = vst [vmem:[#allocation1] ss:$4 sm:$0xff] %v1319
  %4011 = vst [vmem:[%s3804] ss:$4 sm:$0xff] %v1323
  %4012 = vst [vmem:[%s3806] ss:$4 sm:$0xff] %v1326
  %4013 = vst [vmem:[%s3808] ss:$4 sm:$0xff] %v1329
  %4014 = vst [vmem:[%s3810] ss:$4 sm:$0xff] %v1332
  %4015 = vst [vmem:[%s3812] ss:$4 sm:$0xff] %v1335
  %4016 = vst [vmem:[%s3814] ss:$4 sm:$0xff] %v1338
  %4017 = vst [vmem:[%s3816] ss:$4 sm:$0xff] %v1341
  %v4018 = vld.sshfl [vmem:[#allocation1] sm:$0xff pattern:$0x73625140]
  %v4019 = vld.sshfl [vmem:[#allocation1 + $0x20] sm:$0xff pattern:$0x73625140]
  %4020 = vst [vmem:[#allocation1] ss:$4 sm:$0xff] %v1345
  %4021 = vst [vmem:[%s3804] ss:$4 sm:$0xff] %v1348
  %4022 = vst [vmem:[%s3806] ss:$4 sm:$0xff] %v1351
  %4023 = vst [vmem:[%s3808] ss:$4 sm:$0xff] %v1354
  %4024 = vst [vmem:[%s3810] ss:$4 sm:$0xff] %v1357
  %4025 = vst [vmem:[%s3812] ss:$4 sm:$0xff] %v1360
  %4026 = vst [vmem:[%s3814] ss:$4 sm:$0xff] %v1363
  %4027 = vst [vmem:[%s3816] ss:$4 sm:$0xff] %v1367
  %v4028 = vld.sshfl [vmem:[#allocation1] sm:$0xff pattern:$0x73625140]
  %v4029 = vld.sshfl [vmem:[#allocation1 + $0x20] sm:$0xff pattern:$0x73625140]
  %4030 = vst [vmem:[#allocation1] ss:$4 sm:$0xff] %v1370
  %4031 = vst [vmem:[%s3804] ss:$4 sm:$0xff] %v1373
  %4032 = vst [vmem:[%s3806] ss:$4 sm:$0xff] %v1376
  %4033 = vst [vmem:[%s3808] ss:$4 sm:$0xff] %v1379
  %4034 = vst [vmem:[%s3810] ss:$4 sm:$0xff] %v1382
  %4035 = vst [vmem:[%s3812] ss:$4 sm:$0xff] %v1385
  %4036 = vst [vmem:[%s3814] ss:$4 sm:$0xff] %v1389
  %4037 = vst [vmem:[%s3816] ss:$4 sm:$0xff] %v1392
  %v4038 = vld.sshfl [vmem:[#allocation1] sm:$0xff pattern:$0x73625140]
  %v4039 = vld.sshfl [vmem:[#allocation1 + $0x20] sm:$0xff pattern:$0x73625140]
  %4040 = vst [vmem:[#allocation1] ss:$4 sm:$0xff] %v1395
  %4041 = vst [vmem:[%s3804] ss:$4 sm:$0xff] %v1398
  %4042 = vst [vmem:[%s3806] ss:$4 sm:$0xff] %v1401
  %4043 = vst [vmem:[%s3808] ss:$4 sm:$0xff] %v1404
  %4044 = vst [vmem:[%s3810] ss:$4 sm:$0xff] %v1407
  %4045 = vst [vmem:[%s3812] ss:$4 sm:$0xff] %v1708
  %4046 = vst [vmem:[%s3814] ss:$4 sm:$0xff] %v1711
  %4047 = vst [vmem:[%s3816] ss:$4 sm:$0xff] %v1714
  %v4048 = vld.sshfl [vmem:[#allocation1] sm:$0xff pattern:$0x73625140]
  %v4049 = vld.sshfl [vmem:[#allocation1 + $0x20] sm:$0xff pattern:$0x73625140]
  %4050 = vst [vmem:[#allocation1] ss:$4 sm:$0xff] %v1717
  %4051 = vst [vmem:[%s3804] ss:$4 sm:$0xff] %v1720
  %4052 = vst [vmem:[%s3806] ss:$4 sm:$0xff] %v1723
  %4053 = vst [vmem:[%s3808] ss:$4 sm:$0xff] %v1726
  %v4054 = vld.sshfl [vmem:[#allocation1] sm:$0xff pattern:$0x73625140]
  %4055 = vrot.lane.b32.xlu0 %v3818, 32
  %v4056 = vpop.permute.xlu0 %4055
  %4057 = vrot.lane.b32.xlu0 %v3819, 32
  %v4058 = vpop.permute.xlu0 %4057
  %4059 = vrot.lane.b32.xlu0 %v3828, 32
  %v4060 = vpop.permute.xlu0 %4059
  %4061 = vrot.lane.b32.xlu0 %v3829, 32
  %v4062 = vpop.permute.xlu0 %4061
  %4063 = vrot.lane.b32.xlu0 %v3838, 32
  %v4064 = vpop.permute.xlu0 %4063
  %4065 = vrot.lane.b32.xlu0 %v3839, 32
  %v4066 = vpop.permute.xlu0 %4065
  %4067 = vrot.lane.b32.xlu0 %v3848, 32
  %v4068 = vpop.permute.xlu0 %4067
  %4069 = vrot.lane.b32.xlu0 %v3849, 32
  %v4070 = vpop.permute.xlu0 %4069
  %4071 = vrot.lane.b32.xlu0 %v3858, 32
  %v4072 = vpop.permute.xlu0 %4071
  %4073 = vrot.lane.b32.xlu0 %v3859, 32
  %v4074 = vpop.permute.xlu0 %4073
  %4075 = vrot.lane.b32.xlu0 %v3868, 32
  %v4076 = vpop.permute.xlu0 %4075
  %4077 = vrot.lane.b32.xlu0 %v3869, 32
  %v4078 = vpop.permute.xlu0 %4077
  %4079 = vrot.lane.b32.xlu0 %v3878, 32
  %v4080 = vpop.permute.xlu0 %4079
  %4081 = vrot.lane.b32.xlu0 %v3879, 32
  %v4082 = vpop.permute.xlu0 %4081
  %4083 = vrot.lane.b32.xlu0 %v3888, 32
  %v4084 = vpop.permute.xlu0 %4083
  %4085 = vrot.lane.b32.xlu0 %v3889, 32
  %v4086 = vpop.permute.xlu0 %4085
  %4087 = vrot.lane.b32.xlu0 %v3898, 32
  %v4088 = vpop.permute.xlu0 %4087
  %4089 = vrot.lane.b32.xlu0 %v3899, 32
  %v4090 = vpop.permute.xlu0 %4089
  %4091 = vrot.lane.b32.xlu0 %v3908, 32
  %v4092 = vpop.permute.xlu0 %4091
  %4093 = vrot.lane.b32.xlu0 %v3909, 32
  %v4094 = vpop.permute.xlu0 %4093
  %4095 = vrot.lane.b32.xlu0 %v3918, 32
  %v4096 = vpop.permute.xlu0 %4095
  %4097 = vrot.lane.b32.xlu0 %v3919, 32
  %v4098 = vpop.permute.xlu0 %4097
  %4099 = vrot.lane.b32.xlu0 %v3928, 32
  %v4100 = vpop.permute.xlu0 %4099
  %4101 = vrot.lane.b32.xlu0 %v3929, 32
  %v4102 = vpop.permute.xlu0 %4101
  %4103 = vrot.lane.b32.xlu0 %v3938, 32
  %v4104 = vpop.permute.xlu0 %4103
  %4105 = vrot.lane.b32.xlu0 %v3939, 32
  %v4106 = vpop.permute.xlu0 %4105
  %4107 = vrot.lane.b32.xlu0 %v3948, 32
  %v4108 = vpop.permute.xlu0 %4107
  %4109 = vrot.lane.b32.xlu0 %v3949, 32
  %v4110 = vpop.permute.xlu0 %4109
  %4111 = vrot.lane.b32.xlu0 %v3958, 32
  %v4112 = vpop.permute.xlu0 %4111
  %4113 = vrot.lane.b32.xlu0 %v3959, 32
  %v4114 = vpop.permute.xlu0 %4113
  %4115 = vrot.lane.b32.xlu0 %v3968, 32
  %v4116 = vpop.permute.xlu0 %4115
  %4117 = vrot.lane.b32.xlu0 %v3969, 32
  %v4118 = vpop.permute.xlu0 %4117
  %4119 = vrot.lane.b32.xlu0 %v3978, 32
  %v4120 = vpop.permute.xlu0 %4119
  %4121 = vrot.lane.b32.xlu0 %v3979, 32
  %v4122 = vpop.permute.xlu0 %4121
  %4123 = vrot.lane.b32.xlu0 %v3988, 32
  %v4124 = vpop.permute.xlu0 %4123
  %4125 = vrot.lane.b32.xlu0 %v3989, 32
  %v4126 = vpop.permute.xlu0 %4125
  %4127 = vrot.lane.b32.xlu0 %v3998, 32
  %v4128 = vpop.permute.xlu0 %4127
  %4129 = vrot.lane.b32.xlu0 %v3999, 32
  %v4130 = vpop.permute.xlu0 %4129
  %4131 = vrot.lane.b32.xlu0 %v4008, 32
  %v4132 = vpop.permute.xlu0 %4131
  %4133 = vrot.lane.b32.xlu0 %v4009, 32
  %v4134 = vpop.permute.xlu0 %4133
  %4135 = vrot.lane.b32.xlu0 %v4018, 32
  %v4136 = vpop.permute.xlu0 %4135
  %4137 = vrot.lane.b32.xlu0 %v4019, 32
  %v4138 = vpop.permute.xlu0 %4137
  %4139 = vrot.lane.b32.xlu0 %v4028, 32
  %v4140 = vpop.permute.xlu0 %4139
  %4141 = vrot.lane.b32.xlu0 %v4029, 32
  %v4142 = vpop.permute.xlu0 %4141
  %4143 = vrot.lane.b32.xlu0 %v4038, 32
  %v4144 = vpop.permute.xlu0 %4143
  %4145 = vrot.lane.b32.xlu0 %v4039, 32
  %v4146 = vpop.permute.xlu0 %4145
  %4147 = vrot.lane.b32.xlu0 %v4048, 32
  %v4148 = vpop.permute.xlu0 %4147
  %4149 = vrot.lane.b32.xlu0 %v4049, 32
  %v4150 = vpop.permute.xlu0 %4149
  %4151 = vrot.lane.b32.xlu0 %v4054, 32
  %v4152 = vpop.permute.xlu0 %4151
  %4202 = vst [vmem:[#allocation1] ss:$4 sm:$0xff] %v1730
  %s4203 = scalar_lea.vmem [#allocation1], 1
  %4204 = vst [vmem:[%s4203] ss:$4 sm:$0xff] %v1732
  %s4205 = scalar_lea.vmem [#allocation1], 2
  %4206 = vst [vmem:[%s4205] ss:$4 sm:$0xff] %v1734
  %s4207 = scalar_lea.vmem [#allocation1], 3
  %4208 = vst [vmem:[%s4207] ss:$4 sm:$0xff] %v1736
  %s4209 = scalar_lea.vmem [#allocation1], 32
  %4210 = vst [vmem:[%s4209] ss:$4 sm:$0xff] %v1738
  %s4211 = scalar_lea.vmem [#allocation1], 33
  %4212 = vst [vmem:[%s4211] ss:$4 sm:$0xff] %v1740
  %s4213 = scalar_lea.vmem [#allocation1], 34
  %4214 = vst [vmem:[%s4213] ss:$4 sm:$0xff] %v1742
  %s4215 = scalar_lea.vmem [#allocation1], 35
  %4216 = vst [vmem:[%s4215] ss:$4 sm:$0xff] %v1745
  %v4217 = vld.sshfl [vmem:[#allocation1] sm:$0xff pattern:$0x73625140]
  %v4218 = vld.sshfl [vmem:[#allocation1 + $0x20] sm:$0xff pattern:$0x73625140]
  %4219 = vst [vmem:[#allocation1] ss:$4 sm:$0xff] %v1746
  %4220 = vst [vmem:[%s4203] ss:$4 sm:$0xff] %v1747
  %4221 = vst [vmem:[%s4205] ss:$4 sm:$0xff] %v1748
  %4222 = vst [vmem:[%s4207] ss:$4 sm:$0xff] %v1749
  %4223 = vst [vmem:[%s4209] ss:$4 sm:$0xff] %v1750
  %4224 = vst [vmem:[%s4211] ss:$4 sm:$0xff] %v1751
  %4225 = vst [vmem:[%s4213] ss:$4 sm:$0xff] %v1754
  %4226 = vst [vmem:[%s4215] ss:$4 sm:$0xff] %v1755
  %v4227 = vld.sshfl [vmem:[#allocation1] sm:$0xff pattern:$0x73625140]
  %v4228 = vld.sshfl [vmem:[#allocation1 + $0x20] sm:$0xff pattern:$0x73625140]
  %4229 = vst [vmem:[#allocation1] ss:$4 sm:$0xff] %v1756
  %4230 = vst [vmem:[%s4203] ss:$4 sm:$0xff] %v1757
  %4231 = vst [vmem:[%s4205] ss:$4 sm:$0xff] %v1758
  %4232 = vst [vmem:[%s4207] ss:$4 sm:$0xff] %v1759
  %4233 = vst [vmem:[%s4209] ss:$4 sm:$0xff] %v1760
  %4234 = vst [vmem:[%s4211] ss:$4 sm:$0xff] %v1763
  %4235 = vst [vmem:[%s4213] ss:$4 sm:$0xff] %v1764
  %4236 = vst [vmem:[%s4215] ss:$4 sm:$0xff] %v1765
  %v4237 = vld.sshfl [vmem:[#allocation1] sm:$0xff pattern:$0x73625140]
  %v4238 = vld.sshfl [vmem:[#allocation1 + $0x20] sm:$0xff pattern:$0x73625140]
  %4239 = vst [vmem:[#allocation1] ss:$4 sm:$0xff] %v1766
  %4240 = vst [vmem:[%s4203] ss:$4 sm:$0xff] %v1767
  %4241 = vst [vmem:[%s4205] ss:$4 sm:$0xff] %v1768
  %4242 = vst [vmem:[%s4207] ss:$4 sm:$0xff] %v1769
  %4243 = vst [vmem:[%s4209] ss:$4 sm:$0xff] %v1772
  %4244 = vst [vmem:[%s4211] ss:$4 sm:$0xff] %v1773
  %4245 = vst [vmem:[%s4213] ss:$4 sm:$0xff] %v1774
  %4246 = vst [vmem:[%s4215] ss:$4 sm:$0xff] %v1775
  %v4247 = vld.sshfl [vmem:[#allocation1] sm:$0xff pattern:$0x73625140]
  %v4248 = vld.sshfl [vmem:[#allocation1 + $0x20] sm:$0xff pattern:$0x73625140]
  %4249 = vst [vmem:[#allocation1] ss:$4 sm:$0xff] %v1776
  %4250 = vst [vmem:[%s4203] ss:$4 sm:$0xff] %v1777
  %4251 = vst [vmem:[%s4205] ss:$4 sm:$0xff] %v1778
  %4252 = vst [vmem:[%s4207] ss:$4 sm:$0xff] %v1781
  %4253 = vst [vmem:[%s4209] ss:$4 sm:$0xff] %v1782
  %4254 = vst [vmem:[%s4211] ss:$4 sm:$0xff] %v1783
  %4255 = vst [vmem:[%s4213] ss:$4 sm:$0xff] %v1784
  %4256 = vst [vmem:[%s4215] ss:$4 sm:$0xff] %v1785
  %v4257 = vld.sshfl [vmem:[#allocation1] sm:$0xff pattern:$0x73625140]
  %v4258 = vld.sshfl [vmem:[#allocation1 + $0x20] sm:$0xff pattern:$0x73625140]
  %4259 = vst [vmem:[#allocation1] ss:$4 sm:$0xff] %v1786
  %4260 = vst [vmem:[%s4203] ss:$4 sm:$0xff] %v1787
  %4261 = vst [vmem:[%s4205] ss:$4 sm:$0xff] %v1790
  %4262 = vst [vmem:[%s4207] ss:$4 sm:$0xff] %v1791
  %4263 = vst [vmem:[%s4209] ss:$4 sm:$0xff] %v1792
  %4264 = vst [vmem:[%s4211] ss:$4 sm:$0xff] %v1793
  %4265 = vst [vmem:[%s4213] ss:$4 sm:$0xff] %v1794
  %4266 = vst [vmem:[%s4215] ss:$4 sm:$0xff] %v1795
  %v4267 = vld.sshfl [vmem:[#allocation1] sm:$0xff pattern:$0x73625140]
  %v4268 = vld.sshfl [vmem:[#allocation1 + $0x20] sm:$0xff pattern:$0x73625140]
  %4269 = vst [vmem:[#allocation1] ss:$4 sm:$0xff] %v1796
  %4270 = vst [vmem:[%s4203] ss:$4 sm:$0xff] %v1799
  %4271 = vst [vmem:[%s4205] ss:$4 sm:$0xff] %v1800
  %4272 = vst [vmem:[%s4207] ss:$4 sm:$0xff] %v1801
  %4273 = vst [vmem:[%s4209] ss:$4 sm:$0xff] %v1802
  %4274 = vst [vmem:[%s4211] ss:$4 sm:$0xff] %v1803
  %4275 = vst [vmem:[%s4213] ss:$4 sm:$0xff] %v1804
  %4276 = vst [vmem:[%s4215] ss:$4 sm:$0xff] %v1805
  %v4277 = vld.sshfl [vmem:[#allocation1] sm:$0xff pattern:$0x73625140]
  %v4278 = vld.sshfl [vmem:[#allocation1 + $0x20] sm:$0xff pattern:$0x73625140]
  %4279 = vst [vmem:[#allocation1] ss:$4 sm:$0xff] %v1808
  %4280 = vst [vmem:[%s4203] ss:$4 sm:$0xff] %v1809
  %4281 = vst [vmem:[%s4205] ss:$4 sm:$0xff] %v1810
  %4282 = vst [vmem:[%s4207] ss:$4 sm:$0xff] %v1811
  %4283 = vst [vmem:[%s4209] ss:$4 sm:$0xff] %v1812
  %4284 = vst [vmem:[%s4211] ss:$4 sm:$0xff] %v1813
  %4285 = vst [vmem:[%s4213] ss:$4 sm:$0xff] %v1814
  %4286 = vst [vmem:[%s4215] ss:$4 sm:$0xff] %v1817
  %v4287 = vld.sshfl [vmem:[#allocation1] sm:$0xff pattern:$0x73625140]
  %v4288 = vld.sshfl [vmem:[#allocation1 + $0x20] sm:$0xff pattern:$0x73625140]
  %4289 = vst [vmem:[#allocation1] ss:$4 sm:$0xff] %v1818
  %4290 = vst [vmem:[%s4203] ss:$4 sm:$0xff] %v1819
  %4291 = vst [vmem:[%s4205] ss:$4 sm:$0xff] %v1820
  %4292 = vst [vmem:[%s4207] ss:$4 sm:$0xff] %v1821
  %4293 = vst [vmem:[%s4209] ss:$4 sm:$0xff] %v1822
  %4294 = vst [vmem:[%s4211] ss:$4 sm:$0xff] %v1823
  %4295 = vst [vmem:[%s4213] ss:$4 sm:$0xff] %v1826
  %4296 = vst [vmem:[%s4215] ss:$4 sm:$0xff] %v1827
  %v4297 = vld.sshfl [vmem:[#allocation1] sm:$0xff pattern:$0x73625140]
  %v4298 = vld.sshfl [vmem:[#allocation1 + $0x20] sm:$0xff pattern:$0x73625140]
  %4299 = vst [vmem:[#allocation1] ss:$4 sm:$0xff] %v1828
  %4300 = vst [vmem:[%s4203] ss:$4 sm:$0xff] %v1829
  %4301 = vst [vmem:[%s4205] ss:$4 sm:$0xff] %v1830
  %4302 = vst [vmem:[%s4207] ss:$4 sm:$0xff] %v1831
  %4303 = vst [vmem:[%s4209] ss:$4 sm:$0xff] %v1832
  %4304 = vst [vmem:[%s4211] ss:$4 sm:$0xff] %v1835
  %4305 = vst [vmem:[%s4213] ss:$4 sm:$0xff] %v1836
  %4306 = vst [vmem:[%s4215] ss:$4 sm:$0xff] %v1837
  %v4307 = vld.sshfl [vmem:[#allocation1] sm:$0xff pattern:$0x73625140]
  %v4308 = vld.sshfl [vmem:[#allocation1 + $0x20] sm:$0xff pattern:$0x73625140]
  %4309 = vst [vmem:[#allocation1] ss:$4 sm:$0xff] %v1838
  %4310 = vst [vmem:[%s4203] ss:$4 sm:$0xff] %v1839
  %4311 = vst [vmem:[%s4205] ss:$4 sm:$0xff] %v1840
  %4312 = vst [vmem:[%s4207] ss:$4 sm:$0xff] %v1841
  %4313 = vst [vmem:[%s4209] ss:$4 sm:$0xff] %v1844
  %4314 = vst [vmem:[%s4211] ss:$4 sm:$0xff] %v1845
  %4315 = vst [vmem:[%s4213] ss:$4 sm:$0xff] %v1846
  %4316 = vst [vmem:[%s4215] ss:$4 sm:$0xff] %v1847
  %v4317 = vld.sshfl [vmem:[#allocation1] sm:$0xff pattern:$0x73625140]
  %v4318 = vld.sshfl [vmem:[#allocation1 + $0x20] sm:$0xff pattern:$0x73625140]
  %4319 = vst [vmem:[#allocation1] ss:$4 sm:$0xff] %v1848
  %4320 = vst [vmem:[%s4203] ss:$4 sm:$0xff] %v1849
  %4321 = vst [vmem:[%s4205] ss:$4 sm:$0xff] %v1850
  %4322 = vst [vmem:[%s4207] ss:$4 sm:$0xff] %v1853
  %4323 = vst [vmem:[%s4209] ss:$4 sm:$0xff] %v1854
  %4324 = vst [vmem:[%s4211] ss:$4 sm:$0xff] %v1855
  %4325 = vst [vmem:[%s4213] ss:$4 sm:$0xff] %v1856
  %4326 = vst [vmem:[%s4215] ss:$4 sm:$0xff] %v1857
  %v4327 = vld.sshfl [vmem:[#allocation1] sm:$0xff pattern:$0x73625140]
  %v4328 = vld.sshfl [vmem:[#allocation1 + $0x20] sm:$0xff pattern:$0x73625140]
  %4329 = vst [vmem:[#allocation1] ss:$4 sm:$0xff] %v1858
  %4330 = vst [vmem:[%s4203] ss:$4 sm:$0xff] %v1859
  %4331 = vst [vmem:[%s4205] ss:$4 sm:$0xff] %v1862
  %4332 = vst [vmem:[%s4207] ss:$4 sm:$0xff] %v1863
  %4333 = vst [vmem:[%s4209] ss:$4 sm:$0xff] %v1864
  %4334 = vst [vmem:[%s4211] ss:$4 sm:$0xff] %v1865
  %4335 = vst [vmem:[%s4213] ss:$4 sm:$0xff] %v1866
  %4336 = vst [vmem:[%s4215] ss:$4 sm:$0xff] %v1867
  %v4337 = vld.sshfl [vmem:[#allocation1] sm:$0xff pattern:$0x73625140]
  %v4338 = vld.sshfl [vmem:[#allocation1 + $0x20] sm:$0xff pattern:$0x73625140]
  %4339 = vst [vmem:[#allocation1] ss:$4 sm:$0xff] %v1868
  %4340 = vst [vmem:[%s4203] ss:$4 sm:$0xff] %v1871
  %4341 = vst [vmem:[%s4205] ss:$4 sm:$0xff] %v1872
  %4342 = vst [vmem:[%s4207] ss:$4 sm:$0xff] %v1873
  %4343 = vst [vmem:[%s4209] ss:$4 sm:$0xff] %v1874
  %4344 = vst [vmem:[%s4211] ss:$4 sm:$0xff] %v1875
  %4345 = vst [vmem:[%s4213] ss:$4 sm:$0xff] %v1876
  %4346 = vst [vmem:[%s4215] ss:$4 sm:$0xff] %v1877
  %v4347 = vld.sshfl [vmem:[#allocation1] sm:$0xff pattern:$0x73625140]
  %v4348 = vld.sshfl [vmem:[#allocation1 + $0x20] sm:$0xff pattern:$0x73625140]
  %4349 = vst [vmem:[#allocation1] ss:$4 sm:$0xff] %v1880
  %4350 = vst [vmem:[%s4203] ss:$4 sm:$0xff] %v1881
  %4351 = vst [vmem:[%s4205] ss:$4 sm:$0xff] %v1882
  %4352 = vst [vmem:[%s4207] ss:$4 sm:$0xff] %v1883
  %4353 = vst [vmem:[%s4209] ss:$4 sm:$0xff] %v1884
  %4354 = vst [vmem:[%s4211] ss:$4 sm:$0xff] %v1885
  %4355 = vst [vmem:[%s4213] ss:$4 sm:$0xff] %v1886
  %4356 = vst [vmem:[%s4215] ss:$4 sm:$0xff] %v1889
  %v4357 = vld.sshfl [vmem:[#allocation1] sm:$0xff pattern:$0x73625140]
  %v4358 = vld.sshfl [vmem:[#allocation1 + $0x20] sm:$0xff pattern:$0x73625140]
  %4359 = vst [vmem:[#allocation1] ss:$4 sm:$0xff] %v1890
  %4360 = vst [vmem:[%s4203] ss:$4 sm:$0xff] %v1891
  %4361 = vst [vmem:[%s4205] ss:$4 sm:$0xff] %v1892
  %4362 = vst [vmem:[%s4207] ss:$4 sm:$0xff] %v1893
  %4363 = vst [vmem:[%s4209] ss:$4 sm:$0xff] %v1894
  %4364 = vst [vmem:[%s4211] ss:$4 sm:$0xff] %v1895
  %4365 = vst [vmem:[%s4213] ss:$4 sm:$0xff] %v1898
  %4366 = vst [vmem:[%s4215] ss:$4 sm:$0xff] %v1899
  %v4367 = vld.sshfl [vmem:[#allocation1] sm:$0xff pattern:$0x73625140]
  %v4368 = vld.sshfl [vmem:[#allocation1 + $0x20] sm:$0xff pattern:$0x73625140]
  %4369 = vst [vmem:[#allocation1] ss:$4 sm:$0xff] %v1900
  %4370 = vst [vmem:[%s4203] ss:$4 sm:$0xff] %v1901
  %4371 = vst [vmem:[%s4205] ss:$4 sm:$0xff] %v1902
  %4372 = vst [vmem:[%s4207] ss:$4 sm:$0xff] %v1903
  %4373 = vst [vmem:[%s4209] ss:$4 sm:$0xff] %v1904
  %4374 = vst [vmem:[%s4211] ss:$4 sm:$0xff] %v1907
  %4375 = vst [vmem:[%s4213] ss:$4 sm:$0xff] %v1908
  %4376 = vst [vmem:[%s4215] ss:$4 sm:$0xff] %v1909
  %v4377 = vld.sshfl [vmem:[#allocation1] sm:$0xff pattern:$0x73625140]
  %v4378 = vld.sshfl [vmem:[#allocation1 + $0x20] sm:$0xff pattern:$0x73625140]
  %4379 = vst [vmem:[#allocation1] ss:$4 sm:$0xff] %v1910
  %4380 = vst [vmem:[%s4203] ss:$4 sm:$0xff] %v1911
  %4381 = vst [vmem:[%s4205] ss:$4 sm:$0xff] %v1912
  %4382 = vst [vmem:[%s4207] ss:$4 sm:$0xff] %v1913
  %4383 = vst [vmem:[%s4209] ss:$4 sm:$0xff] %v1916
  %4384 = vst [vmem:[%s4211] ss:$4 sm:$0xff] %v1917
  %4385 = vst [vmem:[%s4213] ss:$4 sm:$0xff] %v1918
  %4386 = vst [vmem:[%s4215] ss:$4 sm:$0xff] %v1919
  %v4387 = vld.sshfl [vmem:[#allocation1] sm:$0xff pattern:$0x73625140]
  %v4388 = vld.sshfl [vmem:[#allocation1 + $0x20] sm:$0xff pattern:$0x73625140]
  %4389 = vst [vmem:[#allocation1] ss:$4 sm:$0xff] %v1920
  %4390 = vst [vmem:[%s4203] ss:$4 sm:$0xff] %v1921
  %4391 = vst [vmem:[%s4205] ss:$4 sm:$0xff] %v1922
  %4392 = vst [vmem:[%s4207] ss:$4 sm:$0xff] %v1925
  %4393 = vst [vmem:[%s4209] ss:$4 sm:$0xff] %v1926
  %4394 = vst [vmem:[%s4211] ss:$4 sm:$0xff] %v1927
  %4395 = vst [vmem:[%s4213] ss:$4 sm:$0xff] %v1928
  %4396 = vst [vmem:[%s4215] ss:$4 sm:$0xff] %v1929
  %v4397 = vld.sshfl [vmem:[#allocation1] sm:$0xff pattern:$0x73625140]
  %v4398 = vld.sshfl [vmem:[#allocation1 + $0x20] sm:$0xff pattern:$0x73625140]
  %4399 = vst [vmem:[#allocation1] ss:$4 sm:$0xff] %v1930
  %4400 = vst [vmem:[%s4203] ss:$4 sm:$0xff] %v1931
  %4401 = vst [vmem:[%s4205] ss:$4 sm:$0xff] %v1934
  %4402 = vst [vmem:[%s4207] ss:$4 sm:$0xff] %v1935
  %4403 = vst [vmem:[%s4209] ss:$4 sm:$0xff] %v1936
  %4404 = vst [vmem:[%s4211] ss:$4 sm:$0xff] %v1937
  %4405 = vst [vmem:[%s4213] ss:$4 sm:$0xff] %v1938
  %4406 = vst [vmem:[%s4215] ss:$4 sm:$0xff] %v1939
  %v4407 = vld.sshfl [vmem:[#allocation1] sm:$0xff pattern:$0x73625140]
  %v4408 = vld.sshfl [vmem:[#allocation1 + $0x20] sm:$0xff pattern:$0x73625140]
  %4409 = vst [vmem:[#allocation1] ss:$4 sm:$0xff] %v1940
  %4410 = vst [vmem:[%s4203] ss:$4 sm:$0xff] %v1943
  %4411 = vst [vmem:[%s4205] ss:$4 sm:$0xff] %v1944
  %4412 = vst [vmem:[%s4207] ss:$4 sm:$0xff] %v1945
  %4413 = vst [vmem:[%s4209] ss:$4 sm:$0xff] %v1946
  %4414 = vst [vmem:[%s4211] ss:$4 sm:$0xff] %v1947
  %4415 = vst [vmem:[%s4213] ss:$4 sm:$0xff] %v1948
  %4416 = vst [vmem:[%s4215] ss:$4 sm:$0xff] %v1949
  %v4417 = vld.sshfl [vmem:[#allocation1] sm:$0xff pattern:$0x73625140]
  %v4418 = vld.sshfl [vmem:[#allocation1 + $0x20] sm:$0xff pattern:$0x73625140]
  %4419 = vst [vmem:[#allocation1] ss:$4 sm:$0xff] %v1952
  %4420 = vst [vmem:[%s4203] ss:$4 sm:$0xff] %v1953
  %4421 = vst [vmem:[%s4205] ss:$4 sm:$0xff] %v1954
  %4422 = vst [vmem:[%s4207] ss:$4 sm:$0xff] %v1955
  %4423 = vst [vmem:[%s4209] ss:$4 sm:$0xff] %v1956
  %4424 = vst [vmem:[%s4211] ss:$4 sm:$0xff] %v1957
  %4425 = vst [vmem:[%s4213] ss:$4 sm:$0xff] %v1958
  %4426 = vst [vmem:[%s4215] ss:$4 sm:$0xff] %v1961
  %v4427 = vld.sshfl [vmem:[#allocation1] sm:$0xff pattern:$0x73625140]
  %v4428 = vld.sshfl [vmem:[#allocation1 + $0x20] sm:$0xff pattern:$0x73625140]
  %4429 = vst [vmem:[#allocation1] ss:$4 sm:$0xff] %v1962
  %4430 = vst [vmem:[%s4203] ss:$4 sm:$0xff] %v1963
  %4431 = vst [vmem:[%s4205] ss:$4 sm:$0xff] %v1964
  %4432 = vst [vmem:[%s4207] ss:$4 sm:$0xff] %v1965
  %4433 = vst [vmem:[%s4209] ss:$4 sm:$0xff] %v1966
  %4434 = vst [vmem:[%s4211] ss:$4 sm:$0xff] %v1967
  %4435 = vst [vmem:[%s4213] ss:$4 sm:$0xff] %v1970
  %4436 = vst [vmem:[%s4215] ss:$4 sm:$0xff] %v1971
  %v4437 = vld.sshfl [vmem:[#allocation1] sm:$0xff pattern:$0x73625140]
  %v4438 = vld.sshfl [vmem:[#allocation1 + $0x20] sm:$0xff pattern:$0x73625140]
  %4439 = vst [vmem:[#allocation1] ss:$4 sm:$0xff] %v1972
  %4440 = vst [vmem:[%s4203] ss:$4 sm:$0xff] %v1973
  %4441 = vst [vmem:[%s4205] ss:$4 sm:$0xff] %v1974
  %4442 = vst [vmem:[%s4207] ss:$4 sm:$0xff] %v1975
  %4443 = vst [vmem:[%s4209] ss:$4 sm:$0xff] %v1976
  %4444 = vst [vmem:[%s4211] ss:$4 sm:$0xff] %v1979
  %4445 = vst [vmem:[%s4213] ss:$4 sm:$0xff] %v1980
  %4446 = vst [vmem:[%s4215] ss:$4 sm:$0xff] %v1981
  %v4447 = vld.sshfl [vmem:[#allocation1] sm:$0xff pattern:$0x73625140]
  %v4448 = vld.sshfl [vmem:[#allocation1 + $0x20] sm:$0xff pattern:$0x73625140]
  %4449 = vst [vmem:[#allocation1] ss:$4 sm:$0xff] %v1982
  %4450 = vst [vmem:[%s4203] ss:$4 sm:$0xff] %v1983
  %4451 = vst [vmem:[%s4205] ss:$4 sm:$0xff] %v1984
  %4452 = vst [vmem:[%s4207] ss:$4 sm:$0xff] %v1985
  %v4453 = vld.sshfl [vmem:[#allocation1] sm:$0xff pattern:$0x73625140]
  %4454 = vrot.lane.b32.xlu0 %v4217, 40
  %v4455 = vpop.permute.xlu0 %4454
  %4456 = vrot.lane.b32.xlu0 %v4218, 40
  %v4457 = vpop.permute.xlu0 %4456
  %4458 = vrot.lane.b32.xlu0 %v4227, 40
  %v4459 = vpop.permute.xlu0 %4458
  %4460 = vrot.lane.b32.xlu0 %v4228, 40
  %v4461 = vpop.permute.xlu0 %4460
  %4462 = vrot.lane.b32.xlu0 %v4237, 40
  %v4463 = vpop.permute.xlu0 %4462
  %4464 = vrot.lane.b32.xlu0 %v4238, 40
  %v4465 = vpop.permute.xlu0 %4464
  %4466 = vrot.lane.b32.xlu0 %v4247, 40
  %v4467 = vpop.permute.xlu0 %4466
  %4468 = vrot.lane.b32.xlu0 %v4248, 40
  %v4469 = vpop.permute.xlu0 %4468
  %4470 = vrot.lane.b32.xlu0 %v4257, 40
  %v4471 = vpop.permute.xlu0 %4470
  %4472 = vrot.lane.b32.xlu0 %v4258, 40
  %v4473 = vpop.permute.xlu0 %4472
  %4474 = vrot.lane.b32.xlu0 %v4267, 40
  %v4475 = vpop.permute.xlu0 %4474
  %4476 = vrot.lane.b32.xlu0 %v4268, 40
  %v4477 = vpop.permute.xlu0 %4476
  %4478 = vrot.lane.b32.xlu0 %v4277, 40
  %v4479 = vpop.permute.xlu0 %4478
  %4480 = vrot.lane.b32.xlu0 %v4278, 40
  %v4481 = vpop.permute.xlu0 %4480
  %4482 = vrot.lane.b32.xlu0 %v4287, 40
  %v4483 = vpop.permute.xlu0 %4482
  %4484 = vrot.lane.b32.xlu0 %v4288, 40
  %v4485 = vpop.permute.xlu0 %4484
  %4486 = vrot.lane.b32.xlu0 %v4297, 40
  %v4487 = vpop.permute.xlu0 %4486
  %4488 = vrot.lane.b32.xlu0 %v4298, 40
  %v4489 = vpop.permute.xlu0 %4488
  %4490 = vrot.lane.b32.xlu0 %v4307, 40
  %v4491 = vpop.permute.xlu0 %4490
  %4492 = vrot.lane.b32.xlu0 %v4308, 40
  %v4493 = vpop.permute.xlu0 %4492
  %4494 = vrot.lane.b32.xlu0 %v4317, 40
  %v4495 = vpop.permute.xlu0 %4494
  %4496 = vrot.lane.b32.xlu0 %v4318, 40
  %v4497 = vpop.permute.xlu0 %4496
  %4498 = vrot.lane.b32.xlu0 %v4327, 40
  %v4499 = vpop.permute.xlu0 %4498
  %4500 = vrot.lane.b32.xlu0 %v4328, 40
  %v4501 = vpop.permute.xlu0 %4500
  %4502 = vrot.lane.b32.xlu0 %v4337, 40
  %v4503 = vpop.permute.xlu0 %4502
  %4504 = vrot.lane.b32.xlu0 %v4338, 40
  %v4505 = vpop.permute.xlu0 %4504
  %4506 = vrot.lane.b32.xlu0 %v4347, 40
  %v4507 = vpop.permute.xlu0 %4506
  %4508 = vrot.lane.b32.xlu0 %v4348, 40
  %v4509 = vpop.permute.xlu0 %4508
  %4510 = vrot.lane.b32.xlu0 %v4357, 40
  %v4511 = vpop.permute.xlu0 %4510
  %4512 = vrot.lane.b32.xlu0 %v4358, 40
  %v4513 = vpop.permute.xlu0 %4512
  %4514 = vrot.lane.b32.xlu0 %v4367, 40
  %v4515 = vpop.permute.xlu0 %4514
  %4516 = vrot.lane.b32.xlu0 %v4368, 40
  %v4517 = vpop.permute.xlu0 %4516
  %4518 = vrot.lane.b32.xlu0 %v4377, 40
  %v4519 = vpop.permute.xlu0 %4518
  %4520 = vrot.lane.b32.xlu0 %v4378, 40
  %v4521 = vpop.permute.xlu0 %4520
  %4522 = vrot.lane.b32.xlu0 %v4387, 40
  %v4523 = vpop.permute.xlu0 %4522
  %4524 = vrot.lane.b32.xlu0 %v4388, 40
  %v4525 = vpop.permute.xlu0 %4524
  %4526 = vrot.lane.b32.xlu0 %v4397, 40
  %v4527 = vpop.permute.xlu0 %4526
  %4528 = vrot.lane.b32.xlu0 %v4398, 40
  %v4529 = vpop.permute.xlu0 %4528
  %4530 = vrot.lane.b32.xlu0 %v4407, 40
  %v4531 = vpop.permute.xlu0 %4530
  %4532 = vrot.lane.b32.xlu0 %v4408, 40
  %v4533 = vpop.permute.xlu0 %4532
  %4534 = vrot.lane.b32.xlu0 %v4417, 40
  %v4535 = vpop.permute.xlu0 %4534
  %4536 = vrot.lane.b32.xlu0 %v4418, 40
  %v4537 = vpop.permute.xlu0 %4536
  %4538 = vrot.lane.b32.xlu0 %v4427, 40
  %v4539 = vpop.permute.xlu0 %4538
  %4540 = vrot.lane.b32.xlu0 %v4428, 40
  %v4541 = vpop.permute.xlu0 %4540
  %4542 = vrot.lane.b32.xlu0 %v4437, 40
  %v4543 = vpop.permute.xlu0 %4542
  %4544 = vrot.lane.b32.xlu0 %v4438, 40
  %v4545 = vpop.permute.xlu0 %4544
  %4546 = vrot.lane.b32.xlu0 %v4447, 40
  %v4547 = vpop.permute.xlu0 %4546
  %4548 = vrot.lane.b32.xlu0 %v4448, 40
  %v4549 = vpop.permute.xlu0 %4548
  %4550 = vrot.lane.b32.xlu0 %v4453, 40
  %v4551 = vpop.permute.xlu0 %4550
  %4601 = vst [vmem:[#allocation1] ss:$4 sm:$0xff] %v24
  %s4602 = scalar_lea.vmem [#allocation1], 1
  %4603 = vst [vmem:[%s4602] ss:$4 sm:$0xff] %v627
  %s4604 = scalar_lea.vmem [#allocation1], 2
  %4605 = vst [vmem:[%s4604] ss:$4 sm:$0xff] %v628
  %s4606 = scalar_lea.vmem [#allocation1], 3
  %4607 = vst [vmem:[%s4606] ss:$4 sm:$0xff] %v629
  %s4608 = scalar_lea.vmem [#allocation1], 32
  %4609 = vst [vmem:[%s4608] ss:$4 sm:$0xff] %v25
  %s4610 = scalar_lea.vmem [#allocation1], 33
  %4611 = vst [vmem:[%s4610] ss:$4 sm:$0xff] %v630
  %s4612 = scalar_lea.vmem [#allocation1], 34
  %4613 = vst [vmem:[%s4612] ss:$4 sm:$0xff] %v631
  %s4614 = scalar_lea.vmem [#allocation1], 35
  %4615 = vst [vmem:[%s4614] ss:$4 sm:$0xff] %v26
  %v4616 = vld.sshfl [vmem:[#allocation1] sm:$0xff pattern:$0x73625140]
  %v4617 = vld.sshfl [vmem:[#allocation1 + $0x20] sm:$0xff pattern:$0x73625140]
  %4618 = vst [vmem:[#allocation1] ss:$4 sm:$0xff] %v632
  %4619 = vst [vmem:[%s4602] ss:$4 sm:$0xff] %v633
  %4620 = vst [vmem:[%s4604] ss:$4 sm:$0xff] %v634
  %4621 = vst [vmem:[%s4606] ss:$4 sm:$0xff] %v27
  %4622 = vst [vmem:[%s4608] ss:$4 sm:$0xff] %v635
  %4623 = vst [vmem:[%s4610] ss:$4 sm:$0xff] %v636
  %4624 = vst [vmem:[%s4612] ss:$4 sm:$0xff] %v28
  %4625 = vst [vmem:[%s4614] ss:$4 sm:$0xff] %v637
  %v4626 = vld.sshfl [vmem:[#allocation1] sm:$0xff pattern:$0x73625140]
  %v4627 = vld.sshfl [vmem:[#allocation1 + $0x20] sm:$0xff pattern:$0x73625140]
  %4628 = vst [vmem:[#allocation1] ss:$4 sm:$0xff] %v638
  %4629 = vst [vmem:[%s4602] ss:$4 sm:$0xff] %v639
  %4630 = vst [vmem:[%s4604] ss:$4 sm:$0xff] %v29
  %4631 = vst [vmem:[%s4606] ss:$4 sm:$0xff] %v640
  %4632 = vst [vmem:[%s4608] ss:$4 sm:$0xff] %v641
  %4633 = vst [vmem:[%s4610] ss:$4 sm:$0xff] %v30
  %4634 = vst [vmem:[%s4612] ss:$4 sm:$0xff] %v642
  %4635 = vst [vmem:[%s4614] ss:$4 sm:$0xff] %v643
  %v4636 = vld.sshfl [vmem:[#allocation1] sm:$0xff pattern:$0x73625140]
  %v4637 = vld.sshfl [vmem:[#allocation1 + $0x20] sm:$0xff pattern:$0x73625140]
  %4638 = vst [vmem:[#allocation1] ss:$4 sm:$0xff] %v644
  %4639 = vst [vmem:[%s4602] ss:$4 sm:$0xff] %v31
  %4640 = vst [vmem:[%s4604] ss:$4 sm:$0xff] %v645
  %4641 = vst [vmem:[%s4606] ss:$4 sm:$0xff] %v646
  %4642 = vst [vmem:[%s4608] ss:$4 sm:$0xff] %v32
  %4643 = vst [vmem:[%s4610] ss:$4 sm:$0xff] %v647
  %4644 = vst [vmem:[%s4612] ss:$4 sm:$0xff] %v648
  %4645 = vst [vmem:[%s4614] ss:$4 sm:$0xff] %v649
  %v4646 = vld.sshfl [vmem:[#allocation1] sm:$0xff pattern:$0x73625140]
  %v4647 = vld.sshfl [vmem:[#allocation1 + $0x20] sm:$0xff pattern:$0x73625140]
  %4648 = vst [vmem:[#allocation1] ss:$4 sm:$0xff] %v33
  %4649 = vst [vmem:[%s4602] ss:$4 sm:$0xff] %v650
  %4650 = vst [vmem:[%s4604] ss:$4 sm:$0xff] %v651
  %4651 = vst [vmem:[%s4606] ss:$4 sm:$0xff] %v34
  %4652 = vst [vmem:[%s4608] ss:$4 sm:$0xff] %v652
  %4653 = vst [vmem:[%s4610] ss:$4 sm:$0xff] %v653
  %4654 = vst [vmem:[%s4612] ss:$4 sm:$0xff] %v654
  %4655 = vst [vmem:[%s4614] ss:$4 sm:$0xff] %v35
  %v4656 = vld.sshfl [vmem:[#allocation1] sm:$0xff pattern:$0x73625140]
  %v4657 = vld.sshfl [vmem:[#allocation1 + $0x20] sm:$0xff pattern:$0x73625140]
  %4658 = vst [vmem:[#allocation1] ss:$4 sm:$0xff] %v655
  %4659 = vst [vmem:[%s4602] ss:$4 sm:$0xff] %v656
  %4660 = vst [vmem:[%s4604] ss:$4 sm:$0xff] %v36
  %4661 = vst [vmem:[%s4606] ss:$4 sm:$0xff] %v657
  %4662 = vst [vmem:[%s4608] ss:$4 sm:$0xff] %v658
  %4663 = vst [vmem:[%s4610] ss:$4 sm:$0xff] %v659
  %4664 = vst [vmem:[%s4612] ss:$4 sm:$0xff] %v37
  %4665 = vst [vmem:[%s4614] ss:$4 sm:$0xff] %v660
  %v4666 = vld.sshfl [vmem:[#allocation1] sm:$0xff pattern:$0x73625140]
  %v4667 = vld.sshfl [vmem:[#allocation1 + $0x20] sm:$0xff pattern:$0x73625140]
  %4668 = vst [vmem:[#allocation1] ss:$4 sm:$0xff] %v661
  %4669 = vst [vmem:[%s4602] ss:$4 sm:$0xff] %v38
  %4670 = vst [vmem:[%s4604] ss:$4 sm:$0xff] %v662
  %4671 = vst [vmem:[%s4606] ss:$4 sm:$0xff] %v663
  %4672 = vst [vmem:[%s4608] ss:$4 sm:$0xff] %v664
  %4673 = vst [vmem:[%s4610] ss:$4 sm:$0xff] %v39
  %4674 = vst [vmem:[%s4612] ss:$4 sm:$0xff] %v665
  %4675 = vst [vmem:[%s4614] ss:$4 sm:$0xff] %v666
  %v4676 = vld.sshfl [vmem:[#allocation1] sm:$0xff pattern:$0x73625140]
  %v4677 = vld.sshfl [vmem:[#allocation1 + $0x20] sm:$0xff pattern:$0x73625140]
  %4678 = vst [vmem:[#allocation1] ss:$4 sm:$0xff] %v40
  %4679 = vst [vmem:[%s4602] ss:$4 sm:$0xff] %v667
  %4680 = vst [vmem:[%s4604] ss:$4 sm:$0xff] %v668
  %4681 = vst [vmem:[%s4606] ss:$4 sm:$0xff] %v669
  %4682 = vst [vmem:[%s4608] ss:$4 sm:$0xff] %v41
  %4683 = vst [vmem:[%s4610] ss:$4 sm:$0xff] %v670
  %4684 = vst [vmem:[%s4612] ss:$4 sm:$0xff] %v671
  %4685 = vst [vmem:[%s4614] ss:$4 sm:$0xff] %v42
  %v4686 = vld.sshfl [vmem:[#allocation1] sm:$0xff pattern:$0x73625140]
  %v4687 = vld.sshfl [vmem:[#allocation1 + $0x20] sm:$0xff pattern:$0x73625140]
  %4688 = vst [vmem:[#allocation1] ss:$4 sm:$0xff] %v672
  %4689 = vst [vmem:[%s4602] ss:$4 sm:$0xff] %v673
  %4690 = vst [vmem:[%s4604] ss:$4 sm:$0xff] %v674
  %4691 = vst [vmem:[%s4606] ss:$4 sm:$0xff] %v43
  %4692 = vst [vmem:[%s4608] ss:$4 sm:$0xff] %v675
  %4693 = vst [vmem:[%s4610] ss:$4 sm:$0xff] %v676
  %4694 = vst [vmem:[%s4612] ss:$4 sm:$0xff] %v44
  %4695 = vst [vmem:[%s4614] ss:$4 sm:$0xff] %v677
  %v4696 = vld.sshfl [vmem:[#allocation1] sm:$0xff pattern:$0x73625140]
  %v4697 = vld.sshfl [vmem:[#allocation1 + $0x20] sm:$0xff pattern:$0x73625140]
  %4698 = vst [vmem:[#allocation1] ss:$4 sm:$0xff] %v678
  %4699 = vst [vmem:[%s4602] ss:$4 sm:$0xff] %v679
  %4700 = vst [vmem:[%s4604] ss:$4 sm:$0xff] %v45
  %4701 = vst [vmem:[%s4606] ss:$4 sm:$0xff] %v680
  %4702 = vst [vmem:[%s4608] ss:$4 sm:$0xff] %v681
  %4703 = vst [vmem:[%s4610] ss:$4 sm:$0xff] %v46
  %4704 = vst [vmem:[%s4612] ss:$4 sm:$0xff] %v682
  %4705 = vst [vmem:[%s4614] ss:$4 sm:$0xff] %v683
  %v4706 = vld.sshfl [vmem:[#allocation1] sm:$0xff pattern:$0x73625140]
  %v4707 = vld.sshfl [vmem:[#allocation1 + $0x20] sm:$0xff pattern:$0x73625140]
  %4708 = vst [vmem:[#allocation1] ss:$4 sm:$0xff] %v684
  %4709 = vst [vmem:[%s4602] ss:$4 sm:$0xff] %v47
  %4710 = vst [vmem:[%s4604] ss:$4 sm:$0xff] %v685
  %4711 = vst [vmem:[%s4606] ss:$4 sm:$0xff] %v686
  %4712 = vst [vmem:[%s4608] ss:$4 sm:$0xff] %v48
  %4713 = vst [vmem:[%s4610] ss:$4 sm:$0xff] %v1671
  %4714 = vst [vmem:[%s4612] ss:$4 sm:$0xff] %v1672
  %4715 = vst [vmem:[%s4614] ss:$4 sm:$0xff] %v1673
  %v4716 = vld.sshfl [vmem:[#allocation1] sm:$0xff pattern:$0x73625140]
  %v4717 = vld.sshfl [vmem:[#allocation1 + $0x20] sm:$0xff pattern:$0x73625140]
  %4718 = vst [vmem:[#allocation1] ss:$4 sm:$0xff] %v49
  %4719 = vst [vmem:[%s4602] ss:$4 sm:$0xff] %v1674
  %4720 = vst [vmem:[%s4604] ss:$4 sm:$0xff] %v1675
  %4721 = vst [vmem:[%s4606] ss:$4 sm:$0xff] %v50
  %4722 = vst [vmem:[%s4608] ss:$4 sm:$0xff] %v1990
  %4723 = vst [vmem:[%s4610] ss:$4 sm:$0xff] %v1991
  %4724 = vst [vmem:[%s4612] ss:$4 sm:$0xff] %v1992
  %4725 = vst [vmem:[%s4614] ss:$4 sm:$0xff] %v51
  %v4726 = vld.sshfl [vmem:[#allocation1] sm:$0xff pattern:$0x73625140]
  %v4727 = vld.sshfl [vmem:[#allocation1 + $0x20] sm:$0xff pattern:$0x73625140]
  %4728 = vst [vmem:[#allocation1] ss:$4 sm:$0xff] %v1993
  %4729 = vst [vmem:[%s4602] ss:$4 sm:$0xff] %v1994
  %4730 = vst [vmem:[%s4604] ss:$4 sm:$0xff] %v56
  %4731 = vst [vmem:[%s4606] ss:$4 sm:$0xff] %v697
  %4732 = vst [vmem:[%s4608] ss:$4 sm:$0xff] %v698
  %4733 = vst [vmem:[%s4610] ss:$4 sm:$0xff] %v699
  %4734 = vst [vmem:[%s4612] ss:$4 sm:$0xff] %v57
  %4735 = vst [vmem:[%s4614] ss:$4 sm:$0xff] %v700
  %v4736 = vld.sshfl [vmem:[#allocation1] sm:$0xff pattern:$0x73625140]
  %v4737 = vld.sshfl [vmem:[#allocation1 + $0x20] sm:$0xff pattern:$0x73625140]
  %4738 = vst [vmem:[#allocation1] ss:$4 sm:$0xff] %v701
  %4739 = vst [vmem:[%s4602] ss:$4 sm:$0xff] %v58
  %4740 = vst [vmem:[%s4604] ss:$4 sm:$0xff] %v702
  %4741 = vst [vmem:[%s4606] ss:$4 sm:$0xff] %v703
  %4742 = vst [vmem:[%s4608] ss:$4 sm:$0xff] %v704
  %4743 = vst [vmem:[%s4610] ss:$4 sm:$0xff] %v59
  %4744 = vst [vmem:[%s4612] ss:$4 sm:$0xff] %v705
  %4745 = vst [vmem:[%s4614] ss:$4 sm:$0xff] %v706
  %v4746 = vld.sshfl [vmem:[#allocation1] sm:$0xff pattern:$0x73625140]
  %v4747 = vld.sshfl [vmem:[#allocation1 + $0x20] sm:$0xff pattern:$0x73625140]
  %4748 = vst [vmem:[#allocation1] ss:$4 sm:$0xff] %v60
  %4749 = vst [vmem:[%s4602] ss:$4 sm:$0xff] %v707
  %4750 = vst [vmem:[%s4604] ss:$4 sm:$0xff] %v708
  %4751 = vst [vmem:[%s4606] ss:$4 sm:$0xff] %v709
  %4752 = vst [vmem:[%s4608] ss:$4 sm:$0xff] %v61
  %4753 = vst [vmem:[%s4610] ss:$4 sm:$0xff] %v710
  %4754 = vst [vmem:[%s4612] ss:$4 sm:$0xff] %v711
  %4755 = vst [vmem:[%s4614] ss:$4 sm:$0xff] %v62
  %v4756 = vld.sshfl [vmem:[#allocation1] sm:$0xff pattern:$0x73625140]
  %v4757 = vld.sshfl [vmem:[#allocation1 + $0x20] sm:$0xff pattern:$0x73625140]
  %4758 = vst [vmem:[#allocation1] ss:$4 sm:$0xff] %v712
  %4759 = vst [vmem:[%s4602] ss:$4 sm:$0xff] %v713
  %4760 = vst [vmem:[%s4604] ss:$4 sm:$0xff] %v714
  %4761 = vst [vmem:[%s4606] ss:$4 sm:$0xff] %v63
  %4762 = vst [vmem:[%s4608] ss:$4 sm:$0xff] %v715
  %4763 = vst [vmem:[%s4610] ss:$4 sm:$0xff] %v716
  %4764 = vst [vmem:[%s4612] ss:$4 sm:$0xff] %v64
  %4765 = vst [vmem:[%s4614] ss:$4 sm:$0xff] %v717
  %v4766 = vld.sshfl [vmem:[#allocation1] sm:$0xff pattern:$0x73625140]
  %v4767 = vld.sshfl [vmem:[#allocation1 + $0x20] sm:$0xff pattern:$0x73625140]
  %4768 = vst [vmem:[#allocation1] ss:$4 sm:$0xff] %v718
  %4769 = vst [vmem:[%s4602] ss:$4 sm:$0xff] %v719
  %4770 = vst [vmem:[%s4604] ss:$4 sm:$0xff] %v65
  %4771 = vst [vmem:[%s4606] ss:$4 sm:$0xff] %v720
  %4772 = vst [vmem:[%s4608] ss:$4 sm:$0xff] %v721
  %4773 = vst [vmem:[%s4610] ss:$4 sm:$0xff] %v66
  %4774 = vst [vmem:[%s4612] ss:$4 sm:$0xff] %v722
  %4775 = vst [vmem:[%s4614] ss:$4 sm:$0xff] %v723
  %v4776 = vld.sshfl [vmem:[#allocation1] sm:$0xff pattern:$0x73625140]
  %v4777 = vld.sshfl [vmem:[#allocation1 + $0x20] sm:$0xff pattern:$0x73625140]
  %4778 = vst [vmem:[#allocation1] ss:$4 sm:$0xff] %v724
  %4779 = vst [vmem:[%s4602] ss:$4 sm:$0xff] %v67
  %4780 = vst [vmem:[%s4604] ss:$4 sm:$0xff] %v725
  %4781 = vst [vmem:[%s4606] ss:$4 sm:$0xff] %v726
  %4782 = vst [vmem:[%s4608] ss:$4 sm:$0xff] %v68
  %4783 = vst [vmem:[%s4610] ss:$4 sm:$0xff] %v727
  %4784 = vst [vmem:[%s4612] ss:$4 sm:$0xff] %v728
  %4785 = vst [vmem:[%s4614] ss:$4 sm:$0xff] %v729
  %v4786 = vld.sshfl [vmem:[#allocation1] sm:$0xff pattern:$0x73625140]
  %v4787 = vld.sshfl [vmem:[#allocation1 + $0x20] sm:$0xff pattern:$0x73625140]
  %4788 = vst [vmem:[#allocation1] ss:$4 sm:$0xff] %v69
  %4789 = vst [vmem:[%s4602] ss:$4 sm:$0xff] %v730
  %4790 = vst [vmem:[%s4604] ss:$4 sm:$0xff] %v731
  %4791 = vst [vmem:[%s4606] ss:$4 sm:$0xff] %v70
  %4792 = vst [vmem:[%s4608] ss:$4 sm:$0xff] %v732
  %4793 = vst [vmem:[%s4610] ss:$4 sm:$0xff] %v733
  %4794 = vst [vmem:[%s4612] ss:$4 sm:$0xff] %v734
  %4795 = vst [vmem:[%s4614] ss:$4 sm:$0xff] %v71
  %v4796 = vld.sshfl [vmem:[#allocation1] sm:$0xff pattern:$0x73625140]
  %v4797 = vld.sshfl [vmem:[#allocation1 + $0x20] sm:$0xff pattern:$0x73625140]
  %4798 = vst [vmem:[#allocation1] ss:$4 sm:$0xff] %v735
  %4799 = vst [vmem:[%s4602] ss:$4 sm:$0xff] %v736
  %4800 = vst [vmem:[%s4604] ss:$4 sm:$0xff] %v72
  %4801 = vst [vmem:[%s4606] ss:$4 sm:$0xff] %v737
  %4802 = vst [vmem:[%s4608] ss:$4 sm:$0xff] %v738
  %4803 = vst [vmem:[%s4610] ss:$4 sm:$0xff] %v739
  %4804 = vst [vmem:[%s4612] ss:$4 sm:$0xff] %v73
  %4805 = vst [vmem:[%s4614] ss:$4 sm:$0xff] %v740
  %v4806 = vld.sshfl [vmem:[#allocation1] sm:$0xff pattern:$0x73625140]
  %v4807 = vld.sshfl [vmem:[#allocation1 + $0x20] sm:$0xff pattern:$0x73625140]
  %4808 = vst [vmem:[#allocation1] ss:$4 sm:$0xff] %v741
  %4809 = vst [vmem:[%s4602] ss:$4 sm:$0xff] %v74
  %4810 = vst [vmem:[%s4604] ss:$4 sm:$0xff] %v742
  %4811 = vst [vmem:[%s4606] ss:$4 sm:$0xff] %v743
  %4812 = vst [vmem:[%s4608] ss:$4 sm:$0xff] %v744
  %4813 = vst [vmem:[%s4610] ss:$4 sm:$0xff] %v75
  %4814 = vst [vmem:[%s4612] ss:$4 sm:$0xff] %v745
  %4815 = vst [vmem:[%s4614] ss:$4 sm:$0xff] %v746
  %v4816 = vld.sshfl [vmem:[#allocation1] sm:$0xff pattern:$0x73625140]
  %v4817 = vld.sshfl [vmem:[#allocation1 + $0x20] sm:$0xff pattern:$0x73625140]
  %4818 = vst [vmem:[#allocation1] ss:$4 sm:$0xff] %v76
  %4819 = vst [vmem:[%s4602] ss:$4 sm:$0xff] %v747
  %4820 = vst [vmem:[%s4604] ss:$4 sm:$0xff] %v748
  %4821 = vst [vmem:[%s4606] ss:$4 sm:$0xff] %v749
  %4822 = vst [vmem:[%s4608] ss:$4 sm:$0xff] %v77
  %4823 = vst [vmem:[%s4610] ss:$4 sm:$0xff] %v750
  %4824 = vst [vmem:[%s4612] ss:$4 sm:$0xff] %v751
  %4825 = vst [vmem:[%s4614] ss:$4 sm:$0xff] %v78
  %v4826 = vld.sshfl [vmem:[#allocation1] sm:$0xff pattern:$0x73625140]
  %v4827 = vld.sshfl [vmem:[#allocation1 + $0x20] sm:$0xff pattern:$0x73625140]
  %4828 = vst [vmem:[#allocation1] ss:$4 sm:$0xff] %v752
  %4829 = vst [vmem:[%s4602] ss:$4 sm:$0xff] %v753
  %4830 = vst [vmem:[%s4604] ss:$4 sm:$0xff] %v754
  %4831 = vst [vmem:[%s4606] ss:$4 sm:$0xff] %v79
  %4832 = vst [vmem:[%s4608] ss:$4 sm:$0xff] %v755
  %4833 = vst [vmem:[%s4610] ss:$4 sm:$0xff] %v756
  %4834 = vst [vmem:[%s4612] ss:$4 sm:$0xff] %v80
  %4835 = vst [vmem:[%s4614] ss:$4 sm:$0xff] %v1676
  %v4836 = vld.sshfl [vmem:[#allocation1] sm:$0xff pattern:$0x73625140]
  %v4837 = vld.sshfl [vmem:[#allocation1 + $0x20] sm:$0xff pattern:$0x73625140]
  %4838 = vst [vmem:[#allocation1] ss:$4 sm:$0xff] %v1677
  %4839 = vst [vmem:[%s4602] ss:$4 sm:$0xff] %v1678
  %4840 = vst [vmem:[%s4604] ss:$4 sm:$0xff] %v81
  %4841 = vst [vmem:[%s4606] ss:$4 sm:$0xff] %v1679
  %4842 = vst [vmem:[%s4608] ss:$4 sm:$0xff] %v1680
  %4843 = vst [vmem:[%s4610] ss:$4 sm:$0xff] %v82
  %4844 = vst [vmem:[%s4612] ss:$4 sm:$0xff] %v1995
  %4845 = vst [vmem:[%s4614] ss:$4 sm:$0xff] %v1996
  %v4846 = vld.sshfl [vmem:[#allocation1] sm:$0xff pattern:$0x73625140]
  %v4847 = vld.sshfl [vmem:[#allocation1 + $0x20] sm:$0xff pattern:$0x73625140]
  %4848 = vst [vmem:[#allocation1] ss:$4 sm:$0xff] %v1997
  %4849 = vst [vmem:[%s4602] ss:$4 sm:$0xff] %v83
  %4850 = vst [vmem:[%s4604] ss:$4 sm:$0xff] %v1998
  %4851 = vst [vmem:[%s4606] ss:$4 sm:$0xff] %v1999
  %v4852 = vld.sshfl [vmem:[#allocation1] sm:$0xff pattern:$0x73625140]
  %4853 = vrot.lane.b32.xlu0 %v4616, 48
  %v4854 = vpop.permute.xlu0 %4853
  %4855 = vrot.lane.b32.xlu0 %v4617, 48
  %v4856 = vpop.permute.xlu0 %4855
  %4857 = vrot.lane.b32.xlu0 %v4626, 48
  %v4858 = vpop.permute.xlu0 %4857
  %4859 = vrot.lane.b32.xlu0 %v4627, 48
  %v4860 = vpop.permute.xlu0 %4859
  %4861 = vrot.lane.b32.xlu0 %v4636, 48
  %v4862 = vpop.permute.xlu0 %4861
  %4863 = vrot.lane.b32.xlu0 %v4637, 48
  %v4864 = vpop.permute.xlu0 %4863
  %4865 = vrot.lane.b32.xlu0 %v4646, 48
  %v4866 = vpop.permute.xlu0 %4865
  %4867 = vrot.lane.b32.xlu0 %v4647, 48
  %v4868 = vpop.permute.xlu0 %4867
  %4869 = vrot.lane.b32.xlu0 %v4656, 48
  %v4870 = vpop.permute.xlu0 %4869
  %4871 = vrot.lane.b32.xlu0 %v4657, 48
  %v4872 = vpop.permute.xlu0 %4871
  %4873 = vrot.lane.b32.xlu0 %v4666, 48
  %v4874 = vpop.permute.xlu0 %4873
  %4875 = vrot.lane.b32.xlu0 %v4667, 48
  %v4876 = vpop.permute.xlu0 %4875
  %4877 = vrot.lane.b32.xlu0 %v4676, 48
  %v4878 = vpop.permute.xlu0 %4877
  %4879 = vrot.lane.b32.xlu0 %v4677, 48
  %v4880 = vpop.permute.xlu0 %4879
  %4881 = vrot.lane.b32.xlu0 %v4686, 48
  %v4882 = vpop.permute.xlu0 %4881
  %4883 = vrot.lane.b32.xlu0 %v4687, 48
  %v4884 = vpop.permute.xlu0 %4883
  %4885 = vrot.lane.b32.xlu0 %v4696, 48
  %v4886 = vpop.permute.xlu0 %4885
  %4887 = vrot.lane.b32.xlu0 %v4697, 48
  %v4888 = vpop.permute.xlu0 %4887
  %4889 = vrot.lane.b32.xlu0 %v4706, 48
  %v4890 = vpop.permute.xlu0 %4889
  %4891 = vrot.lane.b32.xlu0 %v4707, 48
  %v4892 = vpop.permute.xlu0 %4891
  %4893 = vrot.lane.b32.xlu0 %v4716, 48
  %v4894 = vpop.permute.xlu0 %4893
  %4895 = vrot.lane.b32.xlu0 %v4717, 48
  %v4896 = vpop.permute.xlu0 %4895
  %4897 = vrot.lane.b32.xlu0 %v4726, 48
  %v4898 = vpop.permute.xlu0 %4897
  %4899 = vrot.lane.b32.xlu0 %v4727, 48
  %v4900 = vpop.permute.xlu0 %4899
  %4901 = vrot.lane.b32.xlu0 %v4736, 48
  %v4902 = vpop.permute.xlu0 %4901
  %4903 = vrot.lane.b32.xlu0 %v4737, 48
  %v4904 = vpop.permute.xlu0 %4903
  %4905 = vrot.lane.b32.xlu0 %v4746, 48
  %v4906 = vpop.permute.xlu0 %4905
  %4907 = vrot.lane.b32.xlu0 %v4747, 48
  %v4908 = vpop.permute.xlu0 %4907
  %4909 = vrot.lane.b32.xlu0 %v4756, 48
  %v4910 = vpop.permute.xlu0 %4909
  %4911 = vrot.lane.b32.xlu0 %v4757, 48
  %v4912 = vpop.permute.xlu0 %4911
  %4913 = vrot.lane.b32.xlu0 %v4766, 48
  %v4914 = vpop.permute.xlu0 %4913
  %4915 = vrot.lane.b32.xlu0 %v4767, 48
  %v4916 = vpop.permute.xlu0 %4915
  %4917 = vrot.lane.b32.xlu0 %v4776, 48
  %v4918 = vpop.permute.xlu0 %4917
  %4919 = vrot.lane.b32.xlu0 %v4777, 48
  %v4920 = vpop.permute.xlu0 %4919
  %4921 = vrot.lane.b32.xlu0 %v4786, 48
  %v4922 = vpop.permute.xlu0 %4921
  %4923 = vrot.lane.b32.xlu0 %v4787, 48
  %v4924 = vpop.permute.xlu0 %4923
  %4925 = vrot.lane.b32.xlu0 %v4796, 48
  %v4926 = vpop.permute.xlu0 %4925
  %4927 = vrot.lane.b32.xlu0 %v4797, 48
  %v4928 = vpop.permute.xlu0 %4927
  %4929 = vrot.lane.b32.xlu0 %v4806, 48
  %v4930 = vpop.permute.xlu0 %4929
  %4931 = vrot.lane.b32.xlu0 %v4807, 48
  %v4932 = vpop.permute.xlu0 %4931
  %4933 = vrot.lane.b32.xlu0 %v4816, 48
  %v4934 = vpop.permute.xlu0 %4933
  %4935 = vrot.lane.b32.xlu0 %v4817, 48
  %v4936 = vpop.permute.xlu0 %4935
  %4937 = vrot.lane.b32.xlu0 %v4826, 48
  %v4938 = vpop.permute.xlu0 %4937
  %4939 = vrot.lane.b32.xlu0 %v4827, 48
  %v4940 = vpop.permute.xlu0 %4939
  %4941 = vrot.lane.b32.xlu0 %v4836, 48
  %v4942 = vpop.permute.xlu0 %4941
  %4943 = vrot.lane.b32.xlu0 %v4837, 48
  %v4944 = vpop.permute.xlu0 %4943
  %4945 = vrot.lane.b32.xlu0 %v4846, 48
  %v4946 = vpop.permute.xlu0 %4945
  %4947 = vrot.lane.b32.xlu0 %v4847, 48
  %v4948 = vpop.permute.xlu0 %4947
  %4949 = vrot.lane.b32.xlu0 %v4852, 48
  %v4950 = vpop.permute.xlu0 %4949
  %5000 = vst [vmem:[#allocation1] ss:$4 sm:$0xff] %v839
  %s5001 = scalar_lea.vmem [#allocation1], 1
  %5002 = vst [vmem:[%s5001] ss:$4 sm:$0xff] %v842
  %s5003 = scalar_lea.vmem [#allocation1], 2
  %5004 = vst [vmem:[%s5003] ss:$4 sm:$0xff] %v845
  %s5005 = scalar_lea.vmem [#allocation1], 3
  %5006 = vst [vmem:[%s5005] ss:$4 sm:$0xff] %v848
  %s5007 = scalar_lea.vmem [#allocation1], 32
  %5008 = vst [vmem:[%s5007] ss:$4 sm:$0xff] %v851
  %s5009 = scalar_lea.vmem [#allocation1], 33
  %5010 = vst [vmem:[%s5009] ss:$4 sm:$0xff] %v854
  %s5011 = scalar_lea.vmem [#allocation1], 34
  %5012 = vst [vmem:[%s5011] ss:$4 sm:$0xff] %v857
  %s5013 = scalar_lea.vmem [#allocation1], 35
  %5014 = vst [vmem:[%s5013] ss:$4 sm:$0xff] %v861
  %v5015 = vld.sshfl [vmem:[#allocation1] sm:$0xff pattern:$0x73625140]
  %v5016 = vld.sshfl [vmem:[#allocation1 + $0x20] sm:$0xff pattern:$0x73625140]
  %5017 = vst [vmem:[#allocation1] ss:$4 sm:$0xff] %v864
  %5018 = vst [vmem:[%s5001] ss:$4 sm:$0xff] %v867
  %5019 = vst [vmem:[%s5003] ss:$4 sm:$0xff] %v870
  %5020 = vst [vmem:[%s5005] ss:$4 sm:$0xff] %v873
  %5021 = vst [vmem:[%s5007] ss:$4 sm:$0xff] %v876
  %5022 = vst [vmem:[%s5009] ss:$4 sm:$0xff] %v879
  %5023 = vst [vmem:[%s5011] ss:$4 sm:$0xff] %v883
  %5024 = vst [vmem:[%s5013] ss:$4 sm:$0xff] %v886
  %v5025 = vld.sshfl [vmem:[#allocation1] sm:$0xff pattern:$0x73625140]
  %v5026 = vld.sshfl [vmem:[#allocation1 + $0x20] sm:$0xff pattern:$0x73625140]
  %5027 = vst [vmem:[#allocation1] ss:$4 sm:$0xff] %v889
  %5028 = vst [vmem:[%s5001] ss:$4 sm:$0xff] %v892
  %5029 = vst [vmem:[%s5003] ss:$4 sm:$0xff] %v895
  %5030 = vst [vmem:[%s5005] ss:$4 sm:$0xff] %v898
  %5031 = vst [vmem:[%s5007] ss:$4 sm:$0xff] %v901
  %5032 = vst [vmem:[%s5009] ss:$4 sm:$0xff] %v905
  %5033 = vst [vmem:[%s5011] ss:$4 sm:$0xff] %v908
  %5034 = vst [vmem:[%s5013] ss:$4 sm:$0xff] %v911
  %v5035 = vld.sshfl [vmem:[#allocation1] sm:$0xff pattern:$0x73625140]
  %v5036 = vld.sshfl [vmem:[#allocation1 + $0x20] sm:$0xff pattern:$0x73625140]
  %5037 = vst [vmem:[#allocation1] ss:$4 sm:$0xff] %v914
  %5038 = vst [vmem:[%s5001] ss:$4 sm:$0xff] %v917
  %5039 = vst [vmem:[%s5003] ss:$4 sm:$0xff] %v920
  %5040 = vst [vmem:[%s5005] ss:$4 sm:$0xff] %v923
  %5041 = vst [vmem:[%s5007] ss:$4 sm:$0xff] %v927
  %5042 = vst [vmem:[%s5009] ss:$4 sm:$0xff] %v930
  %5043 = vst [vmem:[%s5011] ss:$4 sm:$0xff] %v933
  %5044 = vst [vmem:[%s5013] ss:$4 sm:$0xff] %v936
  %v5045 = vld.sshfl [vmem:[#allocation1] sm:$0xff pattern:$0x73625140]
  %v5046 = vld.sshfl [vmem:[#allocation1 + $0x20] sm:$0xff pattern:$0x73625140]
  %5047 = vst [vmem:[#allocation1] ss:$4 sm:$0xff] %v939
  %5048 = vst [vmem:[%s5001] ss:$4 sm:$0xff] %v942
  %5049 = vst [vmem:[%s5003] ss:$4 sm:$0xff] %v945
  %5050 = vst [vmem:[%s5005] ss:$4 sm:$0xff] %v949
  %5051 = vst [vmem:[%s5007] ss:$4 sm:$0xff] %v952
  %5052 = vst [vmem:[%s5009] ss:$4 sm:$0xff] %v955
  %5053 = vst [vmem:[%s5011] ss:$4 sm:$0xff] %v958
  %5054 = vst [vmem:[%s5013] ss:$4 sm:$0xff] %v961
  %v5055 = vld.sshfl [vmem:[#allocation1] sm:$0xff pattern:$0x73625140]
  %v5056 = vld.sshfl [vmem:[#allocation1 + $0x20] sm:$0xff pattern:$0x73625140]
  %5057 = vst [vmem:[#allocation1] ss:$4 sm:$0xff] %v964
  %5058 = vst [vmem:[%s5001] ss:$4 sm:$0xff] %v967
  %5059 = vst [vmem:[%s5003] ss:$4 sm:$0xff] %v971
  %5060 = vst [vmem:[%s5005] ss:$4 sm:$0xff] %v974
  %5061 = vst [vmem:[%s5007] ss:$4 sm:$0xff] %v977
  %5062 = vst [vmem:[%s5009] ss:$4 sm:$0xff] %v980
  %5063 = vst [vmem:[%s5011] ss:$4 sm:$0xff] %v983
  %5064 = vst [vmem:[%s5013] ss:$4 sm:$0xff] %v986
  %v5065 = vld.sshfl [vmem:[#allocation1] sm:$0xff pattern:$0x73625140]
  %v5066 = vld.sshfl [vmem:[#allocation1 + $0x20] sm:$0xff pattern:$0x73625140]
  %5067 = vst [vmem:[#allocation1] ss:$4 sm:$0xff] %v989
  %5068 = vst [vmem:[%s5001] ss:$4 sm:$0xff] %v993
  %5069 = vst [vmem:[%s5003] ss:$4 sm:$0xff] %v996
  %5070 = vst [vmem:[%s5005] ss:$4 sm:$0xff] %v999
  %5071 = vst [vmem:[%s5007] ss:$4 sm:$0xff] %v1002
  %5072 = vst [vmem:[%s5009] ss:$4 sm:$0xff] %v1005
  %5073 = vst [vmem:[%s5011] ss:$4 sm:$0xff] %v1008
  %5074 = vst [vmem:[%s5013] ss:$4 sm:$0xff] %v1011
  %v5075 = vld.sshfl [vmem:[#allocation1] sm:$0xff pattern:$0x73625140]
  %v5076 = vld.sshfl [vmem:[#allocation1 + $0x20] sm:$0xff pattern:$0x73625140]
  %5077 = vst [vmem:[#allocation1] ss:$4 sm:$0xff] %v1015
  %5078 = vst [vmem:[%s5001] ss:$4 sm:$0xff] %v1018
  %5079 = vst [vmem:[%s5003] ss:$4 sm:$0xff] %v1021
  %5080 = vst [vmem:[%s5005] ss:$4 sm:$0xff] %v1024
  %5081 = vst [vmem:[%s5007] ss:$4 sm:$0xff] %v1027
  %5082 = vst [vmem:[%s5009] ss:$4 sm:$0xff] %v1030
  %5083 = vst [vmem:[%s5011] ss:$4 sm:$0xff] %v1033
  %5084 = vst [vmem:[%s5013] ss:$4 sm:$0xff] %v1037
  %v5085 = vld.sshfl [vmem:[#allocation1] sm:$0xff pattern:$0x73625140]
  %v5086 = vld.sshfl [vmem:[#allocation1 + $0x20] sm:$0xff pattern:$0x73625140]
  %5087 = vst [vmem:[#allocation1] ss:$4 sm:$0xff] %v1040
  %5088 = vst [vmem:[%s5001] ss:$4 sm:$0xff] %v1043
  %5089 = vst [vmem:[%s5003] ss:$4 sm:$0xff] %v1046
  %5090 = vst [vmem:[%s5005] ss:$4 sm:$0xff] %v1049
  %5091 = vst [vmem:[%s5007] ss:$4 sm:$0xff] %v1052
  %5092 = vst [vmem:[%s5009] ss:$4 sm:$0xff] %v1055
  %5093 = vst [vmem:[%s5011] ss:$4 sm:$0xff] %v1059
  %5094 = vst [vmem:[%s5013] ss:$4 sm:$0xff] %v1062
  %v5095 = vld.sshfl [vmem:[#allocation1] sm:$0xff pattern:$0x73625140]
  %v5096 = vld.sshfl [vmem:[#allocation1 + $0x20] sm:$0xff pattern:$0x73625140]
  %5097 = vst [vmem:[#allocation1] ss:$4 sm:$0xff] %v1065
  %5098 = vst [vmem:[%s5001] ss:$4 sm:$0xff] %v1068
  %5099 = vst [vmem:[%s5003] ss:$4 sm:$0xff] %v1071
  %5100 = vst [vmem:[%s5005] ss:$4 sm:$0xff] %v1074
  %5101 = vst [vmem:[%s5007] ss:$4 sm:$0xff] %v1077
  %5102 = vst [vmem:[%s5009] ss:$4 sm:$0xff] %v1081
  %5103 = vst [vmem:[%s5011] ss:$4 sm:$0xff] %v1084
  %5104 = vst [vmem:[%s5013] ss:$4 sm:$0xff] %v1087
  %v5105 = vld.sshfl [vmem:[#allocation1] sm:$0xff pattern:$0x73625140]
  %v5106 = vld.sshfl [vmem:[#allocation1 + $0x20] sm:$0xff pattern:$0x73625140]
  %5107 = vst [vmem:[#allocation1] ss:$4 sm:$0xff] %v1090
  %5108 = vst [vmem:[%s5001] ss:$4 sm:$0xff] %v1093
  %5109 = vst [vmem:[%s5003] ss:$4 sm:$0xff] %v1096
  %5110 = vst [vmem:[%s5005] ss:$4 sm:$0xff] %v1099
  %5111 = vst [vmem:[%s5007] ss:$4 sm:$0xff] %v1686
  %5112 = vst [vmem:[%s5009] ss:$4 sm:$0xff] %v1689
  %5113 = vst [vmem:[%s5011] ss:$4 sm:$0xff] %v1692
  %5114 = vst [vmem:[%s5013] ss:$4 sm:$0xff] %v1695
  %v5115 = vld.sshfl [vmem:[#allocation1] sm:$0xff pattern:$0x73625140]
  %v5116 = vld.sshfl [vmem:[#allocation1 + $0x20] sm:$0xff pattern:$0x73625140]
  %5117 = vst [vmem:[#allocation1] ss:$4 sm:$0xff] %v1698
  %5118 = vst [vmem:[%s5001] ss:$4 sm:$0xff] %v1701
  %5119 = vst [vmem:[%s5003] ss:$4 sm:$0xff] %v1704
  %5120 = vst [vmem:[%s5005] ss:$4 sm:$0xff] %v2005
  %5121 = vst [vmem:[%s5007] ss:$4 sm:$0xff] %v2008
  %5122 = vst [vmem:[%s5009] ss:$4 sm:$0xff] %v2011
  %5123 = vst [vmem:[%s5011] ss:$4 sm:$0xff] %v2014
  %5124 = vst [vmem:[%s5013] ss:$4 sm:$0xff] %v2017
  %v5125 = vld.sshfl [vmem:[#allocation1] sm:$0xff pattern:$0x73625140]
  %v5126 = vld.sshfl [vmem:[#allocation1 + $0x20] sm:$0xff pattern:$0x73625140]
  %5127 = vst [vmem:[#allocation1] ss:$4 sm:$0xff] %v2020
  %5128 = vst [vmem:[%s5001] ss:$4 sm:$0xff] %v2023
  %5129 = vst [vmem:[%s5003] ss:$4 sm:$0xff] %v1147
  %5130 = vst [vmem:[%s5005] ss:$4 sm:$0xff] %v1150
  %5131 = vst [vmem:[%s5007] ss:$4 sm:$0xff] %v1153
  %5132 = vst [vmem:[%s5009] ss:$4 sm:$0xff] %v1156
  %5133 = vst [vmem:[%s5011] ss:$4 sm:$0xff] %v1159
  %5134 = vst [vmem:[%s5013] ss:$4 sm:$0xff] %v1162
  %v5135 = vld.sshfl [vmem:[#allocation1] sm:$0xff pattern:$0x73625140]
  %v5136 = vld.sshfl [vmem:[#allocation1 + $0x20] sm:$0xff pattern:$0x73625140]
  %5137 = vst [vmem:[#allocation1] ss:$4 sm:$0xff] %v1165
  %5138 = vst [vmem:[%s5001] ss:$4 sm:$0xff] %v1169
  %5139 = vst [vmem:[%s5003] ss:$4 sm:$0xff] %v1172
  %5140 = vst [vmem:[%s5005] ss:$4 sm:$0xff] %v1175
  %5141 = vst [vmem:[%s5007] ss:$4 sm:$0xff] %v1178
  %5142 = vst [vmem:[%s5009] ss:$4 sm:$0xff] %v1181
  %5143 = vst [vmem:[%s5011] ss:$4 sm:$0xff] %v1184
  %5144 = vst [vmem:[%s5013] ss:$4 sm:$0xff] %v1187
  %v5145 = vld.sshfl [vmem:[#allocation1] sm:$0xff pattern:$0x73625140]
  %v5146 = vld.sshfl [vmem:[#allocation1 + $0x20] sm:$0xff pattern:$0x73625140]
  %5147 = vst [vmem:[#allocation1] ss:$4 sm:$0xff] %v1191
  %5148 = vst [vmem:[%s5001] ss:$4 sm:$0xff] %v1194
  %5149 = vst [vmem:[%s5003] ss:$4 sm:$0xff] %v1197
  %5150 = vst [vmem:[%s5005] ss:$4 sm:$0xff] %v1200
  %5151 = vst [vmem:[%s5007] ss:$4 sm:$0xff] %v1203
  %5152 = vst [vmem:[%s5009] ss:$4 sm:$0xff] %v1206
  %5153 = vst [vmem:[%s5011] ss:$4 sm:$0xff] %v1209
  %5154 = vst [vmem:[%s5013] ss:$4 sm:$0xff] %v1213
  %v5155 = vld.sshfl [vmem:[#allocation1] sm:$0xff pattern:$0x73625140]
  %v5156 = vld.sshfl [vmem:[#allocation1 + $0x20] sm:$0xff pattern:$0x73625140]
  %5157 = vst [vmem:[#allocation1] ss:$4 sm:$0xff] %v1216
  %5158 = vst [vmem:[%s5001] ss:$4 sm:$0xff] %v1219
  %5159 = vst [vmem:[%s5003] ss:$4 sm:$0xff] %v1222
  %5160 = vst [vmem:[%s5005] ss:$4 sm:$0xff] %v1225
  %5161 = vst [vmem:[%s5007] ss:$4 sm:$0xff] %v1228
  %5162 = vst [vmem:[%s5009] ss:$4 sm:$0xff] %v1231
  %5163 = vst [vmem:[%s5011] ss:$4 sm:$0xff] %v1235
  %5164 = vst [vmem:[%s5013] ss:$4 sm:$0xff] %v1238
  %v5165 = vld.sshfl [vmem:[#allocation1] sm:$0xff pattern:$0x73625140]
  %v5166 = vld.sshfl [vmem:[#allocation1 + $0x20] sm:$0xff pattern:$0x73625140]
  %5167 = vst [vmem:[#allocation1] ss:$4 sm:$0xff] %v1241
  %5168 = vst [vmem:[%s5001] ss:$4 sm:$0xff] %v1244
  %5169 = vst [vmem:[%s5003] ss:$4 sm:$0xff] %v1247
  %5170 = vst [vmem:[%s5005] ss:$4 sm:$0xff] %v1250
  %5171 = vst [vmem:[%s5007] ss:$4 sm:$0xff] %v1253
  %5172 = vst [vmem:[%s5009] ss:$4 sm:$0xff] %v1257
  %5173 = vst [vmem:[%s5011] ss:$4 sm:$0xff] %v1260
  %5174 = vst [vmem:[%s5013] ss:$4 sm:$0xff] %v1263
  %v5175 = vld.sshfl [vmem:[#allocation1] sm:$0xff pattern:$0x73625140]
  %v5176 = vld.sshfl [vmem:[#allocation1 + $0x20] sm:$0xff pattern:$0x73625140]
  %5177 = vst [vmem:[#allocation1] ss:$4 sm:$0xff] %v1266
  %5178 = vst [vmem:[%s5001] ss:$4 sm:$0xff] %v1269
  %5179 = vst [vmem:[%s5003] ss:$4 sm:$0xff] %v1272
  %5180 = vst [vmem:[%s5005] ss:$4 sm:$0xff] %v1275
  %5181 = vst [vmem:[%s5007] ss:$4 sm:$0xff] %v1279
  %5182 = vst [vmem:[%s5009] ss:$4 sm:$0xff] %v1282
  %5183 = vst [vmem:[%s5011] ss:$4 sm:$0xff] %v1285
  %5184 = vst [vmem:[%s5013] ss:$4 sm:$0xff] %v1288
  %v5185 = vld.sshfl [vmem:[#allocation1] sm:$0xff pattern:$0x73625140]
  %v5186 = vld.sshfl [vmem:[#allocation1 + $0x20] sm:$0xff pattern:$0x73625140]
  %5187 = vst [vmem:[#allocation1] ss:$4 sm:$0xff] %v1291
  %5188 = vst [vmem:[%s5001] ss:$4 sm:$0xff] %v1294
  %5189 = vst [vmem:[%s5003] ss:$4 sm:$0xff] %v1297
  %5190 = vst [vmem:[%s5005] ss:$4 sm:$0xff] %v1301
  %5191 = vst [vmem:[%s5007] ss:$4 sm:$0xff] %v1304
  %5192 = vst [vmem:[%s5009] ss:$4 sm:$0xff] %v1307
  %5193 = vst [vmem:[%s5011] ss:$4 sm:$0xff] %v1310
  %5194 = vst [vmem:[%s5013] ss:$4 sm:$0xff] %v1313
  %v5195 = vld.sshfl [vmem:[#allocation1] sm:$0xff pattern:$0x73625140]
  %v5196 = vld.sshfl [vmem:[#allocation1 + $0x20] sm:$0xff pattern:$0x73625140]
  %5197 = vst [vmem:[#allocation1] ss:$4 sm:$0xff] %v1316
  %5198 = vst [vmem:[%s5001] ss:$4 sm:$0xff] %v1319
  %5199 = vst [vmem:[%s5003] ss:$4 sm:$0xff] %v1323
  %5200 = vst [vmem:[%s5005] ss:$4 sm:$0xff] %v1326
  %5201 = vst [vmem:[%s5007] ss:$4 sm:$0xff] %v1329
  %5202 = vst [vmem:[%s5009] ss:$4 sm:$0xff] %v1332
  %5203 = vst [vmem:[%s5011] ss:$4 sm:$0xff] %v1335
  %5204 = vst [vmem:[%s5013] ss:$4 sm:$0xff] %v1338
  %v5205 = vld.sshfl [vmem:[#allocation1] sm:$0xff pattern:$0x73625140]
  %v5206 = vld.sshfl [vmem:[#allocation1 + $0x20] sm:$0xff pattern:$0x73625140]
  %5207 = vst [vmem:[#allocation1] ss:$4 sm:$0xff] %v1341
  %5208 = vst [vmem:[%s5001] ss:$4 sm:$0xff] %v1345
  %5209 = vst [vmem:[%s5003] ss:$4 sm:$0xff] %v1348
  %5210 = vst [vmem:[%s5005] ss:$4 sm:$0xff] %v1351
  %5211 = vst [vmem:[%s5007] ss:$4 sm:$0xff] %v1354
  %5212 = vst [vmem:[%s5009] ss:$4 sm:$0xff] %v1357
  %5213 = vst [vmem:[%s5011] ss:$4 sm:$0xff] %v1360
  %5214 = vst [vmem:[%s5013] ss:$4 sm:$0xff] %v1363
  %v5215 = vld.sshfl [vmem:[#allocation1] sm:$0xff pattern:$0x73625140]
  %v5216 = vld.sshfl [vmem:[#allocation1 + $0x20] sm:$0xff pattern:$0x73625140]
  %5217 = vst [vmem:[#allocation1] ss:$4 sm:$0xff] %v1367
  %5218 = vst [vmem:[%s5001] ss:$4 sm:$0xff] %v1370
  %5219 = vst [vmem:[%s5003] ss:$4 sm:$0xff] %v1373
  %5220 = vst [vmem:[%s5005] ss:$4 sm:$0xff] %v1376
  %5221 = vst [vmem:[%s5007] ss:$4 sm:$0xff] %v1379
  %5222 = vst [vmem:[%s5009] ss:$4 sm:$0xff] %v1382
  %5223 = vst [vmem:[%s5011] ss:$4 sm:$0xff] %v1385
  %5224 = vst [vmem:[%s5013] ss:$4 sm:$0xff] %v1389
  %v5225 = vld.sshfl [vmem:[#allocation1] sm:$0xff pattern:$0x73625140]
  %v5226 = vld.sshfl [vmem:[#allocation1 + $0x20] sm:$0xff pattern:$0x73625140]
  %5227 = vst [vmem:[#allocation1] ss:$4 sm:$0xff] %v1392
  %5228 = vst [vmem:[%s5001] ss:$4 sm:$0xff] %v1395
  %5229 = vst [vmem:[%s5003] ss:$4 sm:$0xff] %v1398
  %5230 = vst [vmem:[%s5005] ss:$4 sm:$0xff] %v1401
  %5231 = vst [vmem:[%s5007] ss:$4 sm:$0xff] %v1404
  %5232 = vst [vmem:[%s5009] ss:$4 sm:$0xff] %v1407
  %5233 = vst [vmem:[%s5011] ss:$4 sm:$0xff] %v1708
  %5234 = vst [vmem:[%s5013] ss:$4 sm:$0xff] %v1711
  %v5235 = vld.sshfl [vmem:[#allocation1] sm:$0xff pattern:$0x73625140]
  %v5236 = vld.sshfl [vmem:[#allocation1 + $0x20] sm:$0xff pattern:$0x73625140]
  %5237 = vst [vmem:[#allocation1] ss:$4 sm:$0xff] %v1714
  %5238 = vst [vmem:[%s5001] ss:$4 sm:$0xff] %v1717
  %5239 = vst [vmem:[%s5003] ss:$4 sm:$0xff] %v1720
  %5240 = vst [vmem:[%s5005] ss:$4 sm:$0xff] %v1723
  %5241 = vst [vmem:[%s5007] ss:$4 sm:$0xff] %v1726
  %5242 = vst [vmem:[%s5009] ss:$4 sm:$0xff] %v2027
  %5243 = vst [vmem:[%s5011] ss:$4 sm:$0xff] %v2030
  %5244 = vst [vmem:[%s5013] ss:$4 sm:$0xff] %v2033
  %v5245 = vld.sshfl [vmem:[#allocation1] sm:$0xff pattern:$0x73625140]
  %v5246 = vld.sshfl [vmem:[#allocation1 + $0x20] sm:$0xff pattern:$0x73625140]
  %5247 = vst [vmem:[#allocation1] ss:$4 sm:$0xff] %v2036
  %5248 = vst [vmem:[%s5001] ss:$4 sm:$0xff] %v2039
  %5249 = vst [vmem:[%s5003] ss:$4 sm:$0xff] %v2042
  %5250 = vst [vmem:[%s5005] ss:$4 sm:$0xff] %v2045
  %v5251 = vld.sshfl [vmem:[#allocation1] sm:$0xff pattern:$0x73625140]
  %5252 = vrot.lane.b32.xlu0 %v5015, 56
  %v5253 = vpop.permute.xlu0 %5252
  %5254 = vrot.lane.b32.xlu0 %v5016, 56
  %v5255 = vpop.permute.xlu0 %5254
  %5256 = vrot.lane.b32.xlu0 %v5025, 56
  %v5257 = vpop.permute.xlu0 %5256
  %5258 = vrot.lane.b32.xlu0 %v5026, 56
  %v5259 = vpop.permute.xlu0 %5258
  %5260 = vrot.lane.b32.xlu0 %v5035, 56
  %v5261 = vpop.permute.xlu0 %5260
  %5262 = vrot.lane.b32.xlu0 %v5036, 56
  %v5263 = vpop.permute.xlu0 %5262
  %5264 = vrot.lane.b32.xlu0 %v5045, 56
  %v5265 = vpop.permute.xlu0 %5264
  %5266 = vrot.lane.b32.xlu0 %v5046, 56
  %v5267 = vpop.permute.xlu0 %5266
  %5268 = vrot.lane.b32.xlu0 %v5055, 56
  %v5269 = vpop.permute.xlu0 %5268
  %5270 = vrot.lane.b32.xlu0 %v5056, 56
  %v5271 = vpop.permute.xlu0 %5270
  %5272 = vrot.lane.b32.xlu0 %v5065, 56
  %v5273 = vpop.permute.xlu0 %5272
  %5274 = vrot.lane.b32.xlu0 %v5066, 56
  %v5275 = vpop.permute.xlu0 %5274
  %5276 = vrot.lane.b32.xlu0 %v5075, 56
  %v5277 = vpop.permute.xlu0 %5276
  %5278 = vrot.lane.b32.xlu0 %v5076, 56
  %v5279 = vpop.permute.xlu0 %5278
  %5280 = vrot.lane.b32.xlu0 %v5085, 56
  %v5281 = vpop.permute.xlu0 %5280
  %5282 = vrot.lane.b32.xlu0 %v5086, 56
  %v5283 = vpop.permute.xlu0 %5282
  %5284 = vrot.lane.b32.xlu0 %v5095, 56
  %v5285 = vpop.permute.xlu0 %5284
  %5286 = vrot.lane.b32.xlu0 %v5096, 56
  %v5287 = vpop.permute.xlu0 %5286
  %5288 = vrot.lane.b32.xlu0 %v5105, 56
  %v5289 = vpop.permute.xlu0 %5288
  %5290 = vrot.lane.b32.xlu0 %v5106, 56
  %v5291 = vpop.permute.xlu0 %5290
  %5292 = vrot.lane.b32.xlu0 %v5115, 56
  %v5293 = vpop.permute.xlu0 %5292
  %5294 = vrot.lane.b32.xlu0 %v5116, 56
  %v5295 = vpop.permute.xlu0 %5294
  %5296 = vrot.lane.b32.xlu0 %v5125, 56
  %v5297 = vpop.permute.xlu0 %5296
  %5298 = vrot.lane.b32.xlu0 %v5126, 56
  %v5299 = vpop.permute.xlu0 %5298
  %5300 = vrot.lane.b32.xlu0 %v5135, 56
  %v5301 = vpop.permute.xlu0 %5300
  %5302 = vrot.lane.b32.xlu0 %v5136, 56
  %v5303 = vpop.permute.xlu0 %5302
  %5304 = vrot.lane.b32.xlu0 %v5145, 56
  %v5305 = vpop.permute.xlu0 %5304
  %5306 = vrot.lane.b32.xlu0 %v5146, 56
  %v5307 = vpop.permute.xlu0 %5306
  %5308 = vrot.lane.b32.xlu0 %v5155, 56
  %v5309 = vpop.permute.xlu0 %5308
  %5310 = vrot.lane.b32.xlu0 %v5156, 56
  %v5311 = vpop.permute.xlu0 %5310
  %5312 = vrot.lane.b32.xlu0 %v5165, 56
  %v5313 = vpop.permute.xlu0 %5312
  %5314 = vrot.lane.b32.xlu0 %v5166, 56
  %v5315 = vpop.permute.xlu0 %5314
  %5316 = vrot.lane.b32.xlu0 %v5175, 56
  %v5317 = vpop.permute.xlu0 %5316
  %5318 = vrot.lane.b32.xlu0 %v5176, 56
  %v5319 = vpop.permute.xlu0 %5318
  %5320 = vrot.lane.b32.xlu0 %v5185, 56
  %v5321 = vpop.permute.xlu0 %5320
  %5322 = vrot.lane.b32.xlu0 %v5186, 56
  %v5323 = vpop.permute.xlu0 %5322
  %5324 = vrot.lane.b32.xlu0 %v5195, 56
  %v5325 = vpop.permute.xlu0 %5324
  %5326 = vrot.lane.b32.xlu0 %v5196, 56
  %v5327 = vpop.permute.xlu0 %5326
  %5328 = vrot.lane.b32.xlu0 %v5205, 56
  %v5329 = vpop.permute.xlu0 %5328
  %5330 = vrot.lane.b32.xlu0 %v5206, 56
  %v5331 = vpop.permute.xlu0 %5330
  %5332 = vrot.lane.b32.xlu0 %v5215, 56
  %v5333 = vpop.permute.xlu0 %5332
  %5334 = vrot.lane.b32.xlu0 %v5216, 56
  %v5335 = vpop.permute.xlu0 %5334
  %5336 = vrot.lane.b32.xlu0 %v5225, 56
  %v5337 = vpop.permute.xlu0 %5336
  %5338 = vrot.lane.b32.xlu0 %v5226, 56
  %v5339 = vpop.permute.xlu0 %5338
  %5340 = vrot.lane.b32.xlu0 %v5235, 56
  %v5341 = vpop.permute.xlu0 %5340
  %5342 = vrot.lane.b32.xlu0 %v5236, 56
  %v5343 = vpop.permute.xlu0 %5342
  %5344 = vrot.lane.b32.xlu0 %v5245, 56
  %v5345 = vpop.permute.xlu0 %5344
  %5346 = vrot.lane.b32.xlu0 %v5246, 56
  %v5347 = vpop.permute.xlu0 %5346
  %5348 = vrot.lane.b32.xlu0 %v5251, 56
  %v5349 = vpop.permute.xlu0 %5348
  %5399 = vst [vmem:[#allocation1] ss:$4 sm:$0xff] %v2049
  %s5400 = scalar_lea.vmem [#allocation1], 1
  %5401 = vst [vmem:[%s5400] ss:$4 sm:$0xff] %v2051
  %s5402 = scalar_lea.vmem [#allocation1], 2
  %5403 = vst [vmem:[%s5402] ss:$4 sm:$0xff] %v2053
  %s5404 = scalar_lea.vmem [#allocation1], 3
  %5405 = vst [vmem:[%s5404] ss:$4 sm:$0xff] %v2055
  %s5406 = scalar_lea.vmem [#allocation1], 32
  %5407 = vst [vmem:[%s5406] ss:$4 sm:$0xff] %v2057
  %s5408 = scalar_lea.vmem [#allocation1], 33
  %5409 = vst [vmem:[%s5408] ss:$4 sm:$0xff] %v2059
  %s5410 = scalar_lea.vmem [#allocation1], 34
  %5411 = vst [vmem:[%s5410] ss:$4 sm:$0xff] %v2061
  %s5412 = scalar_lea.vmem [#allocation1], 35
  %5413 = vst [vmem:[%s5412] ss:$4 sm:$0xff] %v2064
  %v5414 = vld.sshfl [vmem:[#allocation1] sm:$0xff pattern:$0x73625140]
  %v5415 = vld.sshfl [vmem:[#allocation1 + $0x20] sm:$0xff pattern:$0x73625140]
  %5416 = vst [vmem:[#allocation1] ss:$4 sm:$0xff] %v2065
  %5417 = vst [vmem:[%s5400] ss:$4 sm:$0xff] %v2066
  %5418 = vst [vmem:[%s5402] ss:$4 sm:$0xff] %v2067
  %5419 = vst [vmem:[%s5404] ss:$4 sm:$0xff] %v2068
  %5420 = vst [vmem:[%s5406] ss:$4 sm:$0xff] %v2069
  %5421 = vst [vmem:[%s5408] ss:$4 sm:$0xff] %v2070
  %5422 = vst [vmem:[%s5410] ss:$4 sm:$0xff] %v2073
  %5423 = vst [vmem:[%s5412] ss:$4 sm:$0xff] %v2074
  %v5424 = vld.sshfl [vmem:[#allocation1] sm:$0xff pattern:$0x73625140]
  %v5425 = vld.sshfl [vmem:[#allocation1 + $0x20] sm:$0xff pattern:$0x73625140]
  %5426 = vst [vmem:[#allocation1] ss:$4 sm:$0xff] %v2075
  %5427 = vst [vmem:[%s5400] ss:$4 sm:$0xff] %v2076
  %5428 = vst [vmem:[%s5402] ss:$4 sm:$0xff] %v2077
  %5429 = vst [vmem:[%s5404] ss:$4 sm:$0xff] %v2078
  %5430 = vst [vmem:[%s5406] ss:$4 sm:$0xff] %v2079
  %5431 = vst [vmem:[%s5408] ss:$4 sm:$0xff] %v2082
  %5432 = vst [vmem:[%s5410] ss:$4 sm:$0xff] %v2083
  %5433 = vst [vmem:[%s5412] ss:$4 sm:$0xff] %v2084
  %v5434 = vld.sshfl [vmem:[#allocation1] sm:$0xff pattern:$0x73625140]
  %v5435 = vld.sshfl [vmem:[#allocation1 + $0x20] sm:$0xff pattern:$0x73625140]
  %5436 = vst [vmem:[#allocation1] ss:$4 sm:$0xff] %v2085
  %5437 = vst [vmem:[%s5400] ss:$4 sm:$0xff] %v2086
  %5438 = vst [vmem:[%s5402] ss:$4 sm:$0xff] %v2087
  %5439 = vst [vmem:[%s5404] ss:$4 sm:$0xff] %v2088
  %5440 = vst [vmem:[%s5406] ss:$4 sm:$0xff] %v2091
  %5441 = vst [vmem:[%s5408] ss:$4 sm:$0xff] %v2092
  %5442 = vst [vmem:[%s5410] ss:$4 sm:$0xff] %v2093
  %5443 = vst [vmem:[%s5412] ss:$4 sm:$0xff] %v2094
  %v5444 = vld.sshfl [vmem:[#allocation1] sm:$0xff pattern:$0x73625140]
  %v5445 = vld.sshfl [vmem:[#allocation1 + $0x20] sm:$0xff pattern:$0x73625140]
  %5446 = vst [vmem:[#allocation1] ss:$4 sm:$0xff] %v2095
  %5447 = vst [vmem:[%s5400] ss:$4 sm:$0xff] %v2096
  %5448 = vst [vmem:[%s5402] ss:$4 sm:$0xff] %v2097
  %5449 = vst [vmem:[%s5404] ss:$4 sm:$0xff] %v2100
  %5450 = vst [vmem:[%s5406] ss:$4 sm:$0xff] %v2101
  %5451 = vst [vmem:[%s5408] ss:$4 sm:$0xff] %v2102
  %5452 = vst [vmem:[%s5410] ss:$4 sm:$0xff] %v2103
  %5453 = vst [vmem:[%s5412] ss:$4 sm:$0xff] %v2104
  %v5454 = vld.sshfl [vmem:[#allocation1] sm:$0xff pattern:$0x73625140]
  %v5455 = vld.sshfl [vmem:[#allocation1 + $0x20] sm:$0xff pattern:$0x73625140]
  %5456 = vst [vmem:[#allocation1] ss:$4 sm:$0xff] %v2105
  %5457 = vst [vmem:[%s5400] ss:$4 sm:$0xff] %v2106
  %5458 = vst [vmem:[%s5402] ss:$4 sm:$0xff] %v2109
  %5459 = vst [vmem:[%s5404] ss:$4 sm:$0xff] %v2110
  %5460 = vst [vmem:[%s5406] ss:$4 sm:$0xff] %v2111
  %5461 = vst [vmem:[%s5408] ss:$4 sm:$0xff] %v2112
  %5462 = vst [vmem:[%s5410] ss:$4 sm:$0xff] %v2113
  %5463 = vst [vmem:[%s5412] ss:$4 sm:$0xff] %v2114
  %v5464 = vld.sshfl [vmem:[#allocation1] sm:$0xff pattern:$0x73625140]
  %v5465 = vld.sshfl [vmem:[#allocation1 + $0x20] sm:$0xff pattern:$0x73625140]
  %5466 = vst [vmem:[#allocation1] ss:$4 sm:$0xff] %v2115
  %5467 = vst [vmem:[%s5400] ss:$4 sm:$0xff] %v2118
  %5468 = vst [vmem:[%s5402] ss:$4 sm:$0xff] %v2119
  %5469 = vst [vmem:[%s5404] ss:$4 sm:$0xff] %v2120
  %5470 = vst [vmem:[%s5406] ss:$4 sm:$0xff] %v2121
  %5471 = vst [vmem:[%s5408] ss:$4 sm:$0xff] %v2122
  %5472 = vst [vmem:[%s5410] ss:$4 sm:$0xff] %v2123
  %5473 = vst [vmem:[%s5412] ss:$4 sm:$0xff] %v2124
  %v5474 = vld.sshfl [vmem:[#allocation1] sm:$0xff pattern:$0x73625140]
  %v5475 = vld.sshfl [vmem:[#allocation1 + $0x20] sm:$0xff pattern:$0x73625140]
  %5476 = vst [vmem:[#allocation1] ss:$4 sm:$0xff] %v2127
  %5477 = vst [vmem:[%s5400] ss:$4 sm:$0xff] %v2128
  %5478 = vst [vmem:[%s5402] ss:$4 sm:$0xff] %v2129
  %5479 = vst [vmem:[%s5404] ss:$4 sm:$0xff] %v2130
  %5480 = vst [vmem:[%s5406] ss:$4 sm:$0xff] %v2131
  %5481 = vst [vmem:[%s5408] ss:$4 sm:$0xff] %v2132
  %5482 = vst [vmem:[%s5410] ss:$4 sm:$0xff] %v2133
  %5483 = vst [vmem:[%s5412] ss:$4 sm:$0xff] %v2136
  %v5484 = vld.sshfl [vmem:[#allocation1] sm:$0xff pattern:$0x73625140]
  %v5485 = vld.sshfl [vmem:[#allocation1 + $0x20] sm:$0xff pattern:$0x73625140]
  %5486 = vst [vmem:[#allocation1] ss:$4 sm:$0xff] %v2137
  %5487 = vst [vmem:[%s5400] ss:$4 sm:$0xff] %v2138
  %5488 = vst [vmem:[%s5402] ss:$4 sm:$0xff] %v2139
  %5489 = vst [vmem:[%s5404] ss:$4 sm:$0xff] %v2140
  %5490 = vst [vmem:[%s5406] ss:$4 sm:$0xff] %v2141
  %5491 = vst [vmem:[%s5408] ss:$4 sm:$0xff] %v2142
  %5492 = vst [vmem:[%s5410] ss:$4 sm:$0xff] %v2145
  %5493 = vst [vmem:[%s5412] ss:$4 sm:$0xff] %v2146
  %v5494 = vld.sshfl [vmem:[#allocation1] sm:$0xff pattern:$0x73625140]
  %v5495 = vld.sshfl [vmem:[#allocation1 + $0x20] sm:$0xff pattern:$0x73625140]
  %5496 = vst [vmem:[#allocation1] ss:$4 sm:$0xff] %v2147
  %5497 = vst [vmem:[%s5400] ss:$4 sm:$0xff] %v2148
  %5498 = vst [vmem:[%s5402] ss:$4 sm:$0xff] %v2149
  %5499 = vst [vmem:[%s5404] ss:$4 sm:$0xff] %v2150
  %5500 = vst [vmem:[%s5406] ss:$4 sm:$0xff] %v2151
  %5501 = vst [vmem:[%s5408] ss:$4 sm:$0xff] %v2154
  %5502 = vst [vmem:[%s5410] ss:$4 sm:$0xff] %v2155
  %5503 = vst [vmem:[%s5412] ss:$4 sm:$0xff] %v2156
  %v5504 = vld.sshfl [vmem:[#allocation1] sm:$0xff pattern:$0x73625140]
  %v5505 = vld.sshfl [vmem:[#allocation1 + $0x20] sm:$0xff pattern:$0x73625140]
  %5506 = vst [vmem:[#allocation1] ss:$4 sm:$0xff] %v2157
  %5507 = vst [vmem:[%s5400] ss:$4 sm:$0xff] %v2158
  %5508 = vst [vmem:[%s5402] ss:$4 sm:$0xff] %v2159
  %5509 = vst [vmem:[%s5404] ss:$4 sm:$0xff] %v2160
  %5510 = vst [vmem:[%s5406] ss:$4 sm:$0xff] %v2163
  %5511 = vst [vmem:[%s5408] ss:$4 sm:$0xff] %v2164
  %5512 = vst [vmem:[%s5410] ss:$4 sm:$0xff] %v2165
  %5513 = vst [vmem:[%s5412] ss:$4 sm:$0xff] %v2166
  %v5514 = vld.sshfl [vmem:[#allocation1] sm:$0xff pattern:$0x73625140]
  %v5515 = vld.sshfl [vmem:[#allocation1 + $0x20] sm:$0xff pattern:$0x73625140]
  %5516 = vst [vmem:[#allocation1] ss:$4 sm:$0xff] %v2167
  %5517 = vst [vmem:[%s5400] ss:$4 sm:$0xff] %v2168
  %5518 = vst [vmem:[%s5402] ss:$4 sm:$0xff] %v2169
  %5519 = vst [vmem:[%s5404] ss:$4 sm:$0xff] %v2172
  %5520 = vst [vmem:[%s5406] ss:$4 sm:$0xff] %v2173
  %5521 = vst [vmem:[%s5408] ss:$4 sm:$0xff] %v2174
  %5522 = vst [vmem:[%s5410] ss:$4 sm:$0xff] %v2175
  %5523 = vst [vmem:[%s5412] ss:$4 sm:$0xff] %v2176
  %v5524 = vld.sshfl [vmem:[#allocation1] sm:$0xff pattern:$0x73625140]
  %v5525 = vld.sshfl [vmem:[#allocation1 + $0x20] sm:$0xff pattern:$0x73625140]
  %5526 = vst [vmem:[#allocation1] ss:$4 sm:$0xff] %v2177
  %5527 = vst [vmem:[%s5400] ss:$4 sm:$0xff] %v2178
  %5528 = vst [vmem:[%s5402] ss:$4 sm:$0xff] %v2181
  %5529 = vst [vmem:[%s5404] ss:$4 sm:$0xff] %v2182
  %5530 = vst [vmem:[%s5406] ss:$4 sm:$0xff] %v2183
  %5531 = vst [vmem:[%s5408] ss:$4 sm:$0xff] %v2184
  %5532 = vst [vmem:[%s5410] ss:$4 sm:$0xff] %v2185
  %5533 = vst [vmem:[%s5412] ss:$4 sm:$0xff] %v2186
  %v5534 = vld.sshfl [vmem:[#allocation1] sm:$0xff pattern:$0x73625140]
  %v5535 = vld.sshfl [vmem:[#allocation1 + $0x20] sm:$0xff pattern:$0x73625140]
  %5536 = vst [vmem:[#allocation1] ss:$4 sm:$0xff] %v2187
  %5537 = vst [vmem:[%s5400] ss:$4 sm:$0xff] %v2190
  %5538 = vst [vmem:[%s5402] ss:$4 sm:$0xff] %v2191
  %5539 = vst [vmem:[%s5404] ss:$4 sm:$0xff] %v2192
  %5540 = vst [vmem:[%s5406] ss:$4 sm:$0xff] %v2193
  %5541 = vst [vmem:[%s5408] ss:$4 sm:$0xff] %v2194
  %5542 = vst [vmem:[%s5410] ss:$4 sm:$0xff] %v2195
  %5543 = vst [vmem:[%s5412] ss:$4 sm:$0xff] %v2196
  %v5544 = vld.sshfl [vmem:[#allocation1] sm:$0xff pattern:$0x73625140]
  %v5545 = vld.sshfl [vmem:[#allocation1 + $0x20] sm:$0xff pattern:$0x73625140]
  %5546 = vst [vmem:[#allocation1] ss:$4 sm:$0xff] %v2199
  %5547 = vst [vmem:[%s5400] ss:$4 sm:$0xff] %v2200
  %5548 = vst [vmem:[%s5402] ss:$4 sm:$0xff] %v2201
  %5549 = vst [vmem:[%s5404] ss:$4 sm:$0xff] %v2202
  %5550 = vst [vmem:[%s5406] ss:$4 sm:$0xff] %v2203
  %5551 = vst [vmem:[%s5408] ss:$4 sm:$0xff] %v2204
  %5552 = vst [vmem:[%s5410] ss:$4 sm:$0xff] %v2205
  %5553 = vst [vmem:[%s5412] ss:$4 sm:$0xff] %v2208
  %v5554 = vld.sshfl [vmem:[#allocation1] sm:$0xff pattern:$0x73625140]
  %v5555 = vld.sshfl [vmem:[#allocation1 + $0x20] sm:$0xff pattern:$0x73625140]
  %5556 = vst [vmem:[#allocation1] ss:$4 sm:$0xff] %v2209
  %5557 = vst [vmem:[%s5400] ss:$4 sm:$0xff] %v2210
  %5558 = vst [vmem:[%s5402] ss:$4 sm:$0xff] %v2211
  %5559 = vst [vmem:[%s5404] ss:$4 sm:$0xff] %v2212
  %5560 = vst [vmem:[%s5406] ss:$4 sm:$0xff] %v2213
  %5561 = vst [vmem:[%s5408] ss:$4 sm:$0xff] %v2214
  %5562 = vst [vmem:[%s5410] ss:$4 sm:$0xff] %v2217
  %5563 = vst [vmem:[%s5412] ss:$4 sm:$0xff] %v2218
  %v5564 = vld.sshfl [vmem:[#allocation1] sm:$0xff pattern:$0x73625140]
  %v5565 = vld.sshfl [vmem:[#allocation1 + $0x20] sm:$0xff pattern:$0x73625140]
  %5566 = vst [vmem:[#allocation1] ss:$4 sm:$0xff] %v2219
  %5567 = vst [vmem:[%s5400] ss:$4 sm:$0xff] %v2220
  %5568 = vst [vmem:[%s5402] ss:$4 sm:$0xff] %v2221
  %5569 = vst [vmem:[%s5404] ss:$4 sm:$0xff] %v2222
  %5570 = vst [vmem:[%s5406] ss:$4 sm:$0xff] %v2223
  %5571 = vst [vmem:[%s5408] ss:$4 sm:$0xff] %v2226
  %5572 = vst [vmem:[%s5410] ss:$4 sm:$0xff] %v2227
  %5573 = vst [vmem:[%s5412] ss:$4 sm:$0xff] %v2228
  %v5574 = vld.sshfl [vmem:[#allocation1] sm:$0xff pattern:$0x73625140]
  %v5575 = vld.sshfl [vmem:[#allocation1 + $0x20] sm:$0xff pattern:$0x73625140]
  %5576 = vst [vmem:[#allocation1] ss:$4 sm:$0xff] %v2229
  %5577 = vst [vmem:[%s5400] ss:$4 sm:$0xff] %v2230
  %5578 = vst [vmem:[%s5402] ss:$4 sm:$0xff] %v2231
  %5579 = vst [vmem:[%s5404] ss:$4 sm:$0xff] %v2232
  %5580 = vst [vmem:[%s5406] ss:$4 sm:$0xff] %v2235
  %5581 = vst [vmem:[%s5408] ss:$4 sm:$0xff] %v2236
  %5582 = vst [vmem:[%s5410] ss:$4 sm:$0xff] %v2237
  %5583 = vst [vmem:[%s5412] ss:$4 sm:$0xff] %v2238
  %v5584 = vld.sshfl [vmem:[#allocation1] sm:$0xff pattern:$0x73625140]
  %v5585 = vld.sshfl [vmem:[#allocation1 + $0x20] sm:$0xff pattern:$0x73625140]
  %5586 = vst [vmem:[#allocation1] ss:$4 sm:$0xff] %v2239
  %5587 = vst [vmem:[%s5400] ss:$4 sm:$0xff] %v2240
  %5588 = vst [vmem:[%s5402] ss:$4 sm:$0xff] %v2241
  %5589 = vst [vmem:[%s5404] ss:$4 sm:$0xff] %v2244
  %5590 = vst [vmem:[%s5406] ss:$4 sm:$0xff] %v2245
  %5591 = vst [vmem:[%s5408] ss:$4 sm:$0xff] %v2246
  %5592 = vst [vmem:[%s5410] ss:$4 sm:$0xff] %v2247
  %5593 = vst [vmem:[%s5412] ss:$4 sm:$0xff] %v2248
  %v5594 = vld.sshfl [vmem:[#allocation1] sm:$0xff pattern:$0x73625140]
  %v5595 = vld.sshfl [vmem:[#allocation1 + $0x20] sm:$0xff pattern:$0x73625140]
  %5596 = vst [vmem:[#allocation1] ss:$4 sm:$0xff] %v2249
  %5597 = vst [vmem:[%s5400] ss:$4 sm:$0xff] %v2250
  %5598 = vst [vmem:[%s5402] ss:$4 sm:$0xff] %v2253
  %5599 = vst [vmem:[%s5404] ss:$4 sm:$0xff] %v2254
  %5600 = vst [vmem:[%s5406] ss:$4 sm:$0xff] %v2255
  %5601 = vst [vmem:[%s5408] ss:$4 sm:$0xff] %v2256
  %5602 = vst [vmem:[%s5410] ss:$4 sm:$0xff] %v2257
  %5603 = vst [vmem:[%s5412] ss:$4 sm:$0xff] %v2258
  %v5604 = vld.sshfl [vmem:[#allocation1] sm:$0xff pattern:$0x73625140]
  %v5605 = vld.sshfl [vmem:[#allocation1 + $0x20] sm:$0xff pattern:$0x73625140]
  %5606 = vst [vmem:[#allocation1] ss:$4 sm:$0xff] %v2259
  %5607 = vst [vmem:[%s5400] ss:$4 sm:$0xff] %v2262
  %5608 = vst [vmem:[%s5402] ss:$4 sm:$0xff] %v2263
  %5609 = vst [vmem:[%s5404] ss:$4 sm:$0xff] %v2264
  %5610 = vst [vmem:[%s5406] ss:$4 sm:$0xff] %v2265
  %5611 = vst [vmem:[%s5408] ss:$4 sm:$0xff] %v2266
  %5612 = vst [vmem:[%s5410] ss:$4 sm:$0xff] %v2267
  %5613 = vst [vmem:[%s5412] ss:$4 sm:$0xff] %v2268
  %v5614 = vld.sshfl [vmem:[#allocation1] sm:$0xff pattern:$0x73625140]
  %v5615 = vld.sshfl [vmem:[#allocation1 + $0x20] sm:$0xff pattern:$0x73625140]
  %5616 = vst [vmem:[#allocation1] ss:$4 sm:$0xff] %v2271
  %5617 = vst [vmem:[%s5400] ss:$4 sm:$0xff] %v2272
  %5618 = vst [vmem:[%s5402] ss:$4 sm:$0xff] %v2273
  %5619 = vst [vmem:[%s5404] ss:$4 sm:$0xff] %v2274
  %5620 = vst [vmem:[%s5406] ss:$4 sm:$0xff] %v2275
  %5621 = vst [vmem:[%s5408] ss:$4 sm:$0xff] %v2276
  %5622 = vst [vmem:[%s5410] ss:$4 sm:$0xff] %v2277
  %5623 = vst [vmem:[%s5412] ss:$4 sm:$0xff] %v2280
  %v5624 = vld.sshfl [vmem:[#allocation1] sm:$0xff pattern:$0x73625140]
  %v5625 = vld.sshfl [vmem:[#allocation1 + $0x20] sm:$0xff pattern:$0x73625140]
  %5626 = vst [vmem:[#allocation1] ss:$4 sm:$0xff] %v2281
  %5627 = vst [vmem:[%s5400] ss:$4 sm:$0xff] %v2282
  %5628 = vst [vmem:[%s5402] ss:$4 sm:$0xff] %v2283
  %5629 = vst [vmem:[%s5404] ss:$4 sm:$0xff] %v2284
  %5630 = vst [vmem:[%s5406] ss:$4 sm:$0xff] %v2285
  %5631 = vst [vmem:[%s5408] ss:$4 sm:$0xff] %v2286
  %5632 = vst [vmem:[%s5410] ss:$4 sm:$0xff] %v2289
  %5633 = vst [vmem:[%s5412] ss:$4 sm:$0xff] %v2290
  %v5634 = vld.sshfl [vmem:[#allocation1] sm:$0xff pattern:$0x73625140]
  %v5635 = vld.sshfl [vmem:[#allocation1 + $0x20] sm:$0xff pattern:$0x73625140]
  %5636 = vst [vmem:[#allocation1] ss:$4 sm:$0xff] %v2291
  %5637 = vst [vmem:[%s5400] ss:$4 sm:$0xff] %v2292
  %5638 = vst [vmem:[%s5402] ss:$4 sm:$0xff] %v2293
  %5639 = vst [vmem:[%s5404] ss:$4 sm:$0xff] %v2294
  %5640 = vst [vmem:[%s5406] ss:$4 sm:$0xff] %v2295
  %5641 = vst [vmem:[%s5408] ss:$4 sm:$0xff] %v2298
  %5642 = vst [vmem:[%s5410] ss:$4 sm:$0xff] %v2299
  %5643 = vst [vmem:[%s5412] ss:$4 sm:$0xff] %v2300
  %v5644 = vld.sshfl [vmem:[#allocation1] sm:$0xff pattern:$0x73625140]
  %v5645 = vld.sshfl [vmem:[#allocation1 + $0x20] sm:$0xff pattern:$0x73625140]
  %5646 = vst [vmem:[#allocation1] ss:$4 sm:$0xff] %v2301
  %5647 = vst [vmem:[%s5400] ss:$4 sm:$0xff] %v2302
  %5648 = vst [vmem:[%s5402] ss:$4 sm:$0xff] %v2303
  %5649 = vst [vmem:[%s5404] ss:$4 sm:$0xff] %v2304
  %v5650 = vld.sshfl [vmem:[#allocation1] sm:$0xff pattern:$0x73625140]
  %5651 = vrot.lane.b32.xlu0 %v5414, 64
  %v5652 = vpop.permute.xlu0 %5651
  %5653 = vrot.lane.b32.xlu0 %v5415, 64
  %v5654 = vpop.permute.xlu0 %5653
  %5655 = vrot.lane.b32.xlu0 %v5424, 64
  %v5656 = vpop.permute.xlu0 %5655
  %5657 = vrot.lane.b32.xlu0 %v5425, 64
  %v5658 = vpop.permute.xlu0 %5657
  %5659 = vrot.lane.b32.xlu0 %v5434, 64
  %v5660 = vpop.permute.xlu0 %5659
  %5661 = vrot.lane.b32.xlu0 %v5435, 64
  %v5662 = vpop.permute.xlu0 %5661
  %5663 = vrot.lane.b32.xlu0 %v5444, 64
  %v5664 = vpop.permute.xlu0 %5663
  %5665 = vrot.lane.b32.xlu0 %v5445, 64
  %v5666 = vpop.permute.xlu0 %5665
  %5667 = vrot.lane.b32.xlu0 %v5454, 64
  %v5668 = vpop.permute.xlu0 %5667
  %5669 = vrot.lane.b32.xlu0 %v5455, 64
  %v5670 = vpop.permute.xlu0 %5669
  %5671 = vrot.lane.b32.xlu0 %v5464, 64
  %v5672 = vpop.permute.xlu0 %5671
  %5673 = vrot.lane.b32.xlu0 %v5465, 64
  %v5674 = vpop.permute.xlu0 %5673
  %5675 = vrot.lane.b32.xlu0 %v5474, 64
  %v5676 = vpop.permute.xlu0 %5675
  %5677 = vrot.lane.b32.xlu0 %v5475, 64
  %v5678 = vpop.permute.xlu0 %5677
  %5679 = vrot.lane.b32.xlu0 %v5484, 64
  %v5680 = vpop.permute.xlu0 %5679
  %5681 = vrot.lane.b32.xlu0 %v5485, 64
  %v5682 = vpop.permute.xlu0 %5681
  %5683 = vrot.lane.b32.xlu0 %v5494, 64
  %v5684 = vpop.permute.xlu0 %5683
  %5685 = vrot.lane.b32.xlu0 %v5495, 64
  %v5686 = vpop.permute.xlu0 %5685
  %5687 = vrot.lane.b32.xlu0 %v5504, 64
  %v5688 = vpop.permute.xlu0 %5687
  %5689 = vrot.lane.b32.xlu0 %v5505, 64
  %v5690 = vpop.permute.xlu0 %5689
  %5691 = vrot.lane.b32.xlu0 %v5514, 64
  %v5692 = vpop.permute.xlu0 %5691
  %5693 = vrot.lane.b32.xlu0 %v5515, 64
  %v5694 = vpop.permute.xlu0 %5693
  %5695 = vrot.lane.b32.xlu0 %v5524, 64
  %v5696 = vpop.permute.xlu0 %5695
  %5697 = vrot.lane.b32.xlu0 %v5525, 64
  %v5698 = vpop.permute.xlu0 %5697
  %5699 = vrot.lane.b32.xlu0 %v5534, 64
  %v5700 = vpop.permute.xlu0 %5699
  %5701 = vrot.lane.b32.xlu0 %v5535, 64
  %v5702 = vpop.permute.xlu0 %5701
  %5703 = vrot.lane.b32.xlu0 %v5544, 64
  %v5704 = vpop.permute.xlu0 %5703
  %5705 = vrot.lane.b32.xlu0 %v5545, 64
  %v5706 = vpop.permute.xlu0 %5705
  %5707 = vrot.lane.b32.xlu0 %v5554, 64
  %v5708 = vpop.permute.xlu0 %5707
  %5709 = vrot.lane.b32.xlu0 %v5555, 64
  %v5710 = vpop.permute.xlu0 %5709
  %5711 = vrot.lane.b32.xlu0 %v5564, 64
  %v5712 = vpop.permute.xlu0 %5711
  %5713 = vrot.lane.b32.xlu0 %v5565, 64
  %v5714 = vpop.permute.xlu0 %5713
  %5715 = vrot.lane.b32.xlu0 %v5574, 64
  %v5716 = vpop.permute.xlu0 %5715
  %5717 = vrot.lane.b32.xlu0 %v5575, 64
  %v5718 = vpop.permute.xlu0 %5717
  %5719 = vrot.lane.b32.xlu0 %v5584, 64
  %v5720 = vpop.permute.xlu0 %5719
  %5721 = vrot.lane.b32.xlu0 %v5585, 64
  %v5722 = vpop.permute.xlu0 %5721
  %5723 = vrot.lane.b32.xlu0 %v5594, 64
  %v5724 = vpop.permute.xlu0 %5723
  %5725 = vrot.lane.b32.xlu0 %v5595, 64
  %v5726 = vpop.permute.xlu0 %5725
  %5727 = vrot.lane.b32.xlu0 %v5604, 64
  %v5728 = vpop.permute.xlu0 %5727
  %5729 = vrot.lane.b32.xlu0 %v5605, 64
  %v5730 = vpop.permute.xlu0 %5729
  %5731 = vrot.lane.b32.xlu0 %v5614, 64
  %v5732 = vpop.permute.xlu0 %5731
  %5733 = vrot.lane.b32.xlu0 %v5615, 64
  %v5734 = vpop.permute.xlu0 %5733
  %5735 = vrot.lane.b32.xlu0 %v5624, 64
  %v5736 = vpop.permute.xlu0 %5735
  %5737 = vrot.lane.b32.xlu0 %v5625, 64
  %v5738 = vpop.permute.xlu0 %5737
  %5739 = vrot.lane.b32.xlu0 %v5634, 64
  %v5740 = vpop.permute.xlu0 %5739
  %5741 = vrot.lane.b32.xlu0 %v5635, 64
  %v5742 = vpop.permute.xlu0 %5741
  %5743 = vrot.lane.b32.xlu0 %v5644, 64
  %v5744 = vpop.permute.xlu0 %5743
  %5745 = vrot.lane.b32.xlu0 %v5645, 64
  %v5746 = vpop.permute.xlu0 %5745
  %5747 = vrot.lane.b32.xlu0 %v5650, 64
  %v5748 = vpop.permute.xlu0 %5747
  %v5798 = vsel %vm84, %v2320, %v2859
  %v5799 = vsel %vm84, %v2321, %v2861
  %v5800 = vsel %vm84, %v2330, %v2863
  %v5801 = vsel %vm84, %v2331, %v2865
  %v5802 = vsel %vm84, %v2340, %v2867
  %v5803 = vsel %vm84, %v2341, %v2869
  %v5804 = vsel %vm84, %v2350, %v2871
  %v5805 = vsel %vm84, %v2351, %v2873
  %v5806 = vsel %vm84, %v2360, %v2875
  %v5807 = vsel %vm84, %v2361, %v2877
  %v5808 = vsel %vm84, %v2370, %v2879
  %v5809 = vsel %vm84, %v2371, %v2881
  %v5810 = vsel %vm84, %v2380, %v2883
  %v5811 = vsel %vm84, %v2381, %v2885
  %v5812 = vsel %vm84, %v2390, %v2887
  %v5813 = vsel %vm84, %v2391, %v2889
  %v5814 = vsel %vm84, %v2400, %v2891
  %v5815 = vsel %vm84, %v2401, %v2893
  %v5816 = vsel %vm84, %v2410, %v2895
  %v5817 = vsel %vm84, %v2411, %v2897
  %v5818 = vsel %vm84, %v2420, %v2899
  %v5819 = vsel %vm84, %v2421, %v2901
  %v5820 = vsel %vm84, %v2430, %v2903
  %v5821 = vsel %vm84, %v2431, %v2905
  %v5822 = vsel %vm84, %v2440, %v2907
  %v5823 = vsel %vm84, %v2441, %v2909
  %v5824 = vsel %vm84, %v2450, %v2911
  %v5825 = vsel %vm84, %v2451, %v2913
  %v5826 = vsel %vm84, %v2460, %v2915
  %v5827 = vsel %vm84, %v2461, %v2917
  %v5828 = vsel %vm84, %v2470, %v2919
  %v5829 = vsel %vm84, %v2471, %v2921
  %v5830 = vsel %vm84, %v2480, %v2923
  %v5831 = vsel %vm84, %v2481, %v2925
  %v5832 = vsel %vm84, %v2490, %v2927
  %v5833 = vsel %vm84, %v2491, %v2929
  %v5834 = vsel %vm84, %v2500, %v2931
  %v5835 = vsel %vm84, %v2501, %v2933
  %v5836 = vsel %vm84, %v2510, %v2935
  %v5837 = vsel %vm84, %v2511, %v2937
  %v5838 = vsel %vm84, %v2520, %v2939
  %v5839 = vsel %vm84, %v2521, %v2941
  %v5840 = vsel %vm84, %v2530, %v2943
  %v5841 = vsel %vm84, %v2531, %v2945
  %v5842 = vsel %vm84, %v2540, %v2947
  %v5843 = vsel %vm84, %v2541, %v2949
  %v5844 = vsel %vm84, %v2550, %v2951
  %v5845 = vsel %vm84, %v2551, %v2953
  %v5846 = vsel %vm84, %v2556, %v2955
  %vm5847 = vcmask 130048
  %v5848 = vsel %vm5847, %v5798, %v3258
  %v5849 = vsel %vm5847, %v5799, %v3260
  %v5850 = vsel %vm5847, %v5800, %v3262
  %v5851 = vsel %vm5847, %v5801, %v3264
  %v5852 = vsel %vm5847, %v5802, %v3266
  %v5853 = vsel %vm5847, %v5803, %v3268
  %v5854 = vsel %vm5847, %v5804, %v3270
  %v5855 = vsel %vm5847, %v5805, %v3272
  %v5856 = vsel %vm5847, %v5806, %v3274
  %v5857 = vsel %vm5847, %v5807, %v3276
  %v5858 = vsel %vm5847, %v5808, %v3278
  %v5859 = vsel %vm5847, %v5809, %v3280
  %v5860 = vsel %vm5847, %v5810, %v3282
  %v5861 = vsel %vm5847, %v5811, %v3284
  %v5862 = vsel %vm5847, %v5812, %v3286
  %v5863 = vsel %vm5847, %v5813, %v3288
  %v5864 = vsel %vm5847, %v5814, %v3290
  %v5865 = vsel %vm5847, %v5815, %v3292
  %v5866 = vsel %vm5847, %v5816, %v3294
  %v5867 = vsel %vm5847, %v5817, %v3296
  %v5868 = vsel %vm5847, %v5818, %v3298
  %v5869 = vsel %vm5847, %v5819, %v3300
  %v5870 = vsel %vm5847, %v5820, %v3302
  %v5871 = vsel %vm5847, %v5821, %v3304
  %v5872 = vsel %vm5847, %v5822, %v3306
  %v5873 = vsel %vm5847, %v5823, %v3308
  %v5874 = vsel %vm5847, %v5824, %v3310
  %v5875 = vsel %vm5847, %v5825, %v3312
  %v5876 = vsel %vm5847, %v5826, %v3314
  %v5877 = vsel %vm5847, %v5827, %v3316
  %v5878 = vsel %vm5847, %v5828, %v3318
  %v5879 = vsel %vm5847, %v5829, %v3320
  %v5880 = vsel %vm5847, %v5830, %v3322
  %v5881 = vsel %vm5847, %v5831, %v3324
  %v5882 = vsel %vm5847, %v5832, %v3326
  %v5883 = vsel %vm5847, %v5833, %v3328
  %v5884 = vsel %vm5847, %v5834, %v3330
  %v5885 = vsel %vm5847, %v5835, %v3332
  %v5886 = vsel %vm5847, %v5836, %v3334
  %v5887 = vsel %vm5847, %v5837, %v3336
  %v5888 = vsel %vm5847, %v5838, %v3338
  %v5889 = vsel %vm5847, %v5839, %v3340
  %v5890 = vsel %vm5847, %v5840, %v3342
  %v5891 = vsel %vm5847, %v5841, %v3344
  %v5892 = vsel %vm5847, %v5842, %v3346
  %v5893 = vsel %vm5847, %v5843, %v3348
  %v5894 = vsel %vm5847, %v5844, %v3350
  %v5895 = vsel %vm5847, %v5845, %v3352
  %v5896 = vsel %vm5847, %v5846, %v3354
  %vm5897 = vcmask 195584
  %v5898 = vsel %vm5897, %v5848, %v3657
  %v5899 = vsel %vm5897, %v5849, %v3659
  %v5900 = vsel %vm5897, %v5850, %v3661
  %v5901 = vsel %vm5897, %v5851, %v3663
  %v5902 = vsel %vm5897, %v5852, %v3665
  %v5903 = vsel %vm5897, %v5853, %v3667
  %v5904 = vsel %vm5897, %v5854, %v3669
  %v5905 = vsel %vm5897, %v5855, %v3671
  %v5906 = vsel %vm5897, %v5856, %v3673
  %v5907 = vsel %vm5897, %v5857, %v3675
  %v5908 = vsel %vm5897, %v5858, %v3677
  %v5909 = vsel %vm5897, %v5859, %v3679
  %v5910 = vsel %vm5897, %v5860, %v3681
  %v5911 = vsel %vm5897, %v5861, %v3683
  %v5912 = vsel %vm5897, %v5862, %v3685
  %v5913 = vsel %vm5897, %v5863, %v3687
  %v5914 = vsel %vm5897, %v5864, %v3689
  %v5915 = vsel %vm5897, %v5865, %v3691
  %v5916 = vsel %vm5897, %v5866, %v3693
  %v5917 = vsel %vm5897, %v5867, %v3695
  %v5918 = vsel %vm5897, %v5868, %v3697
  %v5919 = vsel %vm5897, %v5869, %v3699
  %v5920 = vsel %vm5897, %v5870, %v3701
  %v5921 = vsel %vm5897, %v5871, %v3703
  %v5922 = vsel %vm5897, %v5872, %v3705
  %v5923 = vsel %vm5897, %v5873, %v3707
  %v5924 = vsel %vm5897, %v5874, %v3709
  %v5925 = vsel %vm5897, %v5875, %v3711
  %v5926 = vsel %vm5897, %v5876, %v3713
  %v5927 = vsel %vm5897, %v5877, %v3715
  %v5928 = vsel %vm5897, %v5878, %v3717
  %v5929 = vsel %vm5897, %v5879, %v3719
  %v5930 = vsel %vm5897, %v5880, %v3721
  %v5931 = vsel %vm5897, %v5881, %v3723
  %v5932 = vsel %vm5897, %v5882, %v3725
  %v5933 = vsel %vm5897, %v5883, %v3727
  %v5934 = vsel %vm5897, %v5884, %v3729
  %v5935 = vsel %vm5897, %v5885, %v3731
  %v5936 = vsel %vm5897, %v5886, %v3733
  %v5937 = vsel %vm5897, %v5887, %v3735
  %v5938 = vsel %vm5897, %v5888, %v3737
  %v5939 = vsel %vm5897, %v5889, %v3739
  %v5940 = vsel %vm5897, %v5890, %v3741
  %v5941 = vsel %vm5897, %v5891, %v3743
  %v5942 = vsel %vm5897, %v5892, %v3745
  %v5943 = vsel %vm5897, %v5893, %v3747
  %v5944 = vsel %vm5897, %v5894, %v3749
  %v5945 = vsel %vm5897, %v5895, %v3751
  %v5946 = vsel %vm5897, %v5896, %v3753
  %vm5947 = vcmask 261120
  %v5948 = vsel %vm5947, %v5898, %v4056
  %v5949 = vsel %vm5947, %v5899, %v4058
  %v5950 = vsel %vm5947, %v5900, %v4060
  %v5951 = vsel %vm5947, %v5901, %v4062
  %v5952 = vsel %vm5947, %v5902, %v4064
  %v5953 = vsel %vm5947, %v5903, %v4066
  %v5954 = vsel %vm5947, %v5904, %v4068
  %v5955 = vsel %vm5947, %v5905, %v4070
  %v5956 = vsel %vm5947, %v5906, %v4072
  %v5957 = vsel %vm5947, %v5907, %v4074
  %v5958 = vsel %vm5947, %v5908, %v4076
  %v5959 = vsel %vm5947, %v5909, %v4078
  %v5960 = vsel %vm5947, %v5910, %v4080
  %v5961 = vsel %vm5947, %v5911, %v4082
  %v5962 = vsel %vm5947, %v5912, %v4084
  %v5963 = vsel %vm5947, %v5913, %v4086
  %v5964 = vsel %vm5947, %v5914, %v4088
  %v5965 = vsel %vm5947, %v5915, %v4090
  %v5966 = vsel %vm5947, %v5916, %v4092
  %v5967 = vsel %vm5947, %v5917, %v4094
  %v5968 = vsel %vm5947, %v5918, %v4096
  %v5969 = vsel %vm5947, %v5919, %v4098
  %v5970 = vsel %vm5947, %v5920, %v4100
  %v5971 = vsel %vm5947, %v5921, %v4102
  %v5972 = vsel %vm5947, %v5922, %v4104
  %v5973 = vsel %vm5947, %v5923, %v4106
  %v5974 = vsel %vm5947, %v5924, %v4108
  %v5975 = vsel %vm5947, %v5925, %v4110
  %v5976 = vsel %vm5947, %v5926, %v4112
  %v5977 = vsel %vm5947, %v5927, %v4114
  %v5978 = vsel %vm5947, %v5928, %v4116
  %v5979 = vsel %vm5947, %v5929, %v4118
  %v5980 = vsel %vm5947, %v5930, %v4120
  %v5981 = vsel %vm5947, %v5931, %v4122
  %v5982 = vsel %vm5947, %v5932, %v4124
  %v5983 = vsel %vm5947, %v5933, %v4126
  %v5984 = vsel %vm5947, %v5934, %v4128
  %v5985 = vsel %vm5947, %v5935, %v4130
  %v5986 = vsel %vm5947, %v5936, %v4132
  %v5987 = vsel %vm5947, %v5937, %v4134
  %v5988 = vsel %vm5947, %v5938, %v4136
  %v5989 = vsel %vm5947, %v5939, %v4138
  %v5990 = vsel %vm5947, %v5940, %v4140
  %v5991 = vsel %vm5947, %v5941, %v4142
  %v5992 = vsel %vm5947, %v5942, %v4144
  %v5993 = vsel %vm5947, %v5943, %v4146
  %v5994 = vsel %vm5947, %v5944, %v4148
  %v5995 = vsel %vm5947, %v5945, %v4150
  %v5996 = vsel %vm5947, %v5946, %v4152
  %vm5997 = vcmask 326656
  %v5998 = vsel %vm5997, %v5948, %v4455
  %v5999 = vsel %vm5997, %v5949, %v4457
  %v6000 = vsel %vm5997, %v5950, %v4459
  %v6001 = vsel %vm5997, %v5951, %v4461
  %v6002 = vsel %vm5997, %v5952, %v4463
  %v6003 = vsel %vm5997, %v5953, %v4465
  %v6004 = vsel %vm5997, %v5954, %v4467
  %v6005 = vsel %vm5997, %v5955, %v4469
  %v6006 = vsel %vm5997, %v5956, %v4471
  %v6007 = vsel %vm5997, %v5957, %v4473
  %v6008 = vsel %vm5997, %v5958, %v4475
  %v6009 = vsel %vm5997, %v5959, %v4477
  %v6010 = vsel %vm5997, %v5960, %v4479
  %v6011 = vsel %vm5997, %v5961, %v4481
  %v6012 = vsel %vm5997, %v5962, %v4483
  %v6013 = vsel %vm5997, %v5963, %v4485
  %v6014 = vsel %vm5997, %v5964, %v4487
  %v6015 = vsel %vm5997, %v5965, %v4489
  %v6016 = vsel %vm5997, %v5966, %v4491
  %v6017 = vsel %vm5997, %v5967, %v4493
  %v6018 = vsel %vm5997, %v5968, %v4495
  %v6019 = vsel %vm5997, %v5969, %v4497
  %v6020 = vsel %vm5997, %v5970, %v4499
  %v6021 = vsel %vm5997, %v5971, %v4501
  %v6022 = vsel %vm5997, %v5972, %v4503
  %v6023 = vsel %vm5997, %v5973, %v4505
  %v6024 = vsel %vm5997, %v5974, %v4507
  %v6025 = vsel %vm5997, %v5975, %v4509
  %v6026 = vsel %vm5997, %v5976, %v4511
  %v6027 = vsel %vm5997, %v5977, %v4513
  %v6028 = vsel %vm5997, %v5978, %v4515
  %v6029 = vsel %vm5997, %v5979, %v4517
  %v6030 = vsel %vm5997, %v5980, %v4519
  %v6031 = vsel %vm5997, %v5981, %v4521
  %v6032 = vsel %vm5997, %v5982, %v4523
  %v6033 = vsel %vm5997, %v5983, %v4525
  %v6034 = vsel %vm5997, %v5984, %v4527
  %v6035 = vsel %vm5997, %v5985, %v4529
  %v6036 = vsel %vm5997, %v5986, %v4531
  %v6037 = vsel %vm5997, %v5987, %v4533
  %v6038 = vsel %vm5997, %v5988, %v4535
  %v6039 = vsel %vm5997, %v5989, %v4537
  %v6040 = vsel %vm5997, %v5990, %v4539
  %v6041 = vsel %vm5997, %v5991, %v4541
  %v6042 = vsel %vm5997, %v5992, %v4543
  %v6043 = vsel %vm5997, %v5993, %v4545
  %v6044 = vsel %vm5997, %v5994, %v4547
  %v6045 = vsel %vm5997, %v5995, %v4549
  %v6046 = vsel %vm5997, %v5996, %v4551
  %vm6047 = vcmask 392192
  %v6048 = vsel %vm6047, %v5998, %v4854
  %v6049 = vsel %vm6047, %v5999, %v4856
  %v6050 = vsel %vm6047, %v6000, %v4858
  %v6051 = vsel %vm6047, %v6001, %v4860
  %v6052 = vsel %vm6047, %v6002, %v4862
  %v6053 = vsel %vm6047, %v6003, %v4864
  %v6054 = vsel %vm6047, %v6004, %v4866
  %v6055 = vsel %vm6047, %v6005, %v4868
  %v6056 = vsel %vm6047, %v6006, %v4870
  %v6057 = vsel %vm6047, %v6007, %v4872
  %v6058 = vsel %vm6047, %v6008, %v4874
  %v6059 = vsel %vm6047, %v6009, %v4876
  %v6060 = vsel %vm6047, %v6010, %v4878
  %v6061 = vsel %vm6047, %v6011, %v4880
  %v6062 = vsel %vm6047, %v6012, %v4882
  %v6063 = vsel %vm6047, %v6013, %v4884
  %v6064 = vsel %vm6047, %v6014, %v4886
  %v6065 = vsel %vm6047, %v6015, %v4888
  %v6066 = vsel %vm6047, %v6016, %v4890
  %v6067 = vsel %vm6047, %v6017, %v4892
  %v6068 = vsel %vm6047, %v6018, %v4894
  %v6069 = vsel %vm6047, %v6019, %v4896
  %v6070 = vsel %vm6047, %v6020, %v4898
  %v6071 = vsel %vm6047, %v6021, %v4900
  %v6072 = vsel %vm6047, %v6022, %v4902
  %v6073 = vsel %vm6047, %v6023, %v4904
  %v6074 = vsel %vm6047, %v6024, %v4906
  %v6075 = vsel %vm6047, %v6025, %v4908
  %v6076 = vsel %vm6047, %v6026, %v4910
  %v6077 = vsel %vm6047, %v6027, %v4912
  %v6078 = vsel %vm6047, %v6028, %v4914
  %v6079 = vsel %vm6047, %v6029, %v4916
  %v6080 = vsel %vm6047, %v6030, %v4918
  %v6081 = vsel %vm6047, %v6031, %v4920
  %v6082 = vsel %vm6047, %v6032, %v4922
  %v6083 = vsel %vm6047, %v6033, %v4924
  %v6084 = vsel %vm6047, %v6034, %v4926
  %v6085 = vsel %vm6047, %v6035, %v4928
  %v6086 = vsel %vm6047, %v6036, %v4930
  %v6087 = vsel %vm6047, %v6037, %v4932
  %v6088 = vsel %vm6047, %v6038, %v4934
  %v6089 = vsel %vm6047, %v6039, %v4936
  %v6090 = vsel %vm6047, %v6040, %v4938
  %v6091 = vsel %vm6047, %v6041, %v4940
  %v6092 = vsel %vm6047, %v6042, %v4942
  %v6093 = vsel %vm6047, %v6043, %v4944
  %v6094 = vsel %vm6047, %v6044, %v4946
  %v6095 = vsel %vm6047, %v6045, %v4948
  %v6096 = vsel %vm6047, %v6046, %v4950
  %vm6097 = vcmask 457728
  %v6098 = vsel %vm6097, %v6048, %v5253
  %v6099 = vsel %vm6097, %v6049, %v5255
  %v6100 = vsel %vm6097, %v6050, %v5257
  %v6101 = vsel %vm6097, %v6051, %v5259
  %v6102 = vsel %vm6097, %v6052, %v5261
  %v6103 = vsel %vm6097, %v6053, %v5263
  %v6104 = vsel %vm6097, %v6054, %v5265
  %v6105 = vsel %vm6097, %v6055, %v5267
  %v6106 = vsel %vm6097, %v6056, %v5269
  %v6107 = vsel %vm6097, %v6057, %v5271
  %v6108 = vsel %vm6097, %v6058, %v5273
  %v6109 = vsel %vm6097, %v6059, %v5275
  %v6110 = vsel %vm6097, %v6060, %v5277
  %v6111 = vsel %vm6097, %v6061, %v5279
  %v6112 = vsel %vm6097, %v6062, %v5281
  %v6113 = vsel %vm6097, %v6063, %v5283
  %v6114 = vsel %vm6097, %v6064, %v5285
  %v6115 = vsel %vm6097, %v6065, %v5287
  %v6116 = vsel %vm6097, %v6066, %v5289
  %v6117 = vsel %vm6097, %v6067, %v5291
  %v6118 = vsel %vm6097, %v6068, %v5293
  %v6119 = vsel %vm6097, %v6069, %v5295
  %v6120 = vsel %vm6097, %v6070, %v5297
  %v6121 = vsel %vm6097, %v6071, %v5299
  %v6122 = vsel %vm6097, %v6072, %v5301
  %v6123 = vsel %vm6097, %v6073, %v5303
  %v6124 = vsel %vm6097, %v6074, %v5305
  %v6125 = vsel %vm6097, %v6075, %v5307
  %v6126 = vsel %vm6097, %v6076, %v5309
  %v6127 = vsel %vm6097, %v6077, %v5311
  %v6128 = vsel %vm6097, %v6078, %v5313
  %v6129 = vsel %vm6097, %v6079, %v5315
  %v6130 = vsel %vm6097, %v6080, %v5317
  %v6131 = vsel %vm6097, %v6081, %v5319
  %v6132 = vsel %vm6097, %v6082, %v5321
  %v6133 = vsel %vm6097, %v6083, %v5323
  %v6134 = vsel %vm6097, %v6084, %v5325
  %v6135 = vsel %vm6097, %v6085, %v5327
  %v6136 = vsel %vm6097, %v6086, %v5329
  %v6137 = vsel %vm6097, %v6087, %v5331
  %v6138 = vsel %vm6097, %v6088, %v5333
  %v6139 = vsel %vm6097, %v6089, %v5335
  %v6140 = vsel %vm6097, %v6090, %v5337
  %v6141 = vsel %vm6097, %v6091, %v5339
  %v6142 = vsel %vm6097, %v6092, %v5341
  %v6143 = vsel %vm6097, %v6093, %v5343
  %v6144 = vsel %vm6097, %v6094, %v5345
  %v6145 = vsel %vm6097, %v6095, %v5347
  %v6146 = vsel %vm6097, %v6096, %v5349
  %vm6147 = vcmask 523264
  %v6148 = vsel %vm6147, %v6098, %v5652
  %v6149 = vsel %vm6147, %v6099, %v5654
  %v6150 = vsel %vm6147, %v6100, %v5656
  %v6151 = vsel %vm6147, %v6101, %v5658
  %v6152 = vsel %vm6147, %v6102, %v5660
  %v6153 = vsel %vm6147, %v6103, %v5662
  %v6154 = vsel %vm6147, %v6104, %v5664
  %v6155 = vsel %vm6147, %v6105, %v5666
  %v6156 = vsel %vm6147, %v6106, %v5668
  %v6157 = vsel %vm6147, %v6107, %v5670
  %v6158 = vsel %vm6147, %v6108, %v5672
  %v6159 = vsel %vm6147, %v6109, %v5674
  %v6160 = vsel %vm6147, %v6110, %v5676
  %v6161 = vsel %vm6147, %v6111, %v5678
  %v6162 = vsel %vm6147, %v6112, %v5680
  %v6163 = vsel %vm6147, %v6113, %v5682
  %v6164 = vsel %vm6147, %v6114, %v5684
  %v6165 = vsel %vm6147, %v6115, %v5686
  %v6166 = vsel %vm6147, %v6116, %v5688
  %v6167 = vsel %vm6147, %v6117, %v5690
  %v6168 = vsel %vm6147, %v6118, %v5692
  %v6169 = vsel %vm6147, %v6119, %v5694
  %v6170 = vsel %vm6147, %v6120, %v5696
  %v6171 = vsel %vm6147, %v6121, %v5698
  %v6172 = vsel %vm6147, %v6122, %v5700
  %v6173 = vsel %vm6147, %v6123, %v5702
  %v6174 = vsel %vm6147, %v6124, %v5704
  %v6175 = vsel %vm6147, %v6125, %v5706
  %v6176 = vsel %vm6147, %v6126, %v5708
  %v6177 = vsel %vm6147, %v6127, %v5710
  %v6178 = vsel %vm6147, %v6128, %v5712
  %v6179 = vsel %vm6147, %v6129, %v5714
  %v6180 = vsel %vm6147, %v6130, %v5716
  %v6181 = vsel %vm6147, %v6131, %v5718
  %v6182 = vsel %vm6147, %v6132, %v5720
  %v6183 = vsel %vm6147, %v6133, %v5722
  %v6184 = vsel %vm6147, %v6134, %v5724
  %v6185 = vsel %vm6147, %v6135, %v5726
  %v6186 = vsel %vm6147, %v6136, %v5728
  %v6187 = vsel %vm6147, %v6137, %v5730
  %v6188 = vsel %vm6147, %v6138, %v5732
  %v6189 = vsel %vm6147, %v6139, %v5734
  %v6190 = vsel %vm6147, %v6140, %v5736
  %v6191 = vsel %vm6147, %v6141, %v5738
  %v6192 = vsel %vm6147, %v6142, %v5740
  %v6193 = vsel %vm6147, %v6143, %v5742
  %v6194 = vsel %vm6147, %v6144, %v5744
  %v6195 = vsel %vm6147, %v6145, %v5746
  %v6196 = vsel %vm6147, %v6146, %v5748
  %v6198 = vperm.slane %v560, 0
  %vm6200 = vcmask 588800
  %v6202 = vsel %vm6200, %v6148, 0
  %v6205 = vsel %vm6200, %v6149, 0
  %v6208 = vsel %vm6200, %v6150, 0
  %v6211 = vsel %vm6200, %v6151, 0
  %v6214 = vsel %vm6200, %v6152, 0
  %v6217 = vsel %vm6200, %v6153, 0
  %v6220 = vsel %vm6200, %v6154, 0
  %v6223 = vsel %vm6200, %v6155, 0
  %v6226 = vsel %vm6200, %v6156, 0
  %v6229 = vsel %vm6200, %v6157, 0
  %v6232 = vsel %vm6200, %v6158, 0
  %v6235 = vsel %vm6200, %v6159, 0
  %v6238 = vsel %vm6200, %v6160, 0
  %v6241 = vsel %vm6200, %v6161, 0
  %v6244 = vsel %vm6200, %v6162, 0
  %v6247 = vsel %vm6200, %v6163, 0
  %v6250 = vsel %vm6200, %v6164, 0
  %v6253 = vsel %vm6200, %v6165, 0
  %v6256 = vsel %vm6200, %v6166, 0
  %v6259 = vsel %vm6200, %v6167, 0
  %v6262 = vsel %vm6200, %v6168, 0
  %v6265 = vsel %vm6200, %v6169, 0
  %v6268 = vsel %vm6200, %v6170, 0
  %v6271 = vsel %vm6200, %v6171, 0
  %v6274 = vsel %vm6200, %v6172, 0
  %v6277 = vsel %vm6200, %v6173, 0
  %v6280 = vsel %vm6200, %v6174, 0
  %v6283 = vsel %vm6200, %v6175, 0
  %v6286 = vsel %vm6200, %v6176, 0
  %v6289 = vsel %vm6200, %v6177, 0
  %v6292 = vsel %vm6200, %v6178, 0
  %v6295 = vsel %vm6200, %v6179, 0
  %v6298 = vsel %vm6200, %v6180, 0
  %v6301 = vsel %vm6200, %v6181, 0
  %v6304 = vsel %vm6200, %v6182, 0
  %v6307 = vsel %vm6200, %v6183, 0
  %v6310 = vsel %vm6200, %v6184, 0
  %v6313 = vsel %vm6200, %v6185, 0
  %v6316 = vsel %vm6200, %v6186, 0
  %v6319 = vsel %vm6200, %v6187, 0
  %v6322 = vsel %vm6200, %v6188, 0
  %v6325 = vsel %vm6200, %v6189, 0
  %v6328 = vsel %vm6200, %v6190, 0
  %v6331 = vsel %vm6200, %v6191, 0
  %v6334 = vsel %vm6200, %v6192, 0
  %v6337 = vsel %vm6200, %v6193, 0
  %v6340 = vsel %vm6200, %v6194, 0
  %v6343 = vsel %vm6200, %v6195, 0
  %v6346 = vsel %vm6200, %v6196, 0
  %6348 = vmatpush.msra.mxu0 0.0
  %6349 = vmatpush.msra.mxu0 0.0
  %6350 = vmatpush.msra.mxu0 0.0
  %6351 = vmatpush.msra.mxu0 0.0
  %6352 = vmatpush.msra.mxu0 0.0
  %6353 = vmatpush.msra.mxu0 0.0
  %6354 = vmatpush.msra.mxu0 0.0
  %6355 = vmatpush.msra.mxu0 %v535
  %6356 = vmatpush.msra.mxu0 %v534
  %6357 = vmatpush.msra.mxu0 %v533
  %6358 = vmatpush.msra.mxu0 %v532
  %6359 = vmatpush.msra.mxu0 %v531
  %6360 = vmatpush.msra.mxu0 %v530
  %6361 = vmatpush.msra.mxu0 %v529
  %6362 = vmatpush.msra.mxu0 %v528
  %6363 = vmatpush.msra.mxu0 %v527
  %6364 = vmatmul.f32.gmra.mxu0 %v6202
  %v6365 = vpop.f32.mrf.mxu0
  %v6366 = vadd.f32 %v6198, %v6365
  %6367 = vmatmul.f32.gmra.mxu0 %v6205
  %v6368 = vpop.f32.mrf.mxu0
  %v6369 = vadd.f32 %v6198, %v6368
  %6370 = vmatmul.f32.gmra.mxu0 %v6208
  %v6371 = vpop.f32.mrf.mxu0
  %v6372 = vadd.f32 %v6198, %v6371
  %6373 = vmatmul.f32.gmra.mxu0 %v6211
  %v6374 = vpop.f32.mrf.mxu0
  %v6375 = vadd.f32 %v6198, %v6374
  %6376 = vmatmul.f32.gmra.mxu0 %v6214
  %v6377 = vpop.f32.mrf.mxu0
  %v6378 = vadd.f32 %v6198, %v6377
  %6379 = vmatmul.f32.gmra.mxu0 %v6217
  %v6380 = vpop.f32.mrf.mxu0
  %v6381 = vadd.f32 %v6198, %v6380
  %6382 = vmatmul.f32.gmra.mxu0 %v6220
  %v6383 = vpop.f32.mrf.mxu0
  %v6384 = vadd.f32 %v6198, %v6383
  %6385 = vmatmul.f32.gmra.mxu0 %v6223
  %v6386 = vpop.f32.mrf.mxu0
  %v6387 = vadd.f32 %v6198, %v6386
  %6388 = vmatmul.f32.gmra.mxu0 %v6226
  %v6389 = vpop.f32.mrf.mxu0
  %v6390 = vadd.f32 %v6198, %v6389
  %6391 = vmatmul.f32.gmra.mxu0 %v6229
  %v6392 = vpop.f32.mrf.mxu0
  %v6393 = vadd.f32 %v6198, %v6392
  %6394 = vmatmul.f32.gmra.mxu0 %v6232
  %v6395 = vpop.f32.mrf.mxu0
  %v6396 = vadd.f32 %v6198, %v6395
  %6397 = vmatmul.f32.gmra.mxu0 %v6235
  %v6398 = vpop.f32.mrf.mxu0
  %v6399 = vadd.f32 %v6198, %v6398
  %6400 = vmatmul.f32.gmra.mxu0 %v6238
  %v6401 = vpop.f32.mrf.mxu0
  %v6402 = vadd.f32 %v6198, %v6401
  %6403 = vmatmul.f32.gmra.mxu0 %v6241
  %v6404 = vpop.f32.mrf.mxu0
  %v6405 = vadd.f32 %v6198, %v6404
  %6406 = vmatmul.f32.gmra.mxu0 %v6244
  %v6407 = vpop.f32.mrf.mxu0
  %v6408 = vadd.f32 %v6198, %v6407
  %6409 = vmatmul.f32.gmra.mxu0 %v6247
  %v6410 = vpop.f32.mrf.mxu0
  %v6411 = vadd.f32 %v6198, %v6410
  %6412 = vmatmul.f32.gmra.mxu0 %v6250
  %v6413 = vpop.f32.mrf.mxu0
  %v6414 = vadd.f32 %v6198, %v6413
  %6415 = vmatmul.f32.gmra.mxu0 %v6253
  %v6416 = vpop.f32.mrf.mxu0
  %v6417 = vadd.f32 %v6198, %v6416
  %6418 = vmatmul.f32.gmra.mxu0 %v6256
  %v6419 = vpop.f32.mrf.mxu0
  %v6420 = vadd.f32 %v6198, %v6419
  %6421 = vmatmul.f32.gmra.mxu0 %v6259
  %v6422 = vpop.f32.mrf.mxu0
  %v6423 = vadd.f32 %v6198, %v6422
  %6424 = vmatmul.f32.gmra.mxu0 %v6262
  %v6425 = vpop.f32.mrf.mxu0
  %v6426 = vadd.f32 %v6198, %v6425
  %6427 = vmatmul.f32.gmra.mxu0 %v6265
  %v6428 = vpop.f32.mrf.mxu0
  %v6429 = vadd.f32 %v6198, %v6428
  %6430 = vmatmul.f32.gmra.mxu0 %v6268
  %v6431 = vpop.f32.mrf.mxu0
  %v6432 = vadd.f32 %v6198, %v6431
  %6433 = vmatmul.f32.gmra.mxu0 %v6271
  %v6434 = vpop.f32.mrf.mxu0
  %v6435 = vadd.f32 %v6198, %v6434
  %6436 = vmatmul.f32.gmra.mxu0 %v6274
  %v6437 = vpop.f32.mrf.mxu0
  %v6438 = vadd.f32 %v6198, %v6437
  %6439 = vmatmul.f32.gmra.mxu0 %v6277
  %v6440 = vpop.f32.mrf.mxu0
  %v6441 = vadd.f32 %v6198, %v6440
  %6442 = vmatmul.f32.gmra.mxu0 %v6280
  %v6443 = vpop.f32.mrf.mxu0
  %v6444 = vadd.f32 %v6198, %v6443
  %6445 = vmatmul.f32.gmra.mxu0 %v6283
  %v6446 = vpop.f32.mrf.mxu0
  %v6447 = vadd.f32 %v6198, %v6446
  %6448 = vmatmul.f32.gmra.mxu0 %v6286
  %v6449 = vpop.f32.mrf.mxu0
  %v6450 = vadd.f32 %v6198, %v6449
  %6451 = vmatmul.f32.gmra.mxu0 %v6289
  %v6452 = vpop.f32.mrf.mxu0
  %v6453 = vadd.f32 %v6198, %v6452
  %6454 = vmatmul.f32.gmra.mxu0 %v6292
  %v6455 = vpop.f32.mrf.mxu0
  %v6456 = vadd.f32 %v6198, %v6455
  %6457 = vmatmul.f32.gmra.mxu0 %v6295
  %v6458 = vpop.f32.mrf.mxu0
  %v6459 = vadd.f32 %v6198, %v6458
  %6460 = vmatmul.f32.gmra.mxu0 %v6298
  %v6461 = vpop.f32.mrf.mxu0
  %v6462 = vadd.f32 %v6198, %v6461
  %6463 = vmatmul.f32.gmra.mxu0 %v6301
  %v6464 = vpop.f32.mrf.mxu0
  %v6465 = vadd.f32 %v6198, %v6464
  %6466 = vmatmul.f32.gmra.mxu0 %v6304
  %v6467 = vpop.f32.mrf.mxu0
  %v6468 = vadd.f32 %v6198, %v6467
  %6469 = vmatmul.f32.gmra.mxu0 %v6307
  %v6470 = vpop.f32.mrf.mxu0
  %v6471 = vadd.f32 %v6198, %v6470
  %6472 = vmatmul.f32.gmra.mxu0 %v6310
  %v6473 = vpop.f32.mrf.mxu0
  %v6474 = vadd.f32 %v6198, %v6473
  %6475 = vmatmul.f32.gmra.mxu0 %v6313
  %v6476 = vpop.f32.mrf.mxu0
  %v6477 = vadd.f32 %v6198, %v6476
  %6478 = vmatmul.f32.gmra.mxu0 %v6316
  %v6479 = vpop.f32.mrf.mxu0
  %v6480 = vadd.f32 %v6198, %v6479
  %6481 = vmatmul.f32.gmra.mxu0 %v6319
  %v6482 = vpop.f32.mrf.mxu0
  %v6483 = vadd.f32 %v6198, %v6482
  %6484 = vmatmul.f32.gmra.mxu0 %v6322
  %v6485 = vpop.f32.mrf.mxu0
  %v6486 = vadd.f32 %v6198, %v6485
  %6487 = vmatmul.f32.gmra.mxu0 %v6325
  %v6488 = vpop.f32.mrf.mxu0
  %v6489 = vadd.f32 %v6198, %v6488
  %6490 = vmatmul.f32.gmra.mxu0 %v6328
  %v6491 = vpop.f32.mrf.mxu0
  %v6492 = vadd.f32 %v6198, %v6491
  %6493 = vmatmul.f32.gmra.mxu0 %v6331
  %v6494 = vpop.f32.mrf.mxu0
  %v6495 = vadd.f32 %v6198, %v6494
  %6496 = vmatmul.f32.gmra.mxu0 %v6334
  %v6497 = vpop.f32.mrf.mxu0
  %v6498 = vadd.f32 %v6198, %v6497
  %6499 = vmatmul.f32.gmra.mxu0 %v6337
  %v6500 = vpop.f32.mrf.mxu0
  %v6501 = vadd.f32 %v6198, %v6500
  %6502 = vmatmul.f32.gmra.mxu0 %v6340
  %v6503 = vpop.f32.mrf.mxu0
  %v6504 = vadd.f32 %v6198, %v6503
  %6505 = vmatmul.f32.gmra.mxu0 %v6343
  %v6506 = vpop.f32.mrf.mxu0
  %v6507 = vadd.f32 %v6198, %v6506
  %6508 = vmatmul.f32.gmra.mxu0 %v6346
  %v6509 = vpop.f32.mrf.mxu0
  %v6510 = vadd.f32 %v6198, %v6509
  %6511 = vdwg.mxu0
  %6512 = vst [vmem:[%s5] sm:$0xff] %v6366
  %6513 = vst [vmem:[%s5 + $0x8] sm:$0xff] %v6369
  %6514 = vst [vmem:[%s5 + $0x10] sm:$0xff] %v6372
  %6515 = vst [vmem:[%s5 + $0x18] sm:$0xff] %v6375
  %6516 = vst [vmem:[%s5 + $0x20] sm:$0xff] %v6378
  %6517 = vst [vmem:[%s5 + $0x28] sm:$0xff] %v6381
  %6518 = vst [vmem:[%s5 + $0x30] sm:$0xff] %v6384
  %6519 = vst [vmem:[%s5 + $0x38] sm:$0xff] %v6387
  %6520 = vst [vmem:[%s5 + $0x40] sm:$0xff] %v6390
  %6521 = vst [vmem:[%s5 + $0x48] sm:$0xff] %v6393
  %6522 = vst [vmem:[%s5 + $0x50] sm:$0xff] %v6396
  %6523 = vst [vmem:[%s5 + $0x58] sm:$0xff] %v6399
  %6524 = vst [vmem:[%s5 + $0x60] sm:$0xff] %v6402
  %6525 = vst [vmem:[%s5 + $0x68] sm:$0xff] %v6405
  %6526 = vst [vmem:[%s5 + $0x70] sm:$0xff] %v6408
  %6527 = vst [vmem:[%s5 + $0x78] sm:$0xff] %v6411
  %6528 = vst [vmem:[%s5 + $0x80] sm:$0xff] %v6414
  %6529 = vst [vmem:[%s5 + $0x88] sm:$0xff] %v6417
  %6530 = vst [vmem:[%s5 + $0x90] sm:$0xff] %v6420
  %6531 = vst [vmem:[%s5 + $0x98] sm:$0xff] %v6423
  %6532 = vst [vmem:[%s5 + $0xa0] sm:$0xff] %v6426
  %6533 = vst [vmem:[%s5 + $0xa8] sm:$0xff] %v6429
  %6534 = vst [vmem:[%s5 + $0xb0] sm:$0xff] %v6432
  %6535 = vst [vmem:[%s5 + $0xb8] sm:$0xff] %v6435
  %6536 = vst [vmem:[%s5 + $0xc0] sm:$0xff] %v6438
  %6537 = vst [vmem:[%s5 + $0xc8] sm:$0xff] %v6441
  %6538 = vst [vmem:[%s5 + $0xd0] sm:$0xff] %v6444
  %6539 = vst [vmem:[%s5 + $0xd8] sm:$0xff] %v6447
  %6540 = vst [vmem:[%s5 + $0xe0] sm:$0xff] %v6450
  %6541 = vst [vmem:[%s5 + $0xe8] sm:$0xff] %v6453
  %6542 = vst [vmem:[%s5 + $0xf0] sm:$0xff] %v6456
  %6543 = vst [vmem:[%s5 + $0xf8] sm:$0xff] %v6459
  %6544 = vst [vmem:[%s5 + $0x100] sm:$0xff] %v6462
  %6545 = vst [vmem:[%s5 + $0x108] sm:$0xff] %v6465
  %6546 = vst [vmem:[%s5 + $0x110] sm:$0xff] %v6468
  %6547 = vst [vmem:[%s5 + $0x118] sm:$0xff] %v6471
  %6548 = vst [vmem:[%s5 + $0x120] sm:$0xff] %v6474
  %6549 = vst [vmem:[%s5 + $0x128] sm:$0xff] %v6477
  %6550 = vst [vmem:[%s5 + $0x130] sm:$0xff] %v6480
  %6551 = vst [vmem:[%s5 + $0x138] sm:$0xff] %v6483
  %6552 = vst [vmem:[%s5 + $0x140] sm:$0xff] %v6486
  %6553 = vst [vmem:[%s5 + $0x148] sm:$0xff] %v6489
  %6554 = vst [vmem:[%s5 + $0x150] sm:$0xff] %v6492
  %6555 = vst [vmem:[%s5 + $0x158] sm:$0xff] %v6495
  %6556 = vst [vmem:[%s5 + $0x160] sm:$0xff] %v6498
  %6557 = vst [vmem:[%s5 + $0x168] sm:$0xff] %v6501
  %6558 = vst [vmem:[%s5 + $0x170] sm:$0xff] %v6504
  %6559 = vst [vmem:[%s5 + $0x178] sm:$0xff] %v6507
  %6560 = vst [vmem:[%s5 + $0x180] sm:$0xff] %v6510
  // Predicated region
  $region22: #{fused_bn_conv.1} parent=0 // pred_check
    _
  $region23: #{fused_bn_conv.1} parent=0 // pred_check_branch
    %6562 = sbr.rel (0) target = $region25
  $region24: #{fused_bn_conv.1} parent=0 // pred_region
    _
  $region25: #{fused_bn_conv.1} parent=0 // pred_fallthru
    _
  // Predicated region
  $region26: #{fused_bn_conv.1} parent=0 // pred_check
    _
  $region27: #{fused_bn_conv.1} parent=0 // pred_check_branch
    %6564 = sbr.rel (0) target = $region29
  $region28: #{fused_bn_conv.1} parent=0 // pred_region
    _
  $region29: #{fused_bn_conv.1} parent=0 // pred_fallthru
    _

</llo_original>
